<compile_context>
chip_gen: v5e
topology: v5e:2x2
jax: 0.10.0
libtpu: 0.0.40
codegen_flags: <defaults>
</compile_context>

<pallas_src>
import functools
import math

import jax
import jax.numpy as jnp
from jax.experimental import pallas as pl
from jax.experimental.pallas import tpu as pltpu


# --------------------------- compiler param helpers -------------------------

@functools.lru_cache(maxsize=None)
def _vmem_limit_bytes():
    # Per-generation scoped-VMEM limit: ~half of physical VMEM
    # (64 MiB on v5e/v6e with 128 MiB physical, 32 MiB on v7x with 64 MiB).
    try:
        info = pltpu.get_tpu_info()
        phys = int(getattr(info, "vmem_capacity_bytes", 128 * 1024 * 1024))
    except Exception:  # query unavailable -> conservative default
        phys = 64 * 1024 * 1024
    return int(max(32 * 1024 * 1024, min(96 * 1024 * 1024, phys // 2)))


def _cparams(dimension_semantics):
    return pltpu.CompilerParams(
        dimension_semantics=dimension_semantics,
        vmem_limit_bytes=_vmem_limit_bytes(),
    )


def _round_up(x, m):
    return ((x + m - 1) // m) * m


# ----------------------------- generic tiled linear -------------------------

def _linear_kernel(x_ref, w_ref, b_ref, o_ref, acc_ref):
    @pl.when(pl.program_id(2) == 0)
    def _():
        acc_ref[...] = jnp.zeros_like(acc_ref)

    acc_ref[...] += jnp.dot(
        x_ref[...].astype(jnp.bfloat16),
        w_ref[...].astype(jnp.bfloat16),
        preferred_element_type=jnp.float32,
    )

    @pl.when(pl.program_id(2) == pl.num_programs(2) - 1)
    def _():
        o_ref[...] = acc_ref[...] + b_ref[...]


def linear(x, w, b):
    """(M, K) @ (K, N) + (N,) -> (M, N) f32.

    Inputs are zero-padded to sublane/lane-aligned tiles so odd M/N/K (e.g.
    real vocab sizes) never fall back to full-extent blocks or produce
    lane-misaligned masked stores; the padding is sliced off afterwards.
    """
    M, K = x.shape
    N = w.shape[1]
    tm = min(256, _round_up(M, 8))
    tn = min(512, _round_up(N, 128))
    tk = min(512, _round_up(K, 128))
    Mp, Np, Kp = _round_up(M, tm), _round_up(N, tn), _round_up(K, tk)

    xp = x if (Mp == M and Kp == K) else jnp.pad(x, ((0, Mp - M), (0, Kp - K)))
    wp = w if (Kp == K and Np == N) else jnp.pad(w, ((0, Kp - K), (0, Np - N)))
    bp = (b if Np == N else jnp.pad(b, (0, Np - N))).reshape(1, Np)

    out = pl.pallas_call(
        _linear_kernel,
        out_shape=jax.ShapeDtypeStruct((Mp, Np), jnp.float32),
        grid=(Mp // tm, Np // tn, Kp // tk),
        in_specs=[
            pl.BlockSpec((tm, tk), lambda i, j, k: (i, k)),
            pl.BlockSpec((tk, tn), lambda i, j, k: (k, j)),
            pl.BlockSpec((1, tn), lambda i, j, k: (0, j)),
        ],
        out_specs=pl.BlockSpec((tm, tn), lambda i, j, k: (i, j)),
        scratch_shapes=[pltpu.VMEM((tm, tn), jnp.float32)],
        compiler_params=_cparams(("parallel", "parallel", "arbitrary")),
    )(xp, wp, bp)
    return out[:M, :N] if (Mp != M or Np != N) else out


# -------------------------- fused transformer block -------------------------

def _layernorm(x, g, b):
    mu = jnp.mean(x, axis=-1, keepdims=True)
    xc = x - mu
    var = jnp.mean(xc * xc, axis=-1, keepdims=True)
    return xc * jax.lax.rsqrt(var + 1e-5) * g + b


def _mha_proj(q, k, v, bias, wo_ref, bo, num_heads):
    """Multi-head attention + output projection, entirely in vregs/VMEM.

    q: (Lq, E) f32 (q-projection bias already added), k/v: (Lk, E) f32,
    bias: (Lq, Lk) additive f32 or None, wo_ref: (E, E) bf16 ref, bo: (1, E).
    Returns (Lq, E) f32 (lane-dense: heads merged on the last dim by folding
    per-head, sublane-aligned row slices of wo into the head loop).
    """
    Lq, E = q.shape
    Dh = E // num_heads
    scale = 1.0 / math.sqrt(Dh)
    acc = jnp.zeros((Lq, E), jnp.float32)
    for h in range(num_heads):                      # static unroll, 2-D ops only
        sl = slice(h * Dh, (h + 1) * Dh)
        qh = (q[:, sl] * scale).astype(jnp.bfloat16)  # scale folded into q tile
        kh = k[:, sl].astype(jnp.bfloat16)
        vh = v[:, sl].astype(jnp.bfloat16)
        s = jnp.einsum("qd,kd->qk", qh, kh, preferred_element_type=jnp.float32)
        if bias is not None:
            s = s + bias
        m = jnp.max(s, axis=-1, keepdims=True)
        probs = jnp.exp(s - m)
        probs = probs * pl.reciprocal(
            jnp.sum(probs, axis=-1, keepdims=True), approx=True)
        oh = jnp.dot(probs.astype(jnp.bfloat16), vh,
                     preferred_element_type=jnp.float32)        # (Lq, Dh)
        acc = acc + jnp.dot(oh.astype(jnp.bfloat16), wo_ref[sl, :],
                            preferred_element_type=jnp.float32)  # (Lq, E)
    return acc + bo


def _self_attn(x, wqkv_ref, bqkv_ref, wo_ref, bo_ref, bias, num_heads):
    E = x.shape[-1]
    qkv = jnp.dot(x.astype(jnp.bfloat16), wqkv_ref[...],
                  preferred_element_type=jnp.float32) + bqkv_ref[...]
    q, k, v = qkv[:, :E], qkv[:, E:2 * E], qkv[:, 2 * E:]
    return _mha_proj(q, k, v, bias, wo_ref, bo_ref[...], num_heads)


def _cross_attn(x, kvx, wq_ref, bq_ref, wkv_ref, bkv_ref, wo_ref, bo_ref,
                num_heads):
    E = x.shape[-1]
    q = jnp.dot(x.astype(jnp.bfloat16), wq_ref[...],
                preferred_element_type=jnp.float32) + bq_ref[...]
    kv = jnp.dot(kvx.astype(jnp.bfloat16), wkv_ref[...],
                 preferred_element_type=jnp.float32) + bkv_ref[...]
    k, v = kv[:, :E], kv[:, E:]
    return _mha_proj(q, k, v, None, wo_ref, bo_ref[...], num_heads)


def _mlp(x, w1_ref, b1_ref, w2_ref, b2_ref):
    h = jnp.dot(x.astype(jnp.bfloat16), w1_ref[...],
                preferred_element_type=jnp.float32) + b1_ref[...]
    h = jnp.maximum(h, 0.0)                              # ReLU; dropout = eval no-op
    return jnp.dot(h.astype(jnp.bfloat16), w2_ref[...],
                   preferred_element_type=jnp.float32) + b2_ref[...]


def _enc_block_kernel(x_ref,
                      wqkv_ref, bqkv_ref, wo1_ref, bo1_ref, g1_ref, b1_ref,
                      w1_ref, b1m_ref, w2_ref, b2m_ref, gm_ref, bm_ref,
                      o_ref, *, num_heads):
    x = x_ref[...]                                       # (L, E) f32
    a = _self_attn(x, wqkv_ref, bqkv_ref, wo1_ref, bo1_ref, None, num_heads)
    x = _layernorm(x + a, g1_ref[...], b1_ref[...])
    m = _mlp(x, w1_ref, b1m_ref, w2_ref, b2m_ref)
    o_ref[...] = _layernorm(x + m, gm_ref[...], bm_ref[...])


def _dec_block_kernel(x_ref, bias_ref, kv_ref,
                      wqkv_ref, bqkv_ref, wo1_ref, bo1_ref, g1_ref, b1_ref,
                      wq_ref, bq_ref, wkv_ref, bkv_ref, wo2_ref, bo2_ref,
                      g2_ref, b2_ref,
                      w1_ref, b1m_ref, w2_ref, b2m_ref, gm_ref, bm_ref,
                      o_ref, *, num_heads):
    x = x_ref[...]                                       # (L, E) f32
    a = _self_attn(x, wqkv_ref, bqkv_ref, wo1_ref, bo1_ref, bias_ref[...],
                   num_heads)
    x = _layernorm(x + a, g1_ref[...], b1_ref[...])
    a2 = _cross_attn(x, kv_ref[...], wq_ref, bq_ref, wkv_ref, bkv_ref,
                     wo2_ref, bo2_ref, num_heads)
    x = _layernorm(x + a2, g2_ref[...], b2_ref[...])
    m = _mlp(x, w1_ref, b1m_ref, w2_ref, b2m_ref)
    o_ref[...] = _layernorm(x + m, gm_ref[...], bm_ref[...])


def _full_spec(arr):
    nd = arr.ndim
    return pl.BlockSpec(arr.shape, lambda b: (0,) * nd)   # grid-invariant block


def transformer_block(x, p, num_heads, self_bias=None, kv_cross=None):
    """One fused TransformerBlock == one pallas_call (grid over the batch)."""
    B, L, E = x.shape
    decoder = kv_cross is not None

    def row(v):
        return v.reshape(1, -1)

    a1 = p["attn1"]
    attn1_w = [a1["wqkv"], row(a1["bqkv"]), a1["wo"], row(a1["bo"]),
               row(p["ln1_g"]), row(p["ln1_b"])]
    mlp_w = [p["mlp_w1"], row(p["mlp_b1"]), p["mlp_w2"], row(p["mlp_b2"]),
             row(p["ln_mlp_g"]), row(p["ln_mlp_b"])]

    if decoder:
        a2 = p["attn2"]
        attn2_w = [a2["wq"], row(a2["bq"]), a2["wkv"], row(a2["bkv"]),
                   a2["wo"], row(a2["bo"]), row(p["ln2_g"]), row(p["ln2_b"])]
        Lk = kv_cross.shape[1]
        weights = attn1_w + attn2_w + mlp_w
        args = [x, self_bias, kv_cross] + weights
        in_specs = ([pl.BlockSpec((None, L, E), lambda b: (b, 0, 0)),
                     pl.BlockSpec((None, L, L), lambda b: (b, 0, 0)),
                     pl.BlockSpec((None, Lk, E), lambda b: (b, 0, 0))]
                    + [_full_spec(w) for w in weights])
        kern = functools.partial(_dec_block_kernel, num_heads=num_heads)
    else:
        weights = attn1_w + mlp_w
        args = [x] + weights
        in_specs = ([pl.BlockSpec((None, L, E), lambda b: (b, 0, 0))]
                    + [_full_spec(w) for w in weights])
        kern = functools.partial(_enc_block_kernel, num_heads=num_heads)

    return pl.pallas_call(
        kern,
        out_shape=jax.ShapeDtypeStruct((B, L, E), jnp.float32),
        grid=(B,),
        in_specs=in_specs,
        out_specs=pl.BlockSpec((None, L, E), lambda b: (b, 0, 0)),
        compiler_params=_cparams(("parallel",)),
    )(*args)


# ------------------------------- model pieces -------------------------------

def image_encoder(image, p, num_heads, patch):
    """ImageEncoderWithResNet equivalent.  image layout: NCHW."""
    B, C, H, W = image.shape
    Hn, Wn = H // patch, W // patch
    grid = Hn * Wn
    # TODO(synk): pretrained torchvision ResNet50 backbone replaced by a single
    # deterministic strided patchify conv (kernel=stride=patch) -> feat_dim.
    patches = image.reshape(B, C, Hn, patch, Wn, patch)
    patches = patches.transpose(0, 2, 4, 1, 3, 5).reshape(
        B * grid, C * patch * patch)
    feat = linear(patches, p["stem_w"], p["stem_b"])        # conv-as-matmul
    patch_emb = linear(feat, p["fc_in_w"], p["fc_in_b"])    # fc_in
    E = patch_emb.shape[-1]
    embs = patch_emb.reshape(B, grid, E) + p["pos_embedding"]
    for blk in p["blocks"]:
        embs = transformer_block(embs, blk, num_heads)      # no mask, no cross
    global_image_emb = jnp.mean(embs, axis=1)               # AdaptiveAvgPool1d(1)
    return embs, global_image_emb


def sinusoidal_pos_emb(seq_len, dim):
    half = dim // 2
    scale = math.log(10000.0) / (half - 1)
    freqs = jnp.exp(-jnp.arange(half, dtype=jnp.float32) * scale)
    ang = jnp.arange(seq_len, dtype=jnp.float32)[:, None] * freqs[None, :]
    return jnp.concatenate([jnp.sin(ang), jnp.cos(ang)], axis=-1)


def text_decoder(target_seq, encoder_output, bool_padding_mask, p, num_heads):
    B, L = target_seq.shape
    E = p["embedding"].shape[1]
    embs = p["embedding"][target_seq]                       # nn.Embedding gather
    embs = embs + sinusoidal_pos_emb(L, E)[None, :, :]
    neg = jnp.float32(-1e30)
    causal = jnp.triu(jnp.ones((L, L), jnp.float32), k=1) * neg        # (L, L)
    pad = jnp.where(bool_padding_mask, neg, 0.0)[:, None, :]           # (B, 1, L)
    self_bias = causal[None, :, :] + pad                               # (B, L, L)
    for blk in p["blocks"]:
        embs = transformer_block(embs, blk, num_heads, self_bias=self_bias,
                                 kv_cross=encoder_output)
    global_text_emb = jnp.mean(embs, axis=1)
    logits = linear(embs.reshape(B * L, E), p["fc_out_w"], p["fc_out_b"])
    return logits.reshape(B, L, -1), global_text_emb


def vision_encoder_decoder(params, input_image, target_seq, padding_mask,
                           *, num_heads, patch):
    bool_padding_mask = (padding_mask == 0)
    encoded_seq, global_image_emb = image_encoder(
        input_image, params["encoder"], num_heads, patch)
    decoded_seq, global_text_emb = text_decoder(
        target_seq, encoded_seq, bool_padding_mask, params["decoder"], num_heads)
    return decoded_seq, global_image_emb, global_text_emb


# --------------------------------- parameters -------------------------------

def init_params(key, *, channels_in, patch, feat_dim, hidden, num_layers,
                num_emb, grid):
    keys = iter(jax.random.split(key, 256))

    def w(shape, s=0.02):   # matmul weights: bf16 at rest (halves weight DMA)
        return (jax.random.normal(next(keys), shape, jnp.float32) * s
                ).astype(jnp.bfloat16)

    def f32w(shape, s=0.02):
        return jax.random.normal(next(keys), shape, jnp.float32) * s

    def zeros(shape):
        return jnp.zeros(shape, jnp.float32)

    def ones(shape):
        return jnp.ones(shape, jnp.float32)

    def self_attn_params():   # fused QKV weights (E, 3E)
        return dict(wqkv=w((hidden, 3 * hidden)), bqkv=zeros((3 * hidden,)),
                    wo=w((hidden, hidden)), bo=zeros((hidden,)))

    def cross_attn_params():  # separate Q, fused KV (E, 2E)
        return dict(wq=w((hidden, hidden)), bq=zeros((hidden,)),
                    wkv=w((hidden, 2 * hidden)), bkv=zeros((2 * hidden,)),
                    wo=w((hidden, hidden)), bo=zeros((hidden,)))

    def block_params(decoder):
        p = dict(attn1=self_attn_params(),
                 ln1_g=ones((hidden,)), ln1_b=zeros((hidden,)),
                 mlp_w1=w((hidden, 4 * hidden)), mlp_b1=zeros((4 * hidden,)),
                 mlp_w2=w((4 * hidden, hidden)), mlp_b2=zeros((hidden,)),
                 ln_mlp_g=ones((hidden,)), ln_mlp_b=zeros((hidden,)))
        if decoder:
            p.update(attn2=cross_attn_params(),
                     ln2_g=ones((hidden,)), ln2_b=zeros((hidden,)))
        return p

    encoder = dict(
        stem_w=w((channels_in * patch * patch, feat_dim)),
        stem_b=zeros((feat_dim,)),
        fc_in_w=w((feat_dim, hidden)), fc_in_b=zeros((hidden,)),
        pos_embedding=f32w((1, grid, hidden)),
        blocks=[block_params(False) for _ in range(num_layers[0])],
    )
    decoder = dict(
        embedding=f32w((num_emb, hidden)),
        blocks=[block_params(True) for _ in range(num_layers[1])],
        fc_out_w=w((hidden, num_emb)), fc_out_b=zeros((num_emb,)),
    )
    return dict(encoder=encoder, decoder=decoder)


# ------------------- pure-JAX reference (correctness check) -----------------

def _ref_forward(params, input_image, target_seq, padding_mask, *, num_heads,
                 patch):
    f32 = lambda t: t.astype(jnp.float32)

    def ln(x, g, b):
        mu = x.mean(-1, keepdims=True)
        var = ((x - mu) ** 2).mean(-1, keepdims=True)
        return (x - mu) / jnp.sqrt(var + 1e-5) * g + b

    def mha(xq, xkv, p, bias):
        B, Lq, E = xq.shape
        Lk = xkv.shape[1]
        H = num_heads
        Dh = E // H
        if "wqkv" in p:
            qkv = xq @ f32(p["wqkv"]) + p["bqkv"]
            q, k, v = qkv[..., :E], qkv[..., E:2 * E], qkv[..., 2 * E:]
        else:
            q = xq @ f32(p["wq"]) + p["bq"]
            kv = xkv @ f32(p["wkv"]) + p["bkv"]
            k, v = kv[..., :E], kv[..., E:]
        q = q.reshape(B, Lq, H, Dh).transpose(0, 2, 1, 3)
        k = k.reshape(B, Lk, H, Dh).transpose(0, 2, 1, 3)
        v = v.reshape(B, Lk, H, Dh).transpose(0, 2, 1, 3)
        s = jnp.einsum("bhqd,bhkd->bhqk", q, k) / math.sqrt(Dh)
        if bias is not None:
            s = s + bias[:, None, :, :]
        a = jnp.einsum("bhqk,bhkd->bhqd", jax.nn.softmax(s, axis=-1), v)
        a = a.transpose(0, 2, 1, 3).reshape(B, Lq, E)
        return a @ f32(p["wo"]) + p["bo"]

    def block(x, p, bias=None, kv_cross=None):
        x = ln(x + mha(x, x, p["attn1"], bias), p["ln1_g"], p["ln1_b"])
        if kv_cross is not None:
            x = ln(x + mha(x, kv_cross, p["attn2"], None),
                   p["ln2_g"], p["ln2_b"])
        h = jnp.maximum(x @ f32(p["mlp_w1"]) + p["mlp_b1"], 0.0)
        m = h @ f32(p["mlp_w2"]) + p["mlp_b2"]
        return ln(x + m, p["ln_mlp_g"], p["ln_mlp_b"])

    pe = params["encoder"]
    B, C, H, W = input_image.shape
    Hn, Wn = H // patch, W // patch
    g = Hn * Wn
    patches = input_image.reshape(B, C, Hn, patch, Wn, patch)
    patches = patches.transpose(0, 2, 4, 1, 3, 5).reshape(B * g, C * patch * patch)
    feat = patches @ f32(pe["stem_w"]) + pe["stem_b"]
    emb = feat @ f32(pe["fc_in_w"]) + pe["fc_in_b"]
    E = emb.shape[-1]
    x = emb.reshape(B, g, E) + pe["pos_embedding"]
    for blk in pe["blocks"]:
        x = block(x, blk)
    enc = x
    global_image_emb = enc.mean(axis=1)

    pd = params["decoder"]
    _, L = target_seq.shape
    y = pd["embedding"][target_seq] + sinusoidal_pos_emb(L, E)[None, :, :]
    neg = jnp.float32(-1e30)
    causal = jnp.triu(jnp.ones((L, L), jnp.float32), k=1) * neg
    pad = jnp.where(padding_mask == 0, neg, 0.0)[:, None, :]
    bias = causal[None, :, :] + pad
    for blk in pd["blocks"]:
        y = block(y, blk, bias=bias, kv_cross=enc)
    global_text_emb = y.mean(axis=1)
    logits = y @ f32(pd["fc_out_w"]) + pd["fc_out_b"]
    return logits, global_image_emb, global_text_emb


# ------------------------------------ main ----------------------------------

if __name__ == "__main__":
    B = 2
    channels_in = 3
    image_size = 16
    patch = 4
    grid = (image_size // patch) ** 2          # 16 patches
    feat_dim = 64                              # stand-in for resnet_out_channels
    hidden = 32
    num_heads = 4
    num_layers = (2, 2)
    num_emb = 50
    seq_len = 8

    key = jax.random.PRNGKey(0)
    k_img, k_seq, k_params = jax.random.split(key, 3)

    input_image = jax.random.normal(
        k_img, (B, channels_in, image_size, image_size), jnp.float32)
    target_seq = jax.random.randint(k_seq, (B, seq_len), 0, num_emb)
    lengths = jnp.array([seq_len, seq_len - 3])
    padding_mask = (jnp.arange(seq_len)[None, :] < lengths[:, None]).astype(jnp.int32)

    params = init_params(k_params, channels_in=channels_in, patch=patch,
                         feat_dim=feat_dim, hidden=hidden,
                         num_layers=num_layers, num_emb=num_emb, grid=grid)

    fwd = jax.jit(functools.partial(vision_encoder_decoder,
                                    num_heads=num_heads, patch=patch))
    decoded_seq, global_image_emb, global_text_emb = fwd(
        params, input_image, target_seq, padding_mask)
    jax.block_until_ready((decoded_seq, global_image_emb, global_text_emb))

    assert decoded_seq.shape == (B, seq_len, num_emb)
    assert global_image_emb.shape == (B, hidden)
    assert global_text_emb.shape == (B, hidden)
    assert bool(jnp.all(jnp.isfinite(decoded_seq)))
    assert bool(jnp.all(jnp.isfinite(global_image_emb)))
    assert bool(jnp.all(jnp.isfinite(global_text_emb)))

    # Pure-JAX reference check (same params; tolerance covers bf16 MXU operands
    # and the EUP approx-reciprocal in the softmax denominator).
    ref = _ref_forward(params, input_image, target_seq, padding_mask,
                       num_heads=num_heads, patch=patch)
    for got, want in zip((decoded_seq, global_image_emb, global_text_emb), ref):
        err = float(jnp.max(jnp.abs(got - want)))
        assert err < 5e-2, f"max abs err vs reference: {err}"

    print("KERNEL_OK")
</pallas_src>

<mosaic_0001>
module attributes {stable_mosaic.version = 11 : i64} {
  func.func @_linear_kernel(%arg0: i32, %arg1: i32, %arg2: i32, %arg3: memref<32x128xf32, #tpu.memory_space<vmem>>, %arg4: memref<128x128xbf16, #tpu.memory_space<vmem>>, %arg5: memref<1x128xf32, #tpu.memory_space<vmem>>, %arg6: memref<32x128xf32, #tpu.memory_space<vmem>>, %arg7: memref<32x128xf32, #tpu.memory_space<vmem>>) attributes {dimension_semantics = [#tpu.dimension_semantics<parallel>, #tpu.dimension_semantics<parallel>, #tpu.dimension_semantics<arbitrary>], iteration_bounds = array<i64: 1, 1, 1>, scalar_prefetch = 0 : i64, scratch_operands = 1 : i64, tpu.core_type = #tpu.core_type<tc>, window_params = [{transform_indices = @transform_0, window_bounds = array<i64: 32, 128>}, {transform_indices = @transform_1, window_bounds = array<i64: 128, 128>}, {transform_indices = @transform_2, window_bounds = array<i64: 1, 128>}, {transform_indices = @transform_3, window_bounds = array<i64: 32, 128>}]} {
    %c0_i32 = arith.constant 0 : i32
    %0 = arith.cmpi eq, %arg2, %c0_i32 : i32
    %1 = arith.extui %0 : i1 to i32
    %c0_i32_0 = arith.constant 0 : i32
    %2 = arith.cmpi ne, %1, %c0_i32_0 : i32
    scf.if %2 {
      %cst_10 = arith.constant 0.000000e+00 : f32
      %13 = vector.broadcast %cst_10 : f32 to vector<32x128xf32>
      %c0_11 = arith.constant 0 : index
      %c0_12 = arith.constant 0 : index
      %14 = vector.load %arg7[%c0_11, %c0_12] : memref<32x128xf32, #tpu.memory_space<vmem>>, vector<32x128xf32>
      tpu.vector_store %arg7[%c0_11, %c0_12], %13 {strides = array<i32>} : memref<32x128xf32, #tpu.memory_space<vmem>>, vector<32x128xf32>,
    } else {
    }
    %c0 = arith.constant 0 : index
    %c0_1 = arith.constant 0 : index
    %3 = vector.load %arg7[%c0, %c0_1] : memref<32x128xf32, #tpu.memory_space<vmem>>, vector<32x128xf32>
    %c0_2 = arith.constant 0 : index
    %c0_3 = arith.constant 0 : index
    %4 = vector.load %arg3[%c0_2, %c0_3] : memref<32x128xf32, #tpu.memory_space<vmem>>, vector<32x128xf32>
    %5 = arith.truncf %4 : vector<32x128xf32> to vector<32x128xbf16>
    %c0_4 = arith.constant 0 : index
    %c0_5 = arith.constant 0 : index
    %6 = vector.load %arg4[%c0_4, %c0_5] : memref<128x128xbf16, #tpu.memory_space<vmem>>, vector<128x128xbf16>
    %cst = arith.constant dense<0.000000e+00> : vector<32x128xf32>
    %7 = tpu.matmul %5, %6, %cst {dimension_numbers = #tpu.dot_dimension_numbers<[1], [0], [0], [1], [0, 0, 1, 1], [], []>} : vector<32x128xbf16>, vector<128x128xbf16>, vector<32x128xf32> -> vector<32x128xf32>
    %8 = arith.addf %3, %7 : vector<32x128xf32>
    %c0_6 = arith.constant 0 : index
    %c0_7 = arith.constant 0 : index
    %9 = vector.load %arg7[%c0_6, %c0_7] : memref<32x128xf32, #tpu.memory_space<vmem>>, vector<32x128xf32>
    tpu.vector_store %arg7[%c0_6, %c0_7], %8 {strides = array<i32>} : memref<32x128xf32, #tpu.memory_space<vmem>>, vector<32x128xf32>,
    %c0_i32_8 = arith.constant 0 : i32
    %10 = arith.cmpi eq, %arg2, %c0_i32_8 : i32
    %11 = arith.extui %10 : i1 to i32
    %c0_i32_9 = arith.constant 0 : i32
    %12 = arith.cmpi ne, %11, %c0_i32_9 : i32
    scf.if %12 {
      %c0_10 = arith.constant 0 : index
      %c0_11 = arith.constant 0 : index
      %13 = vector.load %arg7[%c0_10, %c0_11] : memref<32x128xf32, #tpu.memory_space<vmem>>, vector<32x128xf32>
      %c0_12 = arith.constant 0 : index
      %c0_13 = arith.constant 0 : index
      %14 = vector.load %arg5[%c0_12, %c0_13] : memref<1x128xf32, #tpu.memory_space<vmem>>, vector<1x128xf32>
      %15 = vector.broadcast %14 : vector<1x128xf32> to vector<32x128xf32>
      %16 = arith.addf %13, %15 : vector<32x128xf32>
      %c0_14 = arith.constant 0 : index
      %c0_15 = arith.constant 0 : index
      %17 = vector.load %arg6[%c0_14, %c0_15] : memref<32x128xf32, #tpu.memory_space<vmem>>, vector<32x128xf32>
      tpu.vector_store %arg6[%c0_14, %c0_15], %16 {strides = array<i32>} : memref<32x128xf32, #tpu.memory_space<vmem>>, vector<32x128xf32>,
    } else {
    }
    return
  }
  func.func @transform_0(%arg0: i32, %arg1: i32, %arg2: i32) -> (i32, i32) {
    %c0_i32 = arith.constant 0 : i32
    return %arg0, %arg2 : i32, i32
  }
  func.func @transform_1(%arg0: i32, %arg1: i32, %arg2: i32) -> (i32, i32) {
    %c0_i32 = arith.constant 0 : i32
    return %arg2, %arg1 : i32, i32
  }
  func.func @transform_2(%arg0: i32, %arg1: i32, %arg2: i32) -> (i32, i32) {
    %c0_i32 = arith.constant 0 : i32
    %c0_i32_0 = arith.constant 0 : i32
    return %c0_i32, %arg1 : i32, i32
  }
  func.func @transform_3(%arg0: i32, %arg1: i32, %arg2: i32) -> (i32, i32) {
    %c0_i32 = arith.constant 0 : i32
    return %arg0, %arg1 : i32, i32
  }
}

module attributes {stable_mosaic.version = 11 : i64} {
  func.func @_enc_block_kernel(%arg0: i32, %arg1: memref<1x16x32xf32, #tpu.memory_space<vmem>>, %arg2: memref<32x96xbf16, #tpu.memory_space<vmem>>, %arg3: memref<1x96xf32, #tpu.memory_space<vmem>>, %arg4: memref<32x32xbf16, #tpu.memory_space<vmem>>, %arg5: memref<1x32xf32, #tpu.memory_space<vmem>>, %arg6: memref<1x32xf32, #tpu.memory_space<vmem>>, %arg7: memref<1x32xf32, #tpu.memory_space<vmem>>, %arg8: memref<32x128xbf16, #tpu.memory_space<vmem>>, %arg9: memref<1x128xf32, #tpu.memory_space<vmem>>, %arg10: memref<128x32xbf16, #tpu.memory_space<vmem>>, %arg11: memref<1x32xf32, #tpu.memory_space<vmem>>, %arg12: memref<1x32xf32, #tpu.memory_space<vmem>>, %arg13: memref<1x32xf32, #tpu.memory_space<vmem>>, %arg14: memref<1x16x32xf32, #tpu.memory_space<vmem>>) attributes {dimension_semantics = [#tpu.dimension_semantics<parallel>], iteration_bounds = array<i64: 2>, scalar_prefetch = 0 : i64, scratch_operands = 0 : i64, tpu.core_type = #tpu.core_type<tc>, window_params = [{transform_indices = @transform_0, window_bounds = array<i64: 1, 16, 32>}, {pipeline_mode = #tpu.pipeline_mode<synchronous>, transform_indices = @transform_1, window_bounds = array<i64: 32, 96>}, {pipeline_mode = #tpu.pipeline_mode<synchronous>, transform_indices = @transform_2, window_bounds = array<i64: 1, 96>}, {pipeline_mode = #tpu.pipeline_mode<synchronous>, transform_indices = @transform_3, window_bounds = array<i64: 32, 32>}, {pipeline_mode = #tpu.pipeline_mode<synchronous>, transform_indices = @transform_4, window_bounds = array<i64: 1, 32>}, {pipeline_mode = #tpu.pipeline_mode<synchronous>, transform_indices = @transform_5, window_bounds = array<i64: 1, 32>}, {pipeline_mode = #tpu.pipeline_mode<synchronous>, transform_indices = @transform_6, window_bounds = array<i64: 1, 32>}, {pipeline_mode = #tpu.pipeline_mode<synchronous>, transform_indices = @transform_7, window_bounds = array<i64: 32, 128>}, {pipeline_mode = #tpu.pipeline_mode<synchronous>, transform_indices = @transform_8, window_bounds = array<i64: 1, 128>}, {pipeline_mode = #tpu.pipeline_mode<synchronous>, transform_indices = @transform_9, window_bounds = array<i64: 128, 32>}, {pipeline_mode = #tpu.pipeline_mode<synchronous>, transform_indices = @transform_10, window_bounds = array<i64: 1, 32>}, {pipeline_mode = #tpu.pipeline_mode<synchronous>, transform_indices = @transform_11, window_bounds = array<i64: 1, 32>}, {pipeline_mode = #tpu.pipeline_mode<synchronous>, transform_indices = @transform_12, window_bounds = array<i64: 1, 32>}, {transform_indices = @transform_13, window_bounds = array<i64: 1, 16, 32>}]} {
    %c0 = arith.constant 0 : index
    %c0_0 = arith.constant 0 : index
    %c0_1 = arith.constant 0 : index
    %0 = vector.load %arg1[%c0, %c0_0, %c0_1] : memref<1x16x32xf32, #tpu.memory_space<vmem>>, vector<1x16x32xf32>
    %1 = vector.shape_cast %0 : vector<1x16x32xf32> to vector<16x32xf32>
    %2 = arith.truncf %1 : vector<16x32xf32> to vector<16x32xbf16>
    %c0_2 = arith.constant 0 : index
    %c0_3 = arith.constant 0 : index
    %3 = vector.load %arg2[%c0_2, %c0_3] : memref<32x96xbf16, #tpu.memory_space<vmem>>, vector<32x96xbf16>
    %cst = arith.constant dense<0.000000e+00> : vector<16x96xf32>
    %4 = tpu.matmul %2, %3, %cst {dimension_numbers = #tpu.dot_dimension_numbers<[1], [0], [0], [1], [0, 0, 1, 1], [], []>} : vector<16x32xbf16>, vector<32x96xbf16>, vector<16x96xf32> -> vector<16x96xf32>
    %c0_4 = arith.constant 0 : index
    %c0_5 = arith.constant 0 : index
    %5 = vector.load %arg3[%c0_4, %c0_5] : memref<1x96xf32, #tpu.memory_space<vmem>>, vector<1x96xf32>
    %6 = vector.broadcast %5 : vector<1x96xf32> to vector<16x96xf32>
    %7 = arith.addf %4, %6 : vector<16x96xf32>
    %8 = vector.extract_strided_slice %7 {offsets = [0, 0], sizes = [16, 32], strides = [1, 1]} : vector<16x96xf32> to vector<16x32xf32>
    %9 = vector.extract_strided_slice %7 {offsets = [0, 32], sizes = [16, 32], strides = [1, 1]} : vector<16x96xf32> to vector<16x32xf32>
    %10 = vector.extract_strided_slice %7 {offsets = [0, 64], sizes = [16, 32], strides = [1, 1]} : vector<16x96xf32> to vector<16x32xf32>
    %c0_6 = arith.constant 0 : index
    %c0_7 = arith.constant 0 : index
    %11 = vector.load %arg5[%c0_6, %c0_7] : memref<1x32xf32, #tpu.memory_space<vmem>>, vector<1x32xf32>
    %cst_8 = arith.constant 0.000000e+00 : f32
    %12 = vector.broadcast %cst_8 : f32 to vector<16x32xf32>
    %13 = vector.extract_strided_slice %8 {offsets = [0, 0], sizes = [16, 8], strides = [1, 1]} : vector<16x32xf32> to vector<16x8xf32>
    %cst_9 = arith.constant 0.353553385 : f32
    %14 = vector.broadcast %cst_9 : f32 to vector<16x8xf32>
    %15 = arith.mulf %13, %14 : vector<16x8xf32>
    %16 = arith.truncf %15 : vector<16x8xf32> to vector<16x8xbf16>
    %17 = vector.extract_strided_slice %9 {offsets = [0, 0], sizes = [16, 8], strides = [1, 1]} : vector<16x32xf32> to vector<16x8xf32>
    %18 = arith.truncf %17 : vector<16x8xf32> to vector<16x8xbf16>
    %19 = vector.extract_strided_slice %10 {offsets = [0, 0], sizes = [16, 8], strides = [1, 1]} : vector<16x32xf32> to vector<16x8xf32>
    %20 = arith.truncf %19 : vector<16x8xf32> to vector<16x8xbf16>
    "tpu.trace_start"() <{level = 10 : i32, message = "qd,kd->qk"}> : () -> ()
    %cst_10 = arith.constant dense<0.000000e+00> : vector<16x16xf32>
    %21 = tpu.matmul %16, %18, %cst_10 {dimension_numbers = #tpu.dot_dimension_numbers<[1], [1], [0], [0], [0, 0, 1, 0], [], []>} : vector<16x8xbf16>, vector<16x8xbf16>, vector<16x16xf32> -> vector<16x16xf32>
    "tpu.trace_stop"() : () -> ()
    %cst_11 = arith.constant dense<0xFF800000> : vector<16xf32>
    %22 = vector.multi_reduction <maximumf>, %21, %cst_11 [1] : vector<16x16xf32> to vector<16xf32>
    %23 = vector.shape_cast %22 : vector<16xf32> to vector<16x1xf32>
    %24 = vector.broadcast %23 : vector<16x1xf32> to vector<16x16xf32>
    %25 = arith.subf %21, %24 : vector<16x16xf32>
    %26 = math.exp %25 : vector<16x16xf32>
    %cst_12 = arith.constant dense<0.000000e+00> : vector<16xf32>
    %27 = vector.multi_reduction <add>, %26, %cst_12 [1] : vector<16x16xf32> to vector<16xf32>
    %28 = vector.shape_cast %27 : vector<16xf32> to vector<16x1xf32>
    %29 = tpu.reciprocal %28 {approx = true} : vector<16x1xf32> -> vector<16x1xf32>
    %30 = vector.broadcast %29 : vector<16x1xf32> to vector<16x16xf32>
    %31 = arith.mulf %26, %30 : vector<16x16xf32>
    %32 = arith.truncf %31 : vector<16x16xf32> to vector<16x16xbf16>
    %cst_13 = arith.constant dense<0.000000e+00> : vector<16x8xf32>
    %33 = tpu.matmul %32, %20, %cst_13 {dimension_numbers = #tpu.dot_dimension_numbers<[1], [0], [0], [1], [0, 0, 1, 1], [], []>} : vector<16x16xbf16>, vector<16x8xbf16>, vector<16x8xf32> -> vector<16x8xf32>
    %34 = arith.truncf %33 : vector<16x8xf32> to vector<16x8xbf16>
    %c0_14 = arith.constant 0 : index
    %c0_15 = arith.constant 0 : index
    %35 = vector.load %arg4[%c0_14, %c0_15] : memref<32x32xbf16, #tpu.memory_space<vmem>>, vector<8x32xbf16>
    %cst_16 = arith.constant dense<0.000000e+00> : vector<16x32xf32>
    %36 = tpu.matmul %34, %35, %cst_16 {dimension_numbers = #tpu.dot_dimension_numbers<[1], [0], [0], [1], [0, 0, 1, 1], [], []>} : vector<16x8xbf16>, vector<8x32xbf16>, vector<16x32xf32> -> vector<16x32xf32>
    %37 = arith.addf %12, %36 : vector<16x32xf32>
    %38 = vector.extract_strided_slice %8 {offsets = [0, 8], sizes = [16, 8], strides = [1, 1]} : vector<16x32xf32> to vector<16x8xf32>
    %cst_17 = arith.constant 0.353553385 : f32
    %39 = vector.broadcast %cst_17 : f32 to vector<16x8xf32>
    %40 = arith.mulf %38, %39 : vector<16x8xf32>
    %41 = arith.truncf %40 : vector<16x8xf32> to vector<16x8xbf16>
    %42 = vector.extract_strided_slice %9 {offsets = [0, 8], sizes = [16, 8], strides = [1, 1]} : vector<16x32xf32> to vector<16x8xf32>
    %43 = arith.truncf %42 : vector<16x8xf32> to vector<16x8xbf16>
    %44 = vector.extract_strided_slice %10 {offsets = [0, 8], sizes = [16, 8], strides = [1, 1]} : vector<16x32xf32> to vector<16x8xf32>
    %45 = arith.truncf %44 : vector<16x8xf32> to vector<16x8xbf16>
    "tpu.trace_start"() <{level = 10 : i32, message = "qd,kd->qk"}> : () -> ()
    %cst_18 = arith.constant dense<0.000000e+00> : vector<16x16xf32>
    %46 = tpu.matmul %41, %43, %cst_18 {dimension_numbers = #tpu.dot_dimension_numbers<[1], [1], [0], [0], [0, 0, 1, 0], [], []>} : vector<16x8xbf16>, vector<16x8xbf16>, vector<16x16xf32> -> vector<16x16xf32>
    "tpu.trace_stop"() : () -> ()
    %cst_19 = arith.constant dense<0xFF800000> : vector<16xf32>
    %47 = vector.multi_reduction <maximumf>, %46, %cst_19 [1] : vector<16x16xf32> to vector<16xf32>
    %48 = vector.shape_cast %47 : vector<16xf32> to vector<16x1xf32>
    %49 = vector.broadcast %48 : vector<16x1xf32> to vector<16x16xf32>
    %50 = arith.subf %46, %49 : vector<16x16xf32>
    %51 = math.exp %50 : vector<16x16xf32>
    %cst_20 = arith.constant dense<0.000000e+00> : vector<16xf32>
    %52 = vector.multi_reduction <add>, %51, %cst_20 [1] : vector<16x16xf32> to vector<16xf32>
    %53 = vector.shape_cast %52 : vector<16xf32> to vector<16x1xf32>
    %54 = tpu.reciprocal %53 {approx = true} : vector<16x1xf32> -> vector<16x1xf32>
    %55 = vector.broadcast %54 : vector<16x1xf32> to vector<16x16xf32>
    %56 = arith.mulf %51, %55 : vector<16x16xf32>
    %57 = arith.truncf %56 : vector<16x16xf32> to vector<16x16xbf16>
    %cst_21 = arith.constant dense<0.000000e+00> : vector<16x8xf32>
    %58 = tpu.matmul %57, %45, %cst_21 {dimension_numbers = #tpu.dot_dimension_numbers<[1], [0], [0], [1], [0, 0, 1, 1], [], []>} : vector<16x16xbf16>, vector<16x8xbf16>, vector<16x8xf32> -> vector<16x8xf32>
    %59 = arith.truncf %58 : vector<16x8xf32> to vector<16x8xbf16>
    %c8 = arith.constant 8 : index
    %c0_22 = arith.constant 0 : index
    %60 = vector.load %arg4[%c8, %c0_22] : memref<32x32xbf16, #tpu.memory_space<vmem>>, vector<8x32xbf16>
    %cst_23 = arith.constant dense<0.000000e+00> : vector<16x32xf32>
    %61 = tpu.matmul %59, %60, %cst_23 {dimension_numbers = #tpu.dot_dimension_numbers<[1], [0], [0], [1], [0, 0, 1, 1], [], []>} : vector<16x8xbf16>, vector<8x32xbf16>, vector<16x32xf32> -> vector<16x32xf32>
    %62 = arith.addf %37, %61 : vector<16x32xf32>
    %63 = vector.extract_strided_slice %8 {offsets = [0, 16], sizes = [16, 8], strides = [1, 1]} : vector<16x32xf32> to vector<16x8xf32>
    %cst_24 = arith.constant 0.353553385 : f32
    %64 = vector.broadcast %cst_24 : f32 to vector<16x8xf32>
    %65 = arith.mulf %63, %64 : vector<16x8xf32>
    %66 = arith.truncf %65 : vector<16x8xf32> to vector<16x8xbf16>
    %67 = vector.extract_strided_slice %9 {offsets = [0, 16], sizes = [16, 8], strides = [1, 1]} : vector<16x32xf32> to vector<16x8xf32>
    %68 = arith.truncf %67 : vector<16x8xf32> to vector<16x8xbf16>
    %69 = vector.extract_strided_slice %10 {offsets = [0, 16], sizes = [16, 8], strides = [1, 1]} : vector<16x32xf32> to vector<16x8xf32>
    %70 = arith.truncf %69 : vector<16x8xf32> to vector<16x8xbf16>
    "tpu.trace_start"() <{level = 10 : i32, message = "qd,kd->qk"}> : () -> ()
    %cst_25 = arith.constant dense<0.000000e+00> : vector<16x16xf32>
    %71 = tpu.matmul %66, %68, %cst_25 {dimension_numbers = #tpu.dot_dimension_numbers<[1], [1], [0], [0], [0, 0, 1, 0], [], []>} : vector<16x8xbf16>, vector<16x8xbf16>, vector<16x16xf32> -> vector<16x16xf32>
    "tpu.trace_stop"() : () -> ()
    %cst_26 = arith.constant dense<0xFF800000> : vector<16xf32>
    %72 = vector.multi_reduction <maximumf>, %71, %cst_26 [1] : vector<16x16xf32> to vector<16xf32>
    %73 = vector.shape_cast %72 : vector<16xf32> to vector<16x1xf32>
    %74 = vector.broadcast %73 : vector<16x1xf32> to vector<16x16xf32>
    %75 = arith.subf %71, %74 : vector<16x16xf32>
    %76 = math.exp %75 : vector<16x16xf32>
    %cst_27 = arith.constant dense<0.000000e+00> : vector<16xf32>
    %77 = vector.multi_reduction <add>, %76, %cst_27 [1] : vector<16x16xf32> to vector<16xf32>
    %78 = vector.shape_cast %77 : vector<16xf32> to vector<16x1xf32>
    %79 = tpu.reciprocal %78 {approx = true} : vector<16x1xf32> -> vector<16x1xf32>
    %80 = vector.broadcast %79 : vector<16x1xf32> to vector<16x16xf32>
    %81 = arith.mulf %76, %80 : vector<16x16xf32>
    %82 = arith.truncf %81 : vector<16x16xf32> to vector<16x16xbf16>
    %cst_28 = arith.constant dense<0.000000e+00> : vector<16x8xf32>
    %83 = tpu.matmul %82, %70, %cst_28 {dimension_numbers = #tpu.dot_dimension_numbers<[1], [0], [0], [1], [0, 0, 1, 1], [], []>} : vector<16x16xbf16>, vector<16x8xbf16>, vector<16x8xf32> -> vector<16x8xf32>
    %84 = arith.truncf %83 : vector<16x8xf32> to vector<16x8xbf16>
    %c16 = arith.constant 16 : index
    %c0_29 = arith.constant 0 : index
    %85 = vector.load %arg4[%c16, %c0_29] : memref<32x32xbf16, #tpu.memory_space<vmem>>, vector<8x32xbf16>
    %cst_30 = arith.constant dense<0.000000e+00> : vector<16x32xf32>
    %86 = tpu.matmul %84, %85, %cst_30 {dimension_numbers = #tpu.dot_dimension_numbers<[1], [0], [0], [1], [0, 0, 1, 1], [], []>} : vector<16x8xbf16>, vector<8x32xbf16>, vector<16x32xf32> -> vector<16x32xf32>
    %87 = arith.addf %62, %86 : vector<16x32xf32>
    %88 = vector.extract_strided_slice %8 {offsets = [0, 24], sizes = [16, 8], strides = [1, 1]} : vector<16x32xf32> to vector<16x8xf32>
    %cst_31 = arith.constant 0.353553385 : f32
    %89 = vector.broadcast %cst_31 : f32 to vector<16x8xf32>
    %90 = arith.mulf %88, %89 : vector<16x8xf32>
    %91 = arith.truncf %90 : vector<16x8xf32> to vector<16x8xbf16>
    %92 = vector.extract_strided_slice %9 {offsets = [0, 24], sizes = [16, 8], strides = [1, 1]} : vector<16x32xf32> to vector<16x8xf32>
    %93 = arith.truncf %92 : vector<16x8xf32> to vector<16x8xbf16>
    %94 = vector.extract_strided_slice %10 {offsets = [0, 24], sizes = [16, 8], strides = [1, 1]} : vector<16x32xf32> to vector<16x8xf32>
    %95 = arith.truncf %94 : vector<16x8xf32> to vector<16x8xbf16>
    "tpu.trace_start"() <{level = 10 : i32, message = "qd,kd->qk"}> : () -> ()
    %cst_32 = arith.constant dense<0.000000e+00> : vector<16x16xf32>
    %96 = tpu.matmul %91, %93, %cst_32 {dimension_numbers = #tpu.dot_dimension_numbers<[1], [1], [0], [0], [0, 0, 1, 0], [], []>} : vector<16x8xbf16>, vector<16x8xbf16>, vector<16x16xf32> -> vector<16x16xf32>
    "tpu.trace_stop"() : () -> ()
    %cst_33 = arith.constant dense<0xFF800000> : vector<16xf32>
    %97 = vector.multi_reduction <maximumf>, %96, %cst_33 [1] : vector<16x16xf32> to vector<16xf32>
    %98 = vector.shape_cast %97 : vector<16xf32> to vector<16x1xf32>
    %99 = vector.broadcast %98 : vector<16x1xf32> to vector<16x16xf32>
    %100 = arith.subf %96, %99 : vector<16x16xf32>
    %101 = math.exp %100 : vector<16x16xf32>
    %cst_34 = arith.constant dense<0.000000e+00> : vector<16xf32>
    %102 = vector.multi_reduction <add>, %101, %cst_34 [1] : vector<16x16xf32> to vector<16xf32>
    %103 = vector.shape_cast %102 : vector<16xf32> to vector<16x1xf32>
    %104 = tpu.reciprocal %103 {approx = true} : vector<16x1xf32> -> vector<16x1xf32>
    %105 = vector.broadcast %104 : vector<16x1xf32> to vector<16x16xf32>
    %106 = arith.mulf %101, %105 : vector<16x16xf32>
    %107 = arith.truncf %106 : vector<16x16xf32> to vector<16x16xbf16>
    %cst_35 = arith.constant dense<0.000000e+00> : vector<16x8xf32>
    %108 = tpu.matmul %107, %95, %cst_35 {dimension_numbers = #tpu.dot_dimension_numbers<[1], [0], [0], [1], [0, 0, 1, 1], [], []>} : vector<16x16xbf16>, vector<16x8xbf16>, vector<16x8xf32> -> vector<16x8xf32>
    %109 = arith.truncf %108 : vector<16x8xf32> to vector<16x8xbf16>
    %c24 = arith.constant 24 : index
    %c0_36 = arith.constant 0 : index
    %110 = vector.load %arg4[%c24, %c0_36] : memref<32x32xbf16, #tpu.memory_space<vmem>>, vector<8x32xbf16>
    %cst_37 = arith.constant dense<0.000000e+00> : vector<16x32xf32>
    %111 = tpu.matmul %109, %110, %cst_37 {dimension_numbers = #tpu.dot_dimension_numbers<[1], [0], [0], [1], [0, 0, 1, 1], [], []>} : vector<16x8xbf16>, vector<8x32xbf16>, vector<16x32xf32> -> vector<16x32xf32>
    %112 = arith.addf %87, %111 : vector<16x32xf32>
    %113 = vector.broadcast %11 : vector<1x32xf32> to vector<16x32xf32>
    %114 = arith.addf %112, %113 : vector<16x32xf32>
    %115 = arith.addf %1, %114 : vector<16x32xf32>
    %c0_38 = arith.constant 0 : index
    %c0_39 = arith.constant 0 : index
    %116 = vector.load %arg6[%c0_38, %c0_39] : memref<1x32xf32, #tpu.memory_space<vmem>>, vector<1x32xf32>
    %c0_40 = arith.constant 0 : index
    %c0_41 = arith.constant 0 : index
    %117 = vector.load %arg7[%c0_40, %c0_41] : memref<1x32xf32, #tpu.memory_space<vmem>>, vector<1x32xf32>
    %cst_42 = arith.constant dense<0.000000e+00> : vector<16xf32>
    %118 = vector.multi_reduction <add>, %115, %cst_42 [1] : vector<16x32xf32> to vector<16xf32>
    %119 = vector.shape_cast %118 : vector<16xf32> to vector<16x1xf32>
    %cst_43 = arith.constant 3.200000e+01 : f32
    %120 = vector.broadcast %cst_43 : f32 to vector<16x1xf32>
    %121 = arith.divf %119, %120 : vector<16x1xf32>
    %122 = vector.broadcast %121 : vector<16x1xf32> to vector<16x32xf32>
    %123 = arith.subf %115, %122 : vector<16x32xf32>
    %124 = arith.mulf %123, %123 : vector<16x32xf32>
    %cst_44 = arith.constant dense<0.000000e+00> : vector<16xf32>
    %125 = vector.multi_reduction <add>, %124, %cst_44 [1] : vector<16x32xf32> to vector<16xf32>
    %126 = vector.shape_cast %125 : vector<16xf32> to vector<16x1xf32>
    %cst_45 = arith.constant 3.200000e+01 : f32
    %127 = vector.broadcast %cst_45 : f32 to vector<16x1xf32>
    %128 = arith.divf %126, %127 : vector<16x1xf32>
    %cst_46 = arith.constant 9.99999974E-6 : f32
    %129 = vector.broadcast %cst_46 : f32 to vector<16x1xf32>
    %130 = arith.addf %128, %129 : vector<16x1xf32>
    %131 = math.rsqrt %130 : vector<16x1xf32>
    %132 = vector.broadcast %131 : vector<16x1xf32> to vector<16x32xf32>
    %133 = arith.mulf %123, %132 : vector<16x32xf32>
    %134 = vector.broadcast %116 : vector<1x32xf32> to vector<16x32xf32>
    %135 = arith.mulf %133, %134 : vector<16x32xf32>
    %136 = vector.broadcast %117 : vector<1x32xf32> to vector<16x32xf32>
    %137 = arith.addf %135, %136 : vector<16x32xf32>
    %138 = arith.truncf %137 : vector<16x32xf32> to vector<16x32xbf16>
    %c0_47 = arith.constant 0 : index
    %c0_48 = arith.constant 0 : index
    %139 = vector.load %arg8[%c0_47, %c0_48] : memref<32x128xbf16, #tpu.memory_space<vmem>>, vector<32x128xbf16>
    %cst_49 = arith.constant dense<0.000000e+00> : vector<16x128xf32>
    %140 = tpu.matmul %138, %139, %cst_49 {dimension_numbers = #tpu.dot_dimension_numbers<[1], [0], [0], [1], [0, 0, 1, 1], [], []>} : vector<16x32xbf16>, vector<32x128xbf16>, vector<16x128xf32> -> vector<16x128xf32>
    %c0_50 = arith.constant 0 : index
    %c0_51 = arith.constant 0 : index
    %141 = vector.load %arg9[%c0_50, %c0_51] : memref<1x128xf32, #tpu.memory_space<vmem>>, vector<1x128xf32>
    %142 = vector.broadcast %141 : vector<1x128xf32> to vector<16x128xf32>
    %143 = arith.addf %140, %142 : vector<16x128xf32>
    %cst_52 = arith.constant 0.000000e+00 : f32
    %144 = vector.broadcast %cst_52 : f32 to vector<16x128xf32>
    %145 = arith.maximumf %143, %144 : vector<16x128xf32>
    %146 = arith.truncf %145 : vector<16x128xf32> to vector<16x128xbf16>
    %c0_53 = arith.constant 0 : index
    %c0_54 = arith.constant 0 : index
    %147 = vector.load %arg10[%c0_53, %c0_54] : memref<128x32xbf16, #tpu.memory_space<vmem>>, vector<128x32xbf16>
    %cst_55 = arith.constant dense<0.000000e+00> : vector<16x32xf32>
    %148 = tpu.matmul %146, %147, %cst_55 {dimension_numbers = #tpu.dot_dimension_numbers<[1], [0], [0], [1], [0, 0, 1, 1], [], []>} : vector<16x128xbf16>, vector<128x32xbf16>, vector<16x32xf32> -> vector<16x32xf32>
    %c0_56 = arith.constant 0 : index
    %c0_57 = arith.constant 0 : index
    %149 = vector.load %arg11[%c0_56, %c0_57] : memref<1x32xf32, #tpu.memory_space<vmem>>, vector<1x32xf32>
    %150 = vector.broadcast %149 : vector<1x32xf32> to vector<16x32xf32>
    %151 = arith.addf %148, %150 : vector<16x32xf32>
    %152 = arith.addf %137, %151 : vector<16x32xf32>
    %c0_58 = arith.constant 0 : index
    %c0_59 = arith.constant 0 : index
    %153 = vector.load %arg12[%c0_58, %c0_59] : memref<1x32xf32, #tpu.memory_space<vmem>>, vector<1x32xf32>
    %c0_60 = arith.constant 0 : index
    %c0_61 = arith.constant 0 : index
    %154 = vector.load %arg13[%c0_60, %c0_61] : memref<1x32xf32, #tpu.memory_space<vmem>>, vector<1x32xf32>
    %cst_62 = arith.constant dense<0.000000e+00> : vector<16xf32>
    %155 = vector.multi_reduction <add>, %152, %cst_62 [1] : vector<16x32xf32> to vector<16xf32>
    %156 = vector.shape_cast %155 : vector<16xf32> to vector<16x1xf32>
    %cst_63 = arith.constant 3.200000e+01 : f32
    %157 = vector.broadcast %cst_63 : f32 to vector<16x1xf32>
    %158 = arith.divf %156, %157 : vector<16x1xf32>
    %159 = vector.broadcast %158 : vector<16x1xf32> to vector<16x32xf32>
    %160 = arith.subf %152, %159 : vector<16x32xf32>
    %161 = arith.mulf %160, %160 : vector<16x32xf32>
    %cst_64 = arith.constant dense<0.000000e+00> : vector<16xf32>
    %162 = vector.multi_reduction <add>, %161, %cst_64 [1] : vector<16x32xf32> to vector<16xf32>
    %163 = vector.shape_cast %162 : vector<16xf32> to vector<16x1xf32>
    %cst_65 = arith.constant 3.200000e+01 : f32
    %164 = vector.broadcast %cst_65 : f32 to vector<16x1xf32>
    %165 = arith.divf %163, %164 : vector<16x1xf32>
    %cst_66 = arith.constant 9.99999974E-6 : f32
    %166 = vector.broadcast %cst_66 : f32 to vector<16x1xf32>
    %167 = arith.addf %165, %166 : vector<16x1xf32>
    %168 = math.rsqrt %167 : vector<16x1xf32>
    %169 = vector.broadcast %168 : vector<16x1xf32> to vector<16x32xf32>
    %170 = arith.mulf %160, %169 : vector<16x32xf32>
    %171 = vector.broadcast %153 : vector<1x32xf32> to vector<16x32xf32>
    %172 = arith.mulf %170, %171 : vector<16x32xf32>
    %173 = vector.broadcast %154 : vector<1x32xf32> to vector<16x32xf32>
    %174 = arith.addf %172, %173 : vector<16x32xf32>
    %c0_67 = arith.constant 0 : index
    %c0_68 = arith.constant 0 : index
    %c0_69 = arith.constant 0 : index
    %175 = vector.load %arg14[%c0_67, %c0_68, %c0_69] : memref<1x16x32xf32, #tpu.memory_space<vmem>>, vector<1x16x32xf32>
    %176 = vector.shape_cast %175 : vector<1x16x32xf32> to vector<16x32xf32>
    %177 = vector.shape_cast %174 : vector<16x32xf32> to vector<1x16x32xf32>
    tpu.vector_store %arg14[%c0_67, %c0_68, %c0_69], %177 {strides = array<i32>} : memref<1x16x32xf32, #tpu.memory_space<vmem>>, vector<1x16x32xf32>,
    return
  }
  func.func @transform_0(%arg0: i32) -> (i32, i32, i32) {
    %c0_i32 = arith.constant 0 : i32
    %c0_i32_0 = arith.constant 0 : i32
    %c0_i32_1 = arith.constant 0 : i32
    return %arg0, %c0_i32, %c0_i32_0 : i32, i32, i32
  }
  func.func @transform_1(%arg0: i32) -> (i32, i32) {
    %c0_i32 = arith.constant 0 : i32
    %c0_i32_0 = arith.constant 0 : i32
    %c0_i32_1 = arith.constant 0 : i32
    return %c0_i32, %c0_i32_0 : i32, i32
  }
  func.func @transform_2(%arg0: i32) -> (i32, i32) {
    %c0_i32 = arith.constant 0 : i32
    %c0_i32_0 = arith.constant 0 : i32
    %c0_i32_1 = arith.constant 0 : i32
    return %c0_i32, %c0_i32_0 : i32, i32
  }
  func.func @transform_3(%arg0: i32) -> (i32, i32) {
    %c0_i32 = arith.constant 0 : i32
    %c0_i32_0 = arith.constant 0 : i32
    %c0_i32_1 = arith.constant 0 : i32
    return %c0_i32, %c0_i32_0 : i32, i32
  }
  func.func @transform_4(%arg0: i32) -> (i32, i32) {
    %c0_i32 = arith.constant 0 : i32
    %c0_i32_0 = arith.constant 0 : i32
    %c0_i32_1 = arith.constant 0 : i32
    return %c0_i32, %c0_i32_0 : i32, i32
  }
  func.func @transform_5(%arg0: i32) -> (i32, i32) {
    %c0_i32 = arith.constant 0 : i32
    %c0_i32_0 = arith.constant 0 : i32
    %c0_i32_1 = arith.constant 0 : i32
    return %c0_i32, %c0_i32_0 : i32, i32
  }
  func.func @transform_6(%arg0: i32) -> (i32, i32) {
    %c0_i32 = arith.constant 0 : i32
    %c0_i32_0 = arith.constant 0 : i32
    %c0_i32_1 = arith.constant 0 : i32
    return %c0_i32, %c0_i32_0 : i32, i32
  }
  func.func @transform_7(%arg0: i32) -> (i32, i32) {
    %c0_i32 = arith.constant 0 : i32
    %c0_i32_0 = arith.constant 0 : i32
    %c0_i32_1 = arith.constant 0 : i32
    return %c0_i32, %c0_i32_0 : i32, i32
  }
  func.func @transform_8(%arg0: i32) -> (i32, i32) {
    %c0_i32 = arith.constant 0 : i32
    %c0_i32_0 = arith.constant 0 : i32
    %c0_i32_1 = arith.constant 0 : i32
    return %c0_i32, %c0_i32_0 : i32, i32
  }
  func.func @transform_9(%arg0: i32) -> (i32, i32) {
    %c0_i32 = arith.constant 0 : i32
    %c0_i32_0 = arith.constant 0 : i32
    %c0_i32_1 = arith.constant 0 : i32
    return %c0_i32, %c0_i32_0 : i32, i32
  }
  func.func @transform_10(%arg0: i32) -> (i32, i32) {
    %c0_i32 = arith.constant 0 : i32
    %c0_i32_0 = arith.constant 0 : i32
    %c0_i32_1 = arith.constant 0 : i32
    return %c0_i32, %c0_i32_0 : i32, i32
  }
  func.func @transform_11(%arg0: i32) -> (i32, i32) {
    %c0_i32 = arith.constant 0 : i32
    %c0_i32_0 = arith.constant 0 : i32
    %c0_i32_1 = arith.constant 0 : i32
    return %c0_i32, %c0_i32_0 : i32, i32
  }
  func.func @transform_12(%arg0: i32) -> (i32, i32) {
    %c0_i32 = arith.constant 0 : i32
    %c0_i32_0 = arith.constant 0 : i32
    %c0_i32_1 = arith.constant 0 : i32
    return %c0_i32, %c0_i32_0 : i32, i32
  }
  func.func @transform_13(%arg0: i32) -> (i32, i32, i32) {
    %c0_i32 = arith.constant 0 : i32
    %c0_i32_0 = arith.constant 0 : i32
    %c0_i32_1 = arith.constant 0 : i32
    return %arg0, %c0_i32, %c0_i32_0 : i32, i32, i32
  }
}

module attributes {stable_mosaic.version = 11 : i64} {
  func.func @_dec_block_kernel(%arg0: i32, %arg1: memref<1x8x32xf32, #tpu.memory_space<vmem>>, %arg2: memref<1x8x8xf32, #tpu.memory_space<vmem>>, %arg3: memref<1x16x32xf32, #tpu.memory_space<vmem>>, %arg4: memref<32x96xbf16, #tpu.memory_space<vmem>>, %arg5: memref<1x96xf32, #tpu.memory_space<vmem>>, %arg6: memref<32x32xbf16, #tpu.memory_space<vmem>>, %arg7: memref<1x32xf32, #tpu.memory_space<vmem>>, %arg8: memref<1x32xf32, #tpu.memory_space<vmem>>, %arg9: memref<1x32xf32, #tpu.memory_space<vmem>>, %arg10: memref<32x32xbf16, #tpu.memory_space<vmem>>, %arg11: memref<1x32xf32, #tpu.memory_space<vmem>>, %arg12: memref<32x64xbf16, #tpu.memory_space<vmem>>, %arg13: memref<1x64xf32, #tpu.memory_space<vmem>>, %arg14: memref<32x32xbf16, #tpu.memory_space<vmem>>, %arg15: memref<1x32xf32, #tpu.memory_space<vmem>>, %arg16: memref<1x32xf32, #tpu.memory_space<vmem>>, %arg17: memref<1x32xf32, #tpu.memory_space<vmem>>, %arg18: memref<32x128xbf16, #tpu.memory_space<vmem>>, %arg19: memref<1x128xf32, #tpu.memory_space<vmem>>, %arg20: memref<128x32xbf16, #tpu.memory_space<vmem>>, %arg21: memref<1x32xf32, #tpu.memory_space<vmem>>, %arg22: memref<1x32xf32, #tpu.memory_space<vmem>>, %arg23: memref<1x32xf32, #tpu.memory_space<vmem>>, %arg24: memref<1x8x32xf32, #tpu.memory_space<vmem>>) attributes {dimension_semantics = [#tpu.dimension_semantics<parallel>], iteration_bounds = array<i64: 2>, scalar_prefetch = 0 : i64, scratch_operands = 0 : i64, tpu.core_type = #tpu.core_type<tc>, window_params = [{transform_indices = @transform_0, window_bounds = array<i64: 1, 8, 32>}, {transform_indices = @transform_1, window_bounds = array<i64: 1, 8, 8>}, {transform_indices = @transform_2, window_bounds = array<i64: 1, 16, 32>}, {pipeline_mode = #tpu.pipeline_mode<synchronous>, transform_indices = @transform_3, window_bounds = array<i64: 32, 96>}, {pipeline_mode = #tpu.pipeline_mode<synchronous>, transform_indices = @transform_4, window_bounds = array<i64: 1, 96>}, {pipeline_mode = #tpu.pipeline_mode<synchronous>, transform_indices = @transform_5, window_bounds = array<i64: 32, 32>}, {pipeline_mode = #tpu.pipeline_mode<synchronous>, transform_indices = @transform_6, window_bounds = array<i64: 1, 32>}, {pipeline_mode = #tpu.pipeline_mode<synchronous>, transform_indices = @transform_7, window_bounds = array<i64: 1, 32>}, {pipeline_mode = #tpu.pipeline_mode<synchronous>, transform_indices = @transform_8, window_bounds = array<i64: 1, 32>}, {pipeline_mode = #tpu.pipeline_mode<synchronous>, transform_indices = @transform_9, window_bounds = array<i64: 32, 32>}, {pipeline_mode = #tpu.pipeline_mode<synchronous>, transform_indices = @transform_10, window_bounds = array<i64: 1, 32>}, {pipeline_mode = #tpu.pipeline_mode<synchronous>, transform_indices = @transform_11, window_bounds = array<i64: 32, 64>}, {pipeline_mode = #tpu.pipeline_mode<synchronous>, transform_indices = @transform_12, window_bounds = array<i64: 1, 64>}, {pipeline_mode = #tpu.pipeline_mode<synchronous>, transform_indices = @transform_13, window_bounds = array<i64: 32, 32>}, {pipeline_mode = #tpu.pipeline_mode<synchronous>, transform_indices = @transform_14, window_bounds = array<i64: 1, 32>}, {pipeline_mode = #tpu.pipeline_mode<synchronous>, transform_indices = @transform_15, window_bounds = array<i64: 1, 32>}, {pipeline_mode = #tpu.pipeline_mode<synchronous>, transform_indices = @transform_16, window_bounds = array<i64: 1, 32>}, {pipeline_mode = #tpu.pipeline_mode<synchronous>, transform_indices = @transform_17, window_bounds = array<i64: 32, 128>}, {pipeline_mode = #tpu.pipeline_mode<synchronous>, transform_indices = @transform_18, window_bounds = array<i64: 1, 128>}, {pipeline_mode = #tpu.pipeline_mode<synchronous>, transform_indices = @transform_19, window_bounds = array<i64: 128, 32>}, {pipeline_mode = #tpu.pipeline_mode<synchronous>, transform_indices = @transform_20, window_bounds = array<i64: 1, 32>}, {pipeline_mode = #tpu.pipeline_mode<synchronous>, transform_indices = @transform_21, window_bounds = array<i64: 1, 32>}, {pipeline_mode = #tpu.pipeline_mode<synchronous>, transform_indices = @transform_22, window_bounds = array<i64: 1, 32>}, {transform_indices = @transform_23, window_bounds = array<i64: 1, 8, 32>}]} {
    %c0 = arith.constant 0 : index
    %c0_0 = arith.constant 0 : index
    %c0_1 = arith.constant 0 : index
    %0 = vector.load %arg1[%c0, %c0_0, %c0_1] : memref<1x8x32xf32, #tpu.memory_space<vmem>>, vector<1x8x32xf32>
    %1 = vector.shape_cast %0 : vector<1x8x32xf32> to vector<8x32xf32>
    %c0_2 = arith.constant 0 : index
    %c0_3 = arith.constant 0 : index
    %c0_4 = arith.constant 0 : index
    %2 = vector.load %arg2[%c0_2, %c0_3, %c0_4] : memref<1x8x8xf32, #tpu.memory_space<vmem>>, vector<1x8x8xf32>
    %3 = vector.shape_cast %2 : vector<1x8x8xf32> to vector<8x8xf32>
    %4 = arith.truncf %1 : vector<8x32xf32> to vector<8x32xbf16>
    %c0_5 = arith.constant 0 : index
    %c0_6 = arith.constant 0 : index
    %5 = vector.load %arg4[%c0_5, %c0_6] : memref<32x96xbf16, #tpu.memory_space<vmem>>, vector<32x96xbf16>
    %cst = arith.constant dense<0.000000e+00> : vector<8x96xf32>
    %6 = tpu.matmul %4, %5, %cst {dimension_numbers = #tpu.dot_dimension_numbers<[1], [0], [0], [1], [0, 0, 1, 1], [], []>} : vector<8x32xbf16>, vector<32x96xbf16>, vector<8x96xf32> -> vector<8x96xf32>
    %c0_7 = arith.constant 0 : index
    %c0_8 = arith.constant 0 : index
    %7 = vector.load %arg5[%c0_7, %c0_8] : memref<1x96xf32, #tpu.memory_space<vmem>>, vector<1x96xf32>
    %8 = vector.broadcast %7 : vector<1x96xf32> to vector<8x96xf32>
    %9 = arith.addf %6, %8 : vector<8x96xf32>
    %10 = vector.extract_strided_slice %9 {offsets = [0, 0], sizes = [8, 32], strides = [1, 1]} : vector<8x96xf32> to vector<8x32xf32>
    %11 = vector.extract_strided_slice %9 {offsets = [0, 32], sizes = [8, 32], strides = [1, 1]} : vector<8x96xf32> to vector<8x32xf32>
    %12 = vector.extract_strided_slice %9 {offsets = [0, 64], sizes = [8, 32], strides = [1, 1]} : vector<8x96xf32> to vector<8x32xf32>
    %c0_9 = arith.constant 0 : index
    %c0_10 = arith.constant 0 : index
    %13 = vector.load %arg7[%c0_9, %c0_10] : memref<1x32xf32, #tpu.memory_space<vmem>>, vector<1x32xf32>
    %cst_11 = arith.constant 0.000000e+00 : f32
    %14 = vector.broadcast %cst_11 : f32 to vector<8x32xf32>
    %15 = vector.extract_strided_slice %10 {offsets = [0, 0], sizes = [8, 8], strides = [1, 1]} : vector<8x32xf32> to vector<8x8xf32>
    %cst_12 = arith.constant 0.353553385 : f32
    %16 = vector.broadcast %cst_12 : f32 to vector<8x8xf32>
    %17 = arith.mulf %15, %16 : vector<8x8xf32>
    %18 = arith.truncf %17 : vector<8x8xf32> to vector<8x8xbf16>
    %19 = vector.extract_strided_slice %11 {offsets = [0, 0], sizes = [8, 8], strides = [1, 1]} : vector<8x32xf32> to vector<8x8xf32>
    %20 = arith.truncf %19 : vector<8x8xf32> to vector<8x8xbf16>
    %21 = vector.extract_strided_slice %12 {offsets = [0, 0], sizes = [8, 8], strides = [1, 1]} : vector<8x32xf32> to vector<8x8xf32>
    %22 = arith.truncf %21 : vector<8x8xf32> to vector<8x8xbf16>
    "tpu.trace_start"() <{level = 10 : i32, message = "qd,kd->qk"}> : () -> ()
    %cst_13 = arith.constant dense<0.000000e+00> : vector<8x8xf32>
    %23 = tpu.matmul %18, %20, %cst_13 {dimension_numbers = #tpu.dot_dimension_numbers<[1], [1], [0], [0], [0, 0, 1, 0], [], []>} : vector<8x8xbf16>, vector<8x8xbf16>, vector<8x8xf32> -> vector<8x8xf32>
    "tpu.trace_stop"() : () -> ()
    %24 = arith.addf %23, %3 : vector<8x8xf32>
    %cst_14 = arith.constant dense<0xFF800000> : vector<8xf32>
    %25 = vector.multi_reduction <maximumf>, %24, %cst_14 [1] : vector<8x8xf32> to vector<8xf32>
    %26 = vector.shape_cast %25 : vector<8xf32> to vector<8x1xf32>
    %27 = vector.broadcast %26 : vector<8x1xf32> to vector<8x8xf32>
    %28 = arith.subf %24, %27 : vector<8x8xf32>
    %29 = math.exp %28 : vector<8x8xf32>
    %cst_15 = arith.constant dense<0.000000e+00> : vector<8xf32>
    %30 = vector.multi_reduction <add>, %29, %cst_15 [1] : vector<8x8xf32> to vector<8xf32>
    %31 = vector.shape_cast %30 : vector<8xf32> to vector<8x1xf32>
    %32 = tpu.reciprocal %31 {approx = true} : vector<8x1xf32> -> vector<8x1xf32>
    %33 = vector.broadcast %32 : vector<8x1xf32> to vector<8x8xf32>
    %34 = arith.mulf %29, %33 : vector<8x8xf32>
    %35 = arith.truncf %34 : vector<8x8xf32> to vector<8x8xbf16>
    %cst_16 = arith.constant dense<0.000000e+00> : vector<8x8xf32>
    %36 = tpu.matmul %35, %22, %cst_16 {dimension_numbers = #tpu.dot_dimension_numbers<[1], [0], [0], [1], [0, 0, 1, 1], [], []>} : vector<8x8xbf16>, vector<8x8xbf16>, vector<8x8xf32> -> vector<8x8xf32>
    %37 = arith.truncf %36 : vector<8x8xf32> to vector<8x8xbf16>
    %c0_17 = arith.constant 0 : index
    %c0_18 = arith.constant 0 : index
    %38 = vector.load %arg6[%c0_17, %c0_18] : memref<32x32xbf16, #tpu.memory_space<vmem>>, vector<8x32xbf16>
    %cst_19 = arith.constant dense<0.000000e+00> : vector<8x32xf32>
    %39 = tpu.matmul %37, %38, %cst_19 {dimension_numbers = #tpu.dot_dimension_numbers<[1], [0], [0], [1], [0, 0, 1, 1], [], []>} : vector<8x8xbf16>, vector<8x32xbf16>, vector<8x32xf32> -> vector<8x32xf32>
    %40 = arith.addf %14, %39 : vector<8x32xf32>
    %41 = vector.extract_strided_slice %10 {offsets = [0, 8], sizes = [8, 8], strides = [1, 1]} : vector<8x32xf32> to vector<8x8xf32>
    %cst_20 = arith.constant 0.353553385 : f32
    %42 = vector.broadcast %cst_20 : f32 to vector<8x8xf32>
    %43 = arith.mulf %41, %42 : vector<8x8xf32>
    %44 = arith.truncf %43 : vector<8x8xf32> to vector<8x8xbf16>
    %45 = vector.extract_strided_slice %11 {offsets = [0, 8], sizes = [8, 8], strides = [1, 1]} : vector<8x32xf32> to vector<8x8xf32>
    %46 = arith.truncf %45 : vector<8x8xf32> to vector<8x8xbf16>
    %47 = vector.extract_strided_slice %12 {offsets = [0, 8], sizes = [8, 8], strides = [1, 1]} : vector<8x32xf32> to vector<8x8xf32>
    %48 = arith.truncf %47 : vector<8x8xf32> to vector<8x8xbf16>
    "tpu.trace_start"() <{level = 10 : i32, message = "qd,kd->qk"}> : () -> ()
    %cst_21 = arith.constant dense<0.000000e+00> : vector<8x8xf32>
    %49 = tpu.matmul %44, %46, %cst_21 {dimension_numbers = #tpu.dot_dimension_numbers<[1], [1], [0], [0], [0, 0, 1, 0], [], []>} : vector<8x8xbf16>, vector<8x8xbf16>, vector<8x8xf32> -> vector<8x8xf32>
    "tpu.trace_stop"() : () -> ()
    %50 = arith.addf %49, %3 : vector<8x8xf32>
    %cst_22 = arith.constant dense<0xFF800000> : vector<8xf32>
    %51 = vector.multi_reduction <maximumf>, %50, %cst_22 [1] : vector<8x8xf32> to vector<8xf32>
    %52 = vector.shape_cast %51 : vector<8xf32> to vector<8x1xf32>
    %53 = vector.broadcast %52 : vector<8x1xf32> to vector<8x8xf32>
    %54 = arith.subf %50, %53 : vector<8x8xf32>
    %55 = math.exp %54 : vector<8x8xf32>
    %cst_23 = arith.constant dense<0.000000e+00> : vector<8xf32>
    %56 = vector.multi_reduction <add>, %55, %cst_23 [1] : vector<8x8xf32> to vector<8xf32>
    %57 = vector.shape_cast %56 : vector<8xf32> to vector<8x1xf32>
    %58 = tpu.reciprocal %57 {approx = true} : vector<8x1xf32> -> vector<8x1xf32>
    %59 = vector.broadcast %58 : vector<8x1xf32> to vector<8x8xf32>
    %60 = arith.mulf %55, %59 : vector<8x8xf32>
    %61 = arith.truncf %60 : vector<8x8xf32> to vector<8x8xbf16>
    %cst_24 = arith.constant dense<0.000000e+00> : vector<8x8xf32>
    %62 = tpu.matmul %61, %48, %cst_24 {dimension_numbers = #tpu.dot_dimension_numbers<[1], [0], [0], [1], [0, 0, 1, 1], [], []>} : vector<8x8xbf16>, vector<8x8xbf16>, vector<8x8xf32> -> vector<8x8xf32>
    %63 = arith.truncf %62 : vector<8x8xf32> to vector<8x8xbf16>
    %c8 = arith.constant 8 : index
    %c0_25 = arith.constant 0 : index
    %64 = vector.load %arg6[%c8, %c0_25] : memref<32x32xbf16, #tpu.memory_space<vmem>>, vector<8x32xbf16>
    %cst_26 = arith.constant dense<0.000000e+00> : vector<8x32xf32>
    %65 = tpu.matmul %63, %64, %cst_26 {dimension_numbers = #tpu.dot_dimension_numbers<[1], [0], [0], [1], [0, 0, 1, 1], [], []>} : vector<8x8xbf16>, vector<8x32xbf16>, vector<8x32xf32> -> vector<8x32xf32>
    %66 = arith.addf %40, %65 : vector<8x32xf32>
    %67 = vector.extract_strided_slice %10 {offsets = [0, 16], sizes = [8, 8], strides = [1, 1]} : vector<8x32xf32> to vector<8x8xf32>
    %cst_27 = arith.constant 0.353553385 : f32
    %68 = vector.broadcast %cst_27 : f32 to vector<8x8xf32>
    %69 = arith.mulf %67, %68 : vector<8x8xf32>
    %70 = arith.truncf %69 : vector<8x8xf32> to vector<8x8xbf16>
    %71 = vector.extract_strided_slice %11 {offsets = [0, 16], sizes = [8, 8], strides = [1, 1]} : vector<8x32xf32> to vector<8x8xf32>
    %72 = arith.truncf %71 : vector<8x8xf32> to vector<8x8xbf16>
    %73 = vector.extract_strided_slice %12 {offsets = [0, 16], sizes = [8, 8], strides = [1, 1]} : vector<8x32xf32> to vector<8x8xf32>
    %74 = arith.truncf %73 : vector<8x8xf32> to vector<8x8xbf16>
    "tpu.trace_start"() <{level = 10 : i32, message = "qd,kd->qk"}> : () -> ()
    %cst_28 = arith.constant dense<0.000000e+00> : vector<8x8xf32>
    %75 = tpu.matmul %70, %72, %cst_28 {dimension_numbers = #tpu.dot_dimension_numbers<[1], [1], [0], [0], [0, 0, 1, 0], [], []>} : vector<8x8xbf16>, vector<8x8xbf16>, vector<8x8xf32> -> vector<8x8xf32>
    "tpu.trace_stop"() : () -> ()
    %76 = arith.addf %75, %3 : vector<8x8xf32>
    %cst_29 = arith.constant dense<0xFF800000> : vector<8xf32>
    %77 = vector.multi_reduction <maximumf>, %76, %cst_29 [1] : vector<8x8xf32> to vector<8xf32>
    %78 = vector.shape_cast %77 : vector<8xf32> to vector<8x1xf32>
    %79 = vector.broadcast %78 : vector<8x1xf32> to vector<8x8xf32>
    %80 = arith.subf %76, %79 : vector<8x8xf32>
    %81 = math.exp %80 : vector<8x8xf32>
    %cst_30 = arith.constant dense<0.000000e+00> : vector<8xf32>
    %82 = vector.multi_reduction <add>, %81, %cst_30 [1] : vector<8x8xf32> to vector<8xf32>
    %83 = vector.shape_cast %82 : vector<8xf32> to vector<8x1xf32>
    %84 = tpu.reciprocal %83 {approx = true} : vector<8x1xf32> -> vector<8x1xf32>
    %85 = vector.broadcast %84 : vector<8x1xf32> to vector<8x8xf32>
    %86 = arith.mulf %81, %85 : vector<8x8xf32>
    %87 = arith.truncf %86 : vector<8x8xf32> to vector<8x8xbf16>
    %cst_31 = arith.constant dense<0.000000e+00> : vector<8x8xf32>
    %88 = tpu.matmul %87, %74, %cst_31 {dimension_numbers = #tpu.dot_dimension_numbers<[1], [0], [0], [1], [0, 0, 1, 1], [], []>} : vector<8x8xbf16>, vector<8x8xbf16>, vector<8x8xf32> -> vector<8x8xf32>
    %89 = arith.truncf %88 : vector<8x8xf32> to vector<8x8xbf16>
    %c16 = arith.constant 16 : index
    %c0_32 = arith.constant 0 : index
    %90 = vector.load %arg6[%c16, %c0_32] : memref<32x32xbf16, #tpu.memory_space<vmem>>, vector<8x32xbf16>
    %cst_33 = arith.constant dense<0.000000e+00> : vector<8x32xf32>
    %91 = tpu.matmul %89, %90, %cst_33 {dimension_numbers = #tpu.dot_dimension_numbers<[1], [0], [0], [1], [0, 0, 1, 1], [], []>} : vector<8x8xbf16>, vector<8x32xbf16>, vector<8x32xf32> -> vector<8x32xf32>
    %92 = arith.addf %66, %91 : vector<8x32xf32>
    %93 = vector.extract_strided_slice %10 {offsets = [0, 24], sizes = [8, 8], strides = [1, 1]} : vector<8x32xf32> to vector<8x8xf32>
    %cst_34 = arith.constant 0.353553385 : f32
    %94 = vector.broadcast %cst_34 : f32 to vector<8x8xf32>
    %95 = arith.mulf %93, %94 : vector<8x8xf32>
    %96 = arith.truncf %95 : vector<8x8xf32> to vector<8x8xbf16>
    %97 = vector.extract_strided_slice %11 {offsets = [0, 24], sizes = [8, 8], strides = [1, 1]} : vector<8x32xf32> to vector<8x8xf32>
    %98 = arith.truncf %97 : vector<8x8xf32> to vector<8x8xbf16>
    %99 = vector.extract_strided_slice %12 {offsets = [0, 24], sizes = [8, 8], strides = [1, 1]} : vector<8x32xf32> to vector<8x8xf32>
    %100 = arith.truncf %99 : vector<8x8xf32> to vector<8x8xbf16>
    "tpu.trace_start"() <{level = 10 : i32, message = "qd,kd->qk"}> : () -> ()
    %cst_35 = arith.constant dense<0.000000e+00> : vector<8x8xf32>
    %101 = tpu.matmul %96, %98, %cst_35 {dimension_numbers = #tpu.dot_dimension_numbers<[1], [1], [0], [0], [0, 0, 1, 0], [], []>} : vector<8x8xbf16>, vector<8x8xbf16>, vector<8x8xf32> -> vector<8x8xf32>
    "tpu.trace_stop"() : () -> ()
    %102 = arith.addf %101, %3 : vector<8x8xf32>
    %cst_36 = arith.constant dense<0xFF800000> : vector<8xf32>
    %103 = vector.multi_reduction <maximumf>, %102, %cst_36 [1] : vector<8x8xf32> to vector<8xf32>
    %104 = vector.shape_cast %103 : vector<8xf32> to vector<8x1xf32>
    %105 = vector.broadcast %104 : vector<8x1xf32> to vector<8x8xf32>
    %106 = arith.subf %102, %105 : vector<8x8xf32>
    %107 = math.exp %106 : vector<8x8xf32>
    %cst_37 = arith.constant dense<0.000000e+00> : vector<8xf32>
    %108 = vector.multi_reduction <add>, %107, %cst_37 [1] : vector<8x8xf32> to vector<8xf32>
    %109 = vector.shape_cast %108 : vector<8xf32> to vector<8x1xf32>
    %110 = tpu.reciprocal %109 {approx = true} : vector<8x1xf32> -> vector<8x1xf32>
    %111 = vector.broadcast %110 : vector<8x1xf32> to vector<8x8xf32>
    %112 = arith.mulf %107, %111 : vector<8x8xf32>
    %113 = arith.truncf %112 : vector<8x8xf32> to vector<8x8xbf16>
    %cst_38 = arith.constant dense<0.000000e+00> : vector<8x8xf32>
    %114 = tpu.matmul %113, %100, %cst_38 {dimension_numbers = #tpu.dot_dimension_numbers<[1], [0], [0], [1], [0, 0, 1, 1], [], []>} : vector<8x8xbf16>, vector<8x8xbf16>, vector<8x8xf32> -> vector<8x8xf32>
    %115 = arith.truncf %114 : vector<8x8xf32> to vector<8x8xbf16>
    %c24 = arith.constant 24 : index
    %c0_39 = arith.constant 0 : index
    %116 = vector.load %arg6[%c24, %c0_39] : memref<32x32xbf16, #tpu.memory_space<vmem>>, vector<8x32xbf16>
    %cst_40 = arith.constant dense<0.000000e+00> : vector<8x32xf32>
    %117 = tpu.matmul %115, %116, %cst_40 {dimension_numbers = #tpu.dot_dimension_numbers<[1], [0], [0], [1], [0, 0, 1, 1], [], []>} : vector<8x8xbf16>, vector<8x32xbf16>, vector<8x32xf32> -> vector<8x32xf32>
    %118 = arith.addf %92, %117 : vector<8x32xf32>
    %119 = vector.broadcast %13 : vector<1x32xf32> to vector<8x32xf32>
    %120 = arith.addf %118, %119 : vector<8x32xf32>
    %121 = arith.addf %1, %120 : vector<8x32xf32>
    %c0_41 = arith.constant 0 : index
    %c0_42 = arith.constant 0 : index
    %122 = vector.load %arg8[%c0_41, %c0_42] : memref<1x32xf32, #tpu.memory_space<vmem>>, vector<1x32xf32>
    %c0_43 = arith.constant 0 : index
    %c0_44 = arith.constant 0 : index
    %123 = vector.load %arg9[%c0_43, %c0_44] : memref<1x32xf32, #tpu.memory_space<vmem>>, vector<1x32xf32>
    %cst_45 = arith.constant dense<0.000000e+00> : vector<8xf32>
    %124 = vector.multi_reduction <add>, %121, %cst_45 [1] : vector<8x32xf32> to vector<8xf32>
    %125 = vector.shape_cast %124 : vector<8xf32> to vector<8x1xf32>
    %cst_46 = arith.constant 3.200000e+01 : f32
    %126 = vector.broadcast %cst_46 : f32 to vector<8x1xf32>
    %127 = arith.divf %125, %126 : vector<8x1xf32>
    %128 = vector.broadcast %127 : vector<8x1xf32> to vector<8x32xf32>
    %129 = arith.subf %121, %128 : vector<8x32xf32>
    %130 = arith.mulf %129, %129 : vector<8x32xf32>
    %cst_47 = arith.constant dense<0.000000e+00> : vector<8xf32>
    %131 = vector.multi_reduction <add>, %130, %cst_47 [1] : vector<8x32xf32> to vector<8xf32>
    %132 = vector.shape_cast %131 : vector<8xf32> to vector<8x1xf32>
    %cst_48 = arith.constant 3.200000e+01 : f32
    %133 = vector.broadcast %cst_48 : f32 to vector<8x1xf32>
    %134 = arith.divf %132, %133 : vector<8x1xf32>
    %cst_49 = arith.constant 9.99999974E-6 : f32
    %135 = vector.broadcast %cst_49 : f32 to vector<8x1xf32>
    %136 = arith.addf %134, %135 : vector<8x1xf32>
    %137 = math.rsqrt %136 : vector<8x1xf32>
    %138 = vector.broadcast %137 : vector<8x1xf32> to vector<8x32xf32>
    %139 = arith.mulf %129, %138 : vector<8x32xf32>
    %140 = vector.broadcast %122 : vector<1x32xf32> to vector<8x32xf32>
    %141 = arith.mulf %139, %140 : vector<8x32xf32>
    %142 = vector.broadcast %123 : vector<1x32xf32> to vector<8x32xf32>
    %143 = arith.addf %141, %142 : vector<8x32xf32>
    %c0_50 = arith.constant 0 : index
    %c0_51 = arith.constant 0 : index
    %c0_52 = arith.constant 0 : index
    %144 = vector.load %arg3[%c0_50, %c0_51, %c0_52] : memref<1x16x32xf32, #tpu.memory_space<vmem>>, vector<1x16x32xf32>
    %145 = vector.shape_cast %144 : vector<1x16x32xf32> to vector<16x32xf32>
    %146 = arith.truncf %143 : vector<8x32xf32> to vector<8x32xbf16>
    %c0_53 = arith.constant 0 : index
    %c0_54 = arith.constant 0 : index
    %147 = vector.load %arg10[%c0_53, %c0_54] : memref<32x32xbf16, #tpu.memory_space<vmem>>, vector<32x32xbf16>
    %cst_55 = arith.constant dense<0.000000e+00> : vector<8x32xf32>
    %148 = tpu.matmul %146, %147, %cst_55 {dimension_numbers = #tpu.dot_dimension_numbers<[1], [0], [0], [1], [0, 0, 1, 1], [], []>} : vector<8x32xbf16>, vector<32x32xbf16>, vector<8x32xf32> -> vector<8x32xf32>
    %c0_56 = arith.constant 0 : index
    %c0_57 = arith.constant 0 : index
    %149 = vector.load %arg11[%c0_56, %c0_57] : memref<1x32xf32, #tpu.memory_space<vmem>>, vector<1x32xf32>
    %150 = vector.broadcast %149 : vector<1x32xf32> to vector<8x32xf32>
    %151 = arith.addf %148, %150 : vector<8x32xf32>
    %152 = arith.truncf %145 : vector<16x32xf32> to vector<16x32xbf16>
    %c0_58 = arith.constant 0 : index
    %c0_59 = arith.constant 0 : index
    %153 = vector.load %arg12[%c0_58, %c0_59] : memref<32x64xbf16, #tpu.memory_space<vmem>>, vector<32x64xbf16>
    %cst_60 = arith.constant dense<0.000000e+00> : vector<16x64xf32>
    %154 = tpu.matmul %152, %153, %cst_60 {dimension_numbers = #tpu.dot_dimension_numbers<[1], [0], [0], [1], [0, 0, 1, 1], [], []>} : vector<16x32xbf16>, vector<32x64xbf16>, vector<16x64xf32> -> vector<16x64xf32>
    %c0_61 = arith.constant 0 : index
    %c0_62 = arith.constant 0 : index
    %155 = vector.load %arg13[%c0_61, %c0_62] : memref<1x64xf32, #tpu.memory_space<vmem>>, vector<1x64xf32>
    %156 = vector.broadcast %155 : vector<1x64xf32> to vector<16x64xf32>
    %157 = arith.addf %154, %156 : vector<16x64xf32>
    %158 = vector.extract_strided_slice %157 {offsets = [0, 0], sizes = [16, 32], strides = [1, 1]} : vector<16x64xf32> to vector<16x32xf32>
    %159 = vector.extract_strided_slice %157 {offsets = [0, 32], sizes = [16, 32], strides = [1, 1]} : vector<16x64xf32> to vector<16x32xf32>
    %c0_63 = arith.constant 0 : index
    %c0_64 = arith.constant 0 : index
    %160 = vector.load %arg15[%c0_63, %c0_64] : memref<1x32xf32, #tpu.memory_space<vmem>>, vector<1x32xf32>
    %cst_65 = arith.constant 0.000000e+00 : f32
    %161 = vector.broadcast %cst_65 : f32 to vector<8x32xf32>
    %162 = vector.extract_strided_slice %151 {offsets = [0, 0], sizes = [8, 8], strides = [1, 1]} : vector<8x32xf32> to vector<8x8xf32>
    %cst_66 = arith.constant 0.353553385 : f32
    %163 = vector.broadcast %cst_66 : f32 to vector<8x8xf32>
    %164 = arith.mulf %162, %163 : vector<8x8xf32>
    %165 = arith.truncf %164 : vector<8x8xf32> to vector<8x8xbf16>
    %166 = vector.extract_strided_slice %158 {offsets = [0, 0], sizes = [16, 8], strides = [1, 1]} : vector<16x32xf32> to vector<16x8xf32>
    %167 = arith.truncf %166 : vector<16x8xf32> to vector<16x8xbf16>
    %168 = vector.extract_strided_slice %159 {offsets = [0, 0], sizes = [16, 8], strides = [1, 1]} : vector<16x32xf32> to vector<16x8xf32>
    %169 = arith.truncf %168 : vector<16x8xf32> to vector<16x8xbf16>
    "tpu.trace_start"() <{level = 10 : i32, message = "qd,kd->qk"}> : () -> ()
    %cst_67 = arith.constant dense<0.000000e+00> : vector<8x16xf32>
    %170 = tpu.matmul %165, %167, %cst_67 {dimension_numbers = #tpu.dot_dimension_numbers<[1], [1], [0], [0], [0, 0, 1, 0], [], []>} : vector<8x8xbf16>, vector<16x8xbf16>, vector<8x16xf32> -> vector<8x16xf32>
    "tpu.trace_stop"() : () -> ()
    %cst_68 = arith.constant dense<0xFF800000> : vector<8xf32>
    %171 = vector.multi_reduction <maximumf>, %170, %cst_68 [1] : vector<8x16xf32> to vector<8xf32>
    %172 = vector.shape_cast %171 : vector<8xf32> to vector<8x1xf32>
    %173 = vector.broadcast %172 : vector<8x1xf32> to vector<8x16xf32>
    %174 = arith.subf %170, %173 : vector<8x16xf32>
    %175 = math.exp %174 : vector<8x16xf32>
    %cst_69 = arith.constant dense<0.000000e+00> : vector<8xf32>
    %176 = vector.multi_reduction <add>, %175, %cst_69 [1] : vector<8x16xf32> to vector<8xf32>
    %177 = vector.shape_cast %176 : vector<8xf32> to vector<8x1xf32>
    %178 = tpu.reciprocal %177 {approx = true} : vector<8x1xf32> -> vector<8x1xf32>
    %179 = vector.broadcast %178 : vector<8x1xf32> to vector<8x16xf32>
    %180 = arith.mulf %175, %179 : vector<8x16xf32>
    %181 = arith.truncf %180 : vector<8x16xf32> to vector<8x16xbf16>
    %cst_70 = arith.constant dense<0.000000e+00> : vector<8x8xf32>
    %182 = tpu.matmul %181, %169, %cst_70 {dimension_numbers = #tpu.dot_dimension_numbers<[1], [0], [0], [1], [0, 0, 1, 1], [], []>} : vector<8x16xbf16>, vector<16x8xbf16>, vector<8x8xf32> -> vector<8x8xf32>
    %183 = arith.truncf %182 : vector<8x8xf32> to vector<8x8xbf16>
    %c0_71 = arith.constant 0 : index
    %c0_72 = arith.constant 0 : index
    %184 = vector.load %arg14[%c0_71, %c0_72] : memref<32x32xbf16, #tpu.memory_space<vmem>>, vector<8x32xbf16>
    %cst_73 = arith.constant dense<0.000000e+00> : vector<8x32xf32>
    %185 = tpu.matmul %183, %184, %cst_73 {dimension_numbers = #tpu.dot_dimension_numbers<[1], [0], [0], [1], [0, 0, 1, 1], [], []>} : vector<8x8xbf16>, vector<8x32xbf16>, vector<8x32xf32> -> vector<8x32xf32>
    %186 = arith.addf %161, %185 : vector<8x32xf32>
    %187 = vector.extract_strided_slice %151 {offsets = [0, 8], sizes = [8, 8], strides = [1, 1]} : vector<8x32xf32> to vector<8x8xf32>
    %cst_74 = arith.constant 0.353553385 : f32
    %188 = vector.broadcast %cst_74 : f32 to vector<8x8xf32>
    %189 = arith.mulf %187, %188 : vector<8x8xf32>
    %190 = arith.truncf %189 : vector<8x8xf32> to vector<8x8xbf16>
    %191 = vector.extract_strided_slice %158 {offsets = [0, 8], sizes = [16, 8], strides = [1, 1]} : vector<16x32xf32> to vector<16x8xf32>
    %192 = arith.truncf %191 : vector<16x8xf32> to vector<16x8xbf16>
    %193 = vector.extract_strided_slice %159 {offsets = [0, 8], sizes = [16, 8], strides = [1, 1]} : vector<16x32xf32> to vector<16x8xf32>
    %194 = arith.truncf %193 : vector<16x8xf32> to vector<16x8xbf16>
    "tpu.trace_start"() <{level = 10 : i32, message = "qd,kd->qk"}> : () -> ()
    %cst_75 = arith.constant dense<0.000000e+00> : vector<8x16xf32>
    %195 = tpu.matmul %190, %192, %cst_75 {dimension_numbers = #tpu.dot_dimension_numbers<[1], [1], [0], [0], [0, 0, 1, 0], [], []>} : vector<8x8xbf16>, vector<16x8xbf16>, vector<8x16xf32> -> vector<8x16xf32>
    "tpu.trace_stop"() : () -> ()
    %cst_76 = arith.constant dense<0xFF800000> : vector<8xf32>
    %196 = vector.multi_reduction <maximumf>, %195, %cst_76 [1] : vector<8x16xf32> to vector<8xf32>
    %197 = vector.shape_cast %196 : vector<8xf32> to vector<8x1xf32>
    %198 = vector.broadcast %197 : vector<8x1xf32> to vector<8x16xf32>
    %199 = arith.subf %195, %198 : vector<8x16xf32>
    %200 = math.exp %199 : vector<8x16xf32>
    %cst_77 = arith.constant dense<0.000000e+00> : vector<8xf32>
    %201 = vector.multi_reduction <add>, %200, %cst_77 [1] : vector<8x16xf32> to vector<8xf32>
    %202 = vector.shape_cast %201 : vector<8xf32> to vector<8x1xf32>
    %203 = tpu.reciprocal %202 {approx = true} : vector<8x1xf32> -> vector<8x1xf32>
    %204 = vector.broadcast %203 : vector<8x1xf32> to vector<8x16xf32>
    %205 = arith.mulf %200, %204 : vector<8x16xf32>
    %206 = arith.truncf %205 : vector<8x16xf32> to vector<8x16xbf16>
    %cst_78 = arith.constant dense<0.000000e+00> : vector<8x8xf32>
    %207 = tpu.matmul %206, %194, %cst_78 {dimension_numbers = #tpu.dot_dimension_numbers<[1], [0], [0], [1], [0, 0, 1, 1], [], []>} : vector<8x16xbf16>, vector<16x8xbf16>, vector<8x8xf32> -> vector<8x8xf32>
    %208 = arith.truncf %207 : vector<8x8xf32> to vector<8x8xbf16>
    %c8_79 = arith.constant 8 : index
    %c0_80 = arith.constant 0 : index
    %209 = vector.load %arg14[%c8_79, %c0_80] : memref<32x32xbf16, #tpu.memory_space<vmem>>, vector<8x32xbf16>
    %cst_81 = arith.constant dense<0.000000e+00> : vector<8x32xf32>
    %210 = tpu.matmul %208, %209, %cst_81 {dimension_numbers = #tpu.dot_dimension_numbers<[1], [0], [0], [1], [0, 0, 1, 1], [], []>} : vector<8x8xbf16>, vector<8x32xbf16>, vector<8x32xf32> -> vector<8x32xf32>
    %211 = arith.addf %186, %210 : vector<8x32xf32>
    %212 = vector.extract_strided_slice %151 {offsets = [0, 16], sizes = [8, 8], strides = [1, 1]} : vector<8x32xf32> to vector<8x8xf32>
    %cst_82 = arith.constant 0.353553385 : f32
    %213 = vector.broadcast %cst_82 : f32 to vector<8x8xf32>
    %214 = arith.mulf %212, %213 : vector<8x8xf32>
    %215 = arith.truncf %214 : vector<8x8xf32> to vector<8x8xbf16>
    %216 = vector.extract_strided_slice %158 {offsets = [0, 16], sizes = [16, 8], strides = [1, 1]} : vector<16x32xf32> to vector<16x8xf32>
    %217 = arith.truncf %216 : vector<16x8xf32> to vector<16x8xbf16>
    %218 = vector.extract_strided_slice %159 {offsets = [0, 16], sizes = [16, 8], strides = [1, 1]} : vector<16x32xf32> to vector<16x8xf32>
    %219 = arith.truncf %218 : vector<16x8xf32> to vector<16x8xbf16>
    "tpu.trace_start"() <{level = 10 : i32, message = "qd,kd->qk"}> : () -> ()
    %cst_83 = arith.constant dense<0.000000e+00> : vector<8x16xf32>
    %220 = tpu.matmul %215, %217, %cst_83 {dimension_numbers = #tpu.dot_dimension_numbers<[1], [1], [0], [0], [0, 0, 1, 0], [], []>} : vector<8x8xbf16>, vector<16x8xbf16>, vector<8x16xf32> -> vector<8x16xf32>
    "tpu.trace_stop"() : () -> ()
    %cst_84 = arith.constant dense<0xFF800000> : vector<8xf32>
    %221 = vector.multi_reduction <maximumf>, %220, %cst_84 [1] : vector<8x16xf32> to vector<8xf32>
    %222 = vector.shape_cast %221 : vector<8xf32> to vector<8x1xf32>
    %223 = vector.broadcast %222 : vector<8x1xf32> to vector<8x16xf32>
    %224 = arith.subf %220, %223 : vector<8x16xf32>
    %225 = math.exp %224 : vector<8x16xf32>
    %cst_85 = arith.constant dense<0.000000e+00> : vector<8xf32>
    %226 = vector.multi_reduction <add>, %225, %cst_85 [1] : vector<8x16xf32> to vector<8xf32>
    %227 = vector.shape_cast %226 : vector<8xf32> to vector<8x1xf32>
    %228 = tpu.reciprocal %227 {approx = true} : vector<8x1xf32> -> vector<8x1xf32>
    %229 = vector.broadcast %228 : vector<8x1xf32> to vector<8x16xf32>
    %230 = arith.mulf %225, %229 : vector<8x16xf32>
    %231 = arith.truncf %230 : vector<8x16xf32> to vector<8x16xbf16>
    %cst_86 = arith.constant dense<0.000000e+00> : vector<8x8xf32>
    %232 = tpu.matmul %231, %219, %cst_86 {dimension_numbers = #tpu.dot_dimension_numbers<[1], [0], [0], [1], [0, 0, 1, 1], [], []>} : vector<8x16xbf16>, vector<16x8xbf16>, vector<8x8xf32> -> vector<8x8xf32>
    %233 = arith.truncf %232 : vector<8x8xf32> to vector<8x8xbf16>
    %c16_87 = arith.constant 16 : index
    %c0_88 = arith.constant 0 : index
    %234 = vector.load %arg14[%c16_87, %c0_88] : memref<32x32xbf16, #tpu.memory_space<vmem>>, vector<8x32xbf16>
    %cst_89 = arith.constant dense<0.000000e+00> : vector<8x32xf32>
    %235 = tpu.matmul %233, %234, %cst_89 {dimension_numbers = #tpu.dot_dimension_numbers<[1], [0], [0], [1], [0, 0, 1, 1], [], []>} : vector<8x8xbf16>, vector<8x32xbf16>, vector<8x32xf32> -> vector<8x32xf32>
    %236 = arith.addf %211, %235 : vector<8x32xf32>
    %237 = vector.extract_strided_slice %151 {offsets = [0, 24], sizes = [8, 8], strides = [1, 1]} : vector<8x32xf32> to vector<8x8xf32>
    %cst_90 = arith.constant 0.353553385 : f32
    %238 = vector.broadcast %cst_90 : f32 to vector<8x8xf32>
    %239 = arith.mulf %237, %238 : vector<8x8xf32>
    %240 = arith.truncf %239 : vector<8x8xf32> to vector<8x8xbf16>
    %241 = vector.extract_strided_slice %158 {offsets = [0, 24], sizes = [16, 8], strides = [1, 1]} : vector<16x32xf32> to vector<16x8xf32>
    %242 = arith.truncf %241 : vector<16x8xf32> to vector<16x8xbf16>
    %243 = vector.extract_strided_slice %159 {offsets = [0, 24], sizes = [16, 8], strides = [1, 1]} : vector<16x32xf32> to vector<16x8xf32>
    %244 = arith.truncf %243 : vector<16x8xf32> to vector<16x8xbf16>
    "tpu.trace_start"() <{level = 10 : i32, message = "qd,kd->qk"}> : () -> ()
    %cst_91 = arith.constant dense<0.000000e+00> : vector<8x16xf32>
    %245 = tpu.matmul %240, %242, %cst_91 {dimension_numbers = #tpu.dot_dimension_numbers<[1], [1], [0], [0], [0, 0, 1, 0], [], []>} : vector<8x8xbf16>, vector<16x8xbf16>, vector<8x16xf32> -> vector<8x16xf32>
    "tpu.trace_stop"() : () -> ()
    %cst_92 = arith.constant dense<0xFF800000> : vector<8xf32>
    %246 = vector.multi_reduction <maximumf>, %245, %cst_92 [1] : vector<8x16xf32> to vector<8xf32>
    %247 = vector.shape_cast %246 : vector<8xf32> to vector<8x1xf32>
    %248 = vector.broadcast %247 : vector<8x1xf32> to vector<8x16xf32>
    %249 = arith.subf %245, %248 : vector<8x16xf32>
    %250 = math.exp %249 : vector<8x16xf32>
    %cst_93 = arith.constant dense<0.000000e+00> : vector<8xf32>
    %251 = vector.multi_reduction <add>, %250, %cst_93 [1] : vector<8x16xf32> to vector<8xf32>
    %252 = vector.shape_cast %251 : vector<8xf32> to vector<8x1xf32>
    %253 = tpu.reciprocal %252 {approx = true} : vector<8x1xf32> -> vector<8x1xf32>
    %254 = vector.broadcast %253 : vector<8x1xf32> to vector<8x16xf32>
    %255 = arith.mulf %250, %254 : vector<8x16xf32>
    %256 = arith.truncf %255 : vector<8x16xf32> to vector<8x16xbf16>
    %cst_94 = arith.constant dense<0.000000e+00> : vector<8x8xf32>
    %257 = tpu.matmul %256, %244, %cst_94 {dimension_numbers = #tpu.dot_dimension_numbers<[1], [0], [0], [1], [0, 0, 1, 1], [], []>} : vector<8x16xbf16>, vector<16x8xbf16>, vector<8x8xf32> -> vector<8x8xf32>
    %258 = arith.truncf %257 : vector<8x8xf32> to vector<8x8xbf16>
    %c24_95 = arith.constant 24 : index
    %c0_96 = arith.constant 0 : index
    %259 = vector.load %arg14[%c24_95, %c0_96] : memref<32x32xbf16, #tpu.memory_space<vmem>>, vector<8x32xbf16>
    %cst_97 = arith.constant dense<0.000000e+00> : vector<8x32xf32>
    %260 = tpu.matmul %258, %259, %cst_97 {dimension_numbers = #tpu.dot_dimension_numbers<[1], [0], [0], [1], [0, 0, 1, 1], [], []>} : vector<8x8xbf16>, vector<8x32xbf16>, vector<8x32xf32> -> vector<8x32xf32>
    %261 = arith.addf %236, %260 : vector<8x32xf32>
    %262 = vector.broadcast %160 : vector<1x32xf32> to vector<8x32xf32>
    %263 = arith.addf %261, %262 : vector<8x32xf32>
    %264 = arith.addf %143, %263 : vector<8x32xf32>
    %c0_98 = arith.constant 0 : index
    %c0_99 = arith.constant 0 : index
    %265 = vector.load %arg16[%c0_98, %c0_99] : memref<1x32xf32, #tpu.memory_space<vmem>>, vector<1x32xf32>
    %c0_100 = arith.constant 0 : index
    %c0_101 = arith.constant 0 : index
    %266 = vector.load %arg17[%c0_100, %c0_101] : memref<1x32xf32, #tpu.memory_space<vmem>>, vector<1x32xf32>
    %cst_102 = arith.constant dense<0.000000e+00> : vector<8xf32>
    %267 = vector.multi_reduction <add>, %264, %cst_102 [1] : vector<8x32xf32> to vector<8xf32>
    %268 = vector.shape_cast %267 : vector<8xf32> to vector<8x1xf32>
    %cst_103 = arith.constant 3.200000e+01 : f32
    %269 = vector.broadcast %cst_103 : f32 to vector<8x1xf32>
    %270 = arith.divf %268, %269 : vector<8x1xf32>
    %271 = vector.broadcast %270 : vector<8x1xf32> to vector<8x32xf32>
    %272 = arith.subf %264, %271 : vector<8x32xf32>
    %273 = arith.mulf %272, %272 : vector<8x32xf32>
    %cst_104 = arith.constant dense<0.000000e+00> : vector<8xf32>
    %274 = vector.multi_reduction <add>, %273, %cst_104 [1] : vector<8x32xf32> to vector<8xf32>
    %275 = vector.shape_cast %274 : vector<8xf32> to vector<8x1xf32>
    %cst_105 = arith.constant 3.200000e+01 : f32
    %276 = vector.broadcast %cst_105 : f32 to vector<8x1xf32>
    %277 = arith.divf %275, %276 : vector<8x1xf32>
    %cst_106 = arith.constant 9.99999974E-6 : f32
    %278 = vector.broadcast %cst_106 : f32 to vector<8x1xf32>
    %279 = arith.addf %277, %278 : vector<8x1xf32>
    %280 = math.rsqrt %279 : vector<8x1xf32>
    %281 = vector.broadcast %280 : vector<8x1xf32> to vector<8x32xf32>
    %282 = arith.mulf %272, %281 : vector<8x32xf32>
    %283 = vector.broadcast %265 : vector<1x32xf32> to vector<8x32xf32>
    %284 = arith.mulf %282, %283 : vector<8x32xf32>
    %285 = vector.broadcast %266 : vector<1x32xf32> to vector<8x32xf32>
    %286 = arith.addf %284, %285 : vector<8x32xf32>
    %287 = arith.truncf %286 : vector<8x32xf32> to vector<8x32xbf16>
    %c0_107 = arith.constant 0 : index
    %c0_108 = arith.constant 0 : index
    %288 = vector.load %arg18[%c0_107, %c0_108] : memref<32x128xbf16, #tpu.memory_space<vmem>>, vector<32x128xbf16>
    %cst_109 = arith.constant dense<0.000000e+00> : vector<8x128xf32>
    %289 = tpu.matmul %287, %288, %cst_109 {dimension_numbers = #tpu.dot_dimension_numbers<[1], [0], [0], [1], [0, 0, 1, 1], [], []>} : vector<8x32xbf16>, vector<32x128xbf16>, vector<8x128xf32> -> vector<8x128xf32>
    %c0_110 = arith.constant 0 : index
    %c0_111 = arith.constant 0 : index
    %290 = vector.load %arg19[%c0_110, %c0_111] : memref<1x128xf32, #tpu.memory_space<vmem>>, vector<1x128xf32>
    %291 = vector.broadcast %290 : vector<1x128xf32> to vector<8x128xf32>
    %292 = arith.addf %289, %291 : vector<8x128xf32>
    %cst_112 = arith.constant 0.000000e+00 : f32
    %293 = vector.broadcast %cst_112 : f32 to vector<8x128xf32>
    %294 = arith.maximumf %292, %293 : vector<8x128xf32>
    %295 = arith.truncf %294 : vector<8x128xf32> to vector<8x128xbf16>
    %c0_113 = arith.constant 0 : index
    %c0_114 = arith.constant 0 : index
    %296 = vector.load %arg20[%c0_113, %c0_114] : memref<128x32xbf16, #tpu.memory_space<vmem>>, vector<128x32xbf16>
    %cst_115 = arith.constant dense<0.000000e+00> : vector<8x32xf32>
    %297 = tpu.matmul %295, %296, %cst_115 {dimension_numbers = #tpu.dot_dimension_numbers<[1], [0], [0], [1], [0, 0, 1, 1], [], []>} : vector<8x128xbf16>, vector<128x32xbf16>, vector<8x32xf32> -> vector<8x32xf32>
    %c0_116 = arith.constant 0 : index
    %c0_117 = arith.constant 0 : index
    %298 = vector.load %arg21[%c0_116, %c0_117] : memref<1x32xf32, #tpu.memory_space<vmem>>, vector<1x32xf32>
    %299 = vector.broadcast %298 : vector<1x32xf32> to vector<8x32xf32>
    %300 = arith.addf %297, %299 : vector<8x32xf32>
    %301 = arith.addf %286, %300 : vector<8x32xf32>
    %c0_118 = arith.constant 0 : index
    %c0_119 = arith.constant 0 : index
    %302 = vector.load %arg22[%c0_118, %c0_119] : memref<1x32xf32, #tpu.memory_space<vmem>>, vector<1x32xf32>
    %c0_120 = arith.constant 0 : index
    %c0_121 = arith.constant 0 : index
    %303 = vector.load %arg23[%c0_120, %c0_121] : memref<1x32xf32, #tpu.memory_space<vmem>>, vector<1x32xf32>
    %cst_122 = arith.constant dense<0.000000e+00> : vector<8xf32>
    %304 = vector.multi_reduction <add>, %301, %cst_122 [1] : vector<8x32xf32> to vector<8xf32>
    %305 = vector.shape_cast %304 : vector<8xf32> to vector<8x1xf32>
    %cst_123 = arith.constant 3.200000e+01 : f32
    %306 = vector.broadcast %cst_123 : f32 to vector<8x1xf32>
    %307 = arith.divf %305, %306 : vector<8x1xf32>
    %308 = vector.broadcast %307 : vector<8x1xf32> to vector<8x32xf32>
    %309 = arith.subf %301, %308 : vector<8x32xf32>
    %310 = arith.mulf %309, %309 : vector<8x32xf32>
    %cst_124 = arith.constant dense<0.000000e+00> : vector<8xf32>
    %311 = vector.multi_reduction <add>, %310, %cst_124 [1] : vector<8x32xf32> to vector<8xf32>
    %312 = vector.shape_cast %311 : vector<8xf32> to vector<8x1xf32>
    %cst_125 = arith.constant 3.200000e+01 : f32
    %313 = vector.broadcast %cst_125 : f32 to vector<8x1xf32>
    %314 = arith.divf %312, %313 : vector<8x1xf32>
    %cst_126 = arith.constant 9.99999974E-6 : f32
    %315 = vector.broadcast %cst_126 : f32 to vector<8x1xf32>
    %316 = arith.addf %314, %315 : vector<8x1xf32>
    %317 = math.rsqrt %316 : vector<8x1xf32>
    %318 = vector.broadcast %317 : vector<8x1xf32> to vector<8x32xf32>
    %319 = arith.mulf %309, %318 : vector<8x32xf32>
    %320 = vector.broadcast %302 : vector<1x32xf32> to vector<8x32xf32>
    %321 = arith.mulf %319, %320 : vector<8x32xf32>
    %322 = vector.broadcast %303 : vector<1x32xf32> to vector<8x32xf32>
    %323 = arith.addf %321, %322 : vector<8x32xf32>
    %c0_127 = arith.constant 0 : index
    %c0_128 = arith.constant 0 : index
    %c0_129 = arith.constant 0 : index
    %324 = vector.load %arg24[%c0_127, %c0_128, %c0_129] : memref<1x8x32xf32, #tpu.memory_space<vmem>>, vector<1x8x32xf32>
    %325 = vector.shape_cast %324 : vector<1x8x32xf32> to vector<8x32xf32>
    %326 = vector.shape_cast %323 : vector<8x32xf32> to vector<1x8x32xf32>
    tpu.vector_store %arg24[%c0_127, %c0_128, %c0_129], %326 {strides = array<i32>} : memref<1x8x32xf32, #tpu.memory_space<vmem>>, vector<1x8x32xf32>,
    return
  }
  func.func @transform_0(%arg0: i32) -> (i32, i32, i32) {
    %c0_i32 = arith.constant 0 : i32
    %c0_i32_0 = arith.constant 0 : i32
    %c0_i32_1 = arith.constant 0 : i32
    return %arg0, %c0_i32, %c0_i32_0 : i32, i32, i32
  }
  func.func @transform_1(%arg0: i32) -> (i32, i32, i32) {
    %c0_i32 = arith.constant 0 : i32
    %c0_i32_0 = arith.constant 0 : i32
    %c0_i32_1 = arith.constant 0 : i32
    return %arg0, %c0_i32, %c0_i32_0 : i32, i32, i32
  }
  func.func @transform_2(%arg0: i32) -> (i32, i32, i32) {
    %c0_i32 = arith.constant 0 : i32
    %c0_i32_0 = arith.constant 0 : i32
    %c0_i32_1 = arith.constant 0 : i32
    return %arg0, %c0_i32, %c0_i32_0 : i32, i32, i32
  }
  func.func @transform_3(%arg0: i32) -> (i32, i32) {
    %c0_i32 = arith.constant 0 : i32
    %c0_i32_0 = arith.constant 0 : i32
    %c0_i32_1 = arith.constant 0 : i32
    return %c0_i32, %c0_i32_0 : i32, i32
  }
  func.func @transform_4(%arg0: i32) -> (i32, i32) {
    %c0_i32 = arith.constant 0 : i32
    %c0_i32_0 = arith.constant 0 : i32
    %c0_i32_1 = arith.constant 0 : i32
    return %c0_i32, %c0_i32_0 : i32, i32
  }
  func.func @transform_5(%arg0: i32) -> (i32, i32) {
    %c0_i32 = arith.constant 0 : i32
    %c0_i32_0 = arith.constant 0 : i32
    %c0_i32_1 = arith.constant 0 : i32
    return %c0_i32, %c0_i32_0 : i32, i32
  }
  func.func @transform_6(%arg0: i32) -> (i32, i32) {
    %c0_i32 = arith.constant 0 : i32
    %c0_i32_0 = arith.constant 0 : i32
    %c0_i32_1 = arith.constant 0 : i32
    return %c0_i32, %c0_i32_0 : i32, i32
  }
  func.func @transform_7(%arg0: i32) -> (i32, i32) {
    %c0_i32 = arith.constant 0 : i32
    %c0_i32_0 = arith.constant 0 : i32
    %c0_i32_1 = arith.constant 0 : i32
    return %c0_i32, %c0_i32_0 : i32, i32
  }
  func.func @transform_8(%arg0: i32) -> (i32, i32) {
    %c0_i32 = arith.constant 0 : i32
    %c0_i32_0 = arith.constant 0 : i32
    %c0_i32_1 = arith.constant 0 : i32
    return %c0_i32, %c0_i32_0 : i32, i32
  }
  func.func @transform_9(%arg0: i32) -> (i32, i32) {
    %c0_i32 = arith.constant 0 : i32
    %c0_i32_0 = arith.constant 0 : i32
    %c0_i32_1 = arith.constant 0 : i32
    return %c0_i32, %c0_i32_0 : i32, i32
  }
  func.func @transform_10(%arg0: i32) -> (i32, i32) {
    %c0_i32 = arith.constant 0 : i32
    %c0_i32_0 = arith.constant 0 : i32
    %c0_i32_1 = arith.constant 0 : i32
    return %c0_i32, %c0_i32_0 : i32, i32
  }
  func.func @transform_11(%arg0: i32) -> (i32, i32) {
    %c0_i32 = arith.constant 0 : i32
    %c0_i32_0 = arith.constant 0 : i32
    %c0_i32_1 = arith.constant 0 : i32
    return %c0_i32, %c0_i32_0 : i32, i32
  }
  func.func @transform_12(%arg0: i32) -> (i32, i32) {
    %c0_i32 = arith.constant 0 : i32
    %c0_i32_0 = arith.constant 0 : i32
    %c0_i32_1 = arith.constant 0 : i32
    return %c0_i32, %c0_i32_0 : i32, i32
  }
  func.func @transform_13(%arg0: i32) -> (i32, i32) {
    %c0_i32 = arith.constant 0 : i32
    %c0_i32_0 = arith.constant 0 : i32
    %c0_i32_1 = arith.constant 0 : i32
    return %c0_i32, %c0_i32_0 : i32, i32
  }
  func.func @transform_14(%arg0: i32) -> (i32, i32) {
    %c0_i32 = arith.constant 0 : i32
    %c0_i32_0 = arith.constant 0 : i32
    %c0_i32_1 = arith.constant 0 : i32
    return %c0_i32, %c0_i32_0 : i32, i32
  }
  func.func @transform_15(%arg0: i32) -> (i32, i32) {
    %c0_i32 = arith.constant 0 : i32
    %c0_i32_0 = arith.constant 0 : i32
    %c0_i32_1 = arith.constant 0 : i32
    return %c0_i32, %c0_i32_0 : i32, i32
  }
  func.func @transform_16(%arg0: i32) -> (i32, i32) {
    %c0_i32 = arith.constant 0 : i32
    %c0_i32_0 = arith.constant 0 : i32
    %c0_i32_1 = arith.constant 0 : i32
    return %c0_i32, %c0_i32_0 : i32, i32
  }
  func.func @transform_17(%arg0: i32) -> (i32, i32) {
    %c0_i32 = arith.constant 0 : i32
    %c0_i32_0 = arith.constant 0 : i32
    %c0_i32_1 = arith.constant 0 : i32
    return %c0_i32, %c0_i32_0 : i32, i32
  }
  func.func @transform_18(%arg0: i32) -> (i32, i32) {
    %c0_i32 = arith.constant 0 : i32
    %c0_i32_0 = arith.constant 0 : i32
    %c0_i32_1 = arith.constant 0 : i32
    return %c0_i32, %c0_i32_0 : i32, i32
  }
  func.func @transform_19(%arg0: i32) -> (i32, i32) {
    %c0_i32 = arith.constant 0 : i32
    %c0_i32_0 = arith.constant 0 : i32
    %c0_i32_1 = arith.constant 0 : i32
    return %c0_i32, %c0_i32_0 : i32, i32
  }
  func.func @transform_20(%arg0: i32) -> (i32, i32) {
    %c0_i32 = arith.constant 0 : i32
    %c0_i32_0 = arith.constant 0 : i32
    %c0_i32_1 = arith.constant 0 : i32
    return %c0_i32, %c0_i32_0 : i32, i32
  }
  func.func @transform_21(%arg0: i32) -> (i32, i32) {
    %c0_i32 = arith.constant 0 : i32
    %c0_i32_0 = arith.constant 0 : i32
    %c0_i32_1 = arith.constant 0 : i32
    return %c0_i32, %c0_i32_0 : i32, i32
  }
  func.func @transform_22(%arg0: i32) -> (i32, i32) {
    %c0_i32 = arith.constant 0 : i32
    %c0_i32_0 = arith.constant 0 : i32
    %c0_i32_1 = arith.constant 0 : i32
    return %c0_i32, %c0_i32_0 : i32, i32
  }
  func.func @transform_23(%arg0: i32) -> (i32, i32, i32) {
    %c0_i32 = arith.constant 0 : i32
    %c0_i32_0 = arith.constant 0 : i32
    %c0_i32_1 = arith.constant 0 : i32
    return %arg0, %c0_i32, %c0_i32_0 : i32, i32, i32
  }
}

module attributes {stable_mosaic.version = 11 : i64} {
  func.func @_dec_block_kernel(%arg0: i32, %arg1: memref<1x8x32xf32, #tpu.memory_space<vmem>>, %arg2: memref<1x8x8xf32, #tpu.memory_space<vmem>>, %arg3: memref<1x16x32xf32, #tpu.memory_space<vmem>>, %arg4: memref<32x96xbf16, #tpu.memory_space<vmem>>, %arg5: memref<1x96xf32, #tpu.memory_space<vmem>>, %arg6: memref<32x32xbf16, #tpu.memory_space<vmem>>, %arg7: memref<1x32xf32, #tpu.memory_space<vmem>>, %arg8: memref<1x32xf32, #tpu.memory_space<vmem>>, %arg9: memref<1x32xf32, #tpu.memory_space<vmem>>, %arg10: memref<32x32xbf16, #tpu.memory_space<vmem>>, %arg11: memref<1x32xf32, #tpu.memory_space<vmem>>, %arg12: memref<32x64xbf16, #tpu.memory_space<vmem>>, %arg13: memref<1x64xf32, #tpu.memory_space<vmem>>, %arg14: memref<32x32xbf16, #tpu.memory_space<vmem>>, %arg15: memref<1x32xf32, #tpu.memory_space<vmem>>, %arg16: memref<1x32xf32, #tpu.memory_space<vmem>>, %arg17: memref<1x32xf32, #tpu.memory_space<vmem>>, %arg18: memref<32x128xbf16, #tpu.memory_space<vmem>>, %arg19: memref<1x128xf32, #tpu.memory_space<vmem>>, %arg20: memref<128x32xbf16, #tpu.memory_space<vmem>>, %arg21: memref<1x32xf32, #tpu.memory_space<vmem>>, %arg22: memref<1x32xf32, #tpu.memory_space<vmem>>, %arg23: memref<1x32xf32, #tpu.memory_space<vmem>>, %arg24: memref<1x8x32xf32, #tpu.memory_space<vmem>>) attributes {dimension_semantics = [#tpu.dimension_semantics<parallel>], iteration_bounds = array<i64: 2>, scalar_prefetch = 0 : i64, scratch_operands = 0 : i64, tpu.core_type = #tpu.core_type<tc>, window_params = [{transform_indices = @transform_0, window_bounds = array<i64: 1, 8, 32>}, {transform_indices = @transform_1, window_bounds = array<i64: 1, 8, 8>}, {transform_indices = @transform_2, window_bounds = array<i64: 1, 16, 32>}, {pipeline_mode = #tpu.pipeline_mode<synchronous>, transform_indices = @transform_3, window_bounds = array<i64: 32, 96>}, {pipeline_mode = #tpu.pipeline_mode<synchronous>, transform_indices = @transform_4, window_bounds = array<i64: 1, 96>}, {pipeline_mode = #tpu.pipeline_mode<synchronous>, transform_indices = @transform_5, window_bounds = array<i64: 32, 32>}, {pipeline_mode = #tpu.pipeline_mode<synchronous>, transform_indices = @transform_6, window_bounds = array<i64: 1, 32>}, {pipeline_mode = #tpu.pipeline_mode<synchronous>, transform_indices = @transform_7, window_bounds = array<i64: 1, 32>}, {pipeline_mode = #tpu.pipeline_mode<synchronous>, transform_indices = @transform_8, window_bounds = array<i64: 1, 32>}, {pipeline_mode = #tpu.pipeline_mode<synchronous>, transform_indices = @transform_9, window_bounds = array<i64: 32, 32>}, {pipeline_mode = #tpu.pipeline_mode<synchronous>, transform_indices = @transform_10, window_bounds = array<i64: 1, 32>}, {pipeline_mode = #tpu.pipeline_mode<synchronous>, transform_indices = @transform_11, window_bounds = array<i64: 32, 64>}, {pipeline_mode = #tpu.pipeline_mode<synchronous>, transform_indices = @transform_12, window_bounds = array<i64: 1, 64>}, {pipeline_mode = #tpu.pipeline_mode<synchronous>, transform_indices = @transform_13, window_bounds = array<i64: 32, 32>}, {pipeline_mode = #tpu.pipeline_mode<synchronous>, transform_indices = @transform_14, window_bounds = array<i64: 1, 32>}, {pipeline_mode = #tpu.pipeline_mode<synchronous>, transform_indices = @transform_15, window_bounds = array<i64: 1, 32>}, {pipeline_mode = #tpu.pipeline_mode<synchronous>, transform_indices = @transform_16, window_bounds = array<i64: 1, 32>}, {pipeline_mode = #tpu.pipeline_mode<synchronous>, transform_indices = @transform_17, window_bounds = array<i64: 32, 128>}, {pipeline_mode = #tpu.pipeline_mode<synchronous>, transform_indices = @transform_18, window_bounds = array<i64: 1, 128>}, {pipeline_mode = #tpu.pipeline_mode<synchronous>, transform_indices = @transform_19, window_bounds = array<i64: 128, 32>}, {pipeline_mode = #tpu.pipeline_mode<synchronous>, transform_indices = @transform_20, window_bounds = array<i64: 1, 32>}, {pipeline_mode = #tpu.pipeline_mode<synchronous>, transform_indices = @transform_21, window_bounds = array<i64: 1, 32>}, {pipeline_mode = #tpu.pipeline_mode<synchronous>, transform_indices = @transform_22, window_bounds = array<i64: 1, 32>}, {transform_indices = @transform_23, window_bounds = array<i64: 1, 8, 32>}]} {
    %c0 = arith.constant 0 : index
    %c0_0 = arith.constant 0 : index
    %c0_1 = arith.constant 0 : index
    %0 = vector.load %arg1[%c0, %c0_0, %c0_1] : memref<1x8x32xf32, #tpu.memory_space<vmem>>, vector<1x8x32xf32>
    %1 = vector.shape_cast %0 : vector<1x8x32xf32> to vector<8x32xf32>
    %c0_2 = arith.constant 0 : index
    %c0_3 = arith.constant 0 : index
    %c0_4 = arith.constant 0 : index
    %2 = vector.load %arg2[%c0_2, %c0_3, %c0_4] : memref<1x8x8xf32, #tpu.memory_space<vmem>>, vector<1x8x8xf32>
    %3 = vector.shape_cast %2 : vector<1x8x8xf32> to vector<8x8xf32>
    %4 = arith.truncf %1 : vector<8x32xf32> to vector<8x32xbf16>
    %c0_5 = arith.constant 0 : index
    %c0_6 = arith.constant 0 : index
    %5 = vector.load %arg4[%c0_5, %c0_6] : memref<32x96xbf16, #tpu.memory_space<vmem>>, vector<32x96xbf16>
    %cst = arith.constant dense<0.000000e+00> : vector<8x96xf32>
    %6 = tpu.matmul %4, %5, %cst {dimension_numbers = #tpu.dot_dimension_numbers<[1], [0], [0], [1], [0, 0, 1, 1], [], []>} : vector<8x32xbf16>, vector<32x96xbf16>, vector<8x96xf32> -> vector<8x96xf32>
    %c0_7 = arith.constant 0 : index
    %c0_8 = arith.constant 0 : index
    %7 = vector.load %arg5[%c0_7, %c0_8] : memref<1x96xf32, #tpu.memory_space<vmem>>, vector<1x96xf32>
    %8 = vector.broadcast %7 : vector<1x96xf32> to vector<8x96xf32>
    %9 = arith.addf %6, %8 : vector<8x96xf32>
    %10 = vector.extract_strided_slice %9 {offsets = [0, 0], sizes = [8, 32], strides = [1, 1]} : vector<8x96xf32> to vector<8x32xf32>
    %11 = vector.extract_strided_slice %9 {offsets = [0, 32], sizes = [8, 32], strides = [1, 1]} : vector<8x96xf32> to vector<8x32xf32>
    %12 = vector.extract_strided_slice %9 {offsets = [0, 64], sizes = [8, 32], strides = [1, 1]} : vector<8x96xf32> to vector<8x32xf32>
    %c0_9 = arith.constant 0 : index
    %c0_10 = arith.constant 0 : index
    %13 = vector.load %arg7[%c0_9, %c0_10] : memref<1x32xf32, #tpu.memory_space<vmem>>, vector<1x32xf32>
    %cst_11 = arith.constant 0.000000e+00 : f32
    %14 = vector.broadcast %cst_11 : f32 to vector<8x32xf32>
    %15 = vector.extract_strided_slice %10 {offsets = [0, 0], sizes = [8, 8], strides = [1, 1]} : vector<8x32xf32> to vector<8x8xf32>
    %cst_12 = arith.constant 0.353553385 : f32
    %16 = vector.broadcast %cst_12 : f32 to vector<8x8xf32>
    %17 = arith.mulf %15, %16 : vector<8x8xf32>
    %18 = arith.truncf %17 : vector<8x8xf32> to vector<8x8xbf16>
    %19 = vector.extract_strided_slice %11 {offsets = [0, 0], sizes = [8, 8], strides = [1, 1]} : vector<8x32xf32> to vector<8x8xf32>
    %20 = arith.truncf %19 : vector<8x8xf32> to vector<8x8xbf16>
    %21 = vector.extract_strided_slice %12 {offsets = [0, 0], sizes = [8, 8], strides = [1, 1]} : vector<8x32xf32> to vector<8x8xf32>
    %22 = arith.truncf %21 : vector<8x8xf32> to vector<8x8xbf16>
    "tpu.trace_start"() <{level = 10 : i32, message = "qd,kd->qk"}> : () -> ()
    %cst_13 = arith.constant dense<0.000000e+00> : vector<8x8xf32>
    %23 = tpu.matmul %18, %20, %cst_13 {dimension_numbers = #tpu.dot_dimension_numbers<[1], [1], [0], [0], [0, 0, 1, 0], [], []>} : vector<8x8xbf16>, vector<8x8xbf16>, vector<8x8xf32> -> vector<8x8xf32>
    "tpu.trace_stop"() : () -> ()
    %24 = arith.addf %23, %3 : vector<8x8xf32>
    %cst_14 = arith.constant dense<0xFF800000> : vector<8xf32>
    %25 = vector.multi_reduction <maximumf>, %24, %cst_14 [1] : vector<8x8xf32> to vector<8xf32>
    %26 = vector.shape_cast %25 : vector<8xf32> to vector<8x1xf32>
    %27 = vector.broadcast %26 : vector<8x1xf32> to vector<8x8xf32>
    %28 = arith.subf %24, %27 : vector<8x8xf32>
    %29 = math.exp %28 : vector<8x8xf32>
    %cst_15 = arith.constant dense<0.000000e+00> : vector<8xf32>
    %30 = vector.multi_reduction <add>, %29, %cst_15 [1] : vector<8x8xf32> to vector<8xf32>
    %31 = vector.shape_cast %30 : vector<8xf32> to vector<8x1xf32>
    %32 = tpu.reciprocal %31 {approx = true} : vector<8x1xf32> -> vector<8x1xf32>
    %33 = vector.broadcast %32 : vector<8x1xf32> to vector<8x8xf32>
    %34 = arith.mulf %29, %33 : vector<8x8xf32>
    %35 = arith.truncf %34 : vector<8x8xf32> to vector<8x8xbf16>
    %cst_16 = arith.constant dense<0.000000e+00> : vector<8x8xf32>
    %36 = tpu.matmul %35, %22, %cst_16 {dimension_numbers = #tpu.dot_dimension_numbers<[1], [0], [0], [1], [0, 0, 1, 1], [], []>} : vector<8x8xbf16>, vector<8x8xbf16>, vector<8x8xf32> -> vector<8x8xf32>
    %37 = arith.truncf %36 : vector<8x8xf32> to vector<8x8xbf16>
    %c0_17 = arith.constant 0 : index
    %c0_18 = arith.constant 0 : index
    %38 = vector.load %arg6[%c0_17, %c0_18] : memref<32x32xbf16, #tpu.memory_space<vmem>>, vector<8x32xbf16>
    %cst_19 = arith.constant dense<0.000000e+00> : vector<8x32xf32>
    %39 = tpu.matmul %37, %38, %cst_19 {dimension_numbers = #tpu.dot_dimension_numbers<[1], [0], [0], [1], [0, 0, 1, 1], [], []>} : vector<8x8xbf16>, vector<8x32xbf16>, vector<8x32xf32> -> vector<8x32xf32>
    %40 = arith.addf %14, %39 : vector<8x32xf32>
    %41 = vector.extract_strided_slice %10 {offsets = [0, 8], sizes = [8, 8], strides = [1, 1]} : vector<8x32xf32> to vector<8x8xf32>
    %cst_20 = arith.constant 0.353553385 : f32
    %42 = vector.broadcast %cst_20 : f32 to vector<8x8xf32>
    %43 = arith.mulf %41, %42 : vector<8x8xf32>
    %44 = arith.truncf %43 : vector<8x8xf32> to vector<8x8xbf16>
    %45 = vector.extract_strided_slice %11 {offsets = [0, 8], sizes = [8, 8], strides = [1, 1]} : vector<8x32xf32> to vector<8x8xf32>
    %46 = arith.truncf %45 : vector<8x8xf32> to vector<8x8xbf16>
    %47 = vector.extract_strided_slice %12 {offsets = [0, 8], sizes = [8, 8], strides = [1, 1]} : vector<8x32xf32> to vector<8x8xf32>
    %48 = arith.truncf %47 : vector<8x8xf32> to vector<8x8xbf16>
    "tpu.trace_start"() <{level = 10 : i32, message = "qd,kd->qk"}> : () -> ()
    %cst_21 = arith.constant dense<0.000000e+00> : vector<8x8xf32>
    %49 = tpu.matmul %44, %46, %cst_21 {dimension_numbers = #tpu.dot_dimension_numbers<[1], [1], [0], [0], [0, 0, 1, 0], [], []>} : vector<8x8xbf16>, vector<8x8xbf16>, vector<8x8xf32> -> vector<8x8xf32>
    "tpu.trace_stop"() : () -> ()
    %50 = arith.addf %49, %3 : vector<8x8xf32>
    %cst_22 = arith.constant dense<0xFF800000> : vector<8xf32>
    %51 = vector.multi_reduction <maximumf>, %50, %cst_22 [1] : vector<8x8xf32> to vector<8xf32>
    %52 = vector.shape_cast %51 : vector<8xf32> to vector<8x1xf32>
    %53 = vector.broadcast %52 : vector<8x1xf32> to vector<8x8xf32>
    %54 = arith.subf %50, %53 : vector<8x8xf32>
    %55 = math.exp %54 : vector<8x8xf32>
    %cst_23 = arith.constant dense<0.000000e+00> : vector<8xf32>
    %56 = vector.multi_reduction <add>, %55, %cst_23 [1] : vector<8x8xf32> to vector<8xf32>
    %57 = vector.shape_cast %56 : vector<8xf32> to vector<8x1xf32>
    %58 = tpu.reciprocal %57 {approx = true} : vector<8x1xf32> -> vector<8x1xf32>
    %59 = vector.broadcast %58 : vector<8x1xf32> to vector<8x8xf32>
    %60 = arith.mulf %55, %59 : vector<8x8xf32>
    %61 = arith.truncf %60 : vector<8x8xf32> to vector<8x8xbf16>
    %cst_24 = arith.constant dense<0.000000e+00> : vector<8x8xf32>
    %62 = tpu.matmul %61, %48, %cst_24 {dimension_numbers = #tpu.dot_dimension_numbers<[1], [0], [0], [1], [0, 0, 1, 1], [], []>} : vector<8x8xbf16>, vector<8x8xbf16>, vector<8x8xf32> -> vector<8x8xf32>
    %63 = arith.truncf %62 : vector<8x8xf32> to vector<8x8xbf16>
    %c8 = arith.constant 8 : index
    %c0_25 = arith.constant 0 : index
    %64 = vector.load %arg6[%c8, %c0_25] : memref<32x32xbf16, #tpu.memory_space<vmem>>, vector<8x32xbf16>
    %cst_26 = arith.constant dense<0.000000e+00> : vector<8x32xf32>
    %65 = tpu.matmul %63, %64, %cst_26 {dimension_numbers = #tpu.dot_dimension_numbers<[1], [0], [0], [1], [0, 0, 1, 1], [], []>} : vector<8x8xbf16>, vector<8x32xbf16>, vector<8x32xf32> -> vector<8x32xf32>
    %66 = arith.addf %40, %65 : vector<8x32xf32>
    %67 = vector.extract_strided_slice %10 {offsets = [0, 16], sizes = [8, 8], strides = [1, 1]} : vector<8x32xf32> to vector<8x8xf32>
    %cst_27 = arith.constant 0.353553385 : f32
    %68 = vector.broadcast %cst_27 : f32 to vector<8x8xf32>
    %69 = arith.mulf %67, %68 : vector<8x8xf32>
    %70 = arith.truncf %69 : vector<8x8xf32> to vector<8x8xbf16>
    %71 = vector.extract_strided_slice %11 {offsets = [0, 16], sizes = [8, 8], strides = [1, 1]} : vector<8x32xf32> to vector<8x8xf32>
    %72 = arith.truncf %71 : vector<8x8xf32> to vector<8x8xbf16>
    %73 = vector.extract_strided_slice %12 {offsets = [0, 16], sizes = [8, 8], strides = [1, 1]} : vector<8x32xf32> to vector<8x8xf32>
    %74 = arith.truncf %73 : vector<8x8xf32> to vector<8x8xbf16>
    "tpu.trace_start"() <{level = 10 : i32, message = "qd,kd->qk"}> : () -> ()
    %cst_28 = arith.constant dense<0.000000e+00> : vector<8x8xf32>
    %75 = tpu.matmul %70, %72, %cst_28 {dimension_numbers = #tpu.dot_dimension_numbers<[1], [1], [0], [0], [0, 0, 1, 0], [], []>} : vector<8x8xbf16>, vector<8x8xbf16>, vector<8x8xf32> -> vector<8x8xf32>
    "tpu.trace_stop"() : () -> ()
    %76 = arith.addf %75, %3 : vector<8x8xf32>
    %cst_29 = arith.constant dense<0xFF800000> : vector<8xf32>
    %77 = vector.multi_reduction <maximumf>, %76, %cst_29 [1] : vector<8x8xf32> to vector<8xf32>
    %78 = vector.shape_cast %77 : vector<8xf32> to vector<8x1xf32>
    %79 = vector.broadcast %78 : vector<8x1xf32> to vector<8x8xf32>
    %80 = arith.subf %76, %79 : vector<8x8xf32>
    %81 = math.exp %80 : vector<8x8xf32>
    %cst_30 = arith.constant dense<0.000000e+00> : vector<8xf32>
    %82 = vector.multi_reduction <add>, %81, %cst_30 [1] : vector<8x8xf32> to vector<8xf32>
    %83 = vector.shape_cast %82 : vector<8xf32> to vector<8x1xf32>
    %84 = tpu.reciprocal %83 {approx = true} : vector<8x1xf32> -> vector<8x1xf32>
    %85 = vector.broadcast %84 : vector<8x1xf32> to vector<8x8xf32>
    %86 = arith.mulf %81, %85 : vector<8x8xf32>
    %87 = arith.truncf %86 : vector<8x8xf32> to vector<8x8xbf16>
    %cst_31 = arith.constant dense<0.000000e+00> : vector<8x8xf32>
    %88 = tpu.matmul %87, %74, %cst_31 {dimension_numbers = #tpu.dot_dimension_numbers<[1], [0], [0], [1], [0, 0, 1, 1], [], []>} : vector<8x8xbf16>, vector<8x8xbf16>, vector<8x8xf32> -> vector<8x8xf32>
    %89 = arith.truncf %88 : vector<8x8xf32> to vector<8x8xbf16>
    %c16 = arith.constant 16 : index
    %c0_32 = arith.constant 0 : index
    %90 = vector.load %arg6[%c16, %c0_32] : memref<32x32xbf16, #tpu.memory_space<vmem>>, vector<8x32xbf16>
    %cst_33 = arith.constant dense<0.000000e+00> : vector<8x32xf32>
    %91 = tpu.matmul %89, %90, %cst_33 {dimension_numbers = #tpu.dot_dimension_numbers<[1], [0], [0], [1], [0, 0, 1, 1], [], []>} : vector<8x8xbf16>, vector<8x32xbf16>, vector<8x32xf32> -> vector<8x32xf32>
    %92 = arith.addf %66, %91 : vector<8x32xf32>
    %93 = vector.extract_strided_slice %10 {offsets = [0, 24], sizes = [8, 8], strides = [1, 1]} : vector<8x32xf32> to vector<8x8xf32>
    %cst_34 = arith.constant 0.353553385 : f32
    %94 = vector.broadcast %cst_34 : f32 to vector<8x8xf32>
    %95 = arith.mulf %93, %94 : vector<8x8xf32>
    %96 = arith.truncf %95 : vector<8x8xf32> to vector<8x8xbf16>
    %97 = vector.extract_strided_slice %11 {offsets = [0, 24], sizes = [8, 8], strides = [1, 1]} : vector<8x32xf32> to vector<8x8xf32>
    %98 = arith.truncf %97 : vector<8x8xf32> to vector<8x8xbf16>
    %99 = vector.extract_strided_slice %12 {offsets = [0, 24], sizes = [8, 8], strides = [1, 1]} : vector<8x32xf32> to vector<8x8xf32>
    %100 = arith.truncf %99 : vector<8x8xf32> to vector<8x8xbf16>
    "tpu.trace_start"() <{level = 10 : i32, message = "qd,kd->qk"}> : () -> ()
    %cst_35 = arith.constant dense<0.000000e+00> : vector<8x8xf32>
    %101 = tpu.matmul %96, %98, %cst_35 {dimension_numbers = #tpu.dot_dimension_numbers<[1], [1], [0], [0], [0, 0, 1, 0], [], []>} : vector<8x8xbf16>, vector<8x8xbf16>, vector<8x8xf32> -> vector<8x8xf32>
    "tpu.trace_stop"() : () -> ()
    %102 = arith.addf %101, %3 : vector<8x8xf32>
    %cst_36 = arith.constant dense<0xFF800000> : vector<8xf32>
    %103 = vector.multi_reduction <maximumf>, %102, %cst_36 [1] : vector<8x8xf32> to vector<8xf32>
    %104 = vector.shape_cast %103 : vector<8xf32> to vector<8x1xf32>
    %105 = vector.broadcast %104 : vector<8x1xf32> to vector<8x8xf32>
    %106 = arith.subf %102, %105 : vector<8x8xf32>
    %107 = math.exp %106 : vector<8x8xf32>
    %cst_37 = arith.constant dense<0.000000e+00> : vector<8xf32>
    %108 = vector.multi_reduction <add>, %107, %cst_37 [1] : vector<8x8xf32> to vector<8xf32>
    %109 = vector.shape_cast %108 : vector<8xf32> to vector<8x1xf32>
    %110 = tpu.reciprocal %109 {approx = true} : vector<8x1xf32> -> vector<8x1xf32>
    %111 = vector.broadcast %110 : vector<8x1xf32> to vector<8x8xf32>
    %112 = arith.mulf %107, %111 : vector<8x8xf32>
    %113 = arith.truncf %112 : vector<8x8xf32> to vector<8x8xbf16>
    %cst_38 = arith.constant dense<0.000000e+00> : vector<8x8xf32>
    %114 = tpu.matmul %113, %100, %cst_38 {dimension_numbers = #tpu.dot_dimension_numbers<[1], [0], [0], [1], [0, 0, 1, 1], [], []>} : vector<8x8xbf16>, vector<8x8xbf16>, vector<8x8xf32> -> vector<8x8xf32>
    %115 = arith.truncf %114 : vector<8x8xf32> to vector<8x8xbf16>
    %c24 = arith.constant 24 : index
    %c0_39 = arith.constant 0 : index
    %116 = vector.load %arg6[%c24, %c0_39] : memref<32x32xbf16, #tpu.memory_space<vmem>>, vector<8x32xbf16>
    %cst_40 = arith.constant dense<0.000000e+00> : vector<8x32xf32>
    %117 = tpu.matmul %115, %116, %cst_40 {dimension_numbers = #tpu.dot_dimension_numbers<[1], [0], [0], [1], [0, 0, 1, 1], [], []>} : vector<8x8xbf16>, vector<8x32xbf16>, vector<8x32xf32> -> vector<8x32xf32>
    %118 = arith.addf %92, %117 : vector<8x32xf32>
    %119 = vector.broadcast %13 : vector<1x32xf32> to vector<8x32xf32>
    %120 = arith.addf %118, %119 : vector<8x32xf32>
    %121 = arith.addf %1, %120 : vector<8x32xf32>
    %c0_41 = arith.constant 0 : index
    %c0_42 = arith.constant 0 : index
    %122 = vector.load %arg8[%c0_41, %c0_42] : memref<1x32xf32, #tpu.memory_space<vmem>>, vector<1x32xf32>
    %c0_43 = arith.constant 0 : index
    %c0_44 = arith.constant 0 : index
    %123 = vector.load %arg9[%c0_43, %c0_44] : memref<1x32xf32, #tpu.memory_space<vmem>>, vector<1x32xf32>
    %cst_45 = arith.constant dense<0.000000e+00> : vector<8xf32>
    %124 = vector.multi_reduction <add>, %121, %cst_45 [1] : vector<8x32xf32> to vector<8xf32>
    %125 = vector.shape_cast %124 : vector<8xf32> to vector<8x1xf32>
    %cst_46 = arith.constant 3.200000e+01 : f32
    %126 = vector.broadcast %cst_46 : f32 to vector<8x1xf32>
    %127 = arith.divf %125, %126 : vector<8x1xf32>
    %128 = vector.broadcast %127 : vector<8x1xf32> to vector<8x32xf32>
    %129 = arith.subf %121, %128 : vector<8x32xf32>
    %130 = arith.mulf %129, %129 : vector<8x32xf32>
    %cst_47 = arith.constant dense<0.000000e+00> : vector<8xf32>
    %131 = vector.multi_reduction <add>, %130, %cst_47 [1] : vector<8x32xf32> to vector<8xf32>
    %132 = vector.shape_cast %131 : vector<8xf32> to vector<8x1xf32>
    %cst_48 = arith.constant 3.200000e+01 : f32
    %133 = vector.broadcast %cst_48 : f32 to vector<8x1xf32>
    %134 = arith.divf %132, %133 : vector<8x1xf32>
    %cst_49 = arith.constant 9.99999974E-6 : f32
    %135 = vector.broadcast %cst_49 : f32 to vector<8x1xf32>
    %136 = arith.addf %134, %135 : vector<8x1xf32>
    %137 = math.rsqrt %136 : vector<8x1xf32>
    %138 = vector.broadcast %137 : vector<8x1xf32> to vector<8x32xf32>
    %139 = arith.mulf %129, %138 : vector<8x32xf32>
    %140 = vector.broadcast %122 : vector<1x32xf32> to vector<8x32xf32>
    %141 = arith.mulf %139, %140 : vector<8x32xf32>
    %142 = vector.broadcast %123 : vector<1x32xf32> to vector<8x32xf32>
    %143 = arith.addf %141, %142 : vector<8x32xf32>
    %c0_50 = arith.constant 0 : index
    %c0_51 = arith.constant 0 : index
    %c0_52 = arith.constant 0 : index
    %144 = vector.load %arg3[%c0_50, %c0_51, %c0_52] : memref<1x16x32xf32, #tpu.memory_space<vmem>>, vector<1x16x32xf32>
    %145 = vector.shape_cast %144 : vector<1x16x32xf32> to vector<16x32xf32>
    %146 = arith.truncf %143 : vector<8x32xf32> to vector<8x32xbf16>
    %c0_53 = arith.constant 0 : index
    %c0_54 = arith.constant 0 : index
    %147 = vector.load %arg10[%c0_53, %c0_54] : memref<32x32xbf16, #tpu.memory_space<vmem>>, vector<32x32xbf16>
    %cst_55 = arith.constant dense<0.000000e+00> : vector<8x32xf32>
    %148 = tpu.matmul %146, %147, %cst_55 {dimension_numbers = #tpu.dot_dimension_numbers<[1], [0], [0], [1], [0, 0, 1, 1], [], []>} : vector<8x32xbf16>, vector<32x32xbf16>, vector<8x32xf32> -> vector<8x32xf32>
    %c0_56 = arith.constant 0 : index
    %c0_57 = arith.constant 0 : index
    %149 = vector.load %arg11[%c0_56, %c0_57] : memref<1x32xf32, #tpu.memory_space<vmem>>, vector<1x32xf32>
    %150 = vector.broadcast %149 : vector<1x32xf32> to vector<8x32xf32>
    %151 = arith.addf %148, %150 : vector<8x32xf32>
    %152 = arith.truncf %145 : vector<16x32xf32> to vector<16x32xbf16>
    %c0_58 = arith.constant 0 : index
    %c0_59 = arith.constant 0 : index
    %153 = vector.load %arg12[%c0_58, %c0_59] : memref<32x64xbf16, #tpu.memory_space<vmem>>, vector<32x64xbf16>
    %cst_60 = arith.constant dense<0.000000e+00> : vector<16x64xf32>
    %154 = tpu.matmul %152, %153, %cst_60 {dimension_numbers = #tpu.dot_dimension_numbers<[1], [0], [0], [1], [0, 0, 1, 1], [], []>} : vector<16x32xbf16>, vector<32x64xbf16>, vector<16x64xf32> -> vector<16x64xf32>
    %c0_61 = arith.constant 0 : index
    %c0_62 = arith.constant 0 : index
    %155 = vector.load %arg13[%c0_61, %c0_62] : memref<1x64xf32, #tpu.memory_space<vmem>>, vector<1x64xf32>
    %156 = vector.broadcast %155 : vector<1x64xf32> to vector<16x64xf32>
    %157 = arith.addf %154, %156 : vector<16x64xf32>
    %158 = vector.extract_strided_slice %157 {offsets = [0, 0], sizes = [16, 32], strides = [1, 1]} : vector<16x64xf32> to vector<16x32xf32>
    %159 = vector.extract_strided_slice %157 {offsets = [0, 32], sizes = [16, 32], strides = [1, 1]} : vector<16x64xf32> to vector<16x32xf32>
    %c0_63 = arith.constant 0 : index
    %c0_64 = arith.constant 0 : index
    %160 = vector.load %arg15[%c0_63, %c0_64] : memref<1x32xf32, #tpu.memory_space<vmem>>, vector<1x32xf32>
    %cst_65 = arith.constant 0.000000e+00 : f32
    %161 = vector.broadcast %cst_65 : f32 to vector<8x32xf32>
    %162 = vector.extract_strided_slice %151 {offsets = [0, 0], sizes = [8, 8], strides = [1, 1]} : vector<8x32xf32> to vector<8x8xf32>
    %cst_66 = arith.constant 0.353553385 : f32
    %163 = vector.broadcast %cst_66 : f32 to vector<8x8xf32>
    %164 = arith.mulf %162, %163 : vector<8x8xf32>
    %165 = arith.truncf %164 : vector<8x8xf32> to vector<8x8xbf16>
    %166 = vector.extract_strided_slice %158 {offsets = [0, 0], sizes = [16, 8], strides = [1, 1]} : vector<16x32xf32> to vector<16x8xf32>
    %167 = arith.truncf %166 : vector<16x8xf32> to vector<16x8xbf16>
    %168 = vector.extract_strided_slice %159 {offsets = [0, 0], sizes = [16, 8], strides = [1, 1]} : vector<16x32xf32> to vector<16x8xf32>
    %169 = arith.truncf %168 : vector<16x8xf32> to vector<16x8xbf16>
    "tpu.trace_start"() <{level = 10 : i32, message = "qd,kd->qk"}> : () -> ()
    %cst_67 = arith.constant dense<0.000000e+00> : vector<8x16xf32>
    %170 = tpu.matmul %165, %167, %cst_67 {dimension_numbers = #tpu.dot_dimension_numbers<[1], [1], [0], [0], [0, 0, 1, 0], [], []>} : vector<8x8xbf16>, vector<16x8xbf16>, vector<8x16xf32> -> vector<8x16xf32>
    "tpu.trace_stop"() : () -> ()
    %cst_68 = arith.constant dense<0xFF800000> : vector<8xf32>
    %171 = vector.multi_reduction <maximumf>, %170, %cst_68 [1] : vector<8x16xf32> to vector<8xf32>
    %172 = vector.shape_cast %171 : vector<8xf32> to vector<8x1xf32>
    %173 = vector.broadcast %172 : vector<8x1xf32> to vector<8x16xf32>
    %174 = arith.subf %170, %173 : vector<8x16xf32>
    %175 = math.exp %174 : vector<8x16xf32>
    %cst_69 = arith.constant dense<0.000000e+00> : vector<8xf32>
    %176 = vector.multi_reduction <add>, %175, %cst_69 [1] : vector<8x16xf32> to vector<8xf32>
    %177 = vector.shape_cast %176 : vector<8xf32> to vector<8x1xf32>
    %178 = tpu.reciprocal %177 {approx = true} : vector<8x1xf32> -> vector<8x1xf32>
    %179 = vector.broadcast %178 : vector<8x1xf32> to vector<8x16xf32>
    %180 = arith.mulf %175, %179 : vector<8x16xf32>
    %181 = arith.truncf %180 : vector<8x16xf32> to vector<8x16xbf16>
    %cst_70 = arith.constant dense<0.000000e+00> : vector<8x8xf32>
    %182 = tpu.matmul %181, %169, %cst_70 {dimension_numbers = #tpu.dot_dimension_numbers<[1], [0], [0], [1], [0, 0, 1, 1], [], []>} : vector<8x16xbf16>, vector<16x8xbf16>, vector<8x8xf32> -> vector<8x8xf32>
    %183 = arith.truncf %182 : vector<8x8xf32> to vector<8x8xbf16>
    %c0_71 = arith.constant 0 : index
    %c0_72 = arith.constant 0 : index
    %184 = vector.load %arg14[%c0_71, %c0_72] : memref<32x32xbf16, #tpu.memory_space<vmem>>, vector<8x32xbf16>
    %cst_73 = arith.constant dense<0.000000e+00> : vector<8x32xf32>
    %185 = tpu.matmul %183, %184, %cst_73 {dimension_numbers = #tpu.dot_dimension_numbers<[1], [0], [0], [1], [0, 0, 1, 1], [], []>} : vector<8x8xbf16>, vector<8x32xbf16>, vector<8x32xf32> -> vector<8x32xf32>
    %186 = arith.addf %161, %185 : vector<8x32xf32>
    %187 = vector.extract_strided_slice %151 {offsets = [0, 8], sizes = [8, 8], strides = [1, 1]} : vector<8x32xf32> to vector<8x8xf32>
    %cst_74 = arith.constant 0.353553385 : f32
    %188 = vector.broadcast %cst_74 : f32 to vector<8x8xf32>
    %189 = arith.mulf %187, %188 : vector<8x8xf32>
    %190 = arith.truncf %189 : vector<8x8xf32> to vector<8x8xbf16>
    %191 = vector.extract_strided_slice %158 {offsets = [0, 8], sizes = [16, 8], strides = [1, 1]} : vector<16x32xf32> to vector<16x8xf32>
    %192 = arith.truncf %191 : vector<16x8xf32> to vector<16x8xbf16>
    %193 = vector.extract_strided_slice %159 {offsets = [0, 8], sizes = [16, 8], strides = [1, 1]} : vector<16x32xf32> to vector<16x8xf32>
    %194 = arith.truncf %193 : vector<16x8xf32> to vector<16x8xbf16>
    "tpu.trace_start"() <{level = 10 : i32, message = "qd,kd->qk"}> : () -> ()
    %cst_75 = arith.constant dense<0.000000e+00> : vector<8x16xf32>
    %195 = tpu.matmul %190, %192, %cst_75 {dimension_numbers = #tpu.dot_dimension_numbers<[1], [1], [0], [0], [0, 0, 1, 0], [], []>} : vector<8x8xbf16>, vector<16x8xbf16>, vector<8x16xf32> -> vector<8x16xf32>
    "tpu.trace_stop"() : () -> ()
    %cst_76 = arith.constant dense<0xFF800000> : vector<8xf32>
    %196 = vector.multi_reduction <maximumf>, %195, %cst_76 [1] : vector<8x16xf32> to vector<8xf32>
    %197 = vector.shape_cast %196 : vector<8xf32> to vector<8x1xf32>
    %198 = vector.broadcast %197 : vector<8x1xf32> to vector<8x16xf32>
    %199 = arith.subf %195, %198 : vector<8x16xf32>
    %200 = math.exp %199 : vector<8x16xf32>
    %cst_77 = arith.constant dense<0.000000e+00> : vector<8xf32>
    %201 = vector.multi_reduction <add>, %200, %cst_77 [1] : vector<8x16xf32> to vector<8xf32>
    %202 = vector.shape_cast %201 : vector<8xf32> to vector<8x1xf32>
    %203 = tpu.reciprocal %202 {approx = true} : vector<8x1xf32> -> vector<8x1xf32>
    %204 = vector.broadcast %203 : vector<8x1xf32> to vector<8x16xf32>
    %205 = arith.mulf %200, %204 : vector<8x16xf32>
    %206 = arith.truncf %205 : vector<8x16xf32> to vector<8x16xbf16>
    %cst_78 = arith.constant dense<0.000000e+00> : vector<8x8xf32>
    %207 = tpu.matmul %206, %194, %cst_78 {dimension_numbers = #tpu.dot_dimension_numbers<[1], [0], [0], [1], [0, 0, 1, 1], [], []>} : vector<8x16xbf16>, vector<16x8xbf16>, vector<8x8xf32> -> vector<8x8xf32>
    %208 = arith.truncf %207 : vector<8x8xf32> to vector<8x8xbf16>
    %c8_79 = arith.constant 8 : index
    %c0_80 = arith.constant 0 : index
    %209 = vector.load %arg14[%c8_79, %c0_80] : memref<32x32xbf16, #tpu.memory_space<vmem>>, vector<8x32xbf16>
    %cst_81 = arith.constant dense<0.000000e+00> : vector<8x32xf32>
    %210 = tpu.matmul %208, %209, %cst_81 {dimension_numbers = #tpu.dot_dimension_numbers<[1], [0], [0], [1], [0, 0, 1, 1], [], []>} : vector<8x8xbf16>, vector<8x32xbf16>, vector<8x32xf32> -> vector<8x32xf32>
    %211 = arith.addf %186, %210 : vector<8x32xf32>
    %212 = vector.extract_strided_slice %151 {offsets = [0, 16], sizes = [8, 8], strides = [1, 1]} : vector<8x32xf32> to vector<8x8xf32>
    %cst_82 = arith.constant 0.353553385 : f32
    %213 = vector.broadcast %cst_82 : f32 to vector<8x8xf32>
    %214 = arith.mulf %212, %213 : vector<8x8xf32>
    %215 = arith.truncf %214 : vector<8x8xf32> to vector<8x8xbf16>
    %216 = vector.extract_strided_slice %158 {offsets = [0, 16], sizes = [16, 8], strides = [1, 1]} : vector<16x32xf32> to vector<16x8xf32>
    %217 = arith.truncf %216 : vector<16x8xf32> to vector<16x8xbf16>
    %218 = vector.extract_strided_slice %159 {offsets = [0, 16], sizes = [16, 8], strides = [1, 1]} : vector<16x32xf32> to vector<16x8xf32>
    %219 = arith.truncf %218 : vector<16x8xf32> to vector<16x8xbf16>
    "tpu.trace_start"() <{level = 10 : i32, message = "qd,kd->qk"}> : () -> ()
    %cst_83 = arith.constant dense<0.000000e+00> : vector<8x16xf32>
    %220 = tpu.matmul %215, %217, %cst_83 {dimension_numbers = #tpu.dot_dimension_numbers<[1], [1], [0], [0], [0, 0, 1, 0], [], []>} : vector<8x8xbf16>, vector<16x8xbf16>, vector<8x16xf32> -> vector<8x16xf32>
    "tpu.trace_stop"() : () -> ()
    %cst_84 = arith.constant dense<0xFF800000> : vector<8xf32>
    %221 = vector.multi_reduction <maximumf>, %220, %cst_84 [1] : vector<8x16xf32> to vector<8xf32>
    %222 = vector.shape_cast %221 : vector<8xf32> to vector<8x1xf32>
    %223 = vector.broadcast %222 : vector<8x1xf32> to vector<8x16xf32>
    %224 = arith.subf %220, %223 : vector<8x16xf32>
    %225 = math.exp %224 : vector<8x16xf32>
    %cst_85 = arith.constant dense<0.000000e+00> : vector<8xf32>
    %226 = vector.multi_reduction <add>, %225, %cst_85 [1] : vector<8x16xf32> to vector<8xf32>
    %227 = vector.shape_cast %226 : vector<8xf32> to vector<8x1xf32>
    %228 = tpu.reciprocal %227 {approx = true} : vector<8x1xf32> -> vector<8x1xf32>
    %229 = vector.broadcast %228 : vector<8x1xf32> to vector<8x16xf32>
    %230 = arith.mulf %225, %229 : vector<8x16xf32>
    %231 = arith.truncf %230 : vector<8x16xf32> to vector<8x16xbf16>
    %cst_86 = arith.constant dense<0.000000e+00> : vector<8x8xf32>
    %232 = tpu.matmul %231, %219, %cst_86 {dimension_numbers = #tpu.dot_dimension_numbers<[1], [0], [0], [1], [0, 0, 1, 1], [], []>} : vector<8x16xbf16>, vector<16x8xbf16>, vector<8x8xf32> -> vector<8x8xf32>
    %233 = arith.truncf %232 : vector<8x8xf32> to vector<8x8xbf16>
    %c16_87 = arith.constant 16 : index
    %c0_88 = arith.constant 0 : index
    %234 = vector.load %arg14[%c16_87, %c0_88] : memref<32x32xbf16, #tpu.memory_space<vmem>>, vector<8x32xbf16>
    %cst_89 = arith.constant dense<0.000000e+00> : vector<8x32xf32>
    %235 = tpu.matmul %233, %234, %cst_89 {dimension_numbers = #tpu.dot_dimension_numbers<[1], [0], [0], [1], [0, 0, 1, 1], [], []>} : vector<8x8xbf16>, vector<8x32xbf16>, vector<8x32xf32> -> vector<8x32xf32>
    %236 = arith.addf %211, %235 : vector<8x32xf32>
    %237 = vector.extract_strided_slice %151 {offsets = [0, 24], sizes = [8, 8], strides = [1, 1]} : vector<8x32xf32> to vector<8x8xf32>
    %cst_90 = arith.constant 0.353553385 : f32
    %238 = vector.broadcast %cst_90 : f32 to vector<8x8xf32>
    %239 = arith.mulf %237, %238 : vector<8x8xf32>
    %240 = arith.truncf %239 : vector<8x8xf32> to vector<8x8xbf16>
    %241 = vector.extract_strided_slice %158 {offsets = [0, 24], sizes = [16, 8], strides = [1, 1]} : vector<16x32xf32> to vector<16x8xf32>
    %242 = arith.truncf %241 : vector<16x8xf32> to vector<16x8xbf16>
    %243 = vector.extract_strided_slice %159 {offsets = [0, 24], sizes = [16, 8], strides = [1, 1]} : vector<16x32xf32> to vector<16x8xf32>
    %244 = arith.truncf %243 : vector<16x8xf32> to vector<16x8xbf16>
    "tpu.trace_start"() <{level = 10 : i32, message = "qd,kd->qk"}> : () -> ()
    %cst_91 = arith.constant dense<0.000000e+00> : vector<8x16xf32>
    %245 = tpu.matmul %240, %242, %cst_91 {dimension_numbers = #tpu.dot_dimension_numbers<[1], [1], [0], [0], [0, 0, 1, 0], [], []>} : vector<8x8xbf16>, vector<16x8xbf16>, vector<8x16xf32> -> vector<8x16xf32>
    "tpu.trace_stop"() : () -> ()
    %cst_92 = arith.constant dense<0xFF800000> : vector<8xf32>
    %246 = vector.multi_reduction <maximumf>, %245, %cst_92 [1] : vector<8x16xf32> to vector<8xf32>
    %247 = vector.shape_cast %246 : vector<8xf32> to vector<8x1xf32>
    %248 = vector.broadcast %247 : vector<8x1xf32> to vector<8x16xf32>
    %249 = arith.subf %245, %248 : vector<8x16xf32>
    %250 = math.exp %249 : vector<8x16xf32>
    %cst_93 = arith.constant dense<0.000000e+00> : vector<8xf32>
    %251 = vector.multi_reduction <add>, %250, %cst_93 [1] : vector<8x16xf32> to vector<8xf32>
    %252 = vector.shape_cast %251 : vector<8xf32> to vector<8x1xf32>
    %253 = tpu.reciprocal %252 {approx = true} : vector<8x1xf32> -> vector<8x1xf32>
    %254 = vector.broadcast %253 : vector<8x1xf32> to vector<8x16xf32>
    %255 = arith.mulf %250, %254 : vector<8x16xf32>
    %256 = arith.truncf %255 : vector<8x16xf32> to vector<8x16xbf16>
    %cst_94 = arith.constant dense<0.000000e+00> : vector<8x8xf32>
    %257 = tpu.matmul %256, %244, %cst_94 {dimension_numbers = #tpu.dot_dimension_numbers<[1], [0], [0], [1], [0, 0, 1, 1], [], []>} : vector<8x16xbf16>, vector<16x8xbf16>, vector<8x8xf32> -> vector<8x8xf32>
    %258 = arith.truncf %257 : vector<8x8xf32> to vector<8x8xbf16>
    %c24_95 = arith.constant 24 : index
    %c0_96 = arith.constant 0 : index
    %259 = vector.load %arg14[%c24_95, %c0_96] : memref<32x32xbf16, #tpu.memory_space<vmem>>, vector<8x32xbf16>
    %cst_97 = arith.constant dense<0.000000e+00> : vector<8x32xf32>
    %260 = tpu.matmul %258, %259, %cst_97 {dimension_numbers = #tpu.dot_dimension_numbers<[1], [0], [0], [1], [0, 0, 1, 1], [], []>} : vector<8x8xbf16>, vector<8x32xbf16>, vector<8x32xf32> -> vector<8x32xf32>
    %261 = arith.addf %236, %260 : vector<8x32xf32>
    %262 = vector.broadcast %160 : vector<1x32xf32> to vector<8x32xf32>
    %263 = arith.addf %261, %262 : vector<8x32xf32>
    %264 = arith.addf %143, %263 : vector<8x32xf32>
    %c0_98 = arith.constant 0 : index
    %c0_99 = arith.constant 0 : index
    %265 = vector.load %arg16[%c0_98, %c0_99] : memref<1x32xf32, #tpu.memory_space<vmem>>, vector<1x32xf32>
    %c0_100 = arith.constant 0 : index
    %c0_101 = arith.constant 0 : index
    %266 = vector.load %arg17[%c0_100, %c0_101] : memref<1x32xf32, #tpu.memory_space<vmem>>, vector<1x32xf32>
    %cst_102 = arith.constant dense<0.000000e+00> : vector<8xf32>
    %267 = vector.multi_reduction <add>, %264, %cst_102 [1] : vector<8x32xf32> to vector<8xf32>
    %268 = vector.shape_cast %267 : vector<8xf32> to vector<8x1xf32>
    %cst_103 = arith.constant 3.200000e+01 : f32
    %269 = vector.broadcast %cst_103 : f32 to vector<8x1xf32>
    %270 = arith.divf %268, %269 : vector<8x1xf32>
    %271 = vector.broadcast %270 : vector<8x1xf32> to vector<8x32xf32>
    %272 = arith.subf %264, %271 : vector<8x32xf32>
    %273 = arith.mulf %272, %272 : vector<8x32xf32>
    %cst_104 = arith.constant dense<0.000000e+00> : vector<8xf32>
    %274 = vector.multi_reduction <add>, %273, %cst_104 [1] : vector<8x32xf32> to vector<8xf32>
    %275 = vector.shape_cast %274 : vector<8xf32> to vector<8x1xf32>
    %cst_105 = arith.constant 3.200000e+01 : f32
    %276 = vector.broadcast %cst_105 : f32 to vector<8x1xf32>
    %277 = arith.divf %275, %276 : vector<8x1xf32>
    %cst_106 = arith.constant 9.99999974E-6 : f32
    %278 = vector.broadcast %cst_106 : f32 to vector<8x1xf32>
    %279 = arith.addf %277, %278 : vector<8x1xf32>
    %280 = math.rsqrt %279 : vector<8x1xf32>
    %281 = vector.broadcast %280 : vector<8x1xf32> to vector<8x32xf32>
    %282 = arith.mulf %272, %281 : vector<8x32xf32>
    %283 = vector.broadcast %265 : vector<1x32xf32> to vector<8x32xf32>
    %284 = arith.mulf %282, %283 : vector<8x32xf32>
    %285 = vector.broadcast %266 : vector<1x32xf32> to vector<8x32xf32>
    %286 = arith.addf %284, %285 : vector<8x32xf32>
    %287 = arith.truncf %286 : vector<8x32xf32> to vector<8x32xbf16>
    %c0_107 = arith.constant 0 : index
    %c0_108 = arith.constant 0 : index
    %288 = vector.load %arg18[%c0_107, %c0_108] : memref<32x128xbf16, #tpu.memory_space<vmem>>, vector<32x128xbf16>
    %cst_109 = arith.constant dense<0.000000e+00> : vector<8x128xf32>
    %289 = tpu.matmul %287, %288, %cst_109 {dimension_numbers = #tpu.dot_dimension_numbers<[1], [0], [0], [1], [0, 0, 1, 1], [], []>} : vector<8x32xbf16>, vector<32x128xbf16>, vector<8x128xf32> -> vector<8x128xf32>
    %c0_110 = arith.constant 0 : index
    %c0_111 = arith.constant 0 : index
    %290 = vector.load %arg19[%c0_110, %c0_111] : memref<1x128xf32, #tpu.memory_space<vmem>>, vector<1x128xf32>
    %291 = vector.broadcast %290 : vector<1x128xf32> to vector<8x128xf32>
    %292 = arith.addf %289, %291 : vector<8x128xf32>
    %cst_112 = arith.constant 0.000000e+00 : f32
    %293 = vector.broadcast %cst_112 : f32 to vector<8x128xf32>
    %294 = arith.maximumf %292, %293 : vector<8x128xf32>
    %295 = arith.truncf %294 : vector<8x128xf32> to vector<8x128xbf16>
    %c0_113 = arith.constant 0 : index
    %c0_114 = arith.constant 0 : index
    %296 = vector.load %arg20[%c0_113, %c0_114] : memref<128x32xbf16, #tpu.memory_space<vmem>>, vector<128x32xbf16>
    %cst_115 = arith.constant dense<0.000000e+00> : vector<8x32xf32>
    %297 = tpu.matmul %295, %296, %cst_115 {dimension_numbers = #tpu.dot_dimension_numbers<[1], [0], [0], [1], [0, 0, 1, 1], [], []>} : vector<8x128xbf16>, vector<128x32xbf16>, vector<8x32xf32> -> vector<8x32xf32>
    %c0_116 = arith.constant 0 : index
    %c0_117 = arith.constant 0 : index
    %298 = vector.load %arg21[%c0_116, %c0_117] : memref<1x32xf32, #tpu.memory_space<vmem>>, vector<1x32xf32>
    %299 = vector.broadcast %298 : vector<1x32xf32> to vector<8x32xf32>
    %300 = arith.addf %297, %299 : vector<8x32xf32>
    %301 = arith.addf %286, %300 : vector<8x32xf32>
    %c0_118 = arith.constant 0 : index
    %c0_119 = arith.constant 0 : index
    %302 = vector.load %arg22[%c0_118, %c0_119] : memref<1x32xf32, #tpu.memory_space<vmem>>, vector<1x32xf32>
    %c0_120 = arith.constant 0 : index
    %c0_121 = arith.constant 0 : index
    %303 = vector.load %arg23[%c0_120, %c0_121] : memref<1x32xf32, #tpu.memory_space<vmem>>, vector<1x32xf32>
    %cst_122 = arith.constant dense<0.000000e+00> : vector<8xf32>
    %304 = vector.multi_reduction <add>, %301, %cst_122 [1] : vector<8x32xf32> to vector<8xf32>
    %305 = vector.shape_cast %304 : vector<8xf32> to vector<8x1xf32>
    %cst_123 = arith.constant 3.200000e+01 : f32
    %306 = vector.broadcast %cst_123 : f32 to vector<8x1xf32>
    %307 = arith.divf %305, %306 : vector<8x1xf32>
    %308 = vector.broadcast %307 : vector<8x1xf32> to vector<8x32xf32>
    %309 = arith.subf %301, %308 : vector<8x32xf32>
    %310 = arith.mulf %309, %309 : vector<8x32xf32>
    %cst_124 = arith.constant dense<0.000000e+00> : vector<8xf32>
    %311 = vector.multi_reduction <add>, %310, %cst_124 [1] : vector<8x32xf32> to vector<8xf32>
    %312 = vector.shape_cast %311 : vector<8xf32> to vector<8x1xf32>
    %cst_125 = arith.constant 3.200000e+01 : f32
    %313 = vector.broadcast %cst_125 : f32 to vector<8x1xf32>
    %314 = arith.divf %312, %313 : vector<8x1xf32>
    %cst_126 = arith.constant 9.99999974E-6 : f32
    %315 = vector.broadcast %cst_126 : f32 to vector<8x1xf32>
    %316 = arith.addf %314, %315 : vector<8x1xf32>
    %317 = math.rsqrt %316 : vector<8x1xf32>
    %318 = vector.broadcast %317 : vector<8x1xf32> to vector<8x32xf32>
    %319 = arith.mulf %309, %318 : vector<8x32xf32>
    %320 = vector.broadcast %302 : vector<1x32xf32> to vector<8x32xf32>
    %321 = arith.mulf %319, %320 : vector<8x32xf32>
    %322 = vector.broadcast %303 : vector<1x32xf32> to vector<8x32xf32>
    %323 = arith.addf %321, %322 : vector<8x32xf32>
    %c0_127 = arith.constant 0 : index
    %c0_128 = arith.constant 0 : index
    %c0_129 = arith.constant 0 : index
    %324 = vector.load %arg24[%c0_127, %c0_128, %c0_129] : memref<1x8x32xf32, #tpu.memory_space<vmem>>, vector<1x8x32xf32>
    %325 = vector.shape_cast %324 : vector<1x8x32xf32> to vector<8x32xf32>
    %326 = vector.shape_cast %323 : vector<8x32xf32> to vector<1x8x32xf32>
    tpu.vector_store %arg24[%c0_127, %c0_128, %c0_129], %326 {strides = array<i32>} : memref<1x8x32xf32, #tpu.memory_space<vmem>>, vector<1x8x32xf32>,
    return
  }
  func.func @transform_0(%arg0: i32) -> (i32, i32, i32) {
    %c0_i32 = arith.constant 0 : i32
    %c0_i32_0 = arith.constant 0 : i32
    %c0_i32_1 = arith.constant 0 : i32
    return %arg0, %c0_i32, %c0_i32_0 : i32, i32, i32
  }
  func.func @transform_1(%arg0: i32) -> (i32, i32, i32) {
    %c0_i32 = arith.constant 0 : i32
    %c0_i32_0 = arith.constant 0 : i32
    %c0_i32_1 = arith.constant 0 : i32
    return %arg0, %c0_i32, %c0_i32_0 : i32, i32, i32
  }
  func.func @transform_2(%arg0: i32) -> (i32, i32, i32) {
    %c0_i32 = arith.constant 0 : i32
    %c0_i32_0 = arith.constant 0 : i32
    %c0_i32_1 = arith.constant 0 : i32
    return %arg0, %c0_i32, %c0_i32_0 : i32, i32, i32
  }
  func.func @transform_3(%arg0: i32) -> (i32, i32) {
    %c0_i32 = arith.constant 0 : i32
    %c0_i32_0 = arith.constant 0 : i32
    %c0_i32_1 = arith.constant 0 : i32
    return %c0_i32, %c0_i32_0 : i32, i32
  }
  func.func @transform_4(%arg0: i32) -> (i32, i32) {
    %c0_i32 = arith.constant 0 : i32
    %c0_i32_0 = arith.constant 0 : i32
    %c0_i32_1 = arith.constant 0 : i32
    return %c0_i32, %c0_i32_0 : i32, i32
  }
  func.func @transform_5(%arg0: i32) -> (i32, i32) {
    %c0_i32 = arith.constant 0 : i32
    %c0_i32_0 = arith.constant 0 : i32
    %c0_i32_1 = arith.constant 0 : i32
    return %c0_i32, %c0_i32_0 : i32, i32
  }
  func.func @transform_6(%arg0: i32) -> (i32, i32) {
    %c0_i32 = arith.constant 0 : i32
    %c0_i32_0 = arith.constant 0 : i32
    %c0_i32_1 = arith.constant 0 : i32
    return %c0_i32, %c0_i32_0 : i32, i32
  }
  func.func @transform_7(%arg0: i32) -> (i32, i32) {
    %c0_i32 = arith.constant 0 : i32
    %c0_i32_0 = arith.constant 0 : i32
    %c0_i32_1 = arith.constant 0 : i32
    return %c0_i32, %c0_i32_0 : i32, i32
  }
  func.func @transform_8(%arg0: i32) -> (i32, i32) {
    %c0_i32 = arith.constant 0 : i32
    %c0_i32_0 = arith.constant 0 : i32
    %c0_i32_1 = arith.constant 0 : i32
    return %c0_i32, %c0_i32_0 : i32, i32
  }
  func.func @transform_9(%arg0: i32) -> (i32, i32) {
    %c0_i32 = arith.constant 0 : i32
    %c0_i32_0 = arith.constant 0 : i32
    %c0_i32_1 = arith.constant 0 : i32
    return %c0_i32, %c0_i32_0 : i32, i32
  }
  func.func @transform_10(%arg0: i32) -> (i32, i32) {
    %c0_i32 = arith.constant 0 : i32
    %c0_i32_0 = arith.constant 0 : i32
    %c0_i32_1 = arith.constant 0 : i32
    return %c0_i32, %c0_i32_0 : i32, i32
  }
  func.func @transform_11(%arg0: i32) -> (i32, i32) {
    %c0_i32 = arith.constant 0 : i32
    %c0_i32_0 = arith.constant 0 : i32
    %c0_i32_1 = arith.constant 0 : i32
    return %c0_i32, %c0_i32_0 : i32, i32
  }
  func.func @transform_12(%arg0: i32) -> (i32, i32) {
    %c0_i32 = arith.constant 0 : i32
    %c0_i32_0 = arith.constant 0 : i32
    %c0_i32_1 = arith.constant 0 : i32
    return %c0_i32, %c0_i32_0 : i32, i32
  }
  func.func @transform_13(%arg0: i32) -> (i32, i32) {
    %c0_i32 = arith.constant 0 : i32
    %c0_i32_0 = arith.constant 0 : i32
    %c0_i32_1 = arith.constant 0 : i32
    return %c0_i32, %c0_i32_0 : i32, i32
  }
  func.func @transform_14(%arg0: i32) -> (i32, i32) {
    %c0_i32 = arith.constant 0 : i32
    %c0_i32_0 = arith.constant 0 : i32
    %c0_i32_1 = arith.constant 0 : i32
    return %c0_i32, %c0_i32_0 : i32, i32
  }
  func.func @transform_15(%arg0: i32) -> (i32, i32) {
    %c0_i32 = arith.constant 0 : i32
    %c0_i32_0 = arith.constant 0 : i32
    %c0_i32_1 = arith.constant 0 : i32
    return %c0_i32, %c0_i32_0 : i32, i32
  }
  func.func @transform_16(%arg0: i32) -> (i32, i32) {
    %c0_i32 = arith.constant 0 : i32
    %c0_i32_0 = arith.constant 0 : i32
    %c0_i32_1 = arith.constant 0 : i32
    return %c0_i32, %c0_i32_0 : i32, i32
  }
  func.func @transform_17(%arg0: i32) -> (i32, i32) {
    %c0_i32 = arith.constant 0 : i32
    %c0_i32_0 = arith.constant 0 : i32
    %c0_i32_1 = arith.constant 0 : i32
    return %c0_i32, %c0_i32_0 : i32, i32
  }
  func.func @transform_18(%arg0: i32) -> (i32, i32) {
    %c0_i32 = arith.constant 0 : i32
    %c0_i32_0 = arith.constant 0 : i32
    %c0_i32_1 = arith.constant 0 : i32
    return %c0_i32, %c0_i32_0 : i32, i32
  }
  func.func @transform_19(%arg0: i32) -> (i32, i32) {
    %c0_i32 = arith.constant 0 : i32
    %c0_i32_0 = arith.constant 0 : i32
    %c0_i32_1 = arith.constant 0 : i32
    return %c0_i32, %c0_i32_0 : i32, i32
  }
  func.func @transform_20(%arg0: i32) -> (i32, i32) {
    %c0_i32 = arith.constant 0 : i32
    %c0_i32_0 = arith.constant 0 : i32
    %c0_i32_1 = arith.constant 0 : i32
    return %c0_i32, %c0_i32_0 : i32, i32
  }
  func.func @transform_21(%arg0: i32) -> (i32, i32) {
    %c0_i32 = arith.constant 0 : i32
    %c0_i32_0 = arith.constant 0 : i32
    %c0_i32_1 = arith.constant 0 : i32
    return %c0_i32, %c0_i32_0 : i32, i32
  }
  func.func @transform_22(%arg0: i32) -> (i32, i32) {
    %c0_i32 = arith.constant 0 : i32
    %c0_i32_0 = arith.constant 0 : i32
    %c0_i32_1 = arith.constant 0 : i32
    return %c0_i32, %c0_i32_0 : i32, i32
  }
  func.func @transform_23(%arg0: i32) -> (i32, i32, i32) {
    %c0_i32 = arith.constant 0 : i32
    %c0_i32_0 = arith.constant 0 : i32
    %c0_i32_1 = arith.constant 0 : i32
    return %arg0, %c0_i32, %c0_i32_0 : i32, i32, i32
  }
}

module attributes {stable_mosaic.version = 11 : i64} {
  func.func @_linear_kernel(%arg0: i32, %arg1: i32, %arg2: i32, %arg3: memref<16x128xf32, #tpu.memory_space<vmem>>, %arg4: memref<128x128xbf16, #tpu.memory_space<vmem>>, %arg5: memref<1x128xf32, #tpu.memory_space<vmem>>, %arg6: memref<16x128xf32, #tpu.memory_space<vmem>>, %arg7: memref<16x128xf32, #tpu.memory_space<vmem>>) attributes {dimension_semantics = [#tpu.dimension_semantics<parallel>, #tpu.dimension_semantics<parallel>, #tpu.dimension_semantics<arbitrary>], iteration_bounds = array<i64: 1, 1, 1>, scalar_prefetch = 0 : i64, scratch_operands = 1 : i64, tpu.core_type = #tpu.core_type<tc>, window_params = [{transform_indices = @transform_0, window_bounds = array<i64: 16, 128>}, {transform_indices = @transform_1, window_bounds = array<i64: 128, 128>}, {transform_indices = @transform_2, window_bounds = array<i64: 1, 128>}, {transform_indices = @transform_3, window_bounds = array<i64: 16, 128>}]} {
    %c0_i32 = arith.constant 0 : i32
    %0 = arith.cmpi eq, %arg2, %c0_i32 : i32
    %1 = arith.extui %0 : i1 to i32
    %c0_i32_0 = arith.constant 0 : i32
    %2 = arith.cmpi ne, %1, %c0_i32_0 : i32
    scf.if %2 {
      %cst_10 = arith.constant 0.000000e+00 : f32
      %13 = vector.broadcast %cst_10 : f32 to vector<16x128xf32>
      %c0_11 = arith.constant 0 : index
      %c0_12 = arith.constant 0 : index
      %14 = vector.load %arg7[%c0_11, %c0_12] : memref<16x128xf32, #tpu.memory_space<vmem>>, vector<16x128xf32>
      tpu.vector_store %arg7[%c0_11, %c0_12], %13 {strides = array<i32>} : memref<16x128xf32, #tpu.memory_space<vmem>>, vector<16x128xf32>,
    } else {
    }
    %c0 = arith.constant 0 : index
    %c0_1 = arith.constant 0 : index
    %3 = vector.load %arg7[%c0, %c0_1] : memref<16x128xf32, #tpu.memory_space<vmem>>, vector<16x128xf32>
    %c0_2 = arith.constant 0 : index
    %c0_3 = arith.constant 0 : index
    %4 = vector.load %arg3[%c0_2, %c0_3] : memref<16x128xf32, #tpu.memory_space<vmem>>, vector<16x128xf32>
    %5 = arith.truncf %4 : vector<16x128xf32> to vector<16x128xbf16>
    %c0_4 = arith.constant 0 : index
    %c0_5 = arith.constant 0 : index
    %6 = vector.load %arg4[%c0_4, %c0_5] : memref<128x128xbf16, #tpu.memory_space<vmem>>, vector<128x128xbf16>
    %cst = arith.constant dense<0.000000e+00> : vector<16x128xf32>
    %7 = tpu.matmul %5, %6, %cst {dimension_numbers = #tpu.dot_dimension_numbers<[1], [0], [0], [1], [0, 0, 1, 1], [], []>} : vector<16x128xbf16>, vector<128x128xbf16>, vector<16x128xf32> -> vector<16x128xf32>
    %8 = arith.addf %3, %7 : vector<16x128xf32>
    %c0_6 = arith.constant 0 : index
    %c0_7 = arith.constant 0 : index
    %9 = vector.load %arg7[%c0_6, %c0_7] : memref<16x128xf32, #tpu.memory_space<vmem>>, vector<16x128xf32>
    tpu.vector_store %arg7[%c0_6, %c0_7], %8 {strides = array<i32>} : memref<16x128xf32, #tpu.memory_space<vmem>>, vector<16x128xf32>,
    %c0_i32_8 = arith.constant 0 : i32
    %10 = arith.cmpi eq, %arg2, %c0_i32_8 : i32
    %11 = arith.extui %10 : i1 to i32
    %c0_i32_9 = arith.constant 0 : i32
    %12 = arith.cmpi ne, %11, %c0_i32_9 : i32
    scf.if %12 {
      %c0_10 = arith.constant 0 : index
      %c0_11 = arith.constant 0 : index
      %13 = vector.load %arg7[%c0_10, %c0_11] : memref<16x128xf32, #tpu.memory_space<vmem>>, vector<16x128xf32>
      %c0_12 = arith.constant 0 : index
      %c0_13 = arith.constant 0 : index
      %14 = vector.load %arg5[%c0_12, %c0_13] : memref<1x128xf32, #tpu.memory_space<vmem>>, vector<1x128xf32>
      %15 = vector.broadcast %14 : vector<1x128xf32> to vector<16x128xf32>
      %16 = arith.addf %13, %15 : vector<16x128xf32>
      %c0_14 = arith.constant 0 : index
      %c0_15 = arith.constant 0 : index
      %17 = vector.load %arg6[%c0_14, %c0_15] : memref<16x128xf32, #tpu.memory_space<vmem>>, vector<16x128xf32>
      tpu.vector_store %arg6[%c0_14, %c0_15], %16 {strides = array<i32>} : memref<16x128xf32, #tpu.memory_space<vmem>>, vector<16x128xf32>,
    } else {
    }
    return
  }
  func.func @transform_0(%arg0: i32, %arg1: i32, %arg2: i32) -> (i32, i32) {
    %c0_i32 = arith.constant 0 : i32
    return %arg0, %arg2 : i32, i32
  }
  func.func @transform_1(%arg0: i32, %arg1: i32, %arg2: i32) -> (i32, i32) {
    %c0_i32 = arith.constant 0 : i32
    return %arg2, %arg1 : i32, i32
  }
  func.func @transform_2(%arg0: i32, %arg1: i32, %arg2: i32) -> (i32, i32) {
    %c0_i32 = arith.constant 0 : i32
    %c0_i32_0 = arith.constant 0 : i32
    return %c0_i32, %arg1 : i32, i32
  }
  func.func @transform_3(%arg0: i32, %arg1: i32, %arg2: i32) -> (i32, i32) {
    %c0_i32 = arith.constant 0 : i32
    return %arg0, %arg1 : i32, i32
  }
}

</mosaic_0001>

<llo_original>
// kernel: vision_encoder_decoder.7
$region0: #{vision_encoder_decoder.7}
  #allocation0 [shape = 'u32[]', space=smem, size = 0x4, offset = 0x4, fixed_abs, tag = 'smem constant byte address 0x4 - core index']
  #allocation1 [shape = 'u32[72,128]{1,0:T(1,128)}', space=vmem, size = 0x9000, scoped, tag = 'internal scratch']
  #allocation2 [shape = 'f32[32,128]{1,0:T(8,128)}', space=vmem, size = 0x4000, scoped, tag = 'scratch operand']
  %s0 = inlined_call_operand.vmem [shape: f32[32,128], index: 0, kind: input, shape index: {}]
  %s1 = inlined_call_operand.vmem [shape: bf16[128,128], index: 1, kind: input, shape index: {}]
  %s2 = inlined_call_operand.vmem [shape: f32[1,128], index: 2, kind: input, shape index: {}]
  %s3 = inlined_call_operand.vmem [shape: f32[32,128], index: 3, kind: output, shape index: {}]
  %s4 = sld [smem:[#allocation0]]
  $region30: #{vision_encoder_decoder.7} parent=0
    _
  %s6 = ssub.s32 1, %s4
  %s7 = scalar_select 0, %s6, %s4
  // Predicated region
  $region2: #{vision_encoder_decoder.7} parent=0 // pred_check
    _
  $region3: #{vision_encoder_decoder.7} parent=0 // pred_check_branch
    %9 = sbr.rel (0) target = $region5
  $region4: #{vision_encoder_decoder.7} parent=0 // pred_region
    _
  $region5: #{vision_encoder_decoder.7} parent=0 // pred_fallthru
    _
  // Predicated region
  $region6: #{vision_encoder_decoder.7} parent=0 // pred_check
    _
  $region7: #{vision_encoder_decoder.7} parent=0 // pred_check_branch
    %11 = sbr.rel (0) target = $region9
  $region8: #{vision_encoder_decoder.7} parent=0 // pred_region
    _
  $region9: #{vision_encoder_decoder.7} parent=0 // pred_fallthru
    _
  // Predicated region
  $region10: #{vision_encoder_decoder.7} parent=0 // pred_check
    _
  $region11: #{vision_encoder_decoder.7} parent=0 // pred_check_branch
    %13 = sbr.rel (0) target = $region13
  $region12: #{vision_encoder_decoder.7} parent=0 // pred_region
    _
  $region13: #{vision_encoder_decoder.7} parent=0 // pred_fallthru
    _
  %p14 = scmp.eq.s32.totalorder 0, 0
  // Predicated region
  $region14: #{vision_encoder_decoder.7} parent=0 // pred_check
    %p15 = pneg %p14
  $region15: #{vision_encoder_decoder.7} parent=0 // pred_check_branch
    %17 = sbr.rel (%p15) target = $region17
  $region16: #{vision_encoder_decoder.7} parent=0 // pred_region
    %18 = vst [vmem:[#allocation2] sm:$0xff] 0.0
    %19 = vst [vmem:[#allocation2 + $0x8] sm:$0xff] 0.0
    %20 = vst [vmem:[#allocation2 + $0x10] sm:$0xff] 0.0
    %21 = vst [vmem:[#allocation2 + $0x18] sm:$0xff] 0.0
  $region17: #{vision_encoder_decoder.7} parent=0 // pred_fallthru
    _
  %v22 = vld [vmem:[#allocation2] sm:$0xff]
  %v23 = vld [vmem:[#allocation2 + $0x8] sm:$0xff]
  %v24 = vld [vmem:[#allocation2 + $0x10] sm:$0xff]
  %v25 = vld [vmem:[#allocation2 + $0x18] sm:$0xff]
  %v26 = vld [vmem:[%s0] sm:$0xff]
  %v27 = vld [vmem:[%s0 + $0x8] sm:$0xff]
  %v28 = vld [vmem:[%s0 + $0x10] sm:$0xff]
  %v29 = vld [vmem:[%s0 + $0x18] sm:$0xff]
  %v30 = vpack.c.bf16 %v27, %v26
  %v31 = vpack.c.bf16 %v29, %v28
  %v32 = vld [vmem:[%s1] sm:$0xf]
  %v33 = vld [vmem:[%s1 + $0x4] sm:$0xf]
  %v34 = vld [vmem:[%s1 + $0x8] sm:$0xf]
  %v35 = vld [vmem:[%s1 + $0xc] sm:$0xf]
  %v36 = vld [vmem:[%s1 + $0x10] sm:$0xf]
  %v37 = vld [vmem:[%s1 + $0x14] sm:$0xf]
  %v38 = vld [vmem:[%s1 + $0x18] sm:$0xf]
  %v39 = vld [vmem:[%s1 + $0x1c] sm:$0xf]
  %v40 = vld [vmem:[%s1 + $0x20] sm:$0xf]
  %v41 = vld [vmem:[%s1 + $0x24] sm:$0xf]
  %v42 = vld [vmem:[%s1 + $0x28] sm:$0xf]
  %v43 = vld [vmem:[%s1 + $0x2c] sm:$0xf]
  %v44 = vld [vmem:[%s1 + $0x30] sm:$0xf]
  %v45 = vld [vmem:[%s1 + $0x34] sm:$0xf]
  %v46 = vld [vmem:[%s1 + $0x38] sm:$0xf]
  %v47 = vld [vmem:[%s1 + $0x3c] sm:$0xf]
  %v64 = vunpack.c.l.b16 %v32
  %v65 = vunpack.c.l.b16 %v33
  %v66 = vunpack.c.l.b16 %v34
  %v67 = vunpack.c.l.b16 %v35
  %v68 = vunpack.c.l.b16 %v36
  %v69 = vunpack.c.l.b16 %v37
  %v70 = vunpack.c.l.b16 %v38
  %v71 = vunpack.c.l.b16 %v39
  %v72 = vunpack.c.l.b16 %v40
  %v73 = vunpack.c.l.b16 %v41
  %v74 = vunpack.c.l.b16 %v42
  %v75 = vunpack.c.l.b16 %v43
  %v76 = vunpack.c.l.b16 %v44
  %v77 = vunpack.c.l.b16 %v45
  %v78 = vunpack.c.l.b16 %v46
  %v79 = vunpack.c.l.b16 %v47
  %v80 = vpack.c.b16 %v65, %v64
  %v81 = vpack.c.b16 %v67, %v66
  %v82 = vpack.c.b16 %v69, %v68
  %v83 = vpack.c.b16 %v71, %v70
  %v84 = vpack.c.b16 %v73, %v72
  %v85 = vpack.c.b16 %v75, %v74
  %v86 = vpack.c.b16 %v77, %v76
  %v87 = vpack.c.b16 %v79, %v78
  %96 = vmatpush.bf16.msra.mxu0 %v87
  %97 = vmatpush.bf16.msra.mxu0 %v86
  %98 = vmatpush.bf16.msra.mxu0 %v85
  %99 = vmatpush.bf16.msra.mxu0 %v84
  %100 = vmatpush.bf16.msra.mxu0 %v83
  %101 = vmatpush.bf16.msra.mxu0 %v82
  %102 = vmatpush.bf16.msra.mxu0 %v81
  %103 = vmatpush.bf16.msra.mxu0 %v80
  %104 = vmatmul.bf16.gmra.mxu0 %v30
  %v105 = vpop.f32.mrf.mxu0
  %v106 = vadd.f32 0.0, %v105
  %v107 = vpop.f32.mrf.mxu0
  %v108 = vadd.f32 0.0, %v107
  %109 = vmatmul.bf16.gmra.mxu0 %v31
  %v110 = vpop.f32.mrf.mxu0
  %v111 = vadd.f32 0.0, %v110
  %v112 = vpop.f32.mrf.mxu0
  %v113 = vadd.f32 0.0, %v112
  %114 = vdwg.mxu0
  %v115 = vadd.f32 %v22, %v106
  %v116 = vadd.f32 %v23, %v108
  %v117 = vadd.f32 %v24, %v111
  %v118 = vadd.f32 %v25, %v113
  %119 = vst [vmem:[#allocation2] sm:$0xff] %v115
  %120 = vst [vmem:[#allocation2 + $0x8] sm:$0xff] %v116
  %121 = vst [vmem:[#allocation2 + $0x10] sm:$0xff] %v117
  %122 = vst [vmem:[#allocation2 + $0x18] sm:$0xff] %v118
  // Predicated region
  $region18: #{vision_encoder_decoder.7} parent=0 // pred_check
    %p123 = pneg %p14
  $region19: #{vision_encoder_decoder.7} parent=0 // pred_check_branch
    %125 = sbr.rel (%p123) target = $region21
  $region20: #{vision_encoder_decoder.7} parent=0 // pred_region
    %v126 = vld [vmem:[#allocation2] sm:$0xff]
    %v127 = vld [vmem:[#allocation2 + $0x8] sm:$0xff]
    %v128 = vld [vmem:[#allocation2 + $0x10] sm:$0xff]
    %v129 = vld [vmem:[#allocation2 + $0x18] sm:$0xff]
    %v130 = vld [vmem:[%s2] sm:$0x1]
    %v132 = vperm.slane %v130, 0
    %v134 = vadd.f32 %v126, %v132
    %v135 = vadd.f32 %v127, %v132
    %v136 = vadd.f32 %v128, %v132
    %v137 = vadd.f32 %v129, %v132
    %138 = vst [vmem:[%s3] sm:$0xff] %v134
    %139 = vst [vmem:[%s3 + $0x8] sm:$0xff] %v135
    %140 = vst [vmem:[%s3 + $0x10] sm:$0xff] %v136
    %141 = vst [vmem:[%s3 + $0x18] sm:$0xff] %v137
  $region21: #{vision_encoder_decoder.7} parent=0 // pred_fallthru
    _
  // Predicated region
  $region22: #{vision_encoder_decoder.7} parent=0 // pred_check
    _
  $region23: #{vision_encoder_decoder.7} parent=0 // pred_check_branch
    %143 = sbr.rel (0) target = $region25
  $region24: #{vision_encoder_decoder.7} parent=0 // pred_region
    _
  $region25: #{vision_encoder_decoder.7} parent=0 // pred_fallthru
    _
  // Predicated region
  $region26: #{vision_encoder_decoder.7} parent=0 // pred_check
    _
  $region27: #{vision_encoder_decoder.7} parent=0 // pred_check_branch
    %145 = sbr.rel (0) target = $region29
  $region28: #{vision_encoder_decoder.7} parent=0 // pred_region
    _
  $region29: #{vision_encoder_decoder.7} parent=0 // pred_fallthru
    _

// kernel: vision_encoder_decoder.9
$region0: #{vision_encoder_decoder.9}
  #allocation0 [shape = 'u32[]', space=smem, size = 0x4, offset = 0x4, fixed_abs, tag = 'smem constant byte address 0x4 - core index']
  #allocation1 [shape = 'u32[72,128]{1,0:T(1,128)}', space=vmem, size = 0x9000, scoped, tag = 'internal scratch']
  %s0 = inlined_call_operand.vmem [shape: f32[2,16,32], index: 0, kind: input, shape index: {}]
  %s1 = inlined_call_operand.vmem [shape: bf16[32,96], index: 1, kind: input, shape index: {}]
  %s2 = inlined_call_operand.vmem [shape: f32[1,96], index: 2, kind: input, shape index: {}]
  %s3 = inlined_call_operand.vmem [shape: bf16[32,32], index: 3, kind: input, shape index: {}]
  %s4 = inlined_call_operand.vmem [shape: f32[1,32], index: 4, kind: input, shape index: {}]
  %s5 = inlined_call_operand.vmem [shape: f32[1,32], index: 5, kind: input, shape index: {}]
  %s6 = inlined_call_operand.vmem [shape: f32[1,32], index: 6, kind: input, shape index: {}]
  %s7 = inlined_call_operand.vmem [shape: bf16[32,128], index: 7, kind: input, shape index: {}]
  %s8 = inlined_call_operand.vmem [shape: f32[1,128], index: 8, kind: input, shape index: {}]
  %s9 = inlined_call_operand.vmem [shape: bf16[128,32], index: 9, kind: input, shape index: {}]
  %s10 = inlined_call_operand.vmem [shape: f32[1,32], index: 10, kind: input, shape index: {}]
  %s11 = inlined_call_operand.vmem [shape: f32[1,32], index: 11, kind: input, shape index: {}]
  %s12 = inlined_call_operand.vmem [shape: f32[1,32], index: 12, kind: input, shape index: {}]
  %s13 = inlined_call_operand.vmem [shape: f32[2,16,32], index: 13, kind: output, shape index: {}]
  %s14 = sld [smem:[#allocation0]]
  $region85: #{vision_encoder_decoder.9} parent=0
    _
  %s16 = ssub.s32 1, %s14
  %s17 = scalar_select 0, %s16, %s14
  loop: start=0, step=1, limit=4
  $region2: #{vision_encoder_decoder.9} parent=0 // loop_pre_header
    _
  $region3: #{vision_encoder_decoder.9} parent=0 // loop_header
    %s19 = sphi 0, %s23
    %p20 = scmp.ge.s32.totalorder %s19, 4
    %s29 = sphi 0, %s31
    %s32 = sphi 0, %s29
    %s33 = sphi 0, %s32
    %s49 = sphi 0, %s33
    %s53 = sphi 0, %s53
    %s55 = sphi 0, %s53
    %s56 = sphi 0, %s55
    %s70 = sphi 0, %s56
    %s74 = sphi 0, %s74
    %s76 = sphi 0, %s74
    %s77 = sphi 0, %s76
    %s91 = sphi 0, %s77
    %s95 = sphi 0, %s95
    %s97 = sphi 0, %s95
    %s98 = sphi 0, %s97
    %s112 = sphi 0, %s98
    %s116 = sphi 0, %s116
    %s118 = sphi 0, %s116
    %s119 = sphi 0, %s118
    %s133 = sphi 0, %s119
    %s137 = sphi 0, %s137
    %s139 = sphi 0, %s137
    %s140 = sphi 0, %s139
    %s154 = sphi 0, %s140
    %s158 = sphi 0, %s158
    %s160 = sphi 0, %s158
    %s161 = sphi 0, %s160
    %s175 = sphi 0, %s161
    %s179 = sphi 0, %s179
    %s181 = sphi 0, %s179
    %s182 = sphi 0, %s181
    %s196 = sphi 0, %s182
    %s200 = sphi 0, %s200
    %s202 = sphi 0, %s200
    %s203 = sphi 0, %s202
    %s217 = sphi 0, %s203
    %s221 = sphi 0, %s221
    %s223 = sphi 0, %s221
    %s224 = sphi 0, %s223
    %s238 = sphi 0, %s224
    %s242 = sphi 0, %s242
    %s244 = sphi 0, %s242
    %s245 = sphi 0, %s244
    %s259 = sphi 0, %s245
    %s263 = sphi 0, %s263
    %s265 = sphi 0, %s263
    %s266 = sphi 0, %s265
    %s280 = sphi 0, %s266
    %s284 = sphi 0, %s284
    %s286 = sphi 0, %s284
    %s287 = sphi 0, %s286
    %s301 = sphi 0, %s287
    %s307 = sphi 0, %s309
    %s310 = sphi 0, %s307
    %s311 = sphi 0, %s310
    %s327 = sphi 0, %s311
  $region4: #{vision_encoder_decoder.9} parent=0 // loop_header_branch
    %22 = sbr.rel (%p20) target = $region8
  $region5: #{vision_encoder_decoder.9} parent=0 // loop_body
    %s24 = ssub.s32 %s19, 1
    %s25 = ssub.s32 %s19, 2
    %s26 = sadd.s32 %s19, 1
    %s27 = ssub.s32 %s19, %s26
    %p28 = scmp.eq.s32.totalorder %s27, 0
    %s30 = sadd.s32 %s29, 1
    %s31 = scalar_select %p28, %s29, %s30
    %p34 = pneg %p28
    %p35 = scmp.eq.s32.totalorder %s19, 1
    %p36 = por %p34, %p35
    %p37 = scmp.ne.s32.totalorder %s29, %s32
    %p38 = scmp.eq.s32.totalorder %s19, 0
    %p39 = por %p37, %p38
    %p40 = scmp.ne.s32.totalorder %s29, %s32
    %p41 = scmp.eq.s32.totalorder %s24, 1
    %p42 = por %p40, %p41
    %p43 = scmp.ne.s32.totalorder %s32, %s33
    %p44 = scmp.eq.s32.totalorder %s24, 0
    %p45 = por %p43, %p44
    %p46 = scmp.ne.s32.totalorder %s32, %s33
    %p47 = scmp.eq.s32.totalorder %s25, 1
    %p48 = por %p46, %p47
    %p50 = scmp.ne.s32.totalorder %s33, %s49
    %p51 = scmp.eq.s32.totalorder %s25, 0
    %p52 = por %p50, %p51
    %s54 = sadd.s32 %s53, 1
    %p57 = scmp.eq.s32.totalorder %s19, 1
    %p58 = scmp.ne.s32.totalorder %s53, %s55
    %p59 = scmp.eq.s32.totalorder %s19, 0
    %p60 = por %p58, %p59
    %p61 = scmp.ne.s32.totalorder %s53, %s55
    %p62 = scmp.eq.s32.totalorder %s24, 1
    %p63 = por %p61, %p62
    %p64 = scmp.ne.s32.totalorder %s55, %s56
    %p65 = scmp.eq.s32.totalorder %s24, 0
    %p66 = por %p64, %p65
    %p67 = scmp.ne.s32.totalorder %s55, %s56
    %p68 = scmp.eq.s32.totalorder %s25, 1
    %p69 = por %p67, %p68
    %p71 = scmp.ne.s32.totalorder %s56, %s70
    %p72 = scmp.eq.s32.totalorder %s25, 0
    %p73 = por %p71, %p72
    %s75 = sadd.s32 %s74, 1
    %p78 = scmp.eq.s32.totalorder %s19, 1
    %p79 = scmp.ne.s32.totalorder %s74, %s76
    %p80 = scmp.eq.s32.totalorder %s19, 0
    %p81 = por %p79, %p80
    %p82 = scmp.ne.s32.totalorder %s74, %s76
    %p83 = scmp.eq.s32.totalorder %s24, 1
    %p84 = por %p82, %p83
    %p85 = scmp.ne.s32.totalorder %s76, %s77
    %p86 = scmp.eq.s32.totalorder %s24, 0
    %p87 = por %p85, %p86
    %p88 = scmp.ne.s32.totalorder %s76, %s77
    %p89 = scmp.eq.s32.totalorder %s25, 1
    %p90 = por %p88, %p89
    %p92 = scmp.ne.s32.totalorder %s77, %s91
    %p93 = scmp.eq.s32.totalorder %s25, 0
    %p94 = por %p92, %p93
    %s96 = sadd.s32 %s95, 1
    %p99 = scmp.eq.s32.totalorder %s19, 1
    %p100 = scmp.ne.s32.totalorder %s95, %s97
    %p101 = scmp.eq.s32.totalorder %s19, 0
    %p102 = por %p100, %p101
    %p103 = scmp.ne.s32.totalorder %s95, %s97
    %p104 = scmp.eq.s32.totalorder %s24, 1
    %p105 = por %p103, %p104
    %p106 = scmp.ne.s32.totalorder %s97, %s98
    %p107 = scmp.eq.s32.totalorder %s24, 0
    %p108 = por %p106, %p107
    %p109 = scmp.ne.s32.totalorder %s97, %s98
    %p110 = scmp.eq.s32.totalorder %s25, 1
    %p111 = por %p109, %p110
    %p113 = scmp.ne.s32.totalorder %s98, %s112
    %p114 = scmp.eq.s32.totalorder %s25, 0
    %p115 = por %p113, %p114
    %s117 = sadd.s32 %s116, 1
    %p120 = scmp.eq.s32.totalorder %s19, 1
    %p121 = scmp.ne.s32.totalorder %s116, %s118
    %p122 = scmp.eq.s32.totalorder %s19, 0
    %p123 = por %p121, %p122
    %p124 = scmp.ne.s32.totalorder %s116, %s118
    %p125 = scmp.eq.s32.totalorder %s24, 1
    %p126 = por %p124, %p125
    %p127 = scmp.ne.s32.totalorder %s118, %s119
    %p128 = scmp.eq.s32.totalorder %s24, 0
    %p129 = por %p127, %p128
    %p130 = scmp.ne.s32.totalorder %s118, %s119
    %p131 = scmp.eq.s32.totalorder %s25, 1
    %p132 = por %p130, %p131
    %p134 = scmp.ne.s32.totalorder %s119, %s133
    %p135 = scmp.eq.s32.totalorder %s25, 0
    %p136 = por %p134, %p135
    %s138 = sadd.s32 %s137, 1
    %p141 = scmp.eq.s32.totalorder %s19, 1
    %p142 = scmp.ne.s32.totalorder %s137, %s139
    %p143 = scmp.eq.s32.totalorder %s19, 0
    %p144 = por %p142, %p143
    %p145 = scmp.ne.s32.totalorder %s137, %s139
    %p146 = scmp.eq.s32.totalorder %s24, 1
    %p147 = por %p145, %p146
    %p148 = scmp.ne.s32.totalorder %s139, %s140
    %p149 = scmp.eq.s32.totalorder %s24, 0
    %p150 = por %p148, %p149
    %p151 = scmp.ne.s32.totalorder %s139, %s140
    %p152 = scmp.eq.s32.totalorder %s25, 1
    %p153 = por %p151, %p152
    %p155 = scmp.ne.s32.totalorder %s140, %s154
    %p156 = scmp.eq.s32.totalorder %s25, 0
    %p157 = por %p155, %p156
    %s159 = sadd.s32 %s158, 1
    %p162 = scmp.eq.s32.totalorder %s19, 1
    %p163 = scmp.ne.s32.totalorder %s158, %s160
    %p164 = scmp.eq.s32.totalorder %s19, 0
    %p165 = por %p163, %p164
    %p166 = scmp.ne.s32.totalorder %s158, %s160
    %p167 = scmp.eq.s32.totalorder %s24, 1
    %p168 = por %p166, %p167
    %p169 = scmp.ne.s32.totalorder %s160, %s161
    %p170 = scmp.eq.s32.totalorder %s24, 0
    %p171 = por %p169, %p170
    %p172 = scmp.ne.s32.totalorder %s160, %s161
    %p173 = scmp.eq.s32.totalorder %s25, 1
    %p174 = por %p172, %p173
    %p176 = scmp.ne.s32.totalorder %s161, %s175
    %p177 = scmp.eq.s32.totalorder %s25, 0
    %p178 = por %p176, %p177
    %s180 = sadd.s32 %s179, 1
    %p183 = scmp.eq.s32.totalorder %s19, 1
    %p184 = scmp.ne.s32.totalorder %s179, %s181
    %p185 = scmp.eq.s32.totalorder %s19, 0
    %p186 = por %p184, %p185
    %p187 = scmp.ne.s32.totalorder %s179, %s181
    %p188 = scmp.eq.s32.totalorder %s24, 1
    %p189 = por %p187, %p188
    %p190 = scmp.ne.s32.totalorder %s181, %s182
    %p191 = scmp.eq.s32.totalorder %s24, 0
    %p192 = por %p190, %p191
    %p193 = scmp.ne.s32.totalorder %s181, %s182
    %p194 = scmp.eq.s32.totalorder %s25, 1
    %p195 = por %p193, %p194
    %p197 = scmp.ne.s32.totalorder %s182, %s196
    %p198 = scmp.eq.s32.totalorder %s25, 0
    %p199 = por %p197, %p198
    %s201 = sadd.s32 %s200, 1
    %p204 = scmp.eq.s32.totalorder %s19, 1
    %p205 = scmp.ne.s32.totalorder %s200, %s202
    %p206 = scmp.eq.s32.totalorder %s19, 0
    %p207 = por %p205, %p206
    %p208 = scmp.ne.s32.totalorder %s200, %s202
    %p209 = scmp.eq.s32.totalorder %s24, 1
    %p210 = por %p208, %p209
    %p211 = scmp.ne.s32.totalorder %s202, %s203
    %p212 = scmp.eq.s32.totalorder %s24, 0
    %p213 = por %p211, %p212
    %p214 = scmp.ne.s32.totalorder %s202, %s203
    %p215 = scmp.eq.s32.totalorder %s25, 1
    %p216 = por %p214, %p215
    %p218 = scmp.ne.s32.totalorder %s203, %s217
    %p219 = scmp.eq.s32.totalorder %s25, 0
    %p220 = por %p218, %p219
    %s222 = sadd.s32 %s221, 1
    %p225 = scmp.eq.s32.totalorder %s19, 1
    %p226 = scmp.ne.s32.totalorder %s221, %s223
    %p227 = scmp.eq.s32.totalorder %s19, 0
    %p228 = por %p226, %p227
    %p229 = scmp.ne.s32.totalorder %s221, %s223
    %p230 = scmp.eq.s32.totalorder %s24, 1
    %p231 = por %p229, %p230
    %p232 = scmp.ne.s32.totalorder %s223, %s224
    %p233 = scmp.eq.s32.totalorder %s24, 0
    %p234 = por %p232, %p233
    %p235 = scmp.ne.s32.totalorder %s223, %s224
    %p236 = scmp.eq.s32.totalorder %s25, 1
    %p237 = por %p235, %p236
    %p239 = scmp.ne.s32.totalorder %s224, %s238
    %p240 = scmp.eq.s32.totalorder %s25, 0
    %p241 = por %p239, %p240
    %s243 = sadd.s32 %s242, 1
    %p246 = scmp.eq.s32.totalorder %s19, 1
    %p247 = scmp.ne.s32.totalorder %s242, %s244
    %p248 = scmp.eq.s32.totalorder %s19, 0
    %p249 = por %p247, %p248
    %p250 = scmp.ne.s32.totalorder %s242, %s244
    %p251 = scmp.eq.s32.totalorder %s24, 1
    %p252 = por %p250, %p251
    %p253 = scmp.ne.s32.totalorder %s244, %s245
    %p254 = scmp.eq.s32.totalorder %s24, 0
    %p255 = por %p253, %p254
    %p256 = scmp.ne.s32.totalorder %s244, %s245
    %p257 = scmp.eq.s32.totalorder %s25, 1
    %p258 = por %p256, %p257
    %p260 = scmp.ne.s32.totalorder %s245, %s259
    %p261 = scmp.eq.s32.totalorder %s25, 0
    %p262 = por %p260, %p261
    %s264 = sadd.s32 %s263, 1
    %p267 = scmp.eq.s32.totalorder %s19, 1
    %p268 = scmp.ne.s32.totalorder %s263, %s265
    %p269 = scmp.eq.s32.totalorder %s19, 0
    %p270 = por %p268, %p269
    %p271 = scmp.ne.s32.totalorder %s263, %s265
    %p272 = scmp.eq.s32.totalorder %s24, 1
    %p273 = por %p271, %p272
    %p274 = scmp.ne.s32.totalorder %s265, %s266
    %p275 = scmp.eq.s32.totalorder %s24, 0
    %p276 = por %p274, %p275
    %p277 = scmp.ne.s32.totalorder %s265, %s266
    %p278 = scmp.eq.s32.totalorder %s25, 1
    %p279 = por %p277, %p278
    %p281 = scmp.ne.s32.totalorder %s266, %s280
    %p282 = scmp.eq.s32.totalorder %s25, 0
    %p283 = por %p281, %p282
    %s285 = sadd.s32 %s284, 1
    %p288 = scmp.eq.s32.totalorder %s19, 1
    %p289 = scmp.ne.s32.totalorder %s284, %s286
    %p290 = scmp.eq.s32.totalorder %s19, 0
    %p291 = por %p289, %p290
    %p292 = scmp.ne.s32.totalorder %s284, %s286
    %p293 = scmp.eq.s32.totalorder %s24, 1
    %p294 = por %p292, %p293
    %p295 = scmp.ne.s32.totalorder %s286, %s287
    %p296 = scmp.eq.s32.totalorder %s24, 0
    %p297 = por %p295, %p296
    %p298 = scmp.ne.s32.totalorder %s286, %s287
    %p299 = scmp.eq.s32.totalorder %s25, 1
    %p300 = por %p298, %p299
    %p302 = scmp.ne.s32.totalorder %s287, %s301
    %p303 = scmp.eq.s32.totalorder %s25, 0
    %p304 = por %p302, %p303
    %s305 = ssub.s32 %s19, %s26
    %p306 = scmp.eq.s32.totalorder %s305, 0
    %s308 = sadd.s32 %s307, 1
    %s309 = scalar_select %p306, %s307, %s308
    %p312 = pneg %p306
    %p313 = scmp.eq.s32.totalorder %s19, 1
    %p314 = por %p312, %p313
    %p315 = scmp.ne.s32.totalorder %s307, %s310
    %p316 = scmp.eq.s32.totalorder %s19, 0
    %p317 = por %p315, %p316
    %p318 = scmp.ne.s32.totalorder %s307, %s310
    %p319 = scmp.eq.s32.totalorder %s24, 1
    %p320 = por %p318, %p319
    %p321 = scmp.ne.s32.totalorder %s310, %s311
    %p322 = scmp.eq.s32.totalorder %s24, 0
    %p323 = por %p321, %p322
    %p324 = scmp.ne.s32.totalorder %s310, %s311
    %p325 = scmp.eq.s32.totalorder %s25, 1
    %p326 = por %p324, %p325
    %p328 = scmp.ne.s32.totalorder %s311, %s327
    %p329 = scmp.eq.s32.totalorder %s25, 0
    %p330 = por %p328, %p329
    %p331 = scmp.le.s32.totalorder 1, %s19
    %p332 = scmp.lt.s32.totalorder %s19, 3
    %p333 = pnand %p331, %p332
    %p334 = pneg %p333
    // Predicated region
    $region9: #{vision_encoder_decoder.9} parent=5 // pred_check
      _
    $region10: #{vision_encoder_decoder.9} parent=5 // pred_check_branch
      %336 = sbr.rel (%p333) target = $region12
    $region11: #{vision_encoder_decoder.9} parent=5 // pred_region
      %s337 = ssub.s32 %s19, 1
      // Predicated region
      $region13: #{vision_encoder_decoder.9} parent=11 // pred_check
        %p338 = pneg %p66
      $region14: #{vision_encoder_decoder.9} parent=11 // pred_check_branch
        %340 = sbr.rel (%p338) target = $region16
      $region15: #{vision_encoder_decoder.9} parent=11 // pred_region
        _
      $region16: #{vision_encoder_decoder.9} parent=11 // pred_fallthru
        _
      // Predicated region
      $region17: #{vision_encoder_decoder.9} parent=11 // pred_check
        %p341 = pneg %p87
      $region18: #{vision_encoder_decoder.9} parent=11 // pred_check_branch
        %343 = sbr.rel (%p341) target = $region20
      $region19: #{vision_encoder_decoder.9} parent=11 // pred_region
        _
      $region20: #{vision_encoder_decoder.9} parent=11 // pred_fallthru
        _
      // Predicated region
      $region21: #{vision_encoder_decoder.9} parent=11 // pred_check
        %p344 = pneg %p108
      $region22: #{vision_encoder_decoder.9} parent=11 // pred_check_branch
        %346 = sbr.rel (%p344) target = $region24
      $region23: #{vision_encoder_decoder.9} parent=11 // pred_region
        _
      $region24: #{vision_encoder_decoder.9} parent=11 // pred_fallthru
        _
      // Predicated region
      $region25: #{vision_encoder_decoder.9} parent=11 // pred_check
        %p347 = pneg %p129
      $region26: #{vision_encoder_decoder.9} parent=11 // pred_check_branch
        %349 = sbr.rel (%p347) target = $region28
      $region27: #{vision_encoder_decoder.9} parent=11 // pred_region
        _
      $region28: #{vision_encoder_decoder.9} parent=11 // pred_fallthru
        _
      // Predicated region
      $region29: #{vision_encoder_decoder.9} parent=11 // pred_check
        %p350 = pneg %p150
      $region30: #{vision_encoder_decoder.9} parent=11 // pred_check_branch
        %352 = sbr.rel (%p350) target = $region32
      $region31: #{vision_encoder_decoder.9} parent=11 // pred_region
        _
      $region32: #{vision_encoder_decoder.9} parent=11 // pred_fallthru
        _
      // Predicated region
      $region33: #{vision_encoder_decoder.9} parent=11 // pred_check
        %p353 = pneg %p171
      $region34: #{vision_encoder_decoder.9} parent=11 // pred_check_branch
        %355 = sbr.rel (%p353) target = $region36
      $region35: #{vision_encoder_decoder.9} parent=11 // pred_region
        _
      $region36: #{vision_encoder_decoder.9} parent=11 // pred_fallthru
        _
      // Predicated region
      $region37: #{vision_encoder_decoder.9} parent=11 // pred_check
        %p356 = pneg %p192
      $region38: #{vision_encoder_decoder.9} parent=11 // pred_check_branch
        %358 = sbr.rel (%p356) target = $region40
      $region39: #{vision_encoder_decoder.9} parent=11 // pred_region
        _
      $region40: #{vision_encoder_decoder.9} parent=11 // pred_fallthru
        _
      // Predicated region
      $region41: #{vision_encoder_decoder.9} parent=11 // pred_check
        %p359 = pneg %p213
      $region42: #{vision_encoder_decoder.9} parent=11 // pred_check_branch
        %361 = sbr.rel (%p359) target = $region44
      $region43: #{vision_encoder_decoder.9} parent=11 // pred_region
        _
      $region44: #{vision_encoder_decoder.9} parent=11 // pred_fallthru
        _
      // Predicated region
      $region45: #{vision_encoder_decoder.9} parent=11 // pred_check
        %p362 = pneg %p234
      $region46: #{vision_encoder_decoder.9} parent=11 // pred_check_branch
        %364 = sbr.rel (%p362) target = $region48
      $region47: #{vision_encoder_decoder.9} parent=11 // pred_region
        _
      $region48: #{vision_encoder_decoder.9} parent=11 // pred_fallthru
        _
      // Predicated region
      $region49: #{vision_encoder_decoder.9} parent=11 // pred_check
        %p365 = pneg %p255
      $region50: #{vision_encoder_decoder.9} parent=11 // pred_check_branch
        %367 = sbr.rel (%p365) target = $region52
      $region51: #{vision_encoder_decoder.9} parent=11 // pred_region
        _
      $region52: #{vision_encoder_decoder.9} parent=11 // pred_fallthru
        _
      // Predicated region
      $region53: #{vision_encoder_decoder.9} parent=11 // pred_check
        %p368 = pneg %p276
      $region54: #{vision_encoder_decoder.9} parent=11 // pred_check_branch
        %370 = sbr.rel (%p368) target = $region56
      $region55: #{vision_encoder_decoder.9} parent=11 // pred_region
        _
      $region56: #{vision_encoder_decoder.9} parent=11 // pred_fallthru
        _
      // Predicated region
      $region57: #{vision_encoder_decoder.9} parent=11 // pred_check
        %p371 = pneg %p297
      $region58: #{vision_encoder_decoder.9} parent=11 // pred_check_branch
        %373 = sbr.rel (%p371) target = $region60
      $region59: #{vision_encoder_decoder.9} parent=11 // pred_region
        _
      $region60: #{vision_encoder_decoder.9} parent=11 // pred_fallthru
        _
    $region12: #{vision_encoder_decoder.9} parent=5 // pred_fallthru
      _
    %p374 = scmp.lt.s32.totalorder %s19, 2
    // Predicated region
    $region61: #{vision_encoder_decoder.9} parent=5 // pred_check
      %p375 = pneg %p374
    $region62: #{vision_encoder_decoder.9} parent=5 // pred_check_branch
      %377 = sbr.rel (%p375) target = $region64
    $region63: #{vision_encoder_decoder.9} parent=5 // pred_region
      // Predicated region
      $region65: #{vision_encoder_decoder.9} parent=63 // pred_check
        %p378 = pneg %p39
      $region66: #{vision_encoder_decoder.9} parent=63 // pred_check_branch
        %380 = sbr.rel (%p378) target = $region68
      $region67: #{vision_encoder_decoder.9} parent=63 // pred_region
        %p381 = scmp.lt.s32.totalorder %s19, 1
        %s382 = scalar_select %p381, %s19, 1
        %s383 = smul.addr %s382, 2
        %s384 = smul.addr %s383, 8
        %s385 = scalar_lea.vmem %s0, %s384
      $region68: #{vision_encoder_decoder.9} parent=63 // pred_fallthru
        _
    $region64: #{vision_encoder_decoder.9} parent=5 // pred_fallthru
      _
    %p386 = scmp.le.s32.totalorder 1, %s19
    %p387 = scmp.lt.s32.totalorder %s19, 3
    %p388 = pnand %p386, %p387
    %p389 = pneg %p388
    // Predicated region
    $region69: #{vision_encoder_decoder.9} parent=5 // pred_check
      _
    $region70: #{vision_encoder_decoder.9} parent=5 // pred_check_branch
      %391 = sbr.rel (%p388) target = $region72
    $region71: #{vision_encoder_decoder.9} parent=5 // pred_region
      %s392 = ssub.s32 %s19, 1
      %p393 = scmp.lt.s32.totalorder %s24, 1
      %s394 = scalar_select %p393, %s24, 1
      %s395 = smul.addr %s394, 2
      %s396 = smul.addr %s395, 8
      %s397 = scalar_lea.vmem %s0, %s396
      %p398 = pneg %p45
      %p399 = pneg %p42
      %p400 = pneg %p66
      %p401 = pneg %p63
      %p402 = pneg %p87
      %p403 = pneg %p84
      %p404 = pneg %p108
      %p405 = pneg %p105
      %p406 = pneg %p129
      %p407 = pneg %p126
      %p408 = pneg %p150
      %p409 = pneg %p147
      %p410 = pneg %p171
      %p411 = pneg %p168
      %p412 = pneg %p192
      %p413 = pneg %p189
      %p414 = pneg %p213
      %p415 = pneg %p210
      %p416 = pneg %p234
      %p417 = pneg %p231
      %p418 = pneg %p255
      %p419 = pneg %p252
      %p420 = pneg %p276
      %p421 = pneg %p273
      %p422 = pneg %p297
      %p423 = pneg %p294
      %p424 = pneg %p323
      %p425 = pneg %p320
      %p426 = scmp.lt.s32.totalorder %s24, 1
      %s427 = scalar_select %p426, %s24, 1
      %s428 = smul.addr %s427, 2
      %s429 = smul.addr %s428, 8
      %s430 = scalar_lea.vmem %s13, %s429
      %p431 = scmp.lt.s32.totalorder %s24, 1
      %s432 = scalar_select %p431, %s24, 1
      %s433 = smul.addr %s432, 2
      %s434 = smul.addr %s433, 8
      %s435 = scalar_lea.vmem %s0, %s434
      %p436 = scmp.lt.s32.totalorder %s24, 1
      %s437 = scalar_select %p436, %s24, 1
      %s438 = smul.addr %s437, 2
      %s439 = smul.addr %s438, 8
      %s440 = scalar_lea.vmem %s13, %s439
      %v442 = vld [vmem:[%s435] sm:$0xff]
      %v443 = vld [vmem:[%s435 + $0x8] sm:$0xff]
      %v444 = vpack.c.bf16 %v443, %v442
      %v445 = vld [vmem:[%s1] sm:$0xf]
      %v446 = vld [vmem:[%s1 + $0x4] sm:$0xf]
      %v447 = vld [vmem:[%s1 + $0x8] sm:$0xf]
      %v448 = vld [vmem:[%s1 + $0xc] sm:$0xf]
      %v449 = vld [vmem:[%s2] sm:$0x1]
      %v451 = vperm.slane %v449, 0
      %v457 = vunpack.c.l.b16 %v445
      %v458 = vunpack.c.l.b16 %v446
      %v459 = vunpack.c.l.b16 %v447
      %v460 = vunpack.c.l.b16 %v448
      %v461 = vpack.c.b16 %v458, %v457
      %v462 = vpack.c.b16 %v460, %v459
      %vm465 = vcmask 261120
      %v467 = vsel %vm465, %v444, 0
      %469 = vmatpush.bf16.msra.mxu0 0
      %470 = vmatpush.bf16.msra.mxu0 0
      %471 = vmatpush.bf16.msra.mxu0 0
      %472 = vmatpush.bf16.msra.mxu0 0
      %473 = vmatpush.bf16.msra.mxu0 0
      %474 = vmatpush.bf16.msra.mxu0 0
      %475 = vmatpush.bf16.msra.mxu0 %v462
      %476 = vmatpush.bf16.msra.mxu0 %v461
      %477 = vmatmul.bf16.gmra.mxu0 %v467
      %v478 = vpop.f32.mrf.mxu0
      %v479 = vadd.f32 %v451, %v478
      %v480 = vpop.f32.mrf.mxu0
      %v481 = vadd.f32 %v451, %v480
      %482 = vdwg.mxu0
      %v483 = vld [vmem:[%s4] sm:$0x1]
      %v484 = vmul.f32 %v479, 0.35355338
      %v485 = vmul.f32 %v481, 0.35355338
      %v486 = vpack.c.bf16 %v485, %v484
      %v487 = vpack.c.bf16 %v481, %v479
      %489 = vrot.lane.b32.xlu0 %v487, 96
      %v490 = vpop.permute.xlu0 %489
      %vm491 = vcmask 64512
      %v493 = vsel %vm491, %v486, 0
      %v496 = vsel %vm491, %v490, 0
      %498 = vmatpush.bf16.xpose.msra.mxu0 0
      %499 = vmatpush.bf16.xpose.msra.mxu0 0
      %500 = vmatpush.bf16.xpose.msra.mxu0 0
      %501 = vmatpush.bf16.xpose.msra.mxu0 0
      %502 = vmatpush.bf16.xpose.msra.mxu0 0
      %503 = vmatpush.bf16.xpose.msra.mxu0 0
      %504 = vmatpush.bf16.xpose.msra.mxu0 0
      %505 = vmatpush.bf16.xpose.msra.mxu0 %v496
      %506 = vmatmul.bf16.gmra.mxu0 %v493
      %v507 = vpop.f32.mrf.mxu0
      %v508 = vadd.f32 0.0, %v507
      %v509 = vpop.f32.mrf.mxu0
      %v510 = vadd.f32 0.0, %v509
      %511 = vdwg.mxu0
      %vm512 = vcmask 130048
      %v513 = vsel %vm512, %v508, -inf
      %514 = vmax.xlane.f32.xlu0 %v513
      %v515 = vpop.xlane.xlu0 %514
      %v516 = vsel %vm512, %v510, -inf
      %517 = vmax.xlane.f32.xlu0 %v516
      %v518 = vpop.xlane.xlu0 %517
      %v519 = vsub.f32 %v508, %v515
      %v520 = vsub.f32 %v510, %v518
      %v521 = vmul.f32 %v519, 1.442695
      %v522 = vpow.pop %v521
      %v523 = vmul.f32 %v520, 1.442695
      %v524 = vpow.pop %v523
      %v525 = vsel %vm512, %v522, 0.0
      %526 = vadd.xlane.f32.xlu0 %v525
      %v527 = vpop.xlane.xlu0 %526
      %v528 = vsel %vm512, %v524, 0.0
      %529 = vadd.xlane.f32.xlu0 %v528
      %v530 = vpop.xlane.xlu0 %529
      %v531 = vrcp.pop %v527
      %v532 = vrcp.pop %v530
      %v533 = vmul.f32 %v522, %v531
      %v534 = vmul.f32 %v524, %v532
      %v535 = vpack.c.bf16 %v534, %v533
      %536 = vrot.lane.b32.xlu0 %v487, 64
      %v537 = vpop.permute.xlu0 %536
      %v540 = vsel %vm512, %v535, 0
      %542 = vmatpush.bf16.msra.mxu0 0
      %543 = vmatpush.bf16.msra.mxu0 0
      %544 = vmatpush.bf16.msra.mxu0 0
      %545 = vmatpush.bf16.msra.mxu0 0
      %546 = vmatpush.bf16.msra.mxu0 0
      %547 = vmatpush.bf16.msra.mxu0 0
      %548 = vmatpush.bf16.msra.mxu0 0
      %549 = vmatpush.bf16.msra.mxu0 %v537
      %550 = vmatmul.bf16.gmra.mxu0 %v540
      %v551 = vpop.f32.mrf.mxu0
      %v552 = vadd.f32 0.0, %v551
      %v553 = vpop.f32.mrf.mxu0
      %v554 = vadd.f32 0.0, %v553
      %555 = vdwg.mxu0
      %v556 = vpack.c.bf16 %v554, %v552
      %v557 = vld [vmem:[%s3] sm:$0xf]
      %559 = vrot.lane.b32.xlu0 %v486, 120
      %v560 = vpop.permute.xlu0 %559
      %561 = vrot.lane.b32.xlu0 %v487, 88
      %v562 = vpop.permute.xlu0 %561
      %v564 = vsel %vm491, %v560, 0
      %v567 = vsel %vm491, %v562, 0
      %569 = vmatpush.bf16.xpose.msra.mxu0 0
      %570 = vmatpush.bf16.xpose.msra.mxu0 0
      %571 = vmatpush.bf16.xpose.msra.mxu0 0
      %572 = vmatpush.bf16.xpose.msra.mxu0 0
      %573 = vmatpush.bf16.xpose.msra.mxu0 0
      %574 = vmatpush.bf16.xpose.msra.mxu0 0
      %575 = vmatpush.bf16.xpose.msra.mxu0 0
      %576 = vmatpush.bf16.xpose.msra.mxu0 %v567
      %577 = vmatmul.bf16.gmra.mxu0 %v564
      %v578 = vpop.f32.mrf.mxu0
      %v579 = vadd.f32 0.0, %v578
      %v580 = vpop.f32.mrf.mxu0
      %v581 = vadd.f32 0.0, %v580
      %582 = vdwg.mxu0
      %v583 = vsel %vm512, %v579, -inf
      %584 = vmax.xlane.f32.xlu0 %v583
      %v585 = vpop.xlane.xlu0 %584
      %v586 = vsel %vm512, %v581, -inf
      %587 = vmax.xlane.f32.xlu0 %v586
      %v588 = vpop.xlane.xlu0 %587
      %v589 = vsub.f32 %v579, %v585
      %v590 = vsub.f32 %v581, %v588
      %v591 = vmul.f32 %v589, 1.442695
      %v592 = vpow.pop %v591
      %v593 = vmul.f32 %v590, 1.442695
      %v594 = vpow.pop %v593
      %v595 = vsel %vm512, %v592, 0.0
      %596 = vadd.xlane.f32.xlu0 %v595
      %v597 = vpop.xlane.xlu0 %596
      %v598 = vsel %vm512, %v594, 0.0
      %599 = vadd.xlane.f32.xlu0 %v598
      %v600 = vpop.xlane.xlu0 %599
      %v601 = vrcp.pop %v597
      %v602 = vrcp.pop %v600
      %v603 = vmul.f32 %v592, %v601
      %v604 = vmul.f32 %v594, %v602
      %v605 = vpack.c.bf16 %v604, %v603
      %606 = vrot.lane.b32.xlu0 %v487, 56
      %v607 = vpop.permute.xlu0 %606
      %v610 = vsel %vm512, %v605, 0
      %612 = vmatpush.bf16.msra.mxu0 0
      %613 = vmatpush.bf16.msra.mxu0 0
      %614 = vmatpush.bf16.msra.mxu0 0
      %615 = vmatpush.bf16.msra.mxu0 0
      %616 = vmatpush.bf16.msra.mxu0 0
      %617 = vmatpush.bf16.msra.mxu0 0
      %618 = vmatpush.bf16.msra.mxu0 0
      %619 = vmatpush.bf16.msra.mxu0 %v607
      %620 = vmatmul.bf16.gmra.mxu0 %v610
      %v621 = vpop.f32.mrf.mxu0
      %v622 = vadd.f32 0.0, %v621
      %v623 = vpop.f32.mrf.mxu0
      %v624 = vadd.f32 0.0, %v623
      %625 = vdwg.mxu0
      %v626 = vpack.c.bf16 %v624, %v622
      %v627 = vld [vmem:[%s3 + $0x4] sm:$0xf]
      %v629 = vsel %vm491, %v626, 0
      %vm631 = vcmask 1043456
      %v633 = vsel %vm631, %v627, 0
      %635 = vmatpush.bf16.msra.mxu0 0
      %636 = vmatpush.bf16.msra.mxu0 0
      %637 = vmatpush.bf16.msra.mxu0 0
      %638 = vmatpush.bf16.msra.mxu0 0
      %639 = vmatpush.bf16.msra.mxu0 0
      %640 = vmatpush.bf16.msra.mxu0 0
      %641 = vmatpush.bf16.msra.mxu0 0
      %642 = vmatpush.bf16.msra.mxu0 %v633
      %643 = vmatmul.bf16.gmra.mxu0 %v629
      %v644 = vpop.f32.mrf.mxu0
      %v645 = vadd.f32 0.0, %v644
      %v646 = vpop.f32.mrf.mxu0
      %v647 = vadd.f32 0.0, %v646
      %648 = vdwg.mxu0
      %v650 = vsel %vm491, %v556, 0
      %v653 = vsel %vm631, %v557, 0
      %655 = vmatpush.bf16.msra.mxu0 0
      %656 = vmatpush.bf16.msra.mxu0 0
      %657 = vmatpush.bf16.msra.mxu0 0
      %658 = vmatpush.bf16.msra.mxu0 0
      %659 = vmatpush.bf16.msra.mxu0 0
      %660 = vmatpush.bf16.msra.mxu0 0
      %661 = vmatpush.bf16.msra.mxu0 0
      %662 = vmatpush.bf16.msra.mxu0 %v653
      %663 = vmatmul.bf16.gmra.mxu0 %v650
      %v664 = vpop.f32.mrf.mxu0
      %v665 = vadd.f32 %v645, %v664
      %v666 = vpop.f32.mrf.mxu0
      %v667 = vadd.f32 %v647, %v666
      %668 = vdwg.mxu0
      %669 = vrot.lane.b32.xlu0 %v486, 112
      %v670 = vpop.permute.xlu0 %669
      %671 = vrot.lane.b32.xlu0 %v487, 80
      %v672 = vpop.permute.xlu0 %671
      %v674 = vsel %vm491, %v670, 0
      %v677 = vsel %vm491, %v672, 0
      %679 = vmatpush.bf16.xpose.msra.mxu0 0
      %680 = vmatpush.bf16.xpose.msra.mxu0 0
      %681 = vmatpush.bf16.xpose.msra.mxu0 0
      %682 = vmatpush.bf16.xpose.msra.mxu0 0
      %683 = vmatpush.bf16.xpose.msra.mxu0 0
      %684 = vmatpush.bf16.xpose.msra.mxu0 0
      %685 = vmatpush.bf16.xpose.msra.mxu0 0
      %686 = vmatpush.bf16.xpose.msra.mxu0 %v677
      %687 = vmatmul.bf16.gmra.mxu0 %v674
      %v688 = vpop.f32.mrf.mxu0
      %v689 = vadd.f32 0.0, %v688
      %v690 = vpop.f32.mrf.mxu0
      %v691 = vadd.f32 0.0, %v690
      %692 = vdwg.mxu0
      %v693 = vsel %vm512, %v689, -inf
      %694 = vmax.xlane.f32.xlu0 %v693
      %v695 = vpop.xlane.xlu0 %694
      %v696 = vsel %vm512, %v691, -inf
      %697 = vmax.xlane.f32.xlu0 %v696
      %v698 = vpop.xlane.xlu0 %697
      %v699 = vsub.f32 %v689, %v695
      %v700 = vsub.f32 %v691, %v698
      %v701 = vmul.f32 %v699, 1.442695
      %v702 = vpow.pop %v701
      %v703 = vmul.f32 %v700, 1.442695
      %v704 = vpow.pop %v703
      %v705 = vsel %vm512, %v702, 0.0
      %706 = vadd.xlane.f32.xlu0 %v705
      %v707 = vpop.xlane.xlu0 %706
      %v708 = vsel %vm512, %v704, 0.0
      %709 = vadd.xlane.f32.xlu0 %v708
      %v710 = vpop.xlane.xlu0 %709
      %v711 = vrcp.pop %v707
      %v712 = vrcp.pop %v710
      %v713 = vmul.f32 %v702, %v711
      %v714 = vmul.f32 %v704, %v712
      %v715 = vpack.c.bf16 %v714, %v713
      %716 = vrot.lane.b32.xlu0 %v487, 48
      %v717 = vpop.permute.xlu0 %716
      %v720 = vsel %vm512, %v715, 0
      %722 = vmatpush.bf16.msra.mxu0 0
      %723 = vmatpush.bf16.msra.mxu0 0
      %724 = vmatpush.bf16.msra.mxu0 0
      %725 = vmatpush.bf16.msra.mxu0 0
      %726 = vmatpush.bf16.msra.mxu0 0
      %727 = vmatpush.bf16.msra.mxu0 0
      %728 = vmatpush.bf16.msra.mxu0 0
      %729 = vmatpush.bf16.msra.mxu0 %v717
      %730 = vmatmul.bf16.gmra.mxu0 %v720
      %v731 = vpop.f32.mrf.mxu0
      %v732 = vadd.f32 0.0, %v731
      %v733 = vpop.f32.mrf.mxu0
      %v734 = vadd.f32 0.0, %v733
      %735 = vdwg.mxu0
      %v736 = vpack.c.bf16 %v734, %v732
      %v737 = vld [vmem:[%s3 + $0x8] sm:$0xf]
      %v739 = vsel %vm491, %v736, 0
      %v742 = vsel %vm631, %v737, 0
      %744 = vmatpush.bf16.msra.mxu0 0
      %745 = vmatpush.bf16.msra.mxu0 0
      %746 = vmatpush.bf16.msra.mxu0 0
      %747 = vmatpush.bf16.msra.mxu0 0
      %748 = vmatpush.bf16.msra.mxu0 0
      %749 = vmatpush.bf16.msra.mxu0 0
      %750 = vmatpush.bf16.msra.mxu0 0
      %751 = vmatpush.bf16.msra.mxu0 %v742
      %752 = vmatmul.bf16.gmra.mxu0 %v739
      %v753 = vpop.f32.mrf.mxu0
      %v754 = vadd.f32 0.0, %v753
      %v755 = vpop.f32.mrf.mxu0
      %v756 = vadd.f32 0.0, %v755
      %757 = vdwg.mxu0
      %v758 = vadd.f32 %v665, %v754
      %v759 = vadd.f32 %v667, %v756
      %760 = vrot.lane.b32.xlu0 %v486, 104
      %v761 = vpop.permute.xlu0 %760
      %762 = vrot.lane.b32.xlu0 %v487, 72
      %v763 = vpop.permute.xlu0 %762
      %v765 = vsel %vm491, %v761, 0
      %v768 = vsel %vm491, %v763, 0
      %770 = vmatpush.bf16.xpose.msra.mxu0 0
      %771 = vmatpush.bf16.xpose.msra.mxu0 0
      %772 = vmatpush.bf16.xpose.msra.mxu0 0
      %773 = vmatpush.bf16.xpose.msra.mxu0 0
      %774 = vmatpush.bf16.xpose.msra.mxu0 0
      %775 = vmatpush.bf16.xpose.msra.mxu0 0
      %776 = vmatpush.bf16.xpose.msra.mxu0 0
      %777 = vmatpush.bf16.xpose.msra.mxu0 %v768
      %778 = vmatmul.bf16.gmra.mxu0 %v765
      %v779 = vpop.f32.mrf.mxu0
      %v780 = vadd.f32 0.0, %v779
      %v781 = vpop.f32.mrf.mxu0
      %v782 = vadd.f32 0.0, %v781
      %783 = vdwg.mxu0
      %v784 = vsel %vm512, %v780, -inf
      %785 = vmax.xlane.f32.xlu0 %v784
      %v786 = vpop.xlane.xlu0 %785
      %v787 = vsel %vm512, %v782, -inf
      %788 = vmax.xlane.f32.xlu0 %v787
      %v789 = vpop.xlane.xlu0 %788
      %v790 = vsub.f32 %v780, %v786
      %v791 = vsub.f32 %v782, %v789
      %v792 = vmul.f32 %v790, 1.442695
      %v793 = vpow.pop %v792
      %v794 = vmul.f32 %v791, 1.442695
      %v795 = vpow.pop %v794
      %v796 = vsel %vm512, %v793, 0.0
      %797 = vadd.xlane.f32.xlu0 %v796
      %v798 = vpop.xlane.xlu0 %797
      %v799 = vsel %vm512, %v795, 0.0
      %800 = vadd.xlane.f32.xlu0 %v799
      %v801 = vpop.xlane.xlu0 %800
      %v802 = vrcp.pop %v798
      %v803 = vrcp.pop %v801
      %v804 = vmul.f32 %v793, %v802
      %v805 = vmul.f32 %v795, %v803
      %v806 = vpack.c.bf16 %v805, %v804
      %807 = vrot.lane.b32.xlu0 %v487, 40
      %v808 = vpop.permute.xlu0 %807
      %v811 = vsel %vm512, %v806, 0
      %813 = vmatpush.bf16.msra.mxu0 0
      %814 = vmatpush.bf16.msra.mxu0 0
      %815 = vmatpush.bf16.msra.mxu0 0
      %816 = vmatpush.bf16.msra.mxu0 0
      %817 = vmatpush.bf16.msra.mxu0 0
      %818 = vmatpush.bf16.msra.mxu0 0
      %819 = vmatpush.bf16.msra.mxu0 0
      %820 = vmatpush.bf16.msra.mxu0 %v808
      %821 = vmatmul.bf16.gmra.mxu0 %v811
      %v822 = vpop.f32.mrf.mxu0
      %v823 = vadd.f32 0.0, %v822
      %v824 = vpop.f32.mrf.mxu0
      %v825 = vadd.f32 0.0, %v824
      %826 = vdwg.mxu0
      %v827 = vpack.c.bf16 %v825, %v823
      %v828 = vld [vmem:[%s3 + $0xc] sm:$0xf]
      %v830 = vsel %vm491, %v827, 0
      %v833 = vsel %vm631, %v828, 0
      %835 = vmatpush.bf16.msra.mxu0 0
      %836 = vmatpush.bf16.msra.mxu0 0
      %837 = vmatpush.bf16.msra.mxu0 0
      %838 = vmatpush.bf16.msra.mxu0 0
      %839 = vmatpush.bf16.msra.mxu0 0
      %840 = vmatpush.bf16.msra.mxu0 0
      %841 = vmatpush.bf16.msra.mxu0 0
      %842 = vmatpush.bf16.msra.mxu0 %v833
      %843 = vmatmul.bf16.gmra.mxu0 %v830
      %v844 = vpop.f32.mrf.mxu0
      %v845 = vadd.f32 0.0, %v844
      %v846 = vpop.f32.mrf.mxu0
      %v847 = vadd.f32 0.0, %v846
      %848 = vdwg.mxu0
      %v849 = vadd.f32 %v758, %v845
      %v850 = vadd.f32 %v759, %v847
      %v852 = vperm.slane %v483, 0
      %v854 = vadd.f32 %v849, %v852
      %v855 = vadd.f32 %v850, %v852
      %v856 = vadd.f32 %v442, %v854
      %v857 = vadd.f32 %v443, %v855
      %v858 = vld [vmem:[%s5] sm:$0x1]
      %v859 = vld [vmem:[%s6] sm:$0x1]
      %v860 = vsel %vm465, %v856, 0.0
      %861 = vadd.xlane.f32.xlu0 %v860
      %v862 = vpop.xlane.xlu0 %861
      %v863 = vsel %vm465, %v857, 0.0
      %864 = vadd.xlane.f32.xlu0 %v863
      %v865 = vpop.xlane.xlu0 %864
      %v866 = vrcp.pop 32.0
      %v867 = vmul.f32 32.0, %v866
      %v868 = vsub.f32 1.0, %v867
      %v869 = vmul.f32 %v866, %v868
      %v870 = vadd.f32 %v866, %v869
      %vm871 = vweird.f32 %v866
      %v872 = vsel %vm871, %v866, %v870
      %v873 = vmul.f32 %v862, %v872
      %v874 = vmul.f32 %v865, %v872
      %v875 = vsub.f32 %v856, %v873
      %v876 = vsub.f32 %v857, %v874
      %v877 = vmul.f32 %v875, %v875
      %v878 = vmul.f32 %v876, %v876
      %v879 = vsel %vm465, %v877, 0.0
      %880 = vadd.xlane.f32.xlu0 %v879
      %v881 = vpop.xlane.xlu0 %880
      %v882 = vsel %vm465, %v878, 0.0
      %883 = vadd.xlane.f32.xlu0 %v882
      %v884 = vpop.xlane.xlu0 %883
      %v885 = vmul.f32 %v881, %v872
      %v886 = vmul.f32 %v884, %v872
      %v887 = vadd.f32 %v885, 1e-05
      %v888 = vadd.f32 %v886, 1e-05
      %v889 = vrsqrt.pop %v887
      %v890 = vmul.f32 %v889, %v887
      %v891 = vmul.f32 %v890, %v889
      %v892 = vmul.f32 0.5, %v891
      %v893 = vsub.f32 1.5, %v892
      %v894 = vmul.f32 %v889, %v893
      %vm895 = vweird.f32 %v887
      %vm896 = vweird.f32 %v889
      %vm897 = vmor %vm895, %vm896
      %v898 = vsel %vm897, %v889, %v894
      %v899 = vrsqrt.pop %v888
      %v900 = vmul.f32 %v899, %v888
      %v901 = vmul.f32 %v900, %v899
      %v902 = vmul.f32 0.5, %v901
      %v903 = vsub.f32 1.5, %v902
      %v904 = vmul.f32 %v899, %v903
      %vm905 = vweird.f32 %v888
      %vm906 = vweird.f32 %v899
      %vm907 = vmor %vm905, %vm906
      %v908 = vsel %vm907, %v899, %v904
      %v909 = vmul.f32 %v875, %v898
      %v910 = vmul.f32 %v876, %v908
      %v912 = vperm.slane %v858, 0
      %v914 = vmul.f32 %v909, %v912
      %v915 = vmul.f32 %v910, %v912
      %v917 = vperm.slane %v859, 0
      %v919 = vadd.f32 %v914, %v917
      %v920 = vadd.f32 %v915, %v917
      %v921 = vpack.c.bf16 %v920, %v919
      %v922 = vld [vmem:[%s7] sm:$0xf]
      %v923 = vld [vmem:[%s7 + $0x4] sm:$0xf]
      %v924 = vld [vmem:[%s7 + $0x8] sm:$0xf]
      %v925 = vld [vmem:[%s7 + $0xc] sm:$0xf]
      %v926 = vld [vmem:[%s8] sm:$0x1]
      %v928 = vperm.slane %v926, 0
      %v934 = vunpack.c.l.b16 %v922
      %v935 = vunpack.c.l.b16 %v923
      %v936 = vunpack.c.l.b16 %v924
      %v937 = vunpack.c.l.b16 %v925
      %v938 = vpack.c.b16 %v935, %v934
      %v939 = vpack.c.b16 %v937, %v936
      %v943 = vsel %vm465, %v921, 0
      %945 = vmatpush.bf16.msra.mxu0 0
      %946 = vmatpush.bf16.msra.mxu0 0
      %947 = vmatpush.bf16.msra.mxu0 0
      %948 = vmatpush.bf16.msra.mxu0 0
      %949 = vmatpush.bf16.msra.mxu0 0
      %950 = vmatpush.bf16.msra.mxu0 0
      %951 = vmatpush.bf16.msra.mxu0 %v939
      %952 = vmatpush.bf16.msra.mxu0 %v938
      %953 = vmatmul.bf16.gmra.mxu0 %v943
      %v954 = vpop.f32.mrf.mxu0
      %v955 = vadd.f32 %v928, %v954
      %v956 = vpop.f32.mrf.mxu0
      %v957 = vadd.f32 %v928, %v956
      %958 = vdwg.mxu0
      %v959 = vmax.f32 %v955, 0.0
      %v960 = vmax.f32 %v957, 0.0
      %v961 = vpack.c.bf16 %v960, %v959
      %v962 = vld [vmem:[%s9] sm:$0xf]
      %v963 = vld [vmem:[%s9 + $0x4] sm:$0xf]
      %v964 = vld [vmem:[%s9 + $0x8] sm:$0xf]
      %v965 = vld [vmem:[%s9 + $0xc] sm:$0xf]
      %v966 = vld [vmem:[%s9 + $0x10] sm:$0xf]
      %v967 = vld [vmem:[%s9 + $0x14] sm:$0xf]
      %v968 = vld [vmem:[%s9 + $0x18] sm:$0xf]
      %v969 = vld [vmem:[%s9 + $0x1c] sm:$0xf]
      %v970 = vld [vmem:[%s9 + $0x20] sm:$0xf]
      %v971 = vld [vmem:[%s9 + $0x24] sm:$0xf]
      %v972 = vld [vmem:[%s9 + $0x28] sm:$0xf]
      %v973 = vld [vmem:[%s9 + $0x2c] sm:$0xf]
      %v974 = vld [vmem:[%s9 + $0x30] sm:$0xf]
      %v975 = vld [vmem:[%s9 + $0x34] sm:$0xf]
      %v976 = vld [vmem:[%s9 + $0x38] sm:$0xf]
      %v977 = vld [vmem:[%s9 + $0x3c] sm:$0xf]
      %v978 = vld [vmem:[%s10] sm:$0x1]
      %v980 = vperm.slane %v978, 0
      %v998 = vunpack.c.l.b16 %v962
      %v999 = vunpack.c.l.b16 %v963
      %v1000 = vunpack.c.l.b16 %v964
      %v1001 = vunpack.c.l.b16 %v965
      %v1002 = vunpack.c.l.b16 %v966
      %v1003 = vunpack.c.l.b16 %v967
      %v1004 = vunpack.c.l.b16 %v968
      %v1005 = vunpack.c.l.b16 %v969
      %v1006 = vunpack.c.l.b16 %v970
      %v1007 = vunpack.c.l.b16 %v971
      %v1008 = vunpack.c.l.b16 %v972
      %v1009 = vunpack.c.l.b16 %v973
      %v1010 = vunpack.c.l.b16 %v974
      %v1011 = vunpack.c.l.b16 %v975
      %v1012 = vunpack.c.l.b16 %v976
      %v1013 = vunpack.c.l.b16 %v977
      %v1014 = vpack.c.b16 %v999, %v998
      %v1015 = vpack.c.b16 %v1001, %v1000
      %v1016 = vpack.c.b16 %v1003, %v1002
      %v1017 = vpack.c.b16 %v1005, %v1004
      %v1018 = vpack.c.b16 %v1007, %v1006
      %v1019 = vpack.c.b16 %v1009, %v1008
      %v1020 = vpack.c.b16 %v1011, %v1010
      %v1021 = vpack.c.b16 %v1013, %v1012
      %1030 = vmatpush.bf16.msra.mxu0 %v1021
      %1031 = vmatpush.bf16.msra.mxu0 %v1020
      %1032 = vmatpush.bf16.msra.mxu0 %v1019
      %1033 = vmatpush.bf16.msra.mxu0 %v1018
      %1034 = vmatpush.bf16.msra.mxu0 %v1017
      %1035 = vmatpush.bf16.msra.mxu0 %v1016
      %1036 = vmatpush.bf16.msra.mxu0 %v1015
      %1037 = vmatpush.bf16.msra.mxu0 %v1014
      %1038 = vmatmul.bf16.gmra.mxu0 %v961
      %v1039 = vpop.f32.mrf.mxu0
      %v1040 = vadd.f32 %v980, %v1039
      %v1041 = vpop.f32.mrf.mxu0
      %v1042 = vadd.f32 %v980, %v1041
      %1043 = vdwg.mxu0
      %v1044 = vadd.f32 %v919, %v1040
      %v1045 = vadd.f32 %v920, %v1042
      %v1046 = vld [vmem:[%s11] sm:$0x1]
      %v1047 = vld [vmem:[%s12] sm:$0x1]
      %v1048 = vsel %vm465, %v1044, 0.0
      %1049 = vadd.xlane.f32.xlu0 %v1048
      %v1050 = vpop.xlane.xlu0 %1049
      %v1051 = vsel %vm465, %v1045, 0.0
      %1052 = vadd.xlane.f32.xlu0 %v1051
      %v1053 = vpop.xlane.xlu0 %1052
      %v1054 = vmul.f32 %v1050, %v872
      %v1055 = vmul.f32 %v1053, %v872
      %v1056 = vsub.f32 %v1044, %v1054
      %v1057 = vsub.f32 %v1045, %v1055
      %v1058 = vmul.f32 %v1056, %v1056
      %v1059 = vmul.f32 %v1057, %v1057
      %v1060 = vsel %vm465, %v1058, 0.0
      %1061 = vadd.xlane.f32.xlu0 %v1060
      %v1062 = vpop.xlane.xlu0 %1061
      %v1063 = vsel %vm465, %v1059, 0.0
      %1064 = vadd.xlane.f32.xlu0 %v1063
      %v1065 = vpop.xlane.xlu0 %1064
      %v1066 = vmul.f32 %v1062, %v872
      %v1067 = vmul.f32 %v1065, %v872
      %v1068 = vadd.f32 %v1066, 1e-05
      %v1069 = vadd.f32 %v1067, 1e-05
      %v1070 = vrsqrt.pop %v1068
      %v1071 = vmul.f32 %v1070, %v1068
      %v1072 = vmul.f32 %v1071, %v1070
      %v1073 = vmul.f32 0.5, %v1072
      %v1074 = vsub.f32 1.5, %v1073
      %v1075 = vmul.f32 %v1070, %v1074
      %vm1076 = vweird.f32 %v1068
      %vm1077 = vweird.f32 %v1070
      %vm1078 = vmor %vm1076, %vm1077
      %v1079 = vsel %vm1078, %v1070, %v1075
      %v1080 = vrsqrt.pop %v1069
      %v1081 = vmul.f32 %v1080, %v1069
      %v1082 = vmul.f32 %v1081, %v1080
      %v1083 = vmul.f32 0.5, %v1082
      %v1084 = vsub.f32 1.5, %v1083
      %v1085 = vmul.f32 %v1080, %v1084
      %vm1086 = vweird.f32 %v1069
      %vm1087 = vweird.f32 %v1080
      %vm1088 = vmor %vm1086, %vm1087
      %v1089 = vsel %vm1088, %v1080, %v1085
      %v1090 = vmul.f32 %v1056, %v1079
      %v1091 = vmul.f32 %v1057, %v1089
      %v1093 = vperm.slane %v1046, 0
      %v1095 = vmul.f32 %v1090, %v1093
      %v1096 = vmul.f32 %v1091, %v1093
      %v1098 = vperm.slane %v1047, 0
      %v1100 = vadd.f32 %v1095, %v1098
      %v1101 = vadd.f32 %v1096, %v1098
      %1102 = vst.msk [vmem:[%s440] sm:$0xff] %vm465, %v1100
      %1103 = vst.msk [vmem:[%s440 + $0x8] sm:$0xff] %vm465, %v1101
      %p1104 = scmp.lt.s32.totalorder %s24, 1
      %s1105 = scalar_select %p1104, %s24, 1
      %s1106 = smul.addr %s1105, 2
      %s1107 = smul.addr %s1106, 8
      %s1108 = scalar_lea.vmem %s13, %s1107
      // Predicated region
      $region73: #{vision_encoder_decoder.9} parent=71 // pred_check
        %p1109 = pneg %p320
      $region74: #{vision_encoder_decoder.9} parent=71 // pred_check_branch
        %1111 = sbr.rel (%p1109) target = $region76
      $region75: #{vision_encoder_decoder.9} parent=71 // pred_region
        _
      $region76: #{vision_encoder_decoder.9} parent=71 // pred_fallthru
        _
    $region72: #{vision_encoder_decoder.9} parent=5 // pred_fallthru
      _
    %p1112 = scmp.le.s32.totalorder 2, %s19
    // Predicated region
    $region77: #{vision_encoder_decoder.9} parent=5 // pred_check
      %p1113 = pneg %p1112
    $region78: #{vision_encoder_decoder.9} parent=5 // pred_check_branch
      %1115 = sbr.rel (%p1113) target = $region80
    $region79: #{vision_encoder_decoder.9} parent=5 // pred_region
      %s1116 = ssub.s32 %s19, 2
      // Predicated region
      $region81: #{vision_encoder_decoder.9} parent=79 // pred_check
        %p1117 = pneg %p326
      $region82: #{vision_encoder_decoder.9} parent=79 // pred_check_branch
        %1119 = sbr.rel (%p1117) target = $region84
      $region83: #{vision_encoder_decoder.9} parent=79 // pred_region
        %p1120 = scmp.lt.s32.totalorder %s25, 1
        %s1121 = scalar_select %p1120, %s25, 1
        %s1122 = smul.addr %s1121, 2
        %s1123 = smul.addr %s1122, 8
        %s1124 = scalar_lea.vmem %s13, %s1123
      $region84: #{vision_encoder_decoder.9} parent=79 // pred_fallthru
        _
    $region80: #{vision_encoder_decoder.9} parent=5 // pred_fallthru
      _
  $region6: #{vision_encoder_decoder.9} parent=0 // loop_footer
    %s23 = sadd.s32 1, %s19
  $region7: #{vision_encoder_decoder.9} parent=0 // loop_footer_branch
    %18 = sbr.rel target = $region3
  $region8: #{vision_encoder_decoder.9} parent=0 // loop_exit
    _

// kernel: vision_encoder_decoder.13
$region0: #{vision_encoder_decoder.13}
  #allocation0 [shape = 'u32[]', space=smem, size = 0x4, offset = 0x4, fixed_abs, tag = 'smem constant byte address 0x4 - core index']
  #allocation1 [shape = 'u32[72,128]{1,0:T(1,128)}', space=vmem, size = 0x9000, scoped, tag = 'internal scratch']
  #allocation2 [shape = 'f32[16,128]{1,0:T(8,128)}', space=vmem, size = 0x2000, scoped, tag = 'scratch operand']
  %s0 = inlined_call_operand.vmem [shape: f32[16,128], index: 0, kind: input, shape index: {}]
  %s1 = inlined_call_operand.vmem [shape: bf16[128,128], index: 1, kind: input, shape index: {}]
  %s2 = inlined_call_operand.vmem [shape: f32[1,128], index: 2, kind: input, shape index: {}]
  %s3 = inlined_call_operand.vmem [shape: f32[16,128], index: 3, kind: output, shape index: {}]
  %s4 = sld [smem:[#allocation0]]
  $region30: #{vision_encoder_decoder.13} parent=0
    _
  %s6 = ssub.s32 1, %s4
  %s7 = scalar_select 0, %s6, %s4
  // Predicated region
  $region2: #{vision_encoder_decoder.13} parent=0 // pred_check
    _
  $region3: #{vision_encoder_decoder.13} parent=0 // pred_check_branch
    %9 = sbr.rel (0) target = $region5
  $region4: #{vision_encoder_decoder.13} parent=0 // pred_region
    _
  $region5: #{vision_encoder_decoder.13} parent=0 // pred_fallthru
    _
  // Predicated region
  $region6: #{vision_encoder_decoder.13} parent=0 // pred_check
    _
  $region7: #{vision_encoder_decoder.13} parent=0 // pred_check_branch
    %11 = sbr.rel (0) target = $region9
  $region8: #{vision_encoder_decoder.13} parent=0 // pred_region
    _
  $region9: #{vision_encoder_decoder.13} parent=0 // pred_fallthru
    _
  // Predicated region
  $region10: #{vision_encoder_decoder.13} parent=0 // pred_check
    _
  $region11: #{vision_encoder_decoder.13} parent=0 // pred_check_branch
    %13 = sbr.rel (0) target = $region13
  $region12: #{vision_encoder_decoder.13} parent=0 // pred_region
    _
  $region13: #{vision_encoder_decoder.13} parent=0 // pred_fallthru
    _
  %p14 = scmp.eq.s32.totalorder 0, 0
  // Predicated region
  $region14: #{vision_encoder_decoder.13} parent=0 // pred_check
    %p15 = pneg %p14
  $region15: #{vision_encoder_decoder.13} parent=0 // pred_check_branch
    %17 = sbr.rel (%p15) target = $region17
  $region16: #{vision_encoder_decoder.13} parent=0 // pred_region
    %18 = vst [vmem:[#allocation2] sm:$0xff] 0.0
    %19 = vst [vmem:[#allocation2 + $0x8] sm:$0xff] 0.0
  $region17: #{vision_encoder_decoder.13} parent=0 // pred_fallthru
    _
  %v20 = vld [vmem:[#allocation2] sm:$0xff]
  %v21 = vld [vmem:[#allocation2 + $0x8] sm:$0xff]
  %v22 = vld [vmem:[%s0] sm:$0xff]
  %v23 = vld [vmem:[%s0 + $0x8] sm:$0xff]
  %v24 = vpack.c.bf16 %v23, %v22
  %v25 = vld [vmem:[%s1] sm:$0xf]
  %v26 = vld [vmem:[%s1 + $0x4] sm:$0xf]
  %v27 = vld [vmem:[%s1 + $0x8] sm:$0xf]
  %v28 = vld [vmem:[%s1 + $0xc] sm:$0xf]
  %v29 = vld [vmem:[%s1 + $0x10] sm:$0xf]
  %v30 = vld [vmem:[%s1 + $0x14] sm:$0xf]
  %v31 = vld [vmem:[%s1 + $0x18] sm:$0xf]
  %v32 = vld [vmem:[%s1 + $0x1c] sm:$0xf]
  %v33 = vld [vmem:[%s1 + $0x20] sm:$0xf]
  %v34 = vld [vmem:[%s1 + $0x24] sm:$0xf]
  %v35 = vld [vmem:[%s1 + $0x28] sm:$0xf]
  %v36 = vld [vmem:[%s1 + $0x2c] sm:$0xf]
  %v37 = vld [vmem:[%s1 + $0x30] sm:$0xf]
  %v38 = vld [vmem:[%s1 + $0x34] sm:$0xf]
  %v39 = vld [vmem:[%s1 + $0x38] sm:$0xf]
  %v40 = vld [vmem:[%s1 + $0x3c] sm:$0xf]
  %v57 = vunpack.c.l.b16 %v25
  %v58 = vunpack.c.l.b16 %v26
  %v59 = vunpack.c.l.b16 %v27
  %v60 = vunpack.c.l.b16 %v28
  %v61 = vunpack.c.l.b16 %v29
  %v62 = vunpack.c.l.b16 %v30
  %v63 = vunpack.c.l.b16 %v31
  %v64 = vunpack.c.l.b16 %v32
  %v65 = vunpack.c.l.b16 %v33
  %v66 = vunpack.c.l.b16 %v34
  %v67 = vunpack.c.l.b16 %v35
  %v68 = vunpack.c.l.b16 %v36
  %v69 = vunpack.c.l.b16 %v37
  %v70 = vunpack.c.l.b16 %v38
  %v71 = vunpack.c.l.b16 %v39
  %v72 = vunpack.c.l.b16 %v40
  %v73 = vpack.c.b16 %v58, %v57
  %v74 = vpack.c.b16 %v60, %v59
  %v75 = vpack.c.b16 %v62, %v61
  %v76 = vpack.c.b16 %v64, %v63
  %v77 = vpack.c.b16 %v66, %v65
  %v78 = vpack.c.b16 %v68, %v67
  %v79 = vpack.c.b16 %v70, %v69
  %v80 = vpack.c.b16 %v72, %v71
  %89 = vmatpush.bf16.msra.mxu0 %v80
  %90 = vmatpush.bf16.msra.mxu0 %v79
  %91 = vmatpush.bf16.msra.mxu0 %v78
  %92 = vmatpush.bf16.msra.mxu0 %v77
  %93 = vmatpush.bf16.msra.mxu0 %v76
  %94 = vmatpush.bf16.msra.mxu0 %v75
  %95 = vmatpush.bf16.msra.mxu0 %v74
  %96 = vmatpush.bf16.msra.mxu0 %v73
  %97 = vmatmul.bf16.gmra.mxu0 %v24
  %v98 = vpop.f32.mrf.mxu0
  %v99 = vadd.f32 0.0, %v98
  %v100 = vpop.f32.mrf.mxu0
  %v101 = vadd.f32 0.0, %v100
  %102 = vdwg.mxu0
  %v103 = vadd.f32 %v20, %v99
  %v104 = vadd.f32 %v21, %v101
  %105 = vst [vmem:[#allocation2] sm:$0xff] %v103
  %106 = vst [vmem:[#allocation2 + $0x8] sm:$0xff] %v104
  // Predicated region
  $region18: #{vision_encoder_decoder.13} parent=0 // pred_check
    %p107 = pneg %p14
  $region19: #{vision_encoder_decoder.13} parent=0 // pred_check_branch
    %109 = sbr.rel (%p107) target = $region21
  $region20: #{vision_encoder_decoder.13} parent=0 // pred_region
    %v110 = vld [vmem:[#allocation2] sm:$0xff]
    %v111 = vld [vmem:[#allocation2 + $0x8] sm:$0xff]
    %v112 = vld [vmem:[%s2] sm:$0x1]
    %v114 = vperm.slane %v112, 0
    %v116 = vadd.f32 %v110, %v114
    %v117 = vadd.f32 %v111, %v114
    %118 = vst [vmem:[%s3] sm:$0xff] %v116
    %119 = vst [vmem:[%s3 + $0x8] sm:$0xff] %v117
  $region21: #{vision_encoder_decoder.13} parent=0 // pred_fallthru
    _
  // Predicated region
  $region22: #{vision_encoder_decoder.13} parent=0 // pred_check
    _
  $region23: #{vision_encoder_decoder.13} parent=0 // pred_check_branch
    %121 = sbr.rel (0) target = $region25
  $region24: #{vision_encoder_decoder.13} parent=0 // pred_region
    _
  $region25: #{vision_encoder_decoder.13} parent=0 // pred_fallthru
    _
  // Predicated region
  $region26: #{vision_encoder_decoder.13} parent=0 // pred_check
    _
  $region27: #{vision_encoder_decoder.13} parent=0 // pred_check_branch
    %123 = sbr.rel (0) target = $region29
  $region28: #{vision_encoder_decoder.13} parent=0 // pred_region
    _
  $region29: #{vision_encoder_decoder.13} parent=0 // pred_fallthru
    _

// kernel: vision_encoder_decoder.11
$region0: #{vision_encoder_decoder.11}
  #allocation0 [shape = 'u32[]', space=smem, size = 0x4, offset = 0x4, fixed_abs, tag = 'smem constant byte address 0x4 - core index']
  #allocation1 [shape = 'u32[72,128]{1,0:T(1,128)}', space=vmem, size = 0x9000, scoped, tag = 'internal scratch']
  %s0 = inlined_call_operand.vmem [shape: f32[2,8,32], index: 0, kind: input, shape index: {}]
  %s1 = inlined_call_operand.vmem [shape: f32[2,8,8], index: 1, kind: input, shape index: {}]
  %s2 = inlined_call_operand.vmem [shape: f32[2,16,32], index: 2, kind: input, shape index: {}]
  %s3 = inlined_call_operand.vmem [shape: bf16[32,96], index: 3, kind: input, shape index: {}]
  %s4 = inlined_call_operand.vmem [shape: f32[1,96], index: 4, kind: input, shape index: {}]
  %s5 = inlined_call_operand.vmem [shape: bf16[32,32], index: 5, kind: input, shape index: {}]
  %s6 = inlined_call_operand.vmem [shape: f32[1,32], index: 6, kind: input, shape index: {}]
  %s7 = inlined_call_operand.vmem [shape: f32[1,32], index: 7, kind: input, shape index: {}]
  %s8 = inlined_call_operand.vmem [shape: f32[1,32], index: 8, kind: input, shape index: {}]
  %s9 = inlined_call_operand.vmem [shape: bf16[32,32], index: 9, kind: input, shape index: {}]
  %s10 = inlined_call_operand.vmem [shape: f32[1,32], index: 10, kind: input, shape index: {}]
  %s11 = inlined_call_operand.vmem [shape: bf16[32,64], index: 11, kind: input, shape index: {}]
  %s12 = inlined_call_operand.vmem [shape: f32[1,64], index: 12, kind: input, shape index: {}]
  %s13 = inlined_call_operand.vmem [shape: bf16[32,32], index: 13, kind: input, shape index: {}]
  %s14 = inlined_call_operand.vmem [shape: f32[1,32], index: 14, kind: input, shape index: {}]
  %s15 = inlined_call_operand.vmem [shape: f32[1,32], index: 15, kind: input, shape index: {}]
  %s16 = inlined_call_operand.vmem [shape: f32[1,32], index: 16, kind: input, shape index: {}]
  %s17 = inlined_call_operand.vmem [shape: bf16[32,128], index: 17, kind: input, shape index: {}]
  %s18 = inlined_call_operand.vmem [shape: f32[1,128], index: 18, kind: input, shape index: {}]
  %s19 = inlined_call_operand.vmem [shape: bf16[128,32], index: 19, kind: input, shape index: {}]
  %s20 = inlined_call_operand.vmem [shape: f32[1,32], index: 20, kind: input, shape index: {}]
  %s21 = inlined_call_operand.vmem [shape: f32[1,32], index: 21, kind: input, shape index: {}]
  %s22 = inlined_call_operand.vmem [shape: f32[1,32], index: 22, kind: input, shape index: {}]
  %s23 = inlined_call_operand.vmem [shape: f32[2,8,32], index: 23, kind: output, shape index: {}]
  %s24 = sld [smem:[#allocation0]]
  $region125: #{vision_encoder_decoder.11} parent=0
    _
  %s26 = ssub.s32 1, %s24
  %s27 = scalar_select 0, %s26, %s24
  loop: start=0, step=1, limit=4
  $region2: #{vision_encoder_decoder.11} parent=0 // loop_pre_header
    _
  $region3: #{vision_encoder_decoder.11} parent=0 // loop_header
    %s29 = sphi 0, %s33
    %p30 = scmp.ge.s32.totalorder %s29, 4
    %s39 = sphi 0, %s41
    %s42 = sphi 0, %s39
    %s43 = sphi 0, %s42
    %s59 = sphi 0, %s43
    %s65 = sphi 0, %s67
    %s68 = sphi 0, %s65
    %s69 = sphi 0, %s68
    %s85 = sphi 0, %s69
    %s91 = sphi 0, %s93
    %s94 = sphi 0, %s91
    %s95 = sphi 0, %s94
    %s111 = sphi 0, %s95
    %s115 = sphi 0, %s115
    %s117 = sphi 0, %s115
    %s118 = sphi 0, %s117
    %s132 = sphi 0, %s118
    %s136 = sphi 0, %s136
    %s138 = sphi 0, %s136
    %s139 = sphi 0, %s138
    %s153 = sphi 0, %s139
    %s157 = sphi 0, %s157
    %s159 = sphi 0, %s157
    %s160 = sphi 0, %s159
    %s174 = sphi 0, %s160
    %s178 = sphi 0, %s178
    %s180 = sphi 0, %s178
    %s181 = sphi 0, %s180
    %s195 = sphi 0, %s181
    %s199 = sphi 0, %s199
    %s201 = sphi 0, %s199
    %s202 = sphi 0, %s201
    %s216 = sphi 0, %s202
    %s220 = sphi 0, %s220
    %s222 = sphi 0, %s220
    %s223 = sphi 0, %s222
    %s237 = sphi 0, %s223
    %s241 = sphi 0, %s241
    %s243 = sphi 0, %s241
    %s244 = sphi 0, %s243
    %s258 = sphi 0, %s244
    %s262 = sphi 0, %s262
    %s264 = sphi 0, %s262
    %s265 = sphi 0, %s264
    %s279 = sphi 0, %s265
    %s283 = sphi 0, %s283
    %s285 = sphi 0, %s283
    %s286 = sphi 0, %s285
    %s300 = sphi 0, %s286
    %s304 = sphi 0, %s304
    %s306 = sphi 0, %s304
    %s307 = sphi 0, %s306
    %s321 = sphi 0, %s307
    %s325 = sphi 0, %s325
    %s327 = sphi 0, %s325
    %s328 = sphi 0, %s327
    %s342 = sphi 0, %s328
    %s346 = sphi 0, %s346
    %s348 = sphi 0, %s346
    %s349 = sphi 0, %s348
    %s363 = sphi 0, %s349
    %s367 = sphi 0, %s367
    %s369 = sphi 0, %s367
    %s370 = sphi 0, %s369
    %s384 = sphi 0, %s370
    %s388 = sphi 0, %s388
    %s390 = sphi 0, %s388
    %s391 = sphi 0, %s390
    %s405 = sphi 0, %s391
    %s409 = sphi 0, %s409
    %s411 = sphi 0, %s409
    %s412 = sphi 0, %s411
    %s426 = sphi 0, %s412
    %s430 = sphi 0, %s430
    %s432 = sphi 0, %s430
    %s433 = sphi 0, %s432
    %s447 = sphi 0, %s433
    %s451 = sphi 0, %s451
    %s453 = sphi 0, %s451
    %s454 = sphi 0, %s453
    %s468 = sphi 0, %s454
    %s472 = sphi 0, %s472
    %s474 = sphi 0, %s472
    %s475 = sphi 0, %s474
    %s489 = sphi 0, %s475
    %s493 = sphi 0, %s493
    %s495 = sphi 0, %s493
    %s496 = sphi 0, %s495
    %s510 = sphi 0, %s496
    %s514 = sphi 0, %s514
    %s516 = sphi 0, %s514
    %s517 = sphi 0, %s516
    %s531 = sphi 0, %s517
    %s537 = sphi 0, %s539
    %s540 = sphi 0, %s537
    %s541 = sphi 0, %s540
    %s557 = sphi 0, %s541
  $region4: #{vision_encoder_decoder.11} parent=0 // loop_header_branch
    %32 = sbr.rel (%p30) target = $region8
  $region5: #{vision_encoder_decoder.11} parent=0 // loop_body
    %s34 = ssub.s32 %s29, 1
    %s35 = ssub.s32 %s29, 2
    %s36 = sadd.s32 %s29, 1
    %s37 = ssub.s32 %s29, %s36
    %p38 = scmp.eq.s32.totalorder %s37, 0
    %s40 = sadd.s32 %s39, 1
    %s41 = scalar_select %p38, %s39, %s40
    %p44 = pneg %p38
    %p45 = scmp.eq.s32.totalorder %s29, 1
    %p46 = por %p44, %p45
    %p47 = scmp.ne.s32.totalorder %s39, %s42
    %p48 = scmp.eq.s32.totalorder %s29, 0
    %p49 = por %p47, %p48
    %p50 = scmp.ne.s32.totalorder %s39, %s42
    %p51 = scmp.eq.s32.totalorder %s34, 1
    %p52 = por %p50, %p51
    %p53 = scmp.ne.s32.totalorder %s42, %s43
    %p54 = scmp.eq.s32.totalorder %s34, 0
    %p55 = por %p53, %p54
    %p56 = scmp.ne.s32.totalorder %s42, %s43
    %p57 = scmp.eq.s32.totalorder %s35, 1
    %p58 = por %p56, %p57
    %p60 = scmp.ne.s32.totalorder %s43, %s59
    %p61 = scmp.eq.s32.totalorder %s35, 0
    %p62 = por %p60, %p61
    %s63 = ssub.s32 %s29, %s36
    %p64 = scmp.eq.s32.totalorder %s63, 0
    %s66 = sadd.s32 %s65, 1
    %s67 = scalar_select %p64, %s65, %s66
    %p70 = pneg %p64
    %p71 = scmp.eq.s32.totalorder %s29, 1
    %p72 = por %p70, %p71
    %p73 = scmp.ne.s32.totalorder %s65, %s68
    %p74 = scmp.eq.s32.totalorder %s29, 0
    %p75 = por %p73, %p74
    %p76 = scmp.ne.s32.totalorder %s65, %s68
    %p77 = scmp.eq.s32.totalorder %s34, 1
    %p78 = por %p76, %p77
    %p79 = scmp.ne.s32.totalorder %s68, %s69
    %p80 = scmp.eq.s32.totalorder %s34, 0
    %p81 = por %p79, %p80
    %p82 = scmp.ne.s32.totalorder %s68, %s69
    %p83 = scmp.eq.s32.totalorder %s35, 1
    %p84 = por %p82, %p83
    %p86 = scmp.ne.s32.totalorder %s69, %s85
    %p87 = scmp.eq.s32.totalorder %s35, 0
    %p88 = por %p86, %p87
    %s89 = ssub.s32 %s29, %s36
    %p90 = scmp.eq.s32.totalorder %s89, 0
    %s92 = sadd.s32 %s91, 1
    %s93 = scalar_select %p90, %s91, %s92
    %p96 = pneg %p90
    %p97 = scmp.eq.s32.totalorder %s29, 1
    %p98 = por %p96, %p97
    %p99 = scmp.ne.s32.totalorder %s91, %s94
    %p100 = scmp.eq.s32.totalorder %s29, 0
    %p101 = por %p99, %p100
    %p102 = scmp.ne.s32.totalorder %s91, %s94
    %p103 = scmp.eq.s32.totalorder %s34, 1
    %p104 = por %p102, %p103
    %p105 = scmp.ne.s32.totalorder %s94, %s95
    %p106 = scmp.eq.s32.totalorder %s34, 0
    %p107 = por %p105, %p106
    %p108 = scmp.ne.s32.totalorder %s94, %s95
    %p109 = scmp.eq.s32.totalorder %s35, 1
    %p110 = por %p108, %p109
    %p112 = scmp.ne.s32.totalorder %s95, %s111
    %p113 = scmp.eq.s32.totalorder %s35, 0
    %p114 = por %p112, %p113
    %s116 = sadd.s32 %s115, 1
    %p119 = scmp.eq.s32.totalorder %s29, 1
    %p120 = scmp.ne.s32.totalorder %s115, %s117
    %p121 = scmp.eq.s32.totalorder %s29, 0
    %p122 = por %p120, %p121
    %p123 = scmp.ne.s32.totalorder %s115, %s117
    %p124 = scmp.eq.s32.totalorder %s34, 1
    %p125 = por %p123, %p124
    %p126 = scmp.ne.s32.totalorder %s117, %s118
    %p127 = scmp.eq.s32.totalorder %s34, 0
    %p128 = por %p126, %p127
    %p129 = scmp.ne.s32.totalorder %s117, %s118
    %p130 = scmp.eq.s32.totalorder %s35, 1
    %p131 = por %p129, %p130
    %p133 = scmp.ne.s32.totalorder %s118, %s132
    %p134 = scmp.eq.s32.totalorder %s35, 0
    %p135 = por %p133, %p134
    %s137 = sadd.s32 %s136, 1
    %p140 = scmp.eq.s32.totalorder %s29, 1
    %p141 = scmp.ne.s32.totalorder %s136, %s138
    %p142 = scmp.eq.s32.totalorder %s29, 0
    %p143 = por %p141, %p142
    %p144 = scmp.ne.s32.totalorder %s136, %s138
    %p145 = scmp.eq.s32.totalorder %s34, 1
    %p146 = por %p144, %p145
    %p147 = scmp.ne.s32.totalorder %s138, %s139
    %p148 = scmp.eq.s32.totalorder %s34, 0
    %p149 = por %p147, %p148
    %p150 = scmp.ne.s32.totalorder %s138, %s139
    %p151 = scmp.eq.s32.totalorder %s35, 1
    %p152 = por %p150, %p151
    %p154 = scmp.ne.s32.totalorder %s139, %s153
    %p155 = scmp.eq.s32.totalorder %s35, 0
    %p156 = por %p154, %p155
    %s158 = sadd.s32 %s157, 1
    %p161 = scmp.eq.s32.totalorder %s29, 1
    %p162 = scmp.ne.s32.totalorder %s157, %s159
    %p163 = scmp.eq.s32.totalorder %s29, 0
    %p164 = por %p162, %p163
    %p165 = scmp.ne.s32.totalorder %s157, %s159
    %p166 = scmp.eq.s32.totalorder %s34, 1
    %p167 = por %p165, %p166
    %p168 = scmp.ne.s32.totalorder %s159, %s160
    %p169 = scmp.eq.s32.totalorder %s34, 0
    %p170 = por %p168, %p169
    %p171 = scmp.ne.s32.totalorder %s159, %s160
    %p172 = scmp.eq.s32.totalorder %s35, 1
    %p173 = por %p171, %p172
    %p175 = scmp.ne.s32.totalorder %s160, %s174
    %p176 = scmp.eq.s32.totalorder %s35, 0
    %p177 = por %p175, %p176
    %s179 = sadd.s32 %s178, 1
    %p182 = scmp.eq.s32.totalorder %s29, 1
    %p183 = scmp.ne.s32.totalorder %s178, %s180
    %p184 = scmp.eq.s32.totalorder %s29, 0
    %p185 = por %p183, %p184
    %p186 = scmp.ne.s32.totalorder %s178, %s180
    %p187 = scmp.eq.s32.totalorder %s34, 1
    %p188 = por %p186, %p187
    %p189 = scmp.ne.s32.totalorder %s180, %s181
    %p190 = scmp.eq.s32.totalorder %s34, 0
    %p191 = por %p189, %p190
    %p192 = scmp.ne.s32.totalorder %s180, %s181
    %p193 = scmp.eq.s32.totalorder %s35, 1
    %p194 = por %p192, %p193
    %p196 = scmp.ne.s32.totalorder %s181, %s195
    %p197 = scmp.eq.s32.totalorder %s35, 0
    %p198 = por %p196, %p197
    %s200 = sadd.s32 %s199, 1
    %p203 = scmp.eq.s32.totalorder %s29, 1
    %p204 = scmp.ne.s32.totalorder %s199, %s201
    %p205 = scmp.eq.s32.totalorder %s29, 0
    %p206 = por %p204, %p205
    %p207 = scmp.ne.s32.totalorder %s199, %s201
    %p208 = scmp.eq.s32.totalorder %s34, 1
    %p209 = por %p207, %p208
    %p210 = scmp.ne.s32.totalorder %s201, %s202
    %p211 = scmp.eq.s32.totalorder %s34, 0
    %p212 = por %p210, %p211
    %p213 = scmp.ne.s32.totalorder %s201, %s202
    %p214 = scmp.eq.s32.totalorder %s35, 1
    %p215 = por %p213, %p214
    %p217 = scmp.ne.s32.totalorder %s202, %s216
    %p218 = scmp.eq.s32.totalorder %s35, 0
    %p219 = por %p217, %p218
    %s221 = sadd.s32 %s220, 1
    %p224 = scmp.eq.s32.totalorder %s29, 1
    %p225 = scmp.ne.s32.totalorder %s220, %s222
    %p226 = scmp.eq.s32.totalorder %s29, 0
    %p227 = por %p225, %p226
    %p228 = scmp.ne.s32.totalorder %s220, %s222
    %p229 = scmp.eq.s32.totalorder %s34, 1
    %p230 = por %p228, %p229
    %p231 = scmp.ne.s32.totalorder %s222, %s223
    %p232 = scmp.eq.s32.totalorder %s34, 0
    %p233 = por %p231, %p232
    %p234 = scmp.ne.s32.totalorder %s222, %s223
    %p235 = scmp.eq.s32.totalorder %s35, 1
    %p236 = por %p234, %p235
    %p238 = scmp.ne.s32.totalorder %s223, %s237
    %p239 = scmp.eq.s32.totalorder %s35, 0
    %p240 = por %p238, %p239
    %s242 = sadd.s32 %s241, 1
    %p245 = scmp.eq.s32.totalorder %s29, 1
    %p246 = scmp.ne.s32.totalorder %s241, %s243
    %p247 = scmp.eq.s32.totalorder %s29, 0
    %p248 = por %p246, %p247
    %p249 = scmp.ne.s32.totalorder %s241, %s243
    %p250 = scmp.eq.s32.totalorder %s34, 1
    %p251 = por %p249, %p250
    %p252 = scmp.ne.s32.totalorder %s243, %s244
    %p253 = scmp.eq.s32.totalorder %s34, 0
    %p254 = por %p252, %p253
    %p255 = scmp.ne.s32.totalorder %s243, %s244
    %p256 = scmp.eq.s32.totalorder %s35, 1
    %p257 = por %p255, %p256
    %p259 = scmp.ne.s32.totalorder %s244, %s258
    %p260 = scmp.eq.s32.totalorder %s35, 0
    %p261 = por %p259, %p260
    %s263 = sadd.s32 %s262, 1
    %p266 = scmp.eq.s32.totalorder %s29, 1
    %p267 = scmp.ne.s32.totalorder %s262, %s264
    %p268 = scmp.eq.s32.totalorder %s29, 0
    %p269 = por %p267, %p268
    %p270 = scmp.ne.s32.totalorder %s262, %s264
    %p271 = scmp.eq.s32.totalorder %s34, 1
    %p272 = por %p270, %p271
    %p273 = scmp.ne.s32.totalorder %s264, %s265
    %p274 = scmp.eq.s32.totalorder %s34, 0
    %p275 = por %p273, %p274
    %p276 = scmp.ne.s32.totalorder %s264, %s265
    %p277 = scmp.eq.s32.totalorder %s35, 1
    %p278 = por %p276, %p277
    %p280 = scmp.ne.s32.totalorder %s265, %s279
    %p281 = scmp.eq.s32.totalorder %s35, 0
    %p282 = por %p280, %p281
    %s284 = sadd.s32 %s283, 1
    %p287 = scmp.eq.s32.totalorder %s29, 1
    %p288 = scmp.ne.s32.totalorder %s283, %s285
    %p289 = scmp.eq.s32.totalorder %s29, 0
    %p290 = por %p288, %p289
    %p291 = scmp.ne.s32.totalorder %s283, %s285
    %p292 = scmp.eq.s32.totalorder %s34, 1
    %p293 = por %p291, %p292
    %p294 = scmp.ne.s32.totalorder %s285, %s286
    %p295 = scmp.eq.s32.totalorder %s34, 0
    %p296 = por %p294, %p295
    %p297 = scmp.ne.s32.totalorder %s285, %s286
    %p298 = scmp.eq.s32.totalorder %s35, 1
    %p299 = por %p297, %p298
    %p301 = scmp.ne.s32.totalorder %s286, %s300
    %p302 = scmp.eq.s32.totalorder %s35, 0
    %p303 = por %p301, %p302
    %s305 = sadd.s32 %s304, 1
    %p308 = scmp.eq.s32.totalorder %s29, 1
    %p309 = scmp.ne.s32.totalorder %s304, %s306
    %p310 = scmp.eq.s32.totalorder %s29, 0
    %p311 = por %p309, %p310
    %p312 = scmp.ne.s32.totalorder %s304, %s306
    %p313 = scmp.eq.s32.totalorder %s34, 1
    %p314 = por %p312, %p313
    %p315 = scmp.ne.s32.totalorder %s306, %s307
    %p316 = scmp.eq.s32.totalorder %s34, 0
    %p317 = por %p315, %p316
    %p318 = scmp.ne.s32.totalorder %s306, %s307
    %p319 = scmp.eq.s32.totalorder %s35, 1
    %p320 = por %p318, %p319
    %p322 = scmp.ne.s32.totalorder %s307, %s321
    %p323 = scmp.eq.s32.totalorder %s35, 0
    %p324 = por %p322, %p323
    %s326 = sadd.s32 %s325, 1
    %p329 = scmp.eq.s32.totalorder %s29, 1
    %p330 = scmp.ne.s32.totalorder %s325, %s327
    %p331 = scmp.eq.s32.totalorder %s29, 0
    %p332 = por %p330, %p331
    %p333 = scmp.ne.s32.totalorder %s325, %s327
    %p334 = scmp.eq.s32.totalorder %s34, 1
    %p335 = por %p333, %p334
    %p336 = scmp.ne.s32.totalorder %s327, %s328
    %p337 = scmp.eq.s32.totalorder %s34, 0
    %p338 = por %p336, %p337
    %p339 = scmp.ne.s32.totalorder %s327, %s328
    %p340 = scmp.eq.s32.totalorder %s35, 1
    %p341 = por %p339, %p340
    %p343 = scmp.ne.s32.totalorder %s328, %s342
    %p344 = scmp.eq.s32.totalorder %s35, 0
    %p345 = por %p343, %p344
    %s347 = sadd.s32 %s346, 1
    %p350 = scmp.eq.s32.totalorder %s29, 1
    %p351 = scmp.ne.s32.totalorder %s346, %s348
    %p352 = scmp.eq.s32.totalorder %s29, 0
    %p353 = por %p351, %p352
    %p354 = scmp.ne.s32.totalorder %s346, %s348
    %p355 = scmp.eq.s32.totalorder %s34, 1
    %p356 = por %p354, %p355
    %p357 = scmp.ne.s32.totalorder %s348, %s349
    %p358 = scmp.eq.s32.totalorder %s34, 0
    %p359 = por %p357, %p358
    %p360 = scmp.ne.s32.totalorder %s348, %s349
    %p361 = scmp.eq.s32.totalorder %s35, 1
    %p362 = por %p360, %p361
    %p364 = scmp.ne.s32.totalorder %s349, %s363
    %p365 = scmp.eq.s32.totalorder %s35, 0
    %p366 = por %p364, %p365
    %s368 = sadd.s32 %s367, 1
    %p371 = scmp.eq.s32.totalorder %s29, 1
    %p372 = scmp.ne.s32.totalorder %s367, %s369
    %p373 = scmp.eq.s32.totalorder %s29, 0
    %p374 = por %p372, %p373
    %p375 = scmp.ne.s32.totalorder %s367, %s369
    %p376 = scmp.eq.s32.totalorder %s34, 1
    %p377 = por %p375, %p376
    %p378 = scmp.ne.s32.totalorder %s369, %s370
    %p379 = scmp.eq.s32.totalorder %s34, 0
    %p380 = por %p378, %p379
    %p381 = scmp.ne.s32.totalorder %s369, %s370
    %p382 = scmp.eq.s32.totalorder %s35, 1
    %p383 = por %p381, %p382
    %p385 = scmp.ne.s32.totalorder %s370, %s384
    %p386 = scmp.eq.s32.totalorder %s35, 0
    %p387 = por %p385, %p386
    %s389 = sadd.s32 %s388, 1
    %p392 = scmp.eq.s32.totalorder %s29, 1
    %p393 = scmp.ne.s32.totalorder %s388, %s390
    %p394 = scmp.eq.s32.totalorder %s29, 0
    %p395 = por %p393, %p394
    %p396 = scmp.ne.s32.totalorder %s388, %s390
    %p397 = scmp.eq.s32.totalorder %s34, 1
    %p398 = por %p396, %p397
    %p399 = scmp.ne.s32.totalorder %s390, %s391
    %p400 = scmp.eq.s32.totalorder %s34, 0
    %p401 = por %p399, %p400
    %p402 = scmp.ne.s32.totalorder %s390, %s391
    %p403 = scmp.eq.s32.totalorder %s35, 1
    %p404 = por %p402, %p403
    %p406 = scmp.ne.s32.totalorder %s391, %s405
    %p407 = scmp.eq.s32.totalorder %s35, 0
    %p408 = por %p406, %p407
    %s410 = sadd.s32 %s409, 1
    %p413 = scmp.eq.s32.totalorder %s29, 1
    %p414 = scmp.ne.s32.totalorder %s409, %s411
    %p415 = scmp.eq.s32.totalorder %s29, 0
    %p416 = por %p414, %p415
    %p417 = scmp.ne.s32.totalorder %s409, %s411
    %p418 = scmp.eq.s32.totalorder %s34, 1
    %p419 = por %p417, %p418
    %p420 = scmp.ne.s32.totalorder %s411, %s412
    %p421 = scmp.eq.s32.totalorder %s34, 0
    %p422 = por %p420, %p421
    %p423 = scmp.ne.s32.totalorder %s411, %s412
    %p424 = scmp.eq.s32.totalorder %s35, 1
    %p425 = por %p423, %p424
    %p427 = scmp.ne.s32.totalorder %s412, %s426
    %p428 = scmp.eq.s32.totalorder %s35, 0
    %p429 = por %p427, %p428
    %s431 = sadd.s32 %s430, 1
    %p434 = scmp.eq.s32.totalorder %s29, 1
    %p435 = scmp.ne.s32.totalorder %s430, %s432
    %p436 = scmp.eq.s32.totalorder %s29, 0
    %p437 = por %p435, %p436
    %p438 = scmp.ne.s32.totalorder %s430, %s432
    %p439 = scmp.eq.s32.totalorder %s34, 1
    %p440 = por %p438, %p439
    %p441 = scmp.ne.s32.totalorder %s432, %s433
    %p442 = scmp.eq.s32.totalorder %s34, 0
    %p443 = por %p441, %p442
    %p444 = scmp.ne.s32.totalorder %s432, %s433
    %p445 = scmp.eq.s32.totalorder %s35, 1
    %p446 = por %p444, %p445
    %p448 = scmp.ne.s32.totalorder %s433, %s447
    %p449 = scmp.eq.s32.totalorder %s35, 0
    %p450 = por %p448, %p449
    %s452 = sadd.s32 %s451, 1
    %p455 = scmp.eq.s32.totalorder %s29, 1
    %p456 = scmp.ne.s32.totalorder %s451, %s453
    %p457 = scmp.eq.s32.totalorder %s29, 0
    %p458 = por %p456, %p457
    %p459 = scmp.ne.s32.totalorder %s451, %s453
    %p460 = scmp.eq.s32.totalorder %s34, 1
    %p461 = por %p459, %p460
    %p462 = scmp.ne.s32.totalorder %s453, %s454
    %p463 = scmp.eq.s32.totalorder %s34, 0
    %p464 = por %p462, %p463
    %p465 = scmp.ne.s32.totalorder %s453, %s454
    %p466 = scmp.eq.s32.totalorder %s35, 1
    %p467 = por %p465, %p466
    %p469 = scmp.ne.s32.totalorder %s454, %s468
    %p470 = scmp.eq.s32.totalorder %s35, 0
    %p471 = por %p469, %p470
    %s473 = sadd.s32 %s472, 1
    %p476 = scmp.eq.s32.totalorder %s29, 1
    %p477 = scmp.ne.s32.totalorder %s472, %s474
    %p478 = scmp.eq.s32.totalorder %s29, 0
    %p479 = por %p477, %p478
    %p480 = scmp.ne.s32.totalorder %s472, %s474
    %p481 = scmp.eq.s32.totalorder %s34, 1
    %p482 = por %p480, %p481
    %p483 = scmp.ne.s32.totalorder %s474, %s475
    %p484 = scmp.eq.s32.totalorder %s34, 0
    %p485 = por %p483, %p484
    %p486 = scmp.ne.s32.totalorder %s474, %s475
    %p487 = scmp.eq.s32.totalorder %s35, 1
    %p488 = por %p486, %p487
    %p490 = scmp.ne.s32.totalorder %s475, %s489
    %p491 = scmp.eq.s32.totalorder %s35, 0
    %p492 = por %p490, %p491
    %s494 = sadd.s32 %s493, 1
    %p497 = scmp.eq.s32.totalorder %s29, 1
    %p498 = scmp.ne.s32.totalorder %s493, %s495
    %p499 = scmp.eq.s32.totalorder %s29, 0
    %p500 = por %p498, %p499
    %p501 = scmp.ne.s32.totalorder %s493, %s495
    %p502 = scmp.eq.s32.totalorder %s34, 1
    %p503 = por %p501, %p502
    %p504 = scmp.ne.s32.totalorder %s495, %s496
    %p505 = scmp.eq.s32.totalorder %s34, 0
    %p506 = por %p504, %p505
    %p507 = scmp.ne.s32.totalorder %s495, %s496
    %p508 = scmp.eq.s32.totalorder %s35, 1
    %p509 = por %p507, %p508
    %p511 = scmp.ne.s32.totalorder %s496, %s510
    %p512 = scmp.eq.s32.totalorder %s35, 0
    %p513 = por %p511, %p512
    %s515 = sadd.s32 %s514, 1
    %p518 = scmp.eq.s32.totalorder %s29, 1
    %p519 = scmp.ne.s32.totalorder %s514, %s516
    %p520 = scmp.eq.s32.totalorder %s29, 0
    %p521 = por %p519, %p520
    %p522 = scmp.ne.s32.totalorder %s514, %s516
    %p523 = scmp.eq.s32.totalorder %s34, 1
    %p524 = por %p522, %p523
    %p525 = scmp.ne.s32.totalorder %s516, %s517
    %p526 = scmp.eq.s32.totalorder %s34, 0
    %p527 = por %p525, %p526
    %p528 = scmp.ne.s32.totalorder %s516, %s517
    %p529 = scmp.eq.s32.totalorder %s35, 1
    %p530 = por %p528, %p529
    %p532 = scmp.ne.s32.totalorder %s517, %s531
    %p533 = scmp.eq.s32.totalorder %s35, 0
    %p534 = por %p532, %p533
    %s535 = ssub.s32 %s29, %s36
    %p536 = scmp.eq.s32.totalorder %s535, 0
    %s538 = sadd.s32 %s537, 1
    %s539 = scalar_select %p536, %s537, %s538
    %p542 = pneg %p536
    %p543 = scmp.eq.s32.totalorder %s29, 1
    %p544 = por %p542, %p543
    %p545 = scmp.ne.s32.totalorder %s537, %s540
    %p546 = scmp.eq.s32.totalorder %s29, 0
    %p547 = por %p545, %p546
    %p548 = scmp.ne.s32.totalorder %s537, %s540
    %p549 = scmp.eq.s32.totalorder %s34, 1
    %p550 = por %p548, %p549
    %p551 = scmp.ne.s32.totalorder %s540, %s541
    %p552 = scmp.eq.s32.totalorder %s34, 0
    %p553 = por %p551, %p552
    %p554 = scmp.ne.s32.totalorder %s540, %s541
    %p555 = scmp.eq.s32.totalorder %s35, 1
    %p556 = por %p554, %p555
    %p558 = scmp.ne.s32.totalorder %s541, %s557
    %p559 = scmp.eq.s32.totalorder %s35, 0
    %p560 = por %p558, %p559
    %p561 = scmp.le.s32.totalorder 1, %s29
    %p562 = scmp.lt.s32.totalorder %s29, 3
    %p563 = pnand %p561, %p562
    %p564 = pneg %p563
    // Predicated region
    $region9: #{vision_encoder_decoder.11} parent=5 // pred_check
      _
    $region10: #{vision_encoder_decoder.11} parent=5 // pred_check_branch
      %566 = sbr.rel (%p563) target = $region12
    $region11: #{vision_encoder_decoder.11} parent=5 // pred_region
      %s567 = ssub.s32 %s29, 1
      // Predicated region
      $region13: #{vision_encoder_decoder.11} parent=11 // pred_check
        %p568 = pneg %p128
      $region14: #{vision_encoder_decoder.11} parent=11 // pred_check_branch
        %570 = sbr.rel (%p568) target = $region16
      $region15: #{vision_encoder_decoder.11} parent=11 // pred_region
        _
      $region16: #{vision_encoder_decoder.11} parent=11 // pred_fallthru
        _
      // Predicated region
      $region17: #{vision_encoder_decoder.11} parent=11 // pred_check
        %p571 = pneg %p149
      $region18: #{vision_encoder_decoder.11} parent=11 // pred_check_branch
        %573 = sbr.rel (%p571) target = $region20
      $region19: #{vision_encoder_decoder.11} parent=11 // pred_region
        _
      $region20: #{vision_encoder_decoder.11} parent=11 // pred_fallthru
        _
      // Predicated region
      $region21: #{vision_encoder_decoder.11} parent=11 // pred_check
        %p574 = pneg %p170
      $region22: #{vision_encoder_decoder.11} parent=11 // pred_check_branch
        %576 = sbr.rel (%p574) target = $region24
      $region23: #{vision_encoder_decoder.11} parent=11 // pred_region
        _
      $region24: #{vision_encoder_decoder.11} parent=11 // pred_fallthru
        _
      // Predicated region
      $region25: #{vision_encoder_decoder.11} parent=11 // pred_check
        %p577 = pneg %p191
      $region26: #{vision_encoder_decoder.11} parent=11 // pred_check_branch
        %579 = sbr.rel (%p577) target = $region28
      $region27: #{vision_encoder_decoder.11} parent=11 // pred_region
        _
      $region28: #{vision_encoder_decoder.11} parent=11 // pred_fallthru
        _
      // Predicated region
      $region29: #{vision_encoder_decoder.11} parent=11 // pred_check
        %p580 = pneg %p212
      $region30: #{vision_encoder_decoder.11} parent=11 // pred_check_branch
        %582 = sbr.rel (%p580) target = $region32
      $region31: #{vision_encoder_decoder.11} parent=11 // pred_region
        _
      $region32: #{vision_encoder_decoder.11} parent=11 // pred_fallthru
        _
      // Predicated region
      $region33: #{vision_encoder_decoder.11} parent=11 // pred_check
        %p583 = pneg %p233
      $region34: #{vision_encoder_decoder.11} parent=11 // pred_check_branch
        %585 = sbr.rel (%p583) target = $region36
      $region35: #{vision_encoder_decoder.11} parent=11 // pred_region
        _
      $region36: #{vision_encoder_decoder.11} parent=11 // pred_fallthru
        _
      // Predicated region
      $region37: #{vision_encoder_decoder.11} parent=11 // pred_check
        %p586 = pneg %p254
      $region38: #{vision_encoder_decoder.11} parent=11 // pred_check_branch
        %588 = sbr.rel (%p586) target = $region40
      $region39: #{vision_encoder_decoder.11} parent=11 // pred_region
        _
      $region40: #{vision_encoder_decoder.11} parent=11 // pred_fallthru
        _
      // Predicated region
      $region41: #{vision_encoder_decoder.11} parent=11 // pred_check
        %p589 = pneg %p275
      $region42: #{vision_encoder_decoder.11} parent=11 // pred_check_branch
        %591 = sbr.rel (%p589) target = $region44
      $region43: #{vision_encoder_decoder.11} parent=11 // pred_region
        _
      $region44: #{vision_encoder_decoder.11} parent=11 // pred_fallthru
        _
      // Predicated region
      $region45: #{vision_encoder_decoder.11} parent=11 // pred_check
        %p592 = pneg %p296
      $region46: #{vision_encoder_decoder.11} parent=11 // pred_check_branch
        %594 = sbr.rel (%p592) target = $region48
      $region47: #{vision_encoder_decoder.11} parent=11 // pred_region
        _
      $region48: #{vision_encoder_decoder.11} parent=11 // pred_fallthru
        _
      // Predicated region
      $region49: #{vision_encoder_decoder.11} parent=11 // pred_check
        %p595 = pneg %p317
      $region50: #{vision_encoder_decoder.11} parent=11 // pred_check_branch
        %597 = sbr.rel (%p595) target = $region52
      $region51: #{vision_encoder_decoder.11} parent=11 // pred_region
        _
      $region52: #{vision_encoder_decoder.11} parent=11 // pred_fallthru
        _
      // Predicated region
      $region53: #{vision_encoder_decoder.11} parent=11 // pred_check
        %p598 = pneg %p338
      $region54: #{vision_encoder_decoder.11} parent=11 // pred_check_branch
        %600 = sbr.rel (%p598) target = $region56
      $region55: #{vision_encoder_decoder.11} parent=11 // pred_region
        _
      $region56: #{vision_encoder_decoder.11} parent=11 // pred_fallthru
        _
      // Predicated region
      $region57: #{vision_encoder_decoder.11} parent=11 // pred_check
        %p601 = pneg %p359
      $region58: #{vision_encoder_decoder.11} parent=11 // pred_check_branch
        %603 = sbr.rel (%p601) target = $region60
      $region59: #{vision_encoder_decoder.11} parent=11 // pred_region
        _
      $region60: #{vision_encoder_decoder.11} parent=11 // pred_fallthru
        _
      // Predicated region
      $region61: #{vision_encoder_decoder.11} parent=11 // pred_check
        %p604 = pneg %p380
      $region62: #{vision_encoder_decoder.11} parent=11 // pred_check_branch
        %606 = sbr.rel (%p604) target = $region64
      $region63: #{vision_encoder_decoder.11} parent=11 // pred_region
        _
      $region64: #{vision_encoder_decoder.11} parent=11 // pred_fallthru
        _
      // Predicated region
      $region65: #{vision_encoder_decoder.11} parent=11 // pred_check
        %p607 = pneg %p401
      $region66: #{vision_encoder_decoder.11} parent=11 // pred_check_branch
        %609 = sbr.rel (%p607) target = $region68
      $region67: #{vision_encoder_decoder.11} parent=11 // pred_region
        _
      $region68: #{vision_encoder_decoder.11} parent=11 // pred_fallthru
        _
      // Predicated region
      $region69: #{vision_encoder_decoder.11} parent=11 // pred_check
        %p610 = pneg %p422
      $region70: #{vision_encoder_decoder.11} parent=11 // pred_check_branch
        %612 = sbr.rel (%p610) target = $region72
      $region71: #{vision_encoder_decoder.11} parent=11 // pred_region
        _
      $region72: #{vision_encoder_decoder.11} parent=11 // pred_fallthru
        _
      // Predicated region
      $region73: #{vision_encoder_decoder.11} parent=11 // pred_check
        %p613 = pneg %p443
      $region74: #{vision_encoder_decoder.11} parent=11 // pred_check_branch
        %615 = sbr.rel (%p613) target = $region76
      $region75: #{vision_encoder_decoder.11} parent=11 // pred_region
        _
      $region76: #{vision_encoder_decoder.11} parent=11 // pred_fallthru
        _
      // Predicated region
      $region77: #{vision_encoder_decoder.11} parent=11 // pred_check
        %p616 = pneg %p464
      $region78: #{vision_encoder_decoder.11} parent=11 // pred_check_branch
        %618 = sbr.rel (%p616) target = $region80
      $region79: #{vision_encoder_decoder.11} parent=11 // pred_region
        _
      $region80: #{vision_encoder_decoder.11} parent=11 // pred_fallthru
        _
      // Predicated region
      $region81: #{vision_encoder_decoder.11} parent=11 // pred_check
        %p619 = pneg %p485
      $region82: #{vision_encoder_decoder.11} parent=11 // pred_check_branch
        %621 = sbr.rel (%p619) target = $region84
      $region83: #{vision_encoder_decoder.11} parent=11 // pred_region
        _
      $region84: #{vision_encoder_decoder.11} parent=11 // pred_fallthru
        _
      // Predicated region
      $region85: #{vision_encoder_decoder.11} parent=11 // pred_check
        %p622 = pneg %p506
      $region86: #{vision_encoder_decoder.11} parent=11 // pred_check_branch
        %624 = sbr.rel (%p622) target = $region88
      $region87: #{vision_encoder_decoder.11} parent=11 // pred_region
        _
      $region88: #{vision_encoder_decoder.11} parent=11 // pred_fallthru
        _
      // Predicated region
      $region89: #{vision_encoder_decoder.11} parent=11 // pred_check
        %p625 = pneg %p527
      $region90: #{vision_encoder_decoder.11} parent=11 // pred_check_branch
        %627 = sbr.rel (%p625) target = $region92
      $region91: #{vision_encoder_decoder.11} parent=11 // pred_region
        _
      $region92: #{vision_encoder_decoder.11} parent=11 // pred_fallthru
        _
    $region12: #{vision_encoder_decoder.11} parent=5 // pred_fallthru
      _
    %p628 = scmp.lt.s32.totalorder %s29, 2
    // Predicated region
    $region93: #{vision_encoder_decoder.11} parent=5 // pred_check
      %p629 = pneg %p628
    $region94: #{vision_encoder_decoder.11} parent=5 // pred_check_branch
      %631 = sbr.rel (%p629) target = $region96
    $region95: #{vision_encoder_decoder.11} parent=5 // pred_region
      // Predicated region
      $region97: #{vision_encoder_decoder.11} parent=95 // pred_check
        %p632 = pneg %p49
      $region98: #{vision_encoder_decoder.11} parent=95 // pred_check_branch
        %634 = sbr.rel (%p632) target = $region100
      $region99: #{vision_encoder_decoder.11} parent=95 // pred_region
        %p635 = scmp.lt.s32.totalorder %s29, 1
        %s636 = scalar_select %p635, %s29, 1
        %s637 = smul.addr %s636, 8
        %s638 = scalar_lea.vmem %s0, %s637
      $region100: #{vision_encoder_decoder.11} parent=95 // pred_fallthru
        _
      // Predicated region
      $region101: #{vision_encoder_decoder.11} parent=95 // pred_check
        %p639 = pneg %p75
      $region102: #{vision_encoder_decoder.11} parent=95 // pred_check_branch
        %641 = sbr.rel (%p639) target = $region104
      $region103: #{vision_encoder_decoder.11} parent=95 // pred_region
        %p642 = scmp.lt.s32.totalorder %s29, 1
        %s643 = scalar_select %p642, %s29, 1
        %s644 = smul.addr %s643, 8
        %s645 = scalar_lea.vmem %s1, %s644
      $region104: #{vision_encoder_decoder.11} parent=95 // pred_fallthru
        _
      // Predicated region
      $region105: #{vision_encoder_decoder.11} parent=95 // pred_check
        %p646 = pneg %p101
      $region106: #{vision_encoder_decoder.11} parent=95 // pred_check_branch
        %648 = sbr.rel (%p646) target = $region108
      $region107: #{vision_encoder_decoder.11} parent=95 // pred_region
        %p649 = scmp.lt.s32.totalorder %s29, 1
        %s650 = scalar_select %p649, %s29, 1
        %s651 = smul.addr %s650, 2
        %s652 = smul.addr %s651, 8
        %s653 = scalar_lea.vmem %s2, %s652
      $region108: #{vision_encoder_decoder.11} parent=95 // pred_fallthru
        _
    $region96: #{vision_encoder_decoder.11} parent=5 // pred_fallthru
      _
    %p654 = scmp.le.s32.totalorder 1, %s29
    %p655 = scmp.lt.s32.totalorder %s29, 3
    %p656 = pnand %p654, %p655
    %p657 = pneg %p656
    // Predicated region
    $region109: #{vision_encoder_decoder.11} parent=5 // pred_check
      _
    $region110: #{vision_encoder_decoder.11} parent=5 // pred_check_branch
      %659 = sbr.rel (%p656) target = $region112
    $region111: #{vision_encoder_decoder.11} parent=5 // pred_region
      %s660 = ssub.s32 %s29, 1
      %p661 = scmp.lt.s32.totalorder %s34, 1
      %s662 = scalar_select %p661, %s34, 1
      %s663 = smul.addr %s662, 8
      %s664 = scalar_lea.vmem %s0, %s663
      %p665 = pneg %p55
      %p666 = pneg %p52
      %p667 = scmp.lt.s32.totalorder %s34, 1
      %s668 = scalar_select %p667, %s34, 1
      %s669 = smul.addr %s668, 8
      %s670 = scalar_lea.vmem %s1, %s669
      %p671 = pneg %p81
      %p672 = pneg %p78
      %p673 = scmp.lt.s32.totalorder %s34, 1
      %s674 = scalar_select %p673, %s34, 1
      %s675 = smul.addr %s674, 2
      %s676 = smul.addr %s675, 8
      %s677 = scalar_lea.vmem %s2, %s676
      %p678 = pneg %p107
      %p679 = pneg %p104
      %p680 = pneg %p128
      %p681 = pneg %p125
      %p682 = pneg %p149
      %p683 = pneg %p146
      %p684 = pneg %p170
      %p685 = pneg %p167
      %p686 = pneg %p191
      %p687 = pneg %p188
      %p688 = pneg %p212
      %p689 = pneg %p209
      %p690 = pneg %p233
      %p691 = pneg %p230
      %p692 = pneg %p254
      %p693 = pneg %p251
      %p694 = pneg %p275
      %p695 = pneg %p272
      %p696 = pneg %p296
      %p697 = pneg %p293
      %p698 = pneg %p317
      %p699 = pneg %p314
      %p700 = pneg %p338
      %p701 = pneg %p335
      %p702 = pneg %p359
      %p703 = pneg %p356
      %p704 = pneg %p380
      %p705 = pneg %p377
      %p706 = pneg %p401
      %p707 = pneg %p398
      %p708 = pneg %p422
      %p709 = pneg %p419
      %p710 = pneg %p443
      %p711 = pneg %p440
      %p712 = pneg %p464
      %p713 = pneg %p461
      %p714 = pneg %p485
      %p715 = pneg %p482
      %p716 = pneg %p506
      %p717 = pneg %p503
      %p718 = pneg %p527
      %p719 = pneg %p524
      %p720 = pneg %p553
      %p721 = pneg %p550
      %p722 = scmp.lt.s32.totalorder %s34, 1
      %s723 = scalar_select %p722, %s34, 1
      %s724 = smul.addr %s723, 8
      %s725 = scalar_lea.vmem %s23, %s724
      %p726 = scmp.lt.s32.totalorder %s34, 1
      %s727 = scalar_select %p726, %s34, 1
      %s728 = smul.addr %s727, 8
      %s729 = scalar_lea.vmem %s0, %s728
      %p730 = scmp.lt.s32.totalorder %s34, 1
      %s731 = scalar_select %p730, %s34, 1
      %s732 = smul.addr %s731, 8
      %s733 = scalar_lea.vmem %s1, %s732
      %p734 = scmp.lt.s32.totalorder %s34, 1
      %s735 = scalar_select %p734, %s34, 1
      %s736 = smul.addr %s735, 2
      %s737 = smul.addr %s736, 8
      %s738 = scalar_lea.vmem %s2, %s737
      %p739 = scmp.lt.s32.totalorder %s34, 1
      %s740 = scalar_select %p739, %s34, 1
      %s741 = smul.addr %s740, 8
      %s742 = scalar_lea.vmem %s23, %s741
      %v744 = vld [vmem:[%s729] sm:$0xff]
      %v745 = vld [vmem:[%s733] sm:$0xff]
      %v746 = vpack.c.bf16 %v744, %v744
      %v747 = vld [vmem:[%s3] sm:$0xf]
      %v748 = vld [vmem:[%s3 + $0x4] sm:$0xf]
      %v749 = vld [vmem:[%s3 + $0x8] sm:$0xf]
      %v750 = vld [vmem:[%s3 + $0xc] sm:$0xf]
      %v751 = vld [vmem:[%s4] sm:$0x1]
      %v753 = vperm.slane %v751, 0
      %v759 = vunpack.c.l.b16 %v747
      %v760 = vunpack.c.l.b16 %v748
      %v761 = vunpack.c.l.b16 %v749
      %v762 = vunpack.c.l.b16 %v750
      %v763 = vpack.c.b16 %v760, %v759
      %v764 = vpack.c.b16 %v762, %v761
      %vm767 = vcmask 261120
      %v769 = vsel %vm767, %v746, 0
      %771 = vmatpush.bf16.msra.mxu0 0
      %772 = vmatpush.bf16.msra.mxu0 0
      %773 = vmatpush.bf16.msra.mxu0 0
      %774 = vmatpush.bf16.msra.mxu0 0
      %775 = vmatpush.bf16.msra.mxu0 0
      %776 = vmatpush.bf16.msra.mxu0 0
      %777 = vmatpush.bf16.msra.mxu0 %v764
      %778 = vmatpush.bf16.msra.mxu0 %v763
      %779 = vmatmul.bf16.gmra.mxu0 %v769
      %v780 = vpop.f32.mrf.mxu0
      %v781 = vadd.f32 %v753, %v780
      %v782 = vpop.f32.mrf.mxu0
      %783 = vdwg.mxu0
      %v784 = vld [vmem:[%s6] sm:$0x1]
      %v785 = vmul.f32 %v781, 0.35355338
      %v786 = vpack.c.bf16 %v785, %v785
      %v787 = vpack.c.bf16 %v781, %v781
      %789 = vrot.lane.b32.xlu0 %v787, 96
      %v790 = vpop.permute.xlu0 %789
      %vm791 = vcmask 64512
      %v793 = vsel %vm791, %v786, 0
      %v796 = vsel %vm791, %v790, 0
      %798 = vmatpush.bf16.xpose.msra.mxu0 0
      %799 = vmatpush.bf16.xpose.msra.mxu0 0
      %800 = vmatpush.bf16.xpose.msra.mxu0 0
      %801 = vmatpush.bf16.xpose.msra.mxu0 0
      %802 = vmatpush.bf16.xpose.msra.mxu0 0
      %803 = vmatpush.bf16.xpose.msra.mxu0 0
      %804 = vmatpush.bf16.xpose.msra.mxu0 0
      %805 = vmatpush.bf16.xpose.msra.mxu0 %v796
      %806 = vmatmul.bf16.gmra.mxu0 %v793
      %v807 = vpop.f32.mrf.mxu0
      %v808 = vadd.f32 %v745, %v807
      %v809 = vpop.f32.mrf.mxu0
      %810 = vdwg.mxu0
      %v811 = vsel %vm791, %v808, -inf
      %812 = vmax.xlane.f32.xlu0 %v811
      %v813 = vpop.xlane.xlu0 %812
      %v814 = vsub.f32 %v808, %v813
      %v815 = vmul.f32 %v814, 1.442695
      %v816 = vpow.pop %v815
      %v817 = vsel %vm791, %v816, 0.0
      %818 = vadd.xlane.f32.xlu0 %v817
      %v819 = vpop.xlane.xlu0 %818
      %v820 = vrcp.pop %v819
      %v821 = vmul.f32 %v816, %v820
      %v822 = vpack.c.bf16 %v821, %v821
      %823 = vrot.lane.b32.xlu0 %v787, 64
      %v824 = vpop.permute.xlu0 %823
      %v826 = vsel %vm791, %v822, 0
      %vm828 = vcmask 1043456
      %v830 = vsel %vm828, %v824, 0
      %832 = vmatpush.bf16.msra.mxu0 0
      %833 = vmatpush.bf16.msra.mxu0 0
      %834 = vmatpush.bf16.msra.mxu0 0
      %835 = vmatpush.bf16.msra.mxu0 0
      %836 = vmatpush.bf16.msra.mxu0 0
      %837 = vmatpush.bf16.msra.mxu0 0
      %838 = vmatpush.bf16.msra.mxu0 0
      %839 = vmatpush.bf16.msra.mxu0 %v830
      %840 = vmatmul.bf16.gmra.mxu0 %v826
      %v841 = vpop.f32.mrf.mxu0
      %v842 = vadd.f32 0.0, %v841
      %v843 = vpop.f32.mrf.mxu0
      %844 = vdwg.mxu0
      %v845 = vpack.c.bf16 %v842, %v842
      %v846 = vld [vmem:[%s5] sm:$0xf]
      %848 = vrot.lane.b32.xlu0 %v786, 120
      %v849 = vpop.permute.xlu0 %848
      %850 = vrot.lane.b32.xlu0 %v787, 88
      %v851 = vpop.permute.xlu0 %850
      %v853 = vsel %vm791, %v849, 0
      %v856 = vsel %vm791, %v851, 0
      %858 = vmatpush.bf16.xpose.msra.mxu0 0
      %859 = vmatpush.bf16.xpose.msra.mxu0 0
      %860 = vmatpush.bf16.xpose.msra.mxu0 0
      %861 = vmatpush.bf16.xpose.msra.mxu0 0
      %862 = vmatpush.bf16.xpose.msra.mxu0 0
      %863 = vmatpush.bf16.xpose.msra.mxu0 0
      %864 = vmatpush.bf16.xpose.msra.mxu0 0
      %865 = vmatpush.bf16.xpose.msra.mxu0 %v856
      %866 = vmatmul.bf16.gmra.mxu0 %v853
      %v867 = vpop.f32.mrf.mxu0
      %v868 = vadd.f32 %v745, %v867
      %v869 = vpop.f32.mrf.mxu0
      %870 = vdwg.mxu0
      %v871 = vsel %vm791, %v868, -inf
      %872 = vmax.xlane.f32.xlu0 %v871
      %v873 = vpop.xlane.xlu0 %872
      %v874 = vsub.f32 %v868, %v873
      %v875 = vmul.f32 %v874, 1.442695
      %v876 = vpow.pop %v875
      %v877 = vsel %vm791, %v876, 0.0
      %878 = vadd.xlane.f32.xlu0 %v877
      %v879 = vpop.xlane.xlu0 %878
      %v880 = vrcp.pop %v879
      %v881 = vmul.f32 %v876, %v880
      %v882 = vpack.c.bf16 %v881, %v881
      %883 = vrot.lane.b32.xlu0 %v787, 56
      %v884 = vpop.permute.xlu0 %883
      %v886 = vsel %vm791, %v882, 0
      %v889 = vsel %vm828, %v884, 0
      %891 = vmatpush.bf16.msra.mxu0 0
      %892 = vmatpush.bf16.msra.mxu0 0
      %893 = vmatpush.bf16.msra.mxu0 0
      %894 = vmatpush.bf16.msra.mxu0 0
      %895 = vmatpush.bf16.msra.mxu0 0
      %896 = vmatpush.bf16.msra.mxu0 0
      %897 = vmatpush.bf16.msra.mxu0 0
      %898 = vmatpush.bf16.msra.mxu0 %v889
      %899 = vmatmul.bf16.gmra.mxu0 %v886
      %v900 = vpop.f32.mrf.mxu0
      %v901 = vadd.f32 0.0, %v900
      %v902 = vpop.f32.mrf.mxu0
      %903 = vdwg.mxu0
      %v904 = vpack.c.bf16 %v901, %v901
      %v905 = vld [vmem:[%s5 + $0x4] sm:$0xf]
      %v907 = vsel %vm791, %v904, 0
      %v910 = vsel %vm828, %v905, 0
      %912 = vmatpush.bf16.msra.mxu0 0
      %913 = vmatpush.bf16.msra.mxu0 0
      %914 = vmatpush.bf16.msra.mxu0 0
      %915 = vmatpush.bf16.msra.mxu0 0
      %916 = vmatpush.bf16.msra.mxu0 0
      %917 = vmatpush.bf16.msra.mxu0 0
      %918 = vmatpush.bf16.msra.mxu0 0
      %919 = vmatpush.bf16.msra.mxu0 %v910
      %920 = vmatmul.bf16.gmra.mxu0 %v907
      %v921 = vpop.f32.mrf.mxu0
      %v922 = vadd.f32 0.0, %v921
      %v923 = vpop.f32.mrf.mxu0
      %924 = vdwg.mxu0
      %v926 = vsel %vm791, %v845, 0
      %v929 = vsel %vm828, %v846, 0
      %931 = vmatpush.bf16.msra.mxu0 0
      %932 = vmatpush.bf16.msra.mxu0 0
      %933 = vmatpush.bf16.msra.mxu0 0
      %934 = vmatpush.bf16.msra.mxu0 0
      %935 = vmatpush.bf16.msra.mxu0 0
      %936 = vmatpush.bf16.msra.mxu0 0
      %937 = vmatpush.bf16.msra.mxu0 0
      %938 = vmatpush.bf16.msra.mxu0 %v929
      %939 = vmatmul.bf16.gmra.mxu0 %v926
      %v940 = vpop.f32.mrf.mxu0
      %v941 = vadd.f32 %v922, %v940
      %v942 = vpop.f32.mrf.mxu0
      %943 = vdwg.mxu0
      %944 = vrot.lane.b32.xlu0 %v786, 112
      %v945 = vpop.permute.xlu0 %944
      %946 = vrot.lane.b32.xlu0 %v787, 80
      %v947 = vpop.permute.xlu0 %946
      %v949 = vsel %vm791, %v945, 0
      %v952 = vsel %vm791, %v947, 0
      %954 = vmatpush.bf16.xpose.msra.mxu0 0
      %955 = vmatpush.bf16.xpose.msra.mxu0 0
      %956 = vmatpush.bf16.xpose.msra.mxu0 0
      %957 = vmatpush.bf16.xpose.msra.mxu0 0
      %958 = vmatpush.bf16.xpose.msra.mxu0 0
      %959 = vmatpush.bf16.xpose.msra.mxu0 0
      %960 = vmatpush.bf16.xpose.msra.mxu0 0
      %961 = vmatpush.bf16.xpose.msra.mxu0 %v952
      %962 = vmatmul.bf16.gmra.mxu0 %v949
      %v963 = vpop.f32.mrf.mxu0
      %v964 = vadd.f32 %v745, %v963
      %v965 = vpop.f32.mrf.mxu0
      %966 = vdwg.mxu0
      %v967 = vsel %vm791, %v964, -inf
      %968 = vmax.xlane.f32.xlu0 %v967
      %v969 = vpop.xlane.xlu0 %968
      %v970 = vsub.f32 %v964, %v969
      %v971 = vmul.f32 %v970, 1.442695
      %v972 = vpow.pop %v971
      %v973 = vsel %vm791, %v972, 0.0
      %974 = vadd.xlane.f32.xlu0 %v973
      %v975 = vpop.xlane.xlu0 %974
      %v976 = vrcp.pop %v975
      %v977 = vmul.f32 %v972, %v976
      %v978 = vpack.c.bf16 %v977, %v977
      %979 = vrot.lane.b32.xlu0 %v787, 48
      %v980 = vpop.permute.xlu0 %979
      %v982 = vsel %vm791, %v978, 0
      %v985 = vsel %vm828, %v980, 0
      %987 = vmatpush.bf16.msra.mxu0 0
      %988 = vmatpush.bf16.msra.mxu0 0
      %989 = vmatpush.bf16.msra.mxu0 0
      %990 = vmatpush.bf16.msra.mxu0 0
      %991 = vmatpush.bf16.msra.mxu0 0
      %992 = vmatpush.bf16.msra.mxu0 0
      %993 = vmatpush.bf16.msra.mxu0 0
      %994 = vmatpush.bf16.msra.mxu0 %v985
      %995 = vmatmul.bf16.gmra.mxu0 %v982
      %v996 = vpop.f32.mrf.mxu0
      %v997 = vadd.f32 0.0, %v996
      %v998 = vpop.f32.mrf.mxu0
      %999 = vdwg.mxu0
      %v1000 = vpack.c.bf16 %v997, %v997
      %v1001 = vld [vmem:[%s5 + $0x8] sm:$0xf]
      %v1003 = vsel %vm791, %v1000, 0
      %v1006 = vsel %vm828, %v1001, 0
      %1008 = vmatpush.bf16.msra.mxu0 0
      %1009 = vmatpush.bf16.msra.mxu0 0
      %1010 = vmatpush.bf16.msra.mxu0 0
      %1011 = vmatpush.bf16.msra.mxu0 0
      %1012 = vmatpush.bf16.msra.mxu0 0
      %1013 = vmatpush.bf16.msra.mxu0 0
      %1014 = vmatpush.bf16.msra.mxu0 0
      %1015 = vmatpush.bf16.msra.mxu0 %v1006
      %1016 = vmatmul.bf16.gmra.mxu0 %v1003
      %v1017 = vpop.f32.mrf.mxu0
      %v1018 = vadd.f32 0.0, %v1017
      %v1019 = vpop.f32.mrf.mxu0
      %1020 = vdwg.mxu0
      %v1021 = vadd.f32 %v941, %v1018
      %1022 = vrot.lane.b32.xlu0 %v786, 104
      %v1023 = vpop.permute.xlu0 %1022
      %1024 = vrot.lane.b32.xlu0 %v787, 72
      %v1025 = vpop.permute.xlu0 %1024
      %v1027 = vsel %vm791, %v1023, 0
      %v1030 = vsel %vm791, %v1025, 0
      %1032 = vmatpush.bf16.xpose.msra.mxu0 0
      %1033 = vmatpush.bf16.xpose.msra.mxu0 0
      %1034 = vmatpush.bf16.xpose.msra.mxu0 0
      %1035 = vmatpush.bf16.xpose.msra.mxu0 0
      %1036 = vmatpush.bf16.xpose.msra.mxu0 0
      %1037 = vmatpush.bf16.xpose.msra.mxu0 0
      %1038 = vmatpush.bf16.xpose.msra.mxu0 0
      %1039 = vmatpush.bf16.xpose.msra.mxu0 %v1030
      %1040 = vmatmul.bf16.gmra.mxu0 %v1027
      %v1041 = vpop.f32.mrf.mxu0
      %v1042 = vadd.f32 %v745, %v1041
      %v1043 = vpop.f32.mrf.mxu0
      %1044 = vdwg.mxu0
      %v1045 = vsel %vm791, %v1042, -inf
      %1046 = vmax.xlane.f32.xlu0 %v1045
      %v1047 = vpop.xlane.xlu0 %1046
      %v1048 = vsub.f32 %v1042, %v1047
      %v1049 = vmul.f32 %v1048, 1.442695
      %v1050 = vpow.pop %v1049
      %v1051 = vsel %vm791, %v1050, 0.0
      %1052 = vadd.xlane.f32.xlu0 %v1051
      %v1053 = vpop.xlane.xlu0 %1052
      %v1054 = vrcp.pop %v1053
      %v1055 = vmul.f32 %v1050, %v1054
      %v1056 = vpack.c.bf16 %v1055, %v1055
      %1057 = vrot.lane.b32.xlu0 %v787, 40
      %v1058 = vpop.permute.xlu0 %1057
      %v1060 = vsel %vm791, %v1056, 0
      %v1063 = vsel %vm828, %v1058, 0
      %1065 = vmatpush.bf16.msra.mxu0 0
      %1066 = vmatpush.bf16.msra.mxu0 0
      %1067 = vmatpush.bf16.msra.mxu0 0
      %1068 = vmatpush.bf16.msra.mxu0 0
      %1069 = vmatpush.bf16.msra.mxu0 0
      %1070 = vmatpush.bf16.msra.mxu0 0
      %1071 = vmatpush.bf16.msra.mxu0 0
      %1072 = vmatpush.bf16.msra.mxu0 %v1063
      %1073 = vmatmul.bf16.gmra.mxu0 %v1060
      %v1074 = vpop.f32.mrf.mxu0
      %v1075 = vadd.f32 0.0, %v1074
      %v1076 = vpop.f32.mrf.mxu0
      %1077 = vdwg.mxu0
      %v1078 = vpack.c.bf16 %v1075, %v1075
      %v1079 = vld [vmem:[%s5 + $0xc] sm:$0xf]
      %v1081 = vsel %vm791, %v1078, 0
      %v1084 = vsel %vm828, %v1079, 0
      %1086 = vmatpush.bf16.msra.mxu0 0
      %1087 = vmatpush.bf16.msra.mxu0 0
      %1088 = vmatpush.bf16.msra.mxu0 0
      %1089 = vmatpush.bf16.msra.mxu0 0
      %1090 = vmatpush.bf16.msra.mxu0 0
      %1091 = vmatpush.bf16.msra.mxu0 0
      %1092 = vmatpush.bf16.msra.mxu0 0
      %1093 = vmatpush.bf16.msra.mxu0 %v1084
      %1094 = vmatmul.bf16.gmra.mxu0 %v1081
      %v1095 = vpop.f32.mrf.mxu0
      %v1096 = vadd.f32 0.0, %v1095
      %v1097 = vpop.f32.mrf.mxu0
      %1098 = vdwg.mxu0
      %v1099 = vadd.f32 %v1021, %v1096
      %v1101 = vperm.slane %v784, 0
      %v1103 = vadd.f32 %v1099, %v1101
      %v1104 = vadd.f32 %v744, %v1103
      %v1105 = vld [vmem:[%s7] sm:$0x1]
      %v1106 = vld [vmem:[%s8] sm:$0x1]
      %v1107 = vsel %vm767, %v1104, 0.0
      %1108 = vadd.xlane.f32.xlu0 %v1107
      %v1109 = vpop.xlane.xlu0 %1108
      %v1110 = vrcp.pop 32.0
      %v1111 = vmul.f32 32.0, %v1110
      %v1112 = vsub.f32 1.0, %v1111
      %v1113 = vmul.f32 %v1110, %v1112
      %v1114 = vadd.f32 %v1110, %v1113
      %vm1115 = vweird.f32 %v1110
      %v1116 = vsel %vm1115, %v1110, %v1114
      %v1117 = vmul.f32 %v1109, %v1116
      %v1118 = vsub.f32 %v1104, %v1117
      %v1119 = vmul.f32 %v1118, %v1118
      %v1120 = vsel %vm767, %v1119, 0.0
      %1121 = vadd.xlane.f32.xlu0 %v1120
      %v1122 = vpop.xlane.xlu0 %1121
      %v1123 = vmul.f32 %v1122, %v1116
      %v1124 = vadd.f32 %v1123, 1e-05
      %v1125 = vrsqrt.pop %v1124
      %v1126 = vmul.f32 %v1125, %v1124
      %v1127 = vmul.f32 %v1126, %v1125
      %v1128 = vmul.f32 0.5, %v1127
      %v1129 = vsub.f32 1.5, %v1128
      %v1130 = vmul.f32 %v1125, %v1129
      %vm1131 = vweird.f32 %v1124
      %vm1132 = vweird.f32 %v1125
      %vm1133 = vmor %vm1131, %vm1132
      %v1134 = vsel %vm1133, %v1125, %v1130
      %v1135 = vmul.f32 %v1118, %v1134
      %v1137 = vperm.slane %v1105, 0
      %v1139 = vmul.f32 %v1135, %v1137
      %v1141 = vperm.slane %v1106, 0
      %v1143 = vadd.f32 %v1139, %v1141
      %v1144 = vld [vmem:[%s738] sm:$0xff]
      %v1145 = vld [vmem:[%s738 + $0x8] sm:$0xff]
      %v1146 = vpack.c.bf16 %v1143, %v1143
      %v1147 = vld [vmem:[%s9] sm:$0xf]
      %v1148 = vld [vmem:[%s9 + $0x4] sm:$0xf]
      %v1149 = vld [vmem:[%s9 + $0x8] sm:$0xf]
      %v1150 = vld [vmem:[%s9 + $0xc] sm:$0xf]
      %v1151 = vld [vmem:[%s10] sm:$0x1]
      %v1153 = vperm.slane %v1151, 0
      %v1159 = vunpack.c.l.b16 %v1147
      %v1160 = vunpack.c.l.b16 %v1148
      %v1161 = vunpack.c.l.b16 %v1149
      %v1162 = vunpack.c.l.b16 %v1150
      %v1163 = vpack.c.b16 %v1160, %v1159
      %v1164 = vpack.c.b16 %v1162, %v1161
      %v1168 = vsel %vm767, %v1146, 0
      %1170 = vmatpush.bf16.msra.mxu0 0
      %1171 = vmatpush.bf16.msra.mxu0 0
      %1172 = vmatpush.bf16.msra.mxu0 0
      %1173 = vmatpush.bf16.msra.mxu0 0
      %1174 = vmatpush.bf16.msra.mxu0 0
      %1175 = vmatpush.bf16.msra.mxu0 0
      %1176 = vmatpush.bf16.msra.mxu0 %v1164
      %1177 = vmatpush.bf16.msra.mxu0 %v1163
      %1178 = vmatmul.bf16.gmra.mxu0 %v1168
      %v1179 = vpop.f32.mrf.mxu0
      %v1180 = vadd.f32 %v1153, %v1179
      %v1181 = vpop.f32.mrf.mxu0
      %1182 = vdwg.mxu0
      %v1183 = vpack.c.bf16 %v1145, %v1144
      %v1184 = vld [vmem:[%s11] sm:$0xf]
      %v1185 = vld [vmem:[%s11 + $0x4] sm:$0xf]
      %v1186 = vld [vmem:[%s11 + $0x8] sm:$0xf]
      %v1187 = vld [vmem:[%s11 + $0xc] sm:$0xf]
      %v1188 = vld [vmem:[%s12] sm:$0x1]
      %v1190 = vperm.slane %v1188, 0
      %v1196 = vunpack.c.l.b16 %v1184
      %v1197 = vunpack.c.l.b16 %v1185
      %v1198 = vunpack.c.l.b16 %v1186
      %v1199 = vunpack.c.l.b16 %v1187
      %v1200 = vpack.c.b16 %v1197, %v1196
      %v1201 = vpack.c.b16 %v1199, %v1198
      %v1205 = vsel %vm767, %v1183, 0
      %1207 = vmatpush.bf16.msra.mxu0 0
      %1208 = vmatpush.bf16.msra.mxu0 0
      %1209 = vmatpush.bf16.msra.mxu0 0
      %1210 = vmatpush.bf16.msra.mxu0 0
      %1211 = vmatpush.bf16.msra.mxu0 0
      %1212 = vmatpush.bf16.msra.mxu0 0
      %1213 = vmatpush.bf16.msra.mxu0 %v1201
      %1214 = vmatpush.bf16.msra.mxu0 %v1200
      %1215 = vmatmul.bf16.gmra.mxu0 %v1205
      %v1216 = vpop.f32.mrf.mxu0
      %v1217 = vadd.f32 %v1190, %v1216
      %v1218 = vpop.f32.mrf.mxu0
      %v1219 = vadd.f32 %v1190, %v1218
      %1220 = vdwg.mxu0
      %v1221 = vld [vmem:[%s14] sm:$0x1]
      %v1222 = vmul.f32 %v1180, 0.35355338
      %v1223 = vpack.c.bf16 %v1222, %v1222
      %v1224 = vpack.c.bf16 %v1219, %v1217
      %v1226 = vsel %vm791, %v1223, 0
      %v1229 = vsel %vm791, %v1224, 0
      %1231 = vmatpush.bf16.xpose.msra.mxu0 0
      %1232 = vmatpush.bf16.xpose.msra.mxu0 0
      %1233 = vmatpush.bf16.xpose.msra.mxu0 0
      %1234 = vmatpush.bf16.xpose.msra.mxu0 0
      %1235 = vmatpush.bf16.xpose.msra.mxu0 0
      %1236 = vmatpush.bf16.xpose.msra.mxu0 0
      %1237 = vmatpush.bf16.xpose.msra.mxu0 0
      %1238 = vmatpush.bf16.xpose.msra.mxu0 %v1229
      %1239 = vmatmul.bf16.gmra.mxu0 %v1226
      %v1240 = vpop.f32.mrf.mxu0
      %v1241 = vadd.f32 0.0, %v1240
      %v1242 = vpop.f32.mrf.mxu0
      %1243 = vdwg.mxu0
      %vm1244 = vcmask 130048
      %v1245 = vsel %vm1244, %v1241, -inf
      %1246 = vmax.xlane.f32.xlu0 %v1245
      %v1247 = vpop.xlane.xlu0 %1246
      %v1248 = vsub.f32 %v1241, %v1247
      %v1249 = vmul.f32 %v1248, 1.442695
      %v1250 = vpow.pop %v1249
      %v1251 = vsel %vm1244, %v1250, 0.0
      %1252 = vadd.xlane.f32.xlu0 %v1251
      %v1253 = vpop.xlane.xlu0 %1252
      %v1254 = vrcp.pop %v1253
      %v1255 = vmul.f32 %v1250, %v1254
      %v1256 = vpack.c.bf16 %v1255, %v1255
      %1258 = vrot.lane.b32.xlu0 %v1224, 96
      %v1259 = vpop.permute.xlu0 %1258
      %v1262 = vsel %vm1244, %v1256, 0
      %1264 = vmatpush.bf16.msra.mxu0 0
      %1265 = vmatpush.bf16.msra.mxu0 0
      %1266 = vmatpush.bf16.msra.mxu0 0
      %1267 = vmatpush.bf16.msra.mxu0 0
      %1268 = vmatpush.bf16.msra.mxu0 0
      %1269 = vmatpush.bf16.msra.mxu0 0
      %1270 = vmatpush.bf16.msra.mxu0 0
      %1271 = vmatpush.bf16.msra.mxu0 %v1259
      %1272 = vmatmul.bf16.gmra.mxu0 %v1262
      %v1273 = vpop.f32.mrf.mxu0
      %v1274 = vadd.f32 0.0, %v1273
      %v1275 = vpop.f32.mrf.mxu0
      %1276 = vdwg.mxu0
      %v1277 = vpack.c.bf16 %v1274, %v1274
      %v1278 = vld [vmem:[%s13] sm:$0xf]
      %1280 = vrot.lane.b32.xlu0 %v1223, 120
      %v1281 = vpop.permute.xlu0 %1280
      %1282 = vrot.lane.b32.xlu0 %v1224, 120
      %v1283 = vpop.permute.xlu0 %1282
      %v1285 = vsel %vm791, %v1281, 0
      %v1288 = vsel %vm791, %v1283, 0
      %1290 = vmatpush.bf16.xpose.msra.mxu0 0
      %1291 = vmatpush.bf16.xpose.msra.mxu0 0
      %1292 = vmatpush.bf16.xpose.msra.mxu0 0
      %1293 = vmatpush.bf16.xpose.msra.mxu0 0
      %1294 = vmatpush.bf16.xpose.msra.mxu0 0
      %1295 = vmatpush.bf16.xpose.msra.mxu0 0
      %1296 = vmatpush.bf16.xpose.msra.mxu0 0
      %1297 = vmatpush.bf16.xpose.msra.mxu0 %v1288
      %1298 = vmatmul.bf16.gmra.mxu0 %v1285
      %v1299 = vpop.f32.mrf.mxu0
      %v1300 = vadd.f32 0.0, %v1299
      %v1301 = vpop.f32.mrf.mxu0
      %1302 = vdwg.mxu0
      %v1303 = vsel %vm1244, %v1300, -inf
      %1304 = vmax.xlane.f32.xlu0 %v1303
      %v1305 = vpop.xlane.xlu0 %1304
      %v1306 = vsub.f32 %v1300, %v1305
      %v1307 = vmul.f32 %v1306, 1.442695
      %v1308 = vpow.pop %v1307
      %v1309 = vsel %vm1244, %v1308, 0.0
      %1310 = vadd.xlane.f32.xlu0 %v1309
      %v1311 = vpop.xlane.xlu0 %1310
      %v1312 = vrcp.pop %v1311
      %v1313 = vmul.f32 %v1308, %v1312
      %v1314 = vpack.c.bf16 %v1313, %v1313
      %1315 = vrot.lane.b32.xlu0 %v1224, 88
      %v1316 = vpop.permute.xlu0 %1315
      %v1319 = vsel %vm1244, %v1314, 0
      %1321 = vmatpush.bf16.msra.mxu0 0
      %1322 = vmatpush.bf16.msra.mxu0 0
      %1323 = vmatpush.bf16.msra.mxu0 0
      %1324 = vmatpush.bf16.msra.mxu0 0
      %1325 = vmatpush.bf16.msra.mxu0 0
      %1326 = vmatpush.bf16.msra.mxu0 0
      %1327 = vmatpush.bf16.msra.mxu0 0
      %1328 = vmatpush.bf16.msra.mxu0 %v1316
      %1329 = vmatmul.bf16.gmra.mxu0 %v1319
      %v1330 = vpop.f32.mrf.mxu0
      %v1331 = vadd.f32 0.0, %v1330
      %v1332 = vpop.f32.mrf.mxu0
      %1333 = vdwg.mxu0
      %v1334 = vpack.c.bf16 %v1331, %v1331
      %v1335 = vld [vmem:[%s13 + $0x4] sm:$0xf]
      %v1337 = vsel %vm791, %v1334, 0
      %v1340 = vsel %vm828, %v1335, 0
      %1342 = vmatpush.bf16.msra.mxu0 0
      %1343 = vmatpush.bf16.msra.mxu0 0
      %1344 = vmatpush.bf16.msra.mxu0 0
      %1345 = vmatpush.bf16.msra.mxu0 0
      %1346 = vmatpush.bf16.msra.mxu0 0
      %1347 = vmatpush.bf16.msra.mxu0 0
      %1348 = vmatpush.bf16.msra.mxu0 0
      %1349 = vmatpush.bf16.msra.mxu0 %v1340
      %1350 = vmatmul.bf16.gmra.mxu0 %v1337
      %v1351 = vpop.f32.mrf.mxu0
      %v1352 = vadd.f32 0.0, %v1351
      %v1353 = vpop.f32.mrf.mxu0
      %1354 = vdwg.mxu0
      %v1356 = vsel %vm791, %v1277, 0
      %v1359 = vsel %vm828, %v1278, 0
      %1361 = vmatpush.bf16.msra.mxu0 0
      %1362 = vmatpush.bf16.msra.mxu0 0
      %1363 = vmatpush.bf16.msra.mxu0 0
      %1364 = vmatpush.bf16.msra.mxu0 0
      %1365 = vmatpush.bf16.msra.mxu0 0
      %1366 = vmatpush.bf16.msra.mxu0 0
      %1367 = vmatpush.bf16.msra.mxu0 0
      %1368 = vmatpush.bf16.msra.mxu0 %v1359
      %1369 = vmatmul.bf16.gmra.mxu0 %v1356
      %v1370 = vpop.f32.mrf.mxu0
      %v1371 = vadd.f32 %v1352, %v1370
      %v1372 = vpop.f32.mrf.mxu0
      %1373 = vdwg.mxu0
      %1374 = vrot.lane.b32.xlu0 %v1223, 112
      %v1375 = vpop.permute.xlu0 %1374
      %1376 = vrot.lane.b32.xlu0 %v1224, 112
      %v1377 = vpop.permute.xlu0 %1376
      %v1379 = vsel %vm791, %v1375, 0
      %v1382 = vsel %vm791, %v1377, 0
      %1384 = vmatpush.bf16.xpose.msra.mxu0 0
      %1385 = vmatpush.bf16.xpose.msra.mxu0 0
      %1386 = vmatpush.bf16.xpose.msra.mxu0 0
      %1387 = vmatpush.bf16.xpose.msra.mxu0 0
      %1388 = vmatpush.bf16.xpose.msra.mxu0 0
      %1389 = vmatpush.bf16.xpose.msra.mxu0 0
      %1390 = vmatpush.bf16.xpose.msra.mxu0 0
      %1391 = vmatpush.bf16.xpose.msra.mxu0 %v1382
      %1392 = vmatmul.bf16.gmra.mxu0 %v1379
      %v1393 = vpop.f32.mrf.mxu0
      %v1394 = vadd.f32 0.0, %v1393
      %v1395 = vpop.f32.mrf.mxu0
      %1396 = vdwg.mxu0
      %v1397 = vsel %vm1244, %v1394, -inf
      %1398 = vmax.xlane.f32.xlu0 %v1397
      %v1399 = vpop.xlane.xlu0 %1398
      %v1400 = vsub.f32 %v1394, %v1399
      %v1401 = vmul.f32 %v1400, 1.442695
      %v1402 = vpow.pop %v1401
      %v1403 = vsel %vm1244, %v1402, 0.0
      %1404 = vadd.xlane.f32.xlu0 %v1403
      %v1405 = vpop.xlane.xlu0 %1404
      %v1406 = vrcp.pop %v1405
      %v1407 = vmul.f32 %v1402, %v1406
      %v1408 = vpack.c.bf16 %v1407, %v1407
      %1409 = vrot.lane.b32.xlu0 %v1224, 80
      %v1410 = vpop.permute.xlu0 %1409
      %v1413 = vsel %vm1244, %v1408, 0
      %1415 = vmatpush.bf16.msra.mxu0 0
      %1416 = vmatpush.bf16.msra.mxu0 0
      %1417 = vmatpush.bf16.msra.mxu0 0
      %1418 = vmatpush.bf16.msra.mxu0 0
      %1419 = vmatpush.bf16.msra.mxu0 0
      %1420 = vmatpush.bf16.msra.mxu0 0
      %1421 = vmatpush.bf16.msra.mxu0 0
      %1422 = vmatpush.bf16.msra.mxu0 %v1410
      %1423 = vmatmul.bf16.gmra.mxu0 %v1413
      %v1424 = vpop.f32.mrf.mxu0
      %v1425 = vadd.f32 0.0, %v1424
      %v1426 = vpop.f32.mrf.mxu0
      %1427 = vdwg.mxu0
      %v1428 = vpack.c.bf16 %v1425, %v1425
      %v1429 = vld [vmem:[%s13 + $0x8] sm:$0xf]
      %v1431 = vsel %vm791, %v1428, 0
      %v1434 = vsel %vm828, %v1429, 0
      %1436 = vmatpush.bf16.msra.mxu0 0
      %1437 = vmatpush.bf16.msra.mxu0 0
      %1438 = vmatpush.bf16.msra.mxu0 0
      %1439 = vmatpush.bf16.msra.mxu0 0
      %1440 = vmatpush.bf16.msra.mxu0 0
      %1441 = vmatpush.bf16.msra.mxu0 0
      %1442 = vmatpush.bf16.msra.mxu0 0
      %1443 = vmatpush.bf16.msra.mxu0 %v1434
      %1444 = vmatmul.bf16.gmra.mxu0 %v1431
      %v1445 = vpop.f32.mrf.mxu0
      %v1446 = vadd.f32 0.0, %v1445
      %v1447 = vpop.f32.mrf.mxu0
      %1448 = vdwg.mxu0
      %v1449 = vadd.f32 %v1371, %v1446
      %1450 = vrot.lane.b32.xlu0 %v1223, 104
      %v1451 = vpop.permute.xlu0 %1450
      %1452 = vrot.lane.b32.xlu0 %v1224, 104
      %v1453 = vpop.permute.xlu0 %1452
      %v1455 = vsel %vm791, %v1451, 0
      %v1458 = vsel %vm791, %v1453, 0
      %1460 = vmatpush.bf16.xpose.msra.mxu0 0
      %1461 = vmatpush.bf16.xpose.msra.mxu0 0
      %1462 = vmatpush.bf16.xpose.msra.mxu0 0
      %1463 = vmatpush.bf16.xpose.msra.mxu0 0
      %1464 = vmatpush.bf16.xpose.msra.mxu0 0
      %1465 = vmatpush.bf16.xpose.msra.mxu0 0
      %1466 = vmatpush.bf16.xpose.msra.mxu0 0
      %1467 = vmatpush.bf16.xpose.msra.mxu0 %v1458
      %1468 = vmatmul.bf16.gmra.mxu0 %v1455
      %v1469 = vpop.f32.mrf.mxu0
      %v1470 = vadd.f32 0.0, %v1469
      %v1471 = vpop.f32.mrf.mxu0
      %1472 = vdwg.mxu0
      %v1473 = vsel %vm1244, %v1470, -inf
      %1474 = vmax.xlane.f32.xlu0 %v1473
      %v1475 = vpop.xlane.xlu0 %1474
      %v1476 = vsub.f32 %v1470, %v1475
      %v1477 = vmul.f32 %v1476, 1.442695
      %v1478 = vpow.pop %v1477
      %v1479 = vsel %vm1244, %v1478, 0.0
      %1480 = vadd.xlane.f32.xlu0 %v1479
      %v1481 = vpop.xlane.xlu0 %1480
      %v1482 = vrcp.pop %v1481
      %v1483 = vmul.f32 %v1478, %v1482
      %v1484 = vpack.c.bf16 %v1483, %v1483
      %1485 = vrot.lane.b32.xlu0 %v1224, 72
      %v1486 = vpop.permute.xlu0 %1485
      %v1489 = vsel %vm1244, %v1484, 0
      %1491 = vmatpush.bf16.msra.mxu0 0
      %1492 = vmatpush.bf16.msra.mxu0 0
      %1493 = vmatpush.bf16.msra.mxu0 0
      %1494 = vmatpush.bf16.msra.mxu0 0
      %1495 = vmatpush.bf16.msra.mxu0 0
      %1496 = vmatpush.bf16.msra.mxu0 0
      %1497 = vmatpush.bf16.msra.mxu0 0
      %1498 = vmatpush.bf16.msra.mxu0 %v1486
      %1499 = vmatmul.bf16.gmra.mxu0 %v1489
      %v1500 = vpop.f32.mrf.mxu0
      %v1501 = vadd.f32 0.0, %v1500
      %v1502 = vpop.f32.mrf.mxu0
      %1503 = vdwg.mxu0
      %v1504 = vpack.c.bf16 %v1501, %v1501
      %v1505 = vld [vmem:[%s13 + $0xc] sm:$0xf]
      %v1507 = vsel %vm791, %v1504, 0
      %v1510 = vsel %vm828, %v1505, 0
      %1512 = vmatpush.bf16.msra.mxu0 0
      %1513 = vmatpush.bf16.msra.mxu0 0
      %1514 = vmatpush.bf16.msra.mxu0 0
      %1515 = vmatpush.bf16.msra.mxu0 0
      %1516 = vmatpush.bf16.msra.mxu0 0
      %1517 = vmatpush.bf16.msra.mxu0 0
      %1518 = vmatpush.bf16.msra.mxu0 0
      %1519 = vmatpush.bf16.msra.mxu0 %v1510
      %1520 = vmatmul.bf16.gmra.mxu0 %v1507
      %v1521 = vpop.f32.mrf.mxu0
      %v1522 = vadd.f32 0.0, %v1521
      %v1523 = vpop.f32.mrf.mxu0
      %1524 = vdwg.mxu0
      %v1525 = vadd.f32 %v1449, %v1522
      %v1527 = vperm.slane %v1221, 0
      %v1529 = vadd.f32 %v1525, %v1527
      %v1530 = vadd.f32 %v1143, %v1529
      %v1531 = vld [vmem:[%s15] sm:$0x1]
      %v1532 = vld [vmem:[%s16] sm:$0x1]
      %v1533 = vsel %vm767, %v1530, 0.0
      %1534 = vadd.xlane.f32.xlu0 %v1533
      %v1535 = vpop.xlane.xlu0 %1534
      %v1536 = vmul.f32 %v1535, %v1116
      %v1537 = vsub.f32 %v1530, %v1536
      %v1538 = vmul.f32 %v1537, %v1537
      %v1539 = vsel %vm767, %v1538, 0.0
      %1540 = vadd.xlane.f32.xlu0 %v1539
      %v1541 = vpop.xlane.xlu0 %1540
      %v1542 = vmul.f32 %v1541, %v1116
      %v1543 = vadd.f32 %v1542, 1e-05
      %v1544 = vrsqrt.pop %v1543
      %v1545 = vmul.f32 %v1544, %v1543
      %v1546 = vmul.f32 %v1545, %v1544
      %v1547 = vmul.f32 0.5, %v1546
      %v1548 = vsub.f32 1.5, %v1547
      %v1549 = vmul.f32 %v1544, %v1548
      %vm1550 = vweird.f32 %v1543
      %vm1551 = vweird.f32 %v1544
      %vm1552 = vmor %vm1550, %vm1551
      %v1553 = vsel %vm1552, %v1544, %v1549
      %v1554 = vmul.f32 %v1537, %v1553
      %v1556 = vperm.slane %v1531, 0
      %v1558 = vmul.f32 %v1554, %v1556
      %v1560 = vperm.slane %v1532, 0
      %v1562 = vadd.f32 %v1558, %v1560
      %v1563 = vpack.c.bf16 %v1562, %v1562
      %v1564 = vld [vmem:[%s17] sm:$0xf]
      %v1565 = vld [vmem:[%s17 + $0x4] sm:$0xf]
      %v1566 = vld [vmem:[%s17 + $0x8] sm:$0xf]
      %v1567 = vld [vmem:[%s17 + $0xc] sm:$0xf]
      %v1568 = vld [vmem:[%s18] sm:$0x1]
      %v1570 = vperm.slane %v1568, 0
      %v1576 = vunpack.c.l.b16 %v1564
      %v1577 = vunpack.c.l.b16 %v1565
      %v1578 = vunpack.c.l.b16 %v1566
      %v1579 = vunpack.c.l.b16 %v1567
      %v1580 = vpack.c.b16 %v1577, %v1576
      %v1581 = vpack.c.b16 %v1579, %v1578
      %v1585 = vsel %vm767, %v1563, 0
      %1587 = vmatpush.bf16.msra.mxu0 0
      %1588 = vmatpush.bf16.msra.mxu0 0
      %1589 = vmatpush.bf16.msra.mxu0 0
      %1590 = vmatpush.bf16.msra.mxu0 0
      %1591 = vmatpush.bf16.msra.mxu0 0
      %1592 = vmatpush.bf16.msra.mxu0 0
      %1593 = vmatpush.bf16.msra.mxu0 %v1581
      %1594 = vmatpush.bf16.msra.mxu0 %v1580
      %1595 = vmatmul.bf16.gmra.mxu0 %v1585
      %v1596 = vpop.f32.mrf.mxu0
      %v1597 = vadd.f32 %v1570, %v1596
      %v1598 = vpop.f32.mrf.mxu0
      %1599 = vdwg.mxu0
      %v1600 = vmax.f32 %v1597, 0.0
      %v1601 = vpack.c.bf16 %v1600, %v1600
      %v1602 = vld [vmem:[%s19] sm:$0xf]
      %v1603 = vld [vmem:[%s19 + $0x4] sm:$0xf]
      %v1604 = vld [vmem:[%s19 + $0x8] sm:$0xf]
      %v1605 = vld [vmem:[%s19 + $0xc] sm:$0xf]
      %v1606 = vld [vmem:[%s19 + $0x10] sm:$0xf]
      %v1607 = vld [vmem:[%s19 + $0x14] sm:$0xf]
      %v1608 = vld [vmem:[%s19 + $0x18] sm:$0xf]
      %v1609 = vld [vmem:[%s19 + $0x1c] sm:$0xf]
      %v1610 = vld [vmem:[%s19 + $0x20] sm:$0xf]
      %v1611 = vld [vmem:[%s19 + $0x24] sm:$0xf]
      %v1612 = vld [vmem:[%s19 + $0x28] sm:$0xf]
      %v1613 = vld [vmem:[%s19 + $0x2c] sm:$0xf]
      %v1614 = vld [vmem:[%s19 + $0x30] sm:$0xf]
      %v1615 = vld [vmem:[%s19 + $0x34] sm:$0xf]
      %v1616 = vld [vmem:[%s19 + $0x38] sm:$0xf]
      %v1617 = vld [vmem:[%s19 + $0x3c] sm:$0xf]
      %v1618 = vld [vmem:[%s20] sm:$0x1]
      %v1620 = vperm.slane %v1618, 0
      %v1638 = vunpack.c.l.b16 %v1602
      %v1639 = vunpack.c.l.b16 %v1603
      %v1640 = vunpack.c.l.b16 %v1604
      %v1641 = vunpack.c.l.b16 %v1605
      %v1642 = vunpack.c.l.b16 %v1606
      %v1643 = vunpack.c.l.b16 %v1607
      %v1644 = vunpack.c.l.b16 %v1608
      %v1645 = vunpack.c.l.b16 %v1609
      %v1646 = vunpack.c.l.b16 %v1610
      %v1647 = vunpack.c.l.b16 %v1611
      %v1648 = vunpack.c.l.b16 %v1612
      %v1649 = vunpack.c.l.b16 %v1613
      %v1650 = vunpack.c.l.b16 %v1614
      %v1651 = vunpack.c.l.b16 %v1615
      %v1652 = vunpack.c.l.b16 %v1616
      %v1653 = vunpack.c.l.b16 %v1617
      %v1654 = vpack.c.b16 %v1639, %v1638
      %v1655 = vpack.c.b16 %v1641, %v1640
      %v1656 = vpack.c.b16 %v1643, %v1642
      %v1657 = vpack.c.b16 %v1645, %v1644
      %v1658 = vpack.c.b16 %v1647, %v1646
      %v1659 = vpack.c.b16 %v1649, %v1648
      %v1660 = vpack.c.b16 %v1651, %v1650
      %v1661 = vpack.c.b16 %v1653, %v1652
      %1670 = vmatpush.bf16.msra.mxu0 %v1661
      %1671 = vmatpush.bf16.msra.mxu0 %v1660
      %1672 = vmatpush.bf16.msra.mxu0 %v1659
      %1673 = vmatpush.bf16.msra.mxu0 %v1658
      %1674 = vmatpush.bf16.msra.mxu0 %v1657
      %1675 = vmatpush.bf16.msra.mxu0 %v1656
      %1676 = vmatpush.bf16.msra.mxu0 %v1655
      %1677 = vmatpush.bf16.msra.mxu0 %v1654
      %1678 = vmatmul.bf16.gmra.mxu0 %v1601
      %v1679 = vpop.f32.mrf.mxu0
      %v1680 = vadd.f32 %v1620, %v1679
      %v1681 = vpop.f32.mrf.mxu0
      %1682 = vdwg.mxu0
      %v1683 = vadd.f32 %v1562, %v1680
      %v1684 = vld [vmem:[%s21] sm:$0x1]
      %v1685 = vld [vmem:[%s22] sm:$0x1]
      %v1686 = vsel %vm767, %v1683, 0.0
      %1687 = vadd.xlane.f32.xlu0 %v1686
      %v1688 = vpop.xlane.xlu0 %1687
      %v1689 = vmul.f32 %v1688, %v1116
      %v1690 = vsub.f32 %v1683, %v1689
      %v1691 = vmul.f32 %v1690, %v1690
      %v1692 = vsel %vm767, %v1691, 0.0
      %1693 = vadd.xlane.f32.xlu0 %v1692
      %v1694 = vpop.xlane.xlu0 %1693
      %v1695 = vmul.f32 %v1694, %v1116
      %v1696 = vadd.f32 %v1695, 1e-05
      %v1697 = vrsqrt.pop %v1696
      %v1698 = vmul.f32 %v1697, %v1696
      %v1699 = vmul.f32 %v1698, %v1697
      %v1700 = vmul.f32 0.5, %v1699
      %v1701 = vsub.f32 1.5, %v1700
      %v1702 = vmul.f32 %v1697, %v1701
      %vm1703 = vweird.f32 %v1696
      %vm1704 = vweird.f32 %v1697
      %vm1705 = vmor %vm1703, %vm1704
      %v1706 = vsel %vm1705, %v1697, %v1702
      %v1707 = vmul.f32 %v1690, %v1706
      %v1709 = vperm.slane %v1684, 0
      %v1711 = vmul.f32 %v1707, %v1709
      %v1713 = vperm.slane %v1685, 0
      %v1715 = vadd.f32 %v1711, %v1713
      %1716 = vst.msk [vmem:[%s742] sm:$0xff] %vm767, %v1715
      %p1717 = scmp.lt.s32.totalorder %s34, 1
      %s1718 = scalar_select %p1717, %s34, 1
      %s1719 = smul.addr %s1718, 8
      %s1720 = scalar_lea.vmem %s23, %s1719
      // Predicated region
      $region113: #{vision_encoder_decoder.11} parent=111 // pred_check
        %p1721 = pneg %p550
      $region114: #{vision_encoder_decoder.11} parent=111 // pred_check_branch
        %1723 = sbr.rel (%p1721) target = $region116
      $region115: #{vision_encoder_decoder.11} parent=111 // pred_region
        _
      $region116: #{vision_encoder_decoder.11} parent=111 // pred_fallthru
        _
    $region112: #{vision_encoder_decoder.11} parent=5 // pred_fallthru
      _
    %p1724 = scmp.le.s32.totalorder 2, %s29
    // Predicated region
    $region117: #{vision_encoder_decoder.11} parent=5 // pred_check
      %p1725 = pneg %p1724
    $region118: #{vision_encoder_decoder.11} parent=5 // pred_check_branch
      %1727 = sbr.rel (%p1725) target = $region120
    $region119: #{vision_encoder_decoder.11} parent=5 // pred_region
      %s1728 = ssub.s32 %s29, 2
      // Predicated region
      $region121: #{vision_encoder_decoder.11} parent=119 // pred_check
        %p1729 = pneg %p556
      $region122: #{vision_encoder_decoder.11} parent=119 // pred_check_branch
        %1731 = sbr.rel (%p1729) target = $region124
      $region123: #{vision_encoder_decoder.11} parent=119 // pred_region
        %p1732 = scmp.lt.s32.totalorder %s35, 1
        %s1733 = scalar_select %p1732, %s35, 1
        %s1734 = smul.addr %s1733, 8
        %s1735 = scalar_lea.vmem %s23, %s1734
      $region124: #{vision_encoder_decoder.11} parent=119 // pred_fallthru
        _
    $region120: #{vision_encoder_decoder.11} parent=5 // pred_fallthru
      _
  $region6: #{vision_encoder_decoder.11} parent=0 // loop_footer
    %s33 = sadd.s32 1, %s29
  $region7: #{vision_encoder_decoder.11} parent=0 // loop_footer_branch
    %28 = sbr.rel target = $region3
  $region8: #{vision_encoder_decoder.11} parent=0 // loop_exit
    _

// kernel: vision_encoder_decoder.12
$region0: #{vision_encoder_decoder.12}
  #allocation0 [shape = 'u32[]', space=smem, size = 0x4, offset = 0x4, fixed_abs, tag = 'smem constant byte address 0x4 - core index']
  #allocation1 [shape = 'u32[72,128]{1,0:T(1,128)}', space=vmem, size = 0x9000, scoped, tag = 'internal scratch']
  %s0 = inlined_call_operand.vmem [shape: f32[2,8,32], index: 0, kind: input, shape index: {}]
  %s1 = inlined_call_operand.vmem [shape: f32[2,8,8], index: 1, kind: input, shape index: {}]
  %s2 = inlined_call_operand.vmem [shape: f32[2,16,32], index: 2, kind: input, shape index: {}]
  %s3 = inlined_call_operand.vmem [shape: bf16[32,96], index: 3, kind: input, shape index: {}]
  %s4 = inlined_call_operand.vmem [shape: f32[1,96], index: 4, kind: input, shape index: {}]
  %s5 = inlined_call_operand.vmem [shape: bf16[32,32], index: 5, kind: input, shape index: {}]
  %s6 = inlined_call_operand.vmem [shape: f32[1,32], index: 6, kind: input, shape index: {}]
  %s7 = inlined_call_operand.vmem [shape: f32[1,32], index: 7, kind: input, shape index: {}]
  %s8 = inlined_call_operand.vmem [shape: f32[1,32], index: 8, kind: input, shape index: {}]
  %s9 = inlined_call_operand.vmem [shape: bf16[32,32], index: 9, kind: input, shape index: {}]
  %s10 = inlined_call_operand.vmem [shape: f32[1,32], index: 10, kind: input, shape index: {}]
  %s11 = inlined_call_operand.vmem [shape: bf16[32,64], index: 11, kind: input, shape index: {}]
  %s12 = inlined_call_operand.vmem [shape: f32[1,64], index: 12, kind: input, shape index: {}]
  %s13 = inlined_call_operand.vmem [shape: bf16[32,32], index: 13, kind: input, shape index: {}]
  %s14 = inlined_call_operand.vmem [shape: f32[1,32], index: 14, kind: input, shape index: {}]
  %s15 = inlined_call_operand.vmem [shape: f32[1,32], index: 15, kind: input, shape index: {}]
  %s16 = inlined_call_operand.vmem [shape: f32[1,32], index: 16, kind: input, shape index: {}]
  %s17 = inlined_call_operand.vmem [shape: bf16[32,128], index: 17, kind: input, shape index: {}]
  %s18 = inlined_call_operand.vmem [shape: f32[1,128], index: 18, kind: input, shape index: {}]
  %s19 = inlined_call_operand.vmem [shape: bf16[128,32], index: 19, kind: input, shape index: {}]
  %s20 = inlined_call_operand.vmem [shape: f32[1,32], index: 20, kind: input, shape index: {}]
  %s21 = inlined_call_operand.vmem [shape: f32[1,32], index: 21, kind: input, shape index: {}]
  %s22 = inlined_call_operand.hbm [shape: f32[1,32], index: 22, kind: input, shape index: {}]
  %s23 = inlined_call_operand.vmem [shape: f32[2,8,32], index: 23, kind: output, shape index: {}]
  %s24 = sld [smem:[#allocation0]]
  $region129: #{vision_encoder_decoder.12} parent=0
    _
  %s26 = ssub.s32 1, %s24
  %s27 = scalar_select 0, %s26, %s24
  $region1: #{vision_encoder_decoder.12} parent=0
    #allocation2 [shape = 'u8[512]{0}', space=vmem, size = 0x400, scoped, tag = 'input window, operand 22, single buffered']
    #allocation3 [shape = 's32[2]{0}', space=sflag, size = 0x8, scoped, tag = 'scoped memory for vision_encoder_decoder.12']
    %28 = vsyncpa [#allocation3], 0
    loop: start=0, step=1, limit=4
    $region2: #{vision_encoder_decoder.12} parent=1 // loop_pre_header
      _
    $region3: #{vision_encoder_decoder.12} parent=1 // loop_header
      %s30 = sphi 0, %s34
      %p31 = scmp.ge.s32.totalorder %s30, 4
      %s40 = sphi 0, %s42
      %s43 = sphi 0, %s40
      %s44 = sphi 0, %s43
      %s60 = sphi 0, %s44
      %s66 = sphi 0, %s68
      %s69 = sphi 0, %s66
      %s70 = sphi 0, %s69
      %s86 = sphi 0, %s70
      %s92 = sphi 0, %s94
      %s95 = sphi 0, %s92
      %s96 = sphi 0, %s95
      %s112 = sphi 0, %s96
      %s116 = sphi 0, %s116
      %s118 = sphi 0, %s116
      %s119 = sphi 0, %s118
      %s133 = sphi 0, %s119
      %s137 = sphi 0, %s137
      %s139 = sphi 0, %s137
      %s140 = sphi 0, %s139
      %s154 = sphi 0, %s140
      %s158 = sphi 0, %s158
      %s160 = sphi 0, %s158
      %s161 = sphi 0, %s160
      %s175 = sphi 0, %s161
      %s179 = sphi 0, %s179
      %s181 = sphi 0, %s179
      %s182 = sphi 0, %s181
      %s196 = sphi 0, %s182
      %s200 = sphi 0, %s200
      %s202 = sphi 0, %s200
      %s203 = sphi 0, %s202
      %s217 = sphi 0, %s203
      %s221 = sphi 0, %s221
      %s223 = sphi 0, %s221
      %s224 = sphi 0, %s223
      %s238 = sphi 0, %s224
      %s242 = sphi 0, %s242
      %s244 = sphi 0, %s242
      %s245 = sphi 0, %s244
      %s259 = sphi 0, %s245
      %s263 = sphi 0, %s263
      %s265 = sphi 0, %s263
      %s266 = sphi 0, %s265
      %s280 = sphi 0, %s266
      %s284 = sphi 0, %s284
      %s286 = sphi 0, %s284
      %s287 = sphi 0, %s286
      %s301 = sphi 0, %s287
      %s305 = sphi 0, %s305
      %s307 = sphi 0, %s305
      %s308 = sphi 0, %s307
      %s322 = sphi 0, %s308
      %s326 = sphi 0, %s326
      %s328 = sphi 0, %s326
      %s329 = sphi 0, %s328
      %s343 = sphi 0, %s329
      %s347 = sphi 0, %s347
      %s349 = sphi 0, %s347
      %s350 = sphi 0, %s349
      %s364 = sphi 0, %s350
      %s368 = sphi 0, %s368
      %s370 = sphi 0, %s368
      %s371 = sphi 0, %s370
      %s385 = sphi 0, %s371
      %s389 = sphi 0, %s389
      %s391 = sphi 0, %s389
      %s392 = sphi 0, %s391
      %s406 = sphi 0, %s392
      %s410 = sphi 0, %s410
      %s412 = sphi 0, %s410
      %s413 = sphi 0, %s412
      %s427 = sphi 0, %s413
      %s431 = sphi 0, %s431
      %s433 = sphi 0, %s431
      %s434 = sphi 0, %s433
      %s448 = sphi 0, %s434
      %s452 = sphi 0, %s452
      %s454 = sphi 0, %s452
      %s455 = sphi 0, %s454
      %s469 = sphi 0, %s455
      %s473 = sphi 0, %s473
      %s475 = sphi 0, %s473
      %s476 = sphi 0, %s475
      %s490 = sphi 0, %s476
      %s494 = sphi 0, %s494
      %s496 = sphi 0, %s494
      %s497 = sphi 0, %s496
      %s511 = sphi 0, %s497
      %s515 = sphi 0, %s515
      %s517 = sphi 0, %s515
      %s518 = sphi 0, %s517
      %s532 = sphi 0, %s518
      %s538 = sphi 0, %s540
      %s541 = sphi 0, %s538
      %s542 = sphi 0, %s541
      %s558 = sphi 0, %s542
    $region4: #{vision_encoder_decoder.12} parent=1 // loop_header_branch
      %33 = sbr.rel (%p31) target = $region8
    $region5: #{vision_encoder_decoder.12} parent=1 // loop_body
      %s35 = ssub.s32 %s30, 1
      %s36 = ssub.s32 %s30, 2
      %s37 = sadd.s32 %s30, 1
      %s38 = ssub.s32 %s30, %s37
      %p39 = scmp.eq.s32.totalorder %s38, 0
      %s41 = sadd.s32 %s40, 1
      %s42 = scalar_select %p39, %s40, %s41
      %p45 = pneg %p39
      %p46 = scmp.eq.s32.totalorder %s30, 1
      %p47 = por %p45, %p46
      %p48 = scmp.ne.s32.totalorder %s40, %s43
      %p49 = scmp.eq.s32.totalorder %s30, 0
      %p50 = por %p48, %p49
      %p51 = scmp.ne.s32.totalorder %s40, %s43
      %p52 = scmp.eq.s32.totalorder %s35, 1
      %p53 = por %p51, %p52
      %p54 = scmp.ne.s32.totalorder %s43, %s44
      %p55 = scmp.eq.s32.totalorder %s35, 0
      %p56 = por %p54, %p55
      %p57 = scmp.ne.s32.totalorder %s43, %s44
      %p58 = scmp.eq.s32.totalorder %s36, 1
      %p59 = por %p57, %p58
      %p61 = scmp.ne.s32.totalorder %s44, %s60
      %p62 = scmp.eq.s32.totalorder %s36, 0
      %p63 = por %p61, %p62
      %s64 = ssub.s32 %s30, %s37
      %p65 = scmp.eq.s32.totalorder %s64, 0
      %s67 = sadd.s32 %s66, 1
      %s68 = scalar_select %p65, %s66, %s67
      %p71 = pneg %p65
      %p72 = scmp.eq.s32.totalorder %s30, 1
      %p73 = por %p71, %p72
      %p74 = scmp.ne.s32.totalorder %s66, %s69
      %p75 = scmp.eq.s32.totalorder %s30, 0
      %p76 = por %p74, %p75
      %p77 = scmp.ne.s32.totalorder %s66, %s69
      %p78 = scmp.eq.s32.totalorder %s35, 1
      %p79 = por %p77, %p78
      %p80 = scmp.ne.s32.totalorder %s69, %s70
      %p81 = scmp.eq.s32.totalorder %s35, 0
      %p82 = por %p80, %p81
      %p83 = scmp.ne.s32.totalorder %s69, %s70
      %p84 = scmp.eq.s32.totalorder %s36, 1
      %p85 = por %p83, %p84
      %p87 = scmp.ne.s32.totalorder %s70, %s86
      %p88 = scmp.eq.s32.totalorder %s36, 0
      %p89 = por %p87, %p88
      %s90 = ssub.s32 %s30, %s37
      %p91 = scmp.eq.s32.totalorder %s90, 0
      %s93 = sadd.s32 %s92, 1
      %s94 = scalar_select %p91, %s92, %s93
      %p97 = pneg %p91
      %p98 = scmp.eq.s32.totalorder %s30, 1
      %p99 = por %p97, %p98
      %p100 = scmp.ne.s32.totalorder %s92, %s95
      %p101 = scmp.eq.s32.totalorder %s30, 0
      %p102 = por %p100, %p101
      %p103 = scmp.ne.s32.totalorder %s92, %s95
      %p104 = scmp.eq.s32.totalorder %s35, 1
      %p105 = por %p103, %p104
      %p106 = scmp.ne.s32.totalorder %s95, %s96
      %p107 = scmp.eq.s32.totalorder %s35, 0
      %p108 = por %p106, %p107
      %p109 = scmp.ne.s32.totalorder %s95, %s96
      %p110 = scmp.eq.s32.totalorder %s36, 1
      %p111 = por %p109, %p110
      %p113 = scmp.ne.s32.totalorder %s96, %s112
      %p114 = scmp.eq.s32.totalorder %s36, 0
      %p115 = por %p113, %p114
      %s117 = sadd.s32 %s116, 1
      %p120 = scmp.eq.s32.totalorder %s30, 1
      %p121 = scmp.ne.s32.totalorder %s116, %s118
      %p122 = scmp.eq.s32.totalorder %s30, 0
      %p123 = por %p121, %p122
      %p124 = scmp.ne.s32.totalorder %s116, %s118
      %p125 = scmp.eq.s32.totalorder %s35, 1
      %p126 = por %p124, %p125
      %p127 = scmp.ne.s32.totalorder %s118, %s119
      %p128 = scmp.eq.s32.totalorder %s35, 0
      %p129 = por %p127, %p128
      %p130 = scmp.ne.s32.totalorder %s118, %s119
      %p131 = scmp.eq.s32.totalorder %s36, 1
      %p132 = por %p130, %p131
      %p134 = scmp.ne.s32.totalorder %s119, %s133
      %p135 = scmp.eq.s32.totalorder %s36, 0
      %p136 = por %p134, %p135
      %s138 = sadd.s32 %s137, 1
      %p141 = scmp.eq.s32.totalorder %s30, 1
      %p142 = scmp.ne.s32.totalorder %s137, %s139
      %p143 = scmp.eq.s32.totalorder %s30, 0
      %p144 = por %p142, %p143
      %p145 = scmp.ne.s32.totalorder %s137, %s139
      %p146 = scmp.eq.s32.totalorder %s35, 1
      %p147 = por %p145, %p146
      %p148 = scmp.ne.s32.totalorder %s139, %s140
      %p149 = scmp.eq.s32.totalorder %s35, 0
      %p150 = por %p148, %p149
      %p151 = scmp.ne.s32.totalorder %s139, %s140
      %p152 = scmp.eq.s32.totalorder %s36, 1
      %p153 = por %p151, %p152
      %p155 = scmp.ne.s32.totalorder %s140, %s154
      %p156 = scmp.eq.s32.totalorder %s36, 0
      %p157 = por %p155, %p156
      %s159 = sadd.s32 %s158, 1
      %p162 = scmp.eq.s32.totalorder %s30, 1
      %p163 = scmp.ne.s32.totalorder %s158, %s160
      %p164 = scmp.eq.s32.totalorder %s30, 0
      %p165 = por %p163, %p164
      %p166 = scmp.ne.s32.totalorder %s158, %s160
      %p167 = scmp.eq.s32.totalorder %s35, 1
      %p168 = por %p166, %p167
      %p169 = scmp.ne.s32.totalorder %s160, %s161
      %p170 = scmp.eq.s32.totalorder %s35, 0
      %p171 = por %p169, %p170
      %p172 = scmp.ne.s32.totalorder %s160, %s161
      %p173 = scmp.eq.s32.totalorder %s36, 1
      %p174 = por %p172, %p173
      %p176 = scmp.ne.s32.totalorder %s161, %s175
      %p177 = scmp.eq.s32.totalorder %s36, 0
      %p178 = por %p176, %p177
      %s180 = sadd.s32 %s179, 1
      %p183 = scmp.eq.s32.totalorder %s30, 1
      %p184 = scmp.ne.s32.totalorder %s179, %s181
      %p185 = scmp.eq.s32.totalorder %s30, 0
      %p186 = por %p184, %p185
      %p187 = scmp.ne.s32.totalorder %s179, %s181
      %p188 = scmp.eq.s32.totalorder %s35, 1
      %p189 = por %p187, %p188
      %p190 = scmp.ne.s32.totalorder %s181, %s182
      %p191 = scmp.eq.s32.totalorder %s35, 0
      %p192 = por %p190, %p191
      %p193 = scmp.ne.s32.totalorder %s181, %s182
      %p194 = scmp.eq.s32.totalorder %s36, 1
      %p195 = por %p193, %p194
      %p197 = scmp.ne.s32.totalorder %s182, %s196
      %p198 = scmp.eq.s32.totalorder %s36, 0
      %p199 = por %p197, %p198
      %s201 = sadd.s32 %s200, 1
      %p204 = scmp.eq.s32.totalorder %s30, 1
      %p205 = scmp.ne.s32.totalorder %s200, %s202
      %p206 = scmp.eq.s32.totalorder %s30, 0
      %p207 = por %p205, %p206
      %p208 = scmp.ne.s32.totalorder %s200, %s202
      %p209 = scmp.eq.s32.totalorder %s35, 1
      %p210 = por %p208, %p209
      %p211 = scmp.ne.s32.totalorder %s202, %s203
      %p212 = scmp.eq.s32.totalorder %s35, 0
      %p213 = por %p211, %p212
      %p214 = scmp.ne.s32.totalorder %s202, %s203
      %p215 = scmp.eq.s32.totalorder %s36, 1
      %p216 = por %p214, %p215
      %p218 = scmp.ne.s32.totalorder %s203, %s217
      %p219 = scmp.eq.s32.totalorder %s36, 0
      %p220 = por %p218, %p219
      %s222 = sadd.s32 %s221, 1
      %p225 = scmp.eq.s32.totalorder %s30, 1
      %p226 = scmp.ne.s32.totalorder %s221, %s223
      %p227 = scmp.eq.s32.totalorder %s30, 0
      %p228 = por %p226, %p227
      %p229 = scmp.ne.s32.totalorder %s221, %s223
      %p230 = scmp.eq.s32.totalorder %s35, 1
      %p231 = por %p229, %p230
      %p232 = scmp.ne.s32.totalorder %s223, %s224
      %p233 = scmp.eq.s32.totalorder %s35, 0
      %p234 = por %p232, %p233
      %p235 = scmp.ne.s32.totalorder %s223, %s224
      %p236 = scmp.eq.s32.totalorder %s36, 1
      %p237 = por %p235, %p236
      %p239 = scmp.ne.s32.totalorder %s224, %s238
      %p240 = scmp.eq.s32.totalorder %s36, 0
      %p241 = por %p239, %p240
      %s243 = sadd.s32 %s242, 1
      %p246 = scmp.eq.s32.totalorder %s30, 1
      %p247 = scmp.ne.s32.totalorder %s242, %s244
      %p248 = scmp.eq.s32.totalorder %s30, 0
      %p249 = por %p247, %p248
      %p250 = scmp.ne.s32.totalorder %s242, %s244
      %p251 = scmp.eq.s32.totalorder %s35, 1
      %p252 = por %p250, %p251
      %p253 = scmp.ne.s32.totalorder %s244, %s245
      %p254 = scmp.eq.s32.totalorder %s35, 0
      %p255 = por %p253, %p254
      %p256 = scmp.ne.s32.totalorder %s244, %s245
      %p257 = scmp.eq.s32.totalorder %s36, 1
      %p258 = por %p256, %p257
      %p260 = scmp.ne.s32.totalorder %s245, %s259
      %p261 = scmp.eq.s32.totalorder %s36, 0
      %p262 = por %p260, %p261
      %s264 = sadd.s32 %s263, 1
      %p267 = scmp.eq.s32.totalorder %s30, 1
      %p268 = scmp.ne.s32.totalorder %s263, %s265
      %p269 = scmp.eq.s32.totalorder %s30, 0
      %p270 = por %p268, %p269
      %p271 = scmp.ne.s32.totalorder %s263, %s265
      %p272 = scmp.eq.s32.totalorder %s35, 1
      %p273 = por %p271, %p272
      %p274 = scmp.ne.s32.totalorder %s265, %s266
      %p275 = scmp.eq.s32.totalorder %s35, 0
      %p276 = por %p274, %p275
      %p277 = scmp.ne.s32.totalorder %s265, %s266
      %p278 = scmp.eq.s32.totalorder %s36, 1
      %p279 = por %p277, %p278
      %p281 = scmp.ne.s32.totalorder %s266, %s280
      %p282 = scmp.eq.s32.totalorder %s36, 0
      %p283 = por %p281, %p282
      %s285 = sadd.s32 %s284, 1
      %p288 = scmp.eq.s32.totalorder %s30, 1
      %p289 = scmp.ne.s32.totalorder %s284, %s286
      %p290 = scmp.eq.s32.totalorder %s30, 0
      %p291 = por %p289, %p290
      %p292 = scmp.ne.s32.totalorder %s284, %s286
      %p293 = scmp.eq.s32.totalorder %s35, 1
      %p294 = por %p292, %p293
      %p295 = scmp.ne.s32.totalorder %s286, %s287
      %p296 = scmp.eq.s32.totalorder %s35, 0
      %p297 = por %p295, %p296
      %p298 = scmp.ne.s32.totalorder %s286, %s287
      %p299 = scmp.eq.s32.totalorder %s36, 1
      %p300 = por %p298, %p299
      %p302 = scmp.ne.s32.totalorder %s287, %s301
      %p303 = scmp.eq.s32.totalorder %s36, 0
      %p304 = por %p302, %p303
      %s306 = sadd.s32 %s305, 1
      %p309 = scmp.eq.s32.totalorder %s30, 1
      %p310 = scmp.ne.s32.totalorder %s305, %s307
      %p311 = scmp.eq.s32.totalorder %s30, 0
      %p312 = por %p310, %p311
      %p313 = scmp.ne.s32.totalorder %s305, %s307
      %p314 = scmp.eq.s32.totalorder %s35, 1
      %p315 = por %p313, %p314
      %p316 = scmp.ne.s32.totalorder %s307, %s308
      %p317 = scmp.eq.s32.totalorder %s35, 0
      %p318 = por %p316, %p317
      %p319 = scmp.ne.s32.totalorder %s307, %s308
      %p320 = scmp.eq.s32.totalorder %s36, 1
      %p321 = por %p319, %p320
      %p323 = scmp.ne.s32.totalorder %s308, %s322
      %p324 = scmp.eq.s32.totalorder %s36, 0
      %p325 = por %p323, %p324
      %s327 = sadd.s32 %s326, 1
      %p330 = scmp.eq.s32.totalorder %s30, 1
      %p331 = scmp.ne.s32.totalorder %s326, %s328
      %p332 = scmp.eq.s32.totalorder %s30, 0
      %p333 = por %p331, %p332
      %p334 = scmp.ne.s32.totalorder %s326, %s328
      %p335 = scmp.eq.s32.totalorder %s35, 1
      %p336 = por %p334, %p335
      %p337 = scmp.ne.s32.totalorder %s328, %s329
      %p338 = scmp.eq.s32.totalorder %s35, 0
      %p339 = por %p337, %p338
      %p340 = scmp.ne.s32.totalorder %s328, %s329
      %p341 = scmp.eq.s32.totalorder %s36, 1
      %p342 = por %p340, %p341
      %p344 = scmp.ne.s32.totalorder %s329, %s343
      %p345 = scmp.eq.s32.totalorder %s36, 0
      %p346 = por %p344, %p345
      %s348 = sadd.s32 %s347, 1
      %p351 = scmp.eq.s32.totalorder %s30, 1
      %p352 = scmp.ne.s32.totalorder %s347, %s349
      %p353 = scmp.eq.s32.totalorder %s30, 0
      %p354 = por %p352, %p353
      %p355 = scmp.ne.s32.totalorder %s347, %s349
      %p356 = scmp.eq.s32.totalorder %s35, 1
      %p357 = por %p355, %p356
      %p358 = scmp.ne.s32.totalorder %s349, %s350
      %p359 = scmp.eq.s32.totalorder %s35, 0
      %p360 = por %p358, %p359
      %p361 = scmp.ne.s32.totalorder %s349, %s350
      %p362 = scmp.eq.s32.totalorder %s36, 1
      %p363 = por %p361, %p362
      %p365 = scmp.ne.s32.totalorder %s350, %s364
      %p366 = scmp.eq.s32.totalorder %s36, 0
      %p367 = por %p365, %p366
      %s369 = sadd.s32 %s368, 1
      %p372 = scmp.eq.s32.totalorder %s30, 1
      %p373 = scmp.ne.s32.totalorder %s368, %s370
      %p374 = scmp.eq.s32.totalorder %s30, 0
      %p375 = por %p373, %p374
      %p376 = scmp.ne.s32.totalorder %s368, %s370
      %p377 = scmp.eq.s32.totalorder %s35, 1
      %p378 = por %p376, %p377
      %p379 = scmp.ne.s32.totalorder %s370, %s371
      %p380 = scmp.eq.s32.totalorder %s35, 0
      %p381 = por %p379, %p380
      %p382 = scmp.ne.s32.totalorder %s370, %s371
      %p383 = scmp.eq.s32.totalorder %s36, 1
      %p384 = por %p382, %p383
      %p386 = scmp.ne.s32.totalorder %s371, %s385
      %p387 = scmp.eq.s32.totalorder %s36, 0
      %p388 = por %p386, %p387
      %s390 = sadd.s32 %s389, 1
      %p393 = scmp.eq.s32.totalorder %s30, 1
      %p394 = scmp.ne.s32.totalorder %s389, %s391
      %p395 = scmp.eq.s32.totalorder %s30, 0
      %p396 = por %p394, %p395
      %p397 = scmp.ne.s32.totalorder %s389, %s391
      %p398 = scmp.eq.s32.totalorder %s35, 1
      %p399 = por %p397, %p398
      %p400 = scmp.ne.s32.totalorder %s391, %s392
      %p401 = scmp.eq.s32.totalorder %s35, 0
      %p402 = por %p400, %p401
      %p403 = scmp.ne.s32.totalorder %s391, %s392
      %p404 = scmp.eq.s32.totalorder %s36, 1
      %p405 = por %p403, %p404
      %p407 = scmp.ne.s32.totalorder %s392, %s406
      %p408 = scmp.eq.s32.totalorder %s36, 0
      %p409 = por %p407, %p408
      %s411 = sadd.s32 %s410, 1
      %p414 = scmp.eq.s32.totalorder %s30, 1
      %p415 = scmp.ne.s32.totalorder %s410, %s412
      %p416 = scmp.eq.s32.totalorder %s30, 0
      %p417 = por %p415, %p416
      %p418 = scmp.ne.s32.totalorder %s410, %s412
      %p419 = scmp.eq.s32.totalorder %s35, 1
      %p420 = por %p418, %p419
      %p421 = scmp.ne.s32.totalorder %s412, %s413
      %p422 = scmp.eq.s32.totalorder %s35, 0
      %p423 = por %p421, %p422
      %p424 = scmp.ne.s32.totalorder %s412, %s413
      %p425 = scmp.eq.s32.totalorder %s36, 1
      %p426 = por %p424, %p425
      %p428 = scmp.ne.s32.totalorder %s413, %s427
      %p429 = scmp.eq.s32.totalorder %s36, 0
      %p430 = por %p428, %p429
      %s432 = sadd.s32 %s431, 1
      %p435 = scmp.eq.s32.totalorder %s30, 1
      %p436 = scmp.ne.s32.totalorder %s431, %s433
      %p437 = scmp.eq.s32.totalorder %s30, 0
      %p438 = por %p436, %p437
      %p439 = scmp.ne.s32.totalorder %s431, %s433
      %p440 = scmp.eq.s32.totalorder %s35, 1
      %p441 = por %p439, %p440
      %p442 = scmp.ne.s32.totalorder %s433, %s434
      %p443 = scmp.eq.s32.totalorder %s35, 0
      %p444 = por %p442, %p443
      %p445 = scmp.ne.s32.totalorder %s433, %s434
      %p446 = scmp.eq.s32.totalorder %s36, 1
      %p447 = por %p445, %p446
      %p449 = scmp.ne.s32.totalorder %s434, %s448
      %p450 = scmp.eq.s32.totalorder %s36, 0
      %p451 = por %p449, %p450
      %s453 = sadd.s32 %s452, 1
      %p456 = scmp.eq.s32.totalorder %s30, 1
      %p457 = scmp.ne.s32.totalorder %s452, %s454
      %p458 = scmp.eq.s32.totalorder %s30, 0
      %p459 = por %p457, %p458
      %p460 = scmp.ne.s32.totalorder %s452, %s454
      %p461 = scmp.eq.s32.totalorder %s35, 1
      %p462 = por %p460, %p461
      %p463 = scmp.ne.s32.totalorder %s454, %s455
      %p464 = scmp.eq.s32.totalorder %s35, 0
      %p465 = por %p463, %p464
      %p466 = scmp.ne.s32.totalorder %s454, %s455
      %p467 = scmp.eq.s32.totalorder %s36, 1
      %p468 = por %p466, %p467
      %p470 = scmp.ne.s32.totalorder %s455, %s469
      %p471 = scmp.eq.s32.totalorder %s36, 0
      %p472 = por %p470, %p471
      %s474 = sadd.s32 %s473, 1
      %p477 = scmp.eq.s32.totalorder %s30, 1
      %p478 = scmp.ne.s32.totalorder %s473, %s475
      %p479 = scmp.eq.s32.totalorder %s30, 0
      %p480 = por %p478, %p479
      %p481 = scmp.ne.s32.totalorder %s473, %s475
      %p482 = scmp.eq.s32.totalorder %s35, 1
      %p483 = por %p481, %p482
      %p484 = scmp.ne.s32.totalorder %s475, %s476
      %p485 = scmp.eq.s32.totalorder %s35, 0
      %p486 = por %p484, %p485
      %p487 = scmp.ne.s32.totalorder %s475, %s476
      %p488 = scmp.eq.s32.totalorder %s36, 1
      %p489 = por %p487, %p488
      %p491 = scmp.ne.s32.totalorder %s476, %s490
      %p492 = scmp.eq.s32.totalorder %s36, 0
      %p493 = por %p491, %p492
      %s495 = sadd.s32 %s494, 1
      %p498 = scmp.eq.s32.totalorder %s30, 1
      %p499 = scmp.ne.s32.totalorder %s494, %s496
      %p500 = scmp.eq.s32.totalorder %s30, 0
      %p501 = por %p499, %p500
      %p502 = scmp.ne.s32.totalorder %s494, %s496
      %p503 = scmp.eq.s32.totalorder %s35, 1
      %p504 = por %p502, %p503
      %p505 = scmp.ne.s32.totalorder %s496, %s497
      %p506 = scmp.eq.s32.totalorder %s35, 0
      %p507 = por %p505, %p506
      %p508 = scmp.ne.s32.totalorder %s496, %s497
      %p509 = scmp.eq.s32.totalorder %s36, 1
      %p510 = por %p508, %p509
      %p512 = scmp.ne.s32.totalorder %s497, %s511
      %p513 = scmp.eq.s32.totalorder %s36, 0
      %p514 = por %p512, %p513
      %s516 = sadd.s32 %s515, 1
      %p519 = scmp.eq.s32.totalorder %s30, 1
      %p520 = scmp.ne.s32.totalorder %s515, %s517
      %p521 = scmp.eq.s32.totalorder %s30, 0
      %p522 = por %p520, %p521
      %p523 = scmp.ne.s32.totalorder %s515, %s517
      %p524 = scmp.eq.s32.totalorder %s35, 1
      %p525 = por %p523, %p524
      %p526 = scmp.ne.s32.totalorder %s517, %s518
      %p527 = scmp.eq.s32.totalorder %s35, 0
      %p528 = por %p526, %p527
      %p529 = scmp.ne.s32.totalorder %s517, %s518
      %p530 = scmp.eq.s32.totalorder %s36, 1
      %p531 = por %p529, %p530
      %p533 = scmp.ne.s32.totalorder %s518, %s532
      %p534 = scmp.eq.s32.totalorder %s36, 0
      %p535 = por %p533, %p534
      %s536 = ssub.s32 %s30, %s37
      %p537 = scmp.eq.s32.totalorder %s536, 0
      %s539 = sadd.s32 %s538, 1
      %s540 = scalar_select %p537, %s538, %s539
      %p543 = pneg %p537
      %p544 = scmp.eq.s32.totalorder %s30, 1
      %p545 = por %p543, %p544
      %p546 = scmp.ne.s32.totalorder %s538, %s541
      %p547 = scmp.eq.s32.totalorder %s30, 0
      %p548 = por %p546, %p547
      %p549 = scmp.ne.s32.totalorder %s538, %s541
      %p550 = scmp.eq.s32.totalorder %s35, 1
      %p551 = por %p549, %p550
      %p552 = scmp.ne.s32.totalorder %s541, %s542
      %p553 = scmp.eq.s32.totalorder %s35, 0
      %p554 = por %p552, %p553
      %p555 = scmp.ne.s32.totalorder %s541, %s542
      %p556 = scmp.eq.s32.totalorder %s36, 1
      %p557 = por %p555, %p556
      %p559 = scmp.ne.s32.totalorder %s542, %s558
      %p560 = scmp.eq.s32.totalorder %s36, 0
      %p561 = por %p559, %p560
      %p562 = scmp.le.s32.totalorder 1, %s30
      %p563 = scmp.lt.s32.totalorder %s30, 3
      %p564 = pnand %p562, %p563
      %p565 = pneg %p564
      // Predicated region
      $region9: #{vision_encoder_decoder.12} parent=5 // pred_check
        _
      $region10: #{vision_encoder_decoder.12} parent=5 // pred_check_branch
        %567 = sbr.rel (%p564) target = $region12
      $region11: #{vision_encoder_decoder.12} parent=5 // pred_region
        %s568 = ssub.s32 %s30, 1
        // Predicated region
        $region13: #{vision_encoder_decoder.12} parent=11 // pred_check
          %p569 = pneg %p129
        $region14: #{vision_encoder_decoder.12} parent=11 // pred_check_branch
          %571 = sbr.rel (%p569) target = $region16
        $region15: #{vision_encoder_decoder.12} parent=11 // pred_region
          _
        $region16: #{vision_encoder_decoder.12} parent=11 // pred_fallthru
          _
        // Predicated region
        $region17: #{vision_encoder_decoder.12} parent=11 // pred_check
          %p572 = pneg %p150
        $region18: #{vision_encoder_decoder.12} parent=11 // pred_check_branch
          %574 = sbr.rel (%p572) target = $region20
        $region19: #{vision_encoder_decoder.12} parent=11 // pred_region
          _
        $region20: #{vision_encoder_decoder.12} parent=11 // pred_fallthru
          _
        // Predicated region
        $region21: #{vision_encoder_decoder.12} parent=11 // pred_check
          %p575 = pneg %p171
        $region22: #{vision_encoder_decoder.12} parent=11 // pred_check_branch
          %577 = sbr.rel (%p575) target = $region24
        $region23: #{vision_encoder_decoder.12} parent=11 // pred_region
          _
        $region24: #{vision_encoder_decoder.12} parent=11 // pred_fallthru
          _
        // Predicated region
        $region25: #{vision_encoder_decoder.12} parent=11 // pred_check
          %p578 = pneg %p192
        $region26: #{vision_encoder_decoder.12} parent=11 // pred_check_branch
          %580 = sbr.rel (%p578) target = $region28
        $region27: #{vision_encoder_decoder.12} parent=11 // pred_region
          _
        $region28: #{vision_encoder_decoder.12} parent=11 // pred_fallthru
          _
        // Predicated region
        $region29: #{vision_encoder_decoder.12} parent=11 // pred_check
          %p581 = pneg %p213
        $region30: #{vision_encoder_decoder.12} parent=11 // pred_check_branch
          %583 = sbr.rel (%p581) target = $region32
        $region31: #{vision_encoder_decoder.12} parent=11 // pred_region
          _
        $region32: #{vision_encoder_decoder.12} parent=11 // pred_fallthru
          _
        // Predicated region
        $region33: #{vision_encoder_decoder.12} parent=11 // pred_check
          %p584 = pneg %p234
        $region34: #{vision_encoder_decoder.12} parent=11 // pred_check_branch
          %586 = sbr.rel (%p584) target = $region36
        $region35: #{vision_encoder_decoder.12} parent=11 // pred_region
          _
        $region36: #{vision_encoder_decoder.12} parent=11 // pred_fallthru
          _
        // Predicated region
        $region37: #{vision_encoder_decoder.12} parent=11 // pred_check
          %p587 = pneg %p255
        $region38: #{vision_encoder_decoder.12} parent=11 // pred_check_branch
          %589 = sbr.rel (%p587) target = $region40
        $region39: #{vision_encoder_decoder.12} parent=11 // pred_region
          _
        $region40: #{vision_encoder_decoder.12} parent=11 // pred_fallthru
          _
        // Predicated region
        $region41: #{vision_encoder_decoder.12} parent=11 // pred_check
          %p590 = pneg %p276
        $region42: #{vision_encoder_decoder.12} parent=11 // pred_check_branch
          %592 = sbr.rel (%p590) target = $region44
        $region43: #{vision_encoder_decoder.12} parent=11 // pred_region
          _
        $region44: #{vision_encoder_decoder.12} parent=11 // pred_fallthru
          _
        // Predicated region
        $region45: #{vision_encoder_decoder.12} parent=11 // pred_check
          %p593 = pneg %p297
        $region46: #{vision_encoder_decoder.12} parent=11 // pred_check_branch
          %595 = sbr.rel (%p593) target = $region48
        $region47: #{vision_encoder_decoder.12} parent=11 // pred_region
          _
        $region48: #{vision_encoder_decoder.12} parent=11 // pred_fallthru
          _
        // Predicated region
        $region49: #{vision_encoder_decoder.12} parent=11 // pred_check
          %p596 = pneg %p318
        $region50: #{vision_encoder_decoder.12} parent=11 // pred_check_branch
          %598 = sbr.rel (%p596) target = $region52
        $region51: #{vision_encoder_decoder.12} parent=11 // pred_region
          _
        $region52: #{vision_encoder_decoder.12} parent=11 // pred_fallthru
          _
        // Predicated region
        $region53: #{vision_encoder_decoder.12} parent=11 // pred_check
          %p599 = pneg %p339
        $region54: #{vision_encoder_decoder.12} parent=11 // pred_check_branch
          %601 = sbr.rel (%p599) target = $region56
        $region55: #{vision_encoder_decoder.12} parent=11 // pred_region
          _
        $region56: #{vision_encoder_decoder.12} parent=11 // pred_fallthru
          _
        // Predicated region
        $region57: #{vision_encoder_decoder.12} parent=11 // pred_check
          %p602 = pneg %p360
        $region58: #{vision_encoder_decoder.12} parent=11 // pred_check_branch
          %604 = sbr.rel (%p602) target = $region60
        $region59: #{vision_encoder_decoder.12} parent=11 // pred_region
          _
        $region60: #{vision_encoder_decoder.12} parent=11 // pred_fallthru
          _
        // Predicated region
        $region61: #{vision_encoder_decoder.12} parent=11 // pred_check
          %p605 = pneg %p381
        $region62: #{vision_encoder_decoder.12} parent=11 // pred_check_branch
          %607 = sbr.rel (%p605) target = $region64
        $region63: #{vision_encoder_decoder.12} parent=11 // pred_region
          _
        $region64: #{vision_encoder_decoder.12} parent=11 // pred_fallthru
          _
        // Predicated region
        $region65: #{vision_encoder_decoder.12} parent=11 // pred_check
          %p608 = pneg %p402
        $region66: #{vision_encoder_decoder.12} parent=11 // pred_check_branch
          %610 = sbr.rel (%p608) target = $region68
        $region67: #{vision_encoder_decoder.12} parent=11 // pred_region
          _
        $region68: #{vision_encoder_decoder.12} parent=11 // pred_fallthru
          _
        // Predicated region
        $region69: #{vision_encoder_decoder.12} parent=11 // pred_check
          %p611 = pneg %p423
        $region70: #{vision_encoder_decoder.12} parent=11 // pred_check_branch
          %613 = sbr.rel (%p611) target = $region72
        $region71: #{vision_encoder_decoder.12} parent=11 // pred_region
          _
        $region72: #{vision_encoder_decoder.12} parent=11 // pred_fallthru
          _
        // Predicated region
        $region73: #{vision_encoder_decoder.12} parent=11 // pred_check
          %p614 = pneg %p444
        $region74: #{vision_encoder_decoder.12} parent=11 // pred_check_branch
          %616 = sbr.rel (%p614) target = $region76
        $region75: #{vision_encoder_decoder.12} parent=11 // pred_region
          _
        $region76: #{vision_encoder_decoder.12} parent=11 // pred_fallthru
          _
        // Predicated region
        $region77: #{vision_encoder_decoder.12} parent=11 // pred_check
          %p617 = pneg %p465
        $region78: #{vision_encoder_decoder.12} parent=11 // pred_check_branch
          %619 = sbr.rel (%p617) target = $region80
        $region79: #{vision_encoder_decoder.12} parent=11 // pred_region
          _
        $region80: #{vision_encoder_decoder.12} parent=11 // pred_fallthru
          _
        // Predicated region
        $region81: #{vision_encoder_decoder.12} parent=11 // pred_check
          %p620 = pneg %p486
        $region82: #{vision_encoder_decoder.12} parent=11 // pred_check_branch
          %622 = sbr.rel (%p620) target = $region84
        $region83: #{vision_encoder_decoder.12} parent=11 // pred_region
          _
        $region84: #{vision_encoder_decoder.12} parent=11 // pred_fallthru
          _
        // Predicated region
        $region85: #{vision_encoder_decoder.12} parent=11 // pred_check
          %p623 = pneg %p507
        $region86: #{vision_encoder_decoder.12} parent=11 // pred_check_branch
          %625 = sbr.rel (%p623) target = $region88
        $region87: #{vision_encoder_decoder.12} parent=11 // pred_region
          _
        $region88: #{vision_encoder_decoder.12} parent=11 // pred_fallthru
          _
        // Predicated region
        $region89: #{vision_encoder_decoder.12} parent=11 // pred_check
          %p626 = pneg %p528
        $region90: #{vision_encoder_decoder.12} parent=11 // pred_check_branch
          %628 = sbr.rel (%p626) target = $region92
        $region91: #{vision_encoder_decoder.12} parent=11 // pred_region
          %630 = vsyncadd [#allocation3], 0
          %s632 = sshll.u32 %s22, 4
          %s633 = int_to_ptr.hbm [resolvable:$true] %s632
          %s634 = sshll.u32 [#allocation2], 4
          %s635 = int_to_ptr.vmem [resolvable:$true] %s634
          %637 = dma.hbm_to_vmem [thread:$0]  %s633, 16, %s635, [#allocation3]
        $region92: #{vision_encoder_decoder.12} parent=11 // pred_fallthru
          _
      $region12: #{vision_encoder_decoder.12} parent=5 // pred_fallthru
        _
      %p638 = scmp.lt.s32.totalorder %s30, 2
      // Predicated region
      $region93: #{vision_encoder_decoder.12} parent=5 // pred_check
        %p639 = pneg %p638
      $region94: #{vision_encoder_decoder.12} parent=5 // pred_check_branch
        %641 = sbr.rel (%p639) target = $region96
      $region95: #{vision_encoder_decoder.12} parent=5 // pred_region
        // Predicated region
        $region97: #{vision_encoder_decoder.12} parent=95 // pred_check
          %p642 = pneg %p50
        $region98: #{vision_encoder_decoder.12} parent=95 // pred_check_branch
          %644 = sbr.rel (%p642) target = $region100
        $region99: #{vision_encoder_decoder.12} parent=95 // pred_region
          %p645 = scmp.lt.s32.totalorder %s30, 1
          %s646 = scalar_select %p645, %s30, 1
          %s647 = smul.addr %s646, 8
          %s648 = scalar_lea.vmem %s0, %s647
        $region100: #{vision_encoder_decoder.12} parent=95 // pred_fallthru
          _
        // Predicated region
        $region101: #{vision_encoder_decoder.12} parent=95 // pred_check
          %p649 = pneg %p76
        $region102: #{vision_encoder_decoder.12} parent=95 // pred_check_branch
          %651 = sbr.rel (%p649) target = $region104
        $region103: #{vision_encoder_decoder.12} parent=95 // pred_region
          %p652 = scmp.lt.s32.totalorder %s30, 1
          %s653 = scalar_select %p652, %s30, 1
          %s654 = smul.addr %s653, 8
          %s655 = scalar_lea.vmem %s1, %s654
        $region104: #{vision_encoder_decoder.12} parent=95 // pred_fallthru
          _
        // Predicated region
        $region105: #{vision_encoder_decoder.12} parent=95 // pred_check
          %p656 = pneg %p102
        $region106: #{vision_encoder_decoder.12} parent=95 // pred_check_branch
          %658 = sbr.rel (%p656) target = $region108
        $region107: #{vision_encoder_decoder.12} parent=95 // pred_region
          %p659 = scmp.lt.s32.totalorder %s30, 1
          %s660 = scalar_select %p659, %s30, 1
          %s661 = smul.addr %s660, 2
          %s662 = smul.addr %s661, 8
          %s663 = scalar_lea.vmem %s2, %s662
        $region108: #{vision_encoder_decoder.12} parent=95 // pred_fallthru
          _
      $region96: #{vision_encoder_decoder.12} parent=5 // pred_fallthru
        _
      %p664 = scmp.le.s32.totalorder 1, %s30
      %p665 = scmp.lt.s32.totalorder %s30, 3
      %p666 = pnand %p664, %p665
      %p667 = pneg %p666
      // Predicated region
      $region109: #{vision_encoder_decoder.12} parent=5 // pred_check
        _
      $region110: #{vision_encoder_decoder.12} parent=5 // pred_check_branch
        %669 = sbr.rel (%p666) target = $region112
      $region111: #{vision_encoder_decoder.12} parent=5 // pred_region
        %s670 = ssub.s32 %s30, 1
        // Predicated region
        $region113: #{vision_encoder_decoder.12} parent=111 // pred_check
          %p671 = pneg %p528
        $region114: #{vision_encoder_decoder.12} parent=111 // pred_check_branch
          %673 = sbr.rel (%p671) target = $region116
        $region115: #{vision_encoder_decoder.12} parent=111 // pred_region
          %675 = dma.done [#allocation3], 16
        $region116: #{vision_encoder_decoder.12} parent=111 // pred_fallthru
          _
        %p676 = scmp.lt.s32.totalorder %s35, 1
        %s677 = scalar_select %p676, %s35, 1
        %s678 = smul.addr %s677, 8
        %s679 = scalar_lea.vmem %s0, %s678
        %p680 = pneg %p56
        %p681 = pneg %p53
        %p682 = scmp.lt.s32.totalorder %s35, 1
        %s683 = scalar_select %p682, %s35, 1
        %s684 = smul.addr %s683, 8
        %s685 = scalar_lea.vmem %s1, %s684
        %p686 = pneg %p82
        %p687 = pneg %p79
        %p688 = scmp.lt.s32.totalorder %s35, 1
        %s689 = scalar_select %p688, %s35, 1
        %s690 = smul.addr %s689, 2
        %s691 = smul.addr %s690, 8
        %s692 = scalar_lea.vmem %s2, %s691
        %p693 = pneg %p108
        %p694 = pneg %p105
        %p695 = pneg %p129
        %p696 = pneg %p126
        %p697 = pneg %p150
        %p698 = pneg %p147
        %p699 = pneg %p171
        %p700 = pneg %p168
        %p701 = pneg %p192
        %p702 = pneg %p189
        %p703 = pneg %p213
        %p704 = pneg %p210
        %p705 = pneg %p234
        %p706 = pneg %p231
        %p707 = pneg %p255
        %p708 = pneg %p252
        %p709 = pneg %p276
        %p710 = pneg %p273
        %p711 = pneg %p297
        %p712 = pneg %p294
        %p713 = pneg %p318
        %p714 = pneg %p315
        %p715 = pneg %p339
        %p716 = pneg %p336
        %p717 = pneg %p360
        %p718 = pneg %p357
        %p719 = pneg %p381
        %p720 = pneg %p378
        %p721 = pneg %p402
        %p722 = pneg %p399
        %p723 = pneg %p423
        %p724 = pneg %p420
        %p725 = pneg %p444
        %p726 = pneg %p441
        %p727 = pneg %p465
        %p728 = pneg %p462
        %p729 = pneg %p486
        %p730 = pneg %p483
        %p731 = pneg %p507
        %p732 = pneg %p504
        %p733 = pneg %p528
        %p734 = pneg %p525
        %p735 = pneg %p554
        %p736 = pneg %p551
        %p737 = scmp.lt.s32.totalorder %s35, 1
        %s738 = scalar_select %p737, %s35, 1
        %s739 = smul.addr %s738, 8
        %s740 = scalar_lea.vmem %s23, %s739
        %p741 = scmp.lt.s32.totalorder %s35, 1
        %s742 = scalar_select %p741, %s35, 1
        %s743 = smul.addr %s742, 8
        %s744 = scalar_lea.vmem %s0, %s743
        %p745 = scmp.lt.s32.totalorder %s35, 1
        %s746 = scalar_select %p745, %s35, 1
        %s747 = smul.addr %s746, 8
        %s748 = scalar_lea.vmem %s1, %s747
        %p749 = scmp.lt.s32.totalorder %s35, 1
        %s750 = scalar_select %p749, %s35, 1
        %s751 = smul.addr %s750, 2
        %s752 = smul.addr %s751, 8
        %s753 = scalar_lea.vmem %s2, %s752
        %p754 = scmp.lt.s32.totalorder %s35, 1
        %s755 = scalar_select %p754, %s35, 1
        %s756 = smul.addr %s755, 8
        %s757 = scalar_lea.vmem %s23, %s756
        %v759 = vld [vmem:[%s744] sm:$0xff]
        %v760 = vld [vmem:[%s748] sm:$0xff]
        %v761 = vpack.c.bf16 %v759, %v759
        %v762 = vld [vmem:[%s3] sm:$0xf]
        %v763 = vld [vmem:[%s3 + $0x4] sm:$0xf]
        %v764 = vld [vmem:[%s3 + $0x8] sm:$0xf]
        %v765 = vld [vmem:[%s3 + $0xc] sm:$0xf]
        %v766 = vld [vmem:[%s4] sm:$0x1]
        %v768 = vperm.slane %v766, 0
        %v774 = vunpack.c.l.b16 %v762
        %v775 = vunpack.c.l.b16 %v763
        %v776 = vunpack.c.l.b16 %v764
        %v777 = vunpack.c.l.b16 %v765
        %v778 = vpack.c.b16 %v775, %v774
        %v779 = vpack.c.b16 %v777, %v776
        %vm782 = vcmask 261120
        %v784 = vsel %vm782, %v761, 0
        %786 = vmatpush.bf16.msra.mxu0 0
        %787 = vmatpush.bf16.msra.mxu0 0
        %788 = vmatpush.bf16.msra.mxu0 0
        %789 = vmatpush.bf16.msra.mxu0 0
        %790 = vmatpush.bf16.msra.mxu0 0
        %791 = vmatpush.bf16.msra.mxu0 0
        %792 = vmatpush.bf16.msra.mxu0 %v779
        %793 = vmatpush.bf16.msra.mxu0 %v778
        %794 = vmatmul.bf16.gmra.mxu0 %v784
        %v795 = vpop.f32.mrf.mxu0
        %v796 = vadd.f32 %v768, %v795
        %v797 = vpop.f32.mrf.mxu0
        %798 = vdwg.mxu0
        %v799 = vld [vmem:[%s6] sm:$0x1]
        %v800 = vmul.f32 %v796, 0.35355338
        %v801 = vpack.c.bf16 %v800, %v800
        %v802 = vpack.c.bf16 %v796, %v796
        %804 = vrot.lane.b32.xlu0 %v802, 96
        %v805 = vpop.permute.xlu0 %804
        %vm806 = vcmask 64512
        %v808 = vsel %vm806, %v801, 0
        %v811 = vsel %vm806, %v805, 0
        %813 = vmatpush.bf16.xpose.msra.mxu0 0
        %814 = vmatpush.bf16.xpose.msra.mxu0 0
        %815 = vmatpush.bf16.xpose.msra.mxu0 0
        %816 = vmatpush.bf16.xpose.msra.mxu0 0
        %817 = vmatpush.bf16.xpose.msra.mxu0 0
        %818 = vmatpush.bf16.xpose.msra.mxu0 0
        %819 = vmatpush.bf16.xpose.msra.mxu0 0
        %820 = vmatpush.bf16.xpose.msra.mxu0 %v811
        %821 = vmatmul.bf16.gmra.mxu0 %v808
        %v822 = vpop.f32.mrf.mxu0
        %v823 = vadd.f32 %v760, %v822
        %v824 = vpop.f32.mrf.mxu0
        %825 = vdwg.mxu0
        %v826 = vsel %vm806, %v823, -inf
        %827 = vmax.xlane.f32.xlu0 %v826
        %v828 = vpop.xlane.xlu0 %827
        %v829 = vsub.f32 %v823, %v828
        %v830 = vmul.f32 %v829, 1.442695
        %v831 = vpow.pop %v830
        %v832 = vsel %vm806, %v831, 0.0
        %833 = vadd.xlane.f32.xlu0 %v832
        %v834 = vpop.xlane.xlu0 %833
        %v835 = vrcp.pop %v834
        %v836 = vmul.f32 %v831, %v835
        %v837 = vpack.c.bf16 %v836, %v836
        %838 = vrot.lane.b32.xlu0 %v802, 64
        %v839 = vpop.permute.xlu0 %838
        %v841 = vsel %vm806, %v837, 0
        %vm843 = vcmask 1043456
        %v845 = vsel %vm843, %v839, 0
        %847 = vmatpush.bf16.msra.mxu0 0
        %848 = vmatpush.bf16.msra.mxu0 0
        %849 = vmatpush.bf16.msra.mxu0 0
        %850 = vmatpush.bf16.msra.mxu0 0
        %851 = vmatpush.bf16.msra.mxu0 0
        %852 = vmatpush.bf16.msra.mxu0 0
        %853 = vmatpush.bf16.msra.mxu0 0
        %854 = vmatpush.bf16.msra.mxu0 %v845
        %855 = vmatmul.bf16.gmra.mxu0 %v841
        %v856 = vpop.f32.mrf.mxu0
        %v857 = vadd.f32 0.0, %v856
        %v858 = vpop.f32.mrf.mxu0
        %859 = vdwg.mxu0
        %v860 = vpack.c.bf16 %v857, %v857
        %v861 = vld [vmem:[%s5] sm:$0xf]
        %863 = vrot.lane.b32.xlu0 %v801, 120
        %v864 = vpop.permute.xlu0 %863
        %865 = vrot.lane.b32.xlu0 %v802, 88
        %v866 = vpop.permute.xlu0 %865
        %v868 = vsel %vm806, %v864, 0
        %v871 = vsel %vm806, %v866, 0
        %873 = vmatpush.bf16.xpose.msra.mxu0 0
        %874 = vmatpush.bf16.xpose.msra.mxu0 0
        %875 = vmatpush.bf16.xpose.msra.mxu0 0
        %876 = vmatpush.bf16.xpose.msra.mxu0 0
        %877 = vmatpush.bf16.xpose.msra.mxu0 0
        %878 = vmatpush.bf16.xpose.msra.mxu0 0
        %879 = vmatpush.bf16.xpose.msra.mxu0 0
        %880 = vmatpush.bf16.xpose.msra.mxu0 %v871
        %881 = vmatmul.bf16.gmra.mxu0 %v868
        %v882 = vpop.f32.mrf.mxu0
        %v883 = vadd.f32 %v760, %v882
        %v884 = vpop.f32.mrf.mxu0
        %885 = vdwg.mxu0
        %v886 = vsel %vm806, %v883, -inf
        %887 = vmax.xlane.f32.xlu0 %v886
        %v888 = vpop.xlane.xlu0 %887
        %v889 = vsub.f32 %v883, %v888
        %v890 = vmul.f32 %v889, 1.442695
        %v891 = vpow.pop %v890
        %v892 = vsel %vm806, %v891, 0.0
        %893 = vadd.xlane.f32.xlu0 %v892
        %v894 = vpop.xlane.xlu0 %893
        %v895 = vrcp.pop %v894
        %v896 = vmul.f32 %v891, %v895
        %v897 = vpack.c.bf16 %v896, %v896
        %898 = vrot.lane.b32.xlu0 %v802, 56
        %v899 = vpop.permute.xlu0 %898
        %v901 = vsel %vm806, %v897, 0
        %v904 = vsel %vm843, %v899, 0
        %906 = vmatpush.bf16.msra.mxu0 0
        %907 = vmatpush.bf16.msra.mxu0 0
        %908 = vmatpush.bf16.msra.mxu0 0
        %909 = vmatpush.bf16.msra.mxu0 0
        %910 = vmatpush.bf16.msra.mxu0 0
        %911 = vmatpush.bf16.msra.mxu0 0
        %912 = vmatpush.bf16.msra.mxu0 0
        %913 = vmatpush.bf16.msra.mxu0 %v904
        %914 = vmatmul.bf16.gmra.mxu0 %v901
        %v915 = vpop.f32.mrf.mxu0
        %v916 = vadd.f32 0.0, %v915
        %v917 = vpop.f32.mrf.mxu0
        %918 = vdwg.mxu0
        %v919 = vpack.c.bf16 %v916, %v916
        %v920 = vld [vmem:[%s5 + $0x4] sm:$0xf]
        %v922 = vsel %vm806, %v919, 0
        %v925 = vsel %vm843, %v920, 0
        %927 = vmatpush.bf16.msra.mxu0 0
        %928 = vmatpush.bf16.msra.mxu0 0
        %929 = vmatpush.bf16.msra.mxu0 0
        %930 = vmatpush.bf16.msra.mxu0 0
        %931 = vmatpush.bf16.msra.mxu0 0
        %932 = vmatpush.bf16.msra.mxu0 0
        %933 = vmatpush.bf16.msra.mxu0 0
        %934 = vmatpush.bf16.msra.mxu0 %v925
        %935 = vmatmul.bf16.gmra.mxu0 %v922
        %v936 = vpop.f32.mrf.mxu0
        %v937 = vadd.f32 0.0, %v936
        %v938 = vpop.f32.mrf.mxu0
        %939 = vdwg.mxu0
        %v941 = vsel %vm806, %v860, 0
        %v944 = vsel %vm843, %v861, 0
        %946 = vmatpush.bf16.msra.mxu0 0
        %947 = vmatpush.bf16.msra.mxu0 0
        %948 = vmatpush.bf16.msra.mxu0 0
        %949 = vmatpush.bf16.msra.mxu0 0
        %950 = vmatpush.bf16.msra.mxu0 0
        %951 = vmatpush.bf16.msra.mxu0 0
        %952 = vmatpush.bf16.msra.mxu0 0
        %953 = vmatpush.bf16.msra.mxu0 %v944
        %954 = vmatmul.bf16.gmra.mxu0 %v941
        %v955 = vpop.f32.mrf.mxu0
        %v956 = vadd.f32 %v937, %v955
        %v957 = vpop.f32.mrf.mxu0
        %958 = vdwg.mxu0
        %959 = vrot.lane.b32.xlu0 %v801, 112
        %v960 = vpop.permute.xlu0 %959
        %961 = vrot.lane.b32.xlu0 %v802, 80
        %v962 = vpop.permute.xlu0 %961
        %v964 = vsel %vm806, %v960, 0
        %v967 = vsel %vm806, %v962, 0
        %969 = vmatpush.bf16.xpose.msra.mxu0 0
        %970 = vmatpush.bf16.xpose.msra.mxu0 0
        %971 = vmatpush.bf16.xpose.msra.mxu0 0
        %972 = vmatpush.bf16.xpose.msra.mxu0 0
        %973 = vmatpush.bf16.xpose.msra.mxu0 0
        %974 = vmatpush.bf16.xpose.msra.mxu0 0
        %975 = vmatpush.bf16.xpose.msra.mxu0 0
        %976 = vmatpush.bf16.xpose.msra.mxu0 %v967
        %977 = vmatmul.bf16.gmra.mxu0 %v964
        %v978 = vpop.f32.mrf.mxu0
        %v979 = vadd.f32 %v760, %v978
        %v980 = vpop.f32.mrf.mxu0
        %981 = vdwg.mxu0
        %v982 = vsel %vm806, %v979, -inf
        %983 = vmax.xlane.f32.xlu0 %v982
        %v984 = vpop.xlane.xlu0 %983
        %v985 = vsub.f32 %v979, %v984
        %v986 = vmul.f32 %v985, 1.442695
        %v987 = vpow.pop %v986
        %v988 = vsel %vm806, %v987, 0.0
        %989 = vadd.xlane.f32.xlu0 %v988
        %v990 = vpop.xlane.xlu0 %989
        %v991 = vrcp.pop %v990
        %v992 = vmul.f32 %v987, %v991
        %v993 = vpack.c.bf16 %v992, %v992
        %994 = vrot.lane.b32.xlu0 %v802, 48
        %v995 = vpop.permute.xlu0 %994
        %v997 = vsel %vm806, %v993, 0
        %v1000 = vsel %vm843, %v995, 0
        %1002 = vmatpush.bf16.msra.mxu0 0
        %1003 = vmatpush.bf16.msra.mxu0 0
        %1004 = vmatpush.bf16.msra.mxu0 0
        %1005 = vmatpush.bf16.msra.mxu0 0
        %1006 = vmatpush.bf16.msra.mxu0 0
        %1007 = vmatpush.bf16.msra.mxu0 0
        %1008 = vmatpush.bf16.msra.mxu0 0
        %1009 = vmatpush.bf16.msra.mxu0 %v1000
        %1010 = vmatmul.bf16.gmra.mxu0 %v997
        %v1011 = vpop.f32.mrf.mxu0
        %v1012 = vadd.f32 0.0, %v1011
        %v1013 = vpop.f32.mrf.mxu0
        %1014 = vdwg.mxu0
        %v1015 = vpack.c.bf16 %v1012, %v1012
        %v1016 = vld [vmem:[%s5 + $0x8] sm:$0xf]
        %v1018 = vsel %vm806, %v1015, 0
        %v1021 = vsel %vm843, %v1016, 0
        %1023 = vmatpush.bf16.msra.mxu0 0
        %1024 = vmatpush.bf16.msra.mxu0 0
        %1025 = vmatpush.bf16.msra.mxu0 0
        %1026 = vmatpush.bf16.msra.mxu0 0
        %1027 = vmatpush.bf16.msra.mxu0 0
        %1028 = vmatpush.bf16.msra.mxu0 0
        %1029 = vmatpush.bf16.msra.mxu0 0
        %1030 = vmatpush.bf16.msra.mxu0 %v1021
        %1031 = vmatmul.bf16.gmra.mxu0 %v1018
        %v1032 = vpop.f32.mrf.mxu0
        %v1033 = vadd.f32 0.0, %v1032
        %v1034 = vpop.f32.mrf.mxu0
        %1035 = vdwg.mxu0
        %v1036 = vadd.f32 %v956, %v1033
        %1037 = vrot.lane.b32.xlu0 %v801, 104
        %v1038 = vpop.permute.xlu0 %1037
        %1039 = vrot.lane.b32.xlu0 %v802, 72
        %v1040 = vpop.permute.xlu0 %1039
        %v1042 = vsel %vm806, %v1038, 0
        %v1045 = vsel %vm806, %v1040, 0
        %1047 = vmatpush.bf16.xpose.msra.mxu0 0
        %1048 = vmatpush.bf16.xpose.msra.mxu0 0
        %1049 = vmatpush.bf16.xpose.msra.mxu0 0
        %1050 = vmatpush.bf16.xpose.msra.mxu0 0
        %1051 = vmatpush.bf16.xpose.msra.mxu0 0
        %1052 = vmatpush.bf16.xpose.msra.mxu0 0
        %1053 = vmatpush.bf16.xpose.msra.mxu0 0
        %1054 = vmatpush.bf16.xpose.msra.mxu0 %v1045
        %1055 = vmatmul.bf16.gmra.mxu0 %v1042
        %v1056 = vpop.f32.mrf.mxu0
        %v1057 = vadd.f32 %v760, %v1056
        %v1058 = vpop.f32.mrf.mxu0
        %1059 = vdwg.mxu0
        %v1060 = vsel %vm806, %v1057, -inf
        %1061 = vmax.xlane.f32.xlu0 %v1060
        %v1062 = vpop.xlane.xlu0 %1061
        %v1063 = vsub.f32 %v1057, %v1062
        %v1064 = vmul.f32 %v1063, 1.442695
        %v1065 = vpow.pop %v1064
        %v1066 = vsel %vm806, %v1065, 0.0
        %1067 = vadd.xlane.f32.xlu0 %v1066
        %v1068 = vpop.xlane.xlu0 %1067
        %v1069 = vrcp.pop %v1068
        %v1070 = vmul.f32 %v1065, %v1069
        %v1071 = vpack.c.bf16 %v1070, %v1070
        %1072 = vrot.lane.b32.xlu0 %v802, 40
        %v1073 = vpop.permute.xlu0 %1072
        %v1075 = vsel %vm806, %v1071, 0
        %v1078 = vsel %vm843, %v1073, 0
        %1080 = vmatpush.bf16.msra.mxu0 0
        %1081 = vmatpush.bf16.msra.mxu0 0
        %1082 = vmatpush.bf16.msra.mxu0 0
        %1083 = vmatpush.bf16.msra.mxu0 0
        %1084 = vmatpush.bf16.msra.mxu0 0
        %1085 = vmatpush.bf16.msra.mxu0 0
        %1086 = vmatpush.bf16.msra.mxu0 0
        %1087 = vmatpush.bf16.msra.mxu0 %v1078
        %1088 = vmatmul.bf16.gmra.mxu0 %v1075
        %v1089 = vpop.f32.mrf.mxu0
        %v1090 = vadd.f32 0.0, %v1089
        %v1091 = vpop.f32.mrf.mxu0
        %1092 = vdwg.mxu0
        %v1093 = vpack.c.bf16 %v1090, %v1090
        %v1094 = vld [vmem:[%s5 + $0xc] sm:$0xf]
        %v1096 = vsel %vm806, %v1093, 0
        %v1099 = vsel %vm843, %v1094, 0
        %1101 = vmatpush.bf16.msra.mxu0 0
        %1102 = vmatpush.bf16.msra.mxu0 0
        %1103 = vmatpush.bf16.msra.mxu0 0
        %1104 = vmatpush.bf16.msra.mxu0 0
        %1105 = vmatpush.bf16.msra.mxu0 0
        %1106 = vmatpush.bf16.msra.mxu0 0
        %1107 = vmatpush.bf16.msra.mxu0 0
        %1108 = vmatpush.bf16.msra.mxu0 %v1099
        %1109 = vmatmul.bf16.gmra.mxu0 %v1096
        %v1110 = vpop.f32.mrf.mxu0
        %v1111 = vadd.f32 0.0, %v1110
        %v1112 = vpop.f32.mrf.mxu0
        %1113 = vdwg.mxu0
        %v1114 = vadd.f32 %v1036, %v1111
        %v1116 = vperm.slane %v799, 0
        %v1118 = vadd.f32 %v1114, %v1116
        %v1119 = vadd.f32 %v759, %v1118
        %v1120 = vld [vmem:[%s7] sm:$0x1]
        %v1121 = vld [vmem:[%s8] sm:$0x1]
        %v1122 = vsel %vm782, %v1119, 0.0
        %1123 = vadd.xlane.f32.xlu0 %v1122
        %v1124 = vpop.xlane.xlu0 %1123
        %v1125 = vrcp.pop 32.0
        %v1126 = vmul.f32 32.0, %v1125
        %v1127 = vsub.f32 1.0, %v1126
        %v1128 = vmul.f32 %v1125, %v1127
        %v1129 = vadd.f32 %v1125, %v1128
        %vm1130 = vweird.f32 %v1125
        %v1131 = vsel %vm1130, %v1125, %v1129
        %v1132 = vmul.f32 %v1124, %v1131
        %v1133 = vsub.f32 %v1119, %v1132
        %v1134 = vmul.f32 %v1133, %v1133
        %v1135 = vsel %vm782, %v1134, 0.0
        %1136 = vadd.xlane.f32.xlu0 %v1135
        %v1137 = vpop.xlane.xlu0 %1136
        %v1138 = vmul.f32 %v1137, %v1131
        %v1139 = vadd.f32 %v1138, 1e-05
        %v1140 = vrsqrt.pop %v1139
        %v1141 = vmul.f32 %v1140, %v1139
        %v1142 = vmul.f32 %v1141, %v1140
        %v1143 = vmul.f32 0.5, %v1142
        %v1144 = vsub.f32 1.5, %v1143
        %v1145 = vmul.f32 %v1140, %v1144
        %vm1146 = vweird.f32 %v1139
        %vm1147 = vweird.f32 %v1140
        %vm1148 = vmor %vm1146, %vm1147
        %v1149 = vsel %vm1148, %v1140, %v1145
        %v1150 = vmul.f32 %v1133, %v1149
        %v1152 = vperm.slane %v1120, 0
        %v1154 = vmul.f32 %v1150, %v1152
        %v1156 = vperm.slane %v1121, 0
        %v1158 = vadd.f32 %v1154, %v1156
        %v1159 = vld [vmem:[%s753] sm:$0xff]
        %v1160 = vld [vmem:[%s753 + $0x8] sm:$0xff]
        %v1161 = vpack.c.bf16 %v1158, %v1158
        %v1162 = vld [vmem:[%s9] sm:$0xf]
        %v1163 = vld [vmem:[%s9 + $0x4] sm:$0xf]
        %v1164 = vld [vmem:[%s9 + $0x8] sm:$0xf]
        %v1165 = vld [vmem:[%s9 + $0xc] sm:$0xf]
        %v1166 = vld [vmem:[%s10] sm:$0x1]
        %v1168 = vperm.slane %v1166, 0
        %v1174 = vunpack.c.l.b16 %v1162
        %v1175 = vunpack.c.l.b16 %v1163
        %v1176 = vunpack.c.l.b16 %v1164
        %v1177 = vunpack.c.l.b16 %v1165
        %v1178 = vpack.c.b16 %v1175, %v1174
        %v1179 = vpack.c.b16 %v1177, %v1176
        %v1183 = vsel %vm782, %v1161, 0
        %1185 = vmatpush.bf16.msra.mxu0 0
        %1186 = vmatpush.bf16.msra.mxu0 0
        %1187 = vmatpush.bf16.msra.mxu0 0
        %1188 = vmatpush.bf16.msra.mxu0 0
        %1189 = vmatpush.bf16.msra.mxu0 0
        %1190 = vmatpush.bf16.msra.mxu0 0
        %1191 = vmatpush.bf16.msra.mxu0 %v1179
        %1192 = vmatpush.bf16.msra.mxu0 %v1178
        %1193 = vmatmul.bf16.gmra.mxu0 %v1183
        %v1194 = vpop.f32.mrf.mxu0
        %v1195 = vadd.f32 %v1168, %v1194
        %v1196 = vpop.f32.mrf.mxu0
        %1197 = vdwg.mxu0
        %v1198 = vpack.c.bf16 %v1160, %v1159
        %v1199 = vld [vmem:[%s11] sm:$0xf]
        %v1200 = vld [vmem:[%s11 + $0x4] sm:$0xf]
        %v1201 = vld [vmem:[%s11 + $0x8] sm:$0xf]
        %v1202 = vld [vmem:[%s11 + $0xc] sm:$0xf]
        %v1203 = vld [vmem:[%s12] sm:$0x1]
        %v1205 = vperm.slane %v1203, 0
        %v1211 = vunpack.c.l.b16 %v1199
        %v1212 = vunpack.c.l.b16 %v1200
        %v1213 = vunpack.c.l.b16 %v1201
        %v1214 = vunpack.c.l.b16 %v1202
        %v1215 = vpack.c.b16 %v1212, %v1211
        %v1216 = vpack.c.b16 %v1214, %v1213
        %v1220 = vsel %vm782, %v1198, 0
        %1222 = vmatpush.bf16.msra.mxu0 0
        %1223 = vmatpush.bf16.msra.mxu0 0
        %1224 = vmatpush.bf16.msra.mxu0 0
        %1225 = vmatpush.bf16.msra.mxu0 0
        %1226 = vmatpush.bf16.msra.mxu0 0
        %1227 = vmatpush.bf16.msra.mxu0 0
        %1228 = vmatpush.bf16.msra.mxu0 %v1216
        %1229 = vmatpush.bf16.msra.mxu0 %v1215
        %1230 = vmatmul.bf16.gmra.mxu0 %v1220
        %v1231 = vpop.f32.mrf.mxu0
        %v1232 = vadd.f32 %v1205, %v1231
        %v1233 = vpop.f32.mrf.mxu0
        %v1234 = vadd.f32 %v1205, %v1233
        %1235 = vdwg.mxu0
        %v1236 = vld [vmem:[%s14] sm:$0x1]
        %v1237 = vmul.f32 %v1195, 0.35355338
        %v1238 = vpack.c.bf16 %v1237, %v1237
        %v1239 = vpack.c.bf16 %v1234, %v1232
        %v1241 = vsel %vm806, %v1238, 0
        %v1244 = vsel %vm806, %v1239, 0
        %1246 = vmatpush.bf16.xpose.msra.mxu0 0
        %1247 = vmatpush.bf16.xpose.msra.mxu0 0
        %1248 = vmatpush.bf16.xpose.msra.mxu0 0
        %1249 = vmatpush.bf16.xpose.msra.mxu0 0
        %1250 = vmatpush.bf16.xpose.msra.mxu0 0
        %1251 = vmatpush.bf16.xpose.msra.mxu0 0
        %1252 = vmatpush.bf16.xpose.msra.mxu0 0
        %1253 = vmatpush.bf16.xpose.msra.mxu0 %v1244
        %1254 = vmatmul.bf16.gmra.mxu0 %v1241
        %v1255 = vpop.f32.mrf.mxu0
        %v1256 = vadd.f32 0.0, %v1255
        %v1257 = vpop.f32.mrf.mxu0
        %1258 = vdwg.mxu0
        %vm1259 = vcmask 130048
        %v1260 = vsel %vm1259, %v1256, -inf
        %1261 = vmax.xlane.f32.xlu0 %v1260
        %v1262 = vpop.xlane.xlu0 %1261
        %v1263 = vsub.f32 %v1256, %v1262
        %v1264 = vmul.f32 %v1263, 1.442695
        %v1265 = vpow.pop %v1264
        %v1266 = vsel %vm1259, %v1265, 0.0
        %1267 = vadd.xlane.f32.xlu0 %v1266
        %v1268 = vpop.xlane.xlu0 %1267
        %v1269 = vrcp.pop %v1268
        %v1270 = vmul.f32 %v1265, %v1269
        %v1271 = vpack.c.bf16 %v1270, %v1270
        %1273 = vrot.lane.b32.xlu0 %v1239, 96
        %v1274 = vpop.permute.xlu0 %1273
        %v1277 = vsel %vm1259, %v1271, 0
        %1279 = vmatpush.bf16.msra.mxu0 0
        %1280 = vmatpush.bf16.msra.mxu0 0
        %1281 = vmatpush.bf16.msra.mxu0 0
        %1282 = vmatpush.bf16.msra.mxu0 0
        %1283 = vmatpush.bf16.msra.mxu0 0
        %1284 = vmatpush.bf16.msra.mxu0 0
        %1285 = vmatpush.bf16.msra.mxu0 0
        %1286 = vmatpush.bf16.msra.mxu0 %v1274
        %1287 = vmatmul.bf16.gmra.mxu0 %v1277
        %v1288 = vpop.f32.mrf.mxu0
        %v1289 = vadd.f32 0.0, %v1288
        %v1290 = vpop.f32.mrf.mxu0
        %1291 = vdwg.mxu0
        %v1292 = vpack.c.bf16 %v1289, %v1289
        %v1293 = vld [vmem:[%s13] sm:$0xf]
        %1295 = vrot.lane.b32.xlu0 %v1238, 120
        %v1296 = vpop.permute.xlu0 %1295
        %1297 = vrot.lane.b32.xlu0 %v1239, 120
        %v1298 = vpop.permute.xlu0 %1297
        %v1300 = vsel %vm806, %v1296, 0
        %v1303 = vsel %vm806, %v1298, 0
        %1305 = vmatpush.bf16.xpose.msra.mxu0 0
        %1306 = vmatpush.bf16.xpose.msra.mxu0 0
        %1307 = vmatpush.bf16.xpose.msra.mxu0 0
        %1308 = vmatpush.bf16.xpose.msra.mxu0 0
        %1309 = vmatpush.bf16.xpose.msra.mxu0 0
        %1310 = vmatpush.bf16.xpose.msra.mxu0 0
        %1311 = vmatpush.bf16.xpose.msra.mxu0 0
        %1312 = vmatpush.bf16.xpose.msra.mxu0 %v1303
        %1313 = vmatmul.bf16.gmra.mxu0 %v1300
        %v1314 = vpop.f32.mrf.mxu0
        %v1315 = vadd.f32 0.0, %v1314
        %v1316 = vpop.f32.mrf.mxu0
        %1317 = vdwg.mxu0
        %v1318 = vsel %vm1259, %v1315, -inf
        %1319 = vmax.xlane.f32.xlu0 %v1318
        %v1320 = vpop.xlane.xlu0 %1319
        %v1321 = vsub.f32 %v1315, %v1320
        %v1322 = vmul.f32 %v1321, 1.442695
        %v1323 = vpow.pop %v1322
        %v1324 = vsel %vm1259, %v1323, 0.0
        %1325 = vadd.xlane.f32.xlu0 %v1324
        %v1326 = vpop.xlane.xlu0 %1325
        %v1327 = vrcp.pop %v1326
        %v1328 = vmul.f32 %v1323, %v1327
        %v1329 = vpack.c.bf16 %v1328, %v1328
        %1330 = vrot.lane.b32.xlu0 %v1239, 88
        %v1331 = vpop.permute.xlu0 %1330
        %v1334 = vsel %vm1259, %v1329, 0
        %1336 = vmatpush.bf16.msra.mxu0 0
        %1337 = vmatpush.bf16.msra.mxu0 0
        %1338 = vmatpush.bf16.msra.mxu0 0
        %1339 = vmatpush.bf16.msra.mxu0 0
        %1340 = vmatpush.bf16.msra.mxu0 0
        %1341 = vmatpush.bf16.msra.mxu0 0
        %1342 = vmatpush.bf16.msra.mxu0 0
        %1343 = vmatpush.bf16.msra.mxu0 %v1331
        %1344 = vmatmul.bf16.gmra.mxu0 %v1334
        %v1345 = vpop.f32.mrf.mxu0
        %v1346 = vadd.f32 0.0, %v1345
        %v1347 = vpop.f32.mrf.mxu0
        %1348 = vdwg.mxu0
        %v1349 = vpack.c.bf16 %v1346, %v1346
        %v1350 = vld [vmem:[%s13 + $0x4] sm:$0xf]
        %v1352 = vsel %vm806, %v1349, 0
        %v1355 = vsel %vm843, %v1350, 0
        %1357 = vmatpush.bf16.msra.mxu0 0
        %1358 = vmatpush.bf16.msra.mxu0 0
        %1359 = vmatpush.bf16.msra.mxu0 0
        %1360 = vmatpush.bf16.msra.mxu0 0
        %1361 = vmatpush.bf16.msra.mxu0 0
        %1362 = vmatpush.bf16.msra.mxu0 0
        %1363 = vmatpush.bf16.msra.mxu0 0
        %1364 = vmatpush.bf16.msra.mxu0 %v1355
        %1365 = vmatmul.bf16.gmra.mxu0 %v1352
        %v1366 = vpop.f32.mrf.mxu0
        %v1367 = vadd.f32 0.0, %v1366
        %v1368 = vpop.f32.mrf.mxu0
        %1369 = vdwg.mxu0
        %v1371 = vsel %vm806, %v1292, 0
        %v1374 = vsel %vm843, %v1293, 0
        %1376 = vmatpush.bf16.msra.mxu0 0
        %1377 = vmatpush.bf16.msra.mxu0 0
        %1378 = vmatpush.bf16.msra.mxu0 0
        %1379 = vmatpush.bf16.msra.mxu0 0
        %1380 = vmatpush.bf16.msra.mxu0 0
        %1381 = vmatpush.bf16.msra.mxu0 0
        %1382 = vmatpush.bf16.msra.mxu0 0
        %1383 = vmatpush.bf16.msra.mxu0 %v1374
        %1384 = vmatmul.bf16.gmra.mxu0 %v1371
        %v1385 = vpop.f32.mrf.mxu0
        %v1386 = vadd.f32 %v1367, %v1385
        %v1387 = vpop.f32.mrf.mxu0
        %1388 = vdwg.mxu0
        %1389 = vrot.lane.b32.xlu0 %v1238, 112
        %v1390 = vpop.permute.xlu0 %1389
        %1391 = vrot.lane.b32.xlu0 %v1239, 112
        %v1392 = vpop.permute.xlu0 %1391
        %v1394 = vsel %vm806, %v1390, 0
        %v1397 = vsel %vm806, %v1392, 0
        %1399 = vmatpush.bf16.xpose.msra.mxu0 0
        %1400 = vmatpush.bf16.xpose.msra.mxu0 0
        %1401 = vmatpush.bf16.xpose.msra.mxu0 0
        %1402 = vmatpush.bf16.xpose.msra.mxu0 0
        %1403 = vmatpush.bf16.xpose.msra.mxu0 0
        %1404 = vmatpush.bf16.xpose.msra.mxu0 0
        %1405 = vmatpush.bf16.xpose.msra.mxu0 0
        %1406 = vmatpush.bf16.xpose.msra.mxu0 %v1397
        %1407 = vmatmul.bf16.gmra.mxu0 %v1394
        %v1408 = vpop.f32.mrf.mxu0
        %v1409 = vadd.f32 0.0, %v1408
        %v1410 = vpop.f32.mrf.mxu0
        %1411 = vdwg.mxu0
        %v1412 = vsel %vm1259, %v1409, -inf
        %1413 = vmax.xlane.f32.xlu0 %v1412
        %v1414 = vpop.xlane.xlu0 %1413
        %v1415 = vsub.f32 %v1409, %v1414
        %v1416 = vmul.f32 %v1415, 1.442695
        %v1417 = vpow.pop %v1416
        %v1418 = vsel %vm1259, %v1417, 0.0
        %1419 = vadd.xlane.f32.xlu0 %v1418
        %v1420 = vpop.xlane.xlu0 %1419
        %v1421 = vrcp.pop %v1420
        %v1422 = vmul.f32 %v1417, %v1421
        %v1423 = vpack.c.bf16 %v1422, %v1422
        %1424 = vrot.lane.b32.xlu0 %v1239, 80
        %v1425 = vpop.permute.xlu0 %1424
        %v1428 = vsel %vm1259, %v1423, 0
        %1430 = vmatpush.bf16.msra.mxu0 0
        %1431 = vmatpush.bf16.msra.mxu0 0
        %1432 = vmatpush.bf16.msra.mxu0 0
        %1433 = vmatpush.bf16.msra.mxu0 0
        %1434 = vmatpush.bf16.msra.mxu0 0
        %1435 = vmatpush.bf16.msra.mxu0 0
        %1436 = vmatpush.bf16.msra.mxu0 0
        %1437 = vmatpush.bf16.msra.mxu0 %v1425
        %1438 = vmatmul.bf16.gmra.mxu0 %v1428
        %v1439 = vpop.f32.mrf.mxu0
        %v1440 = vadd.f32 0.0, %v1439
        %v1441 = vpop.f32.mrf.mxu0
        %1442 = vdwg.mxu0
        %v1443 = vpack.c.bf16 %v1440, %v1440
        %v1444 = vld [vmem:[%s13 + $0x8] sm:$0xf]
        %v1446 = vsel %vm806, %v1443, 0
        %v1449 = vsel %vm843, %v1444, 0
        %1451 = vmatpush.bf16.msra.mxu0 0
        %1452 = vmatpush.bf16.msra.mxu0 0
        %1453 = vmatpush.bf16.msra.mxu0 0
        %1454 = vmatpush.bf16.msra.mxu0 0
        %1455 = vmatpush.bf16.msra.mxu0 0
        %1456 = vmatpush.bf16.msra.mxu0 0
        %1457 = vmatpush.bf16.msra.mxu0 0
        %1458 = vmatpush.bf16.msra.mxu0 %v1449
        %1459 = vmatmul.bf16.gmra.mxu0 %v1446
        %v1460 = vpop.f32.mrf.mxu0
        %v1461 = vadd.f32 0.0, %v1460
        %v1462 = vpop.f32.mrf.mxu0
        %1463 = vdwg.mxu0
        %v1464 = vadd.f32 %v1386, %v1461
        %1465 = vrot.lane.b32.xlu0 %v1238, 104
        %v1466 = vpop.permute.xlu0 %1465
        %1467 = vrot.lane.b32.xlu0 %v1239, 104
        %v1468 = vpop.permute.xlu0 %1467
        %v1470 = vsel %vm806, %v1466, 0
        %v1473 = vsel %vm806, %v1468, 0
        %1475 = vmatpush.bf16.xpose.msra.mxu0 0
        %1476 = vmatpush.bf16.xpose.msra.mxu0 0
        %1477 = vmatpush.bf16.xpose.msra.mxu0 0
        %1478 = vmatpush.bf16.xpose.msra.mxu0 0
        %1479 = vmatpush.bf16.xpose.msra.mxu0 0
        %1480 = vmatpush.bf16.xpose.msra.mxu0 0
        %1481 = vmatpush.bf16.xpose.msra.mxu0 0
        %1482 = vmatpush.bf16.xpose.msra.mxu0 %v1473
        %1483 = vmatmul.bf16.gmra.mxu0 %v1470
        %v1484 = vpop.f32.mrf.mxu0
        %v1485 = vadd.f32 0.0, %v1484
        %v1486 = vpop.f32.mrf.mxu0
        %1487 = vdwg.mxu0
        %v1488 = vsel %vm1259, %v1485, -inf
        %1489 = vmax.xlane.f32.xlu0 %v1488
        %v1490 = vpop.xlane.xlu0 %1489
        %v1491 = vsub.f32 %v1485, %v1490
        %v1492 = vmul.f32 %v1491, 1.442695
        %v1493 = vpow.pop %v1492
        %v1494 = vsel %vm1259, %v1493, 0.0
        %1495 = vadd.xlane.f32.xlu0 %v1494
        %v1496 = vpop.xlane.xlu0 %1495
        %v1497 = vrcp.pop %v1496
        %v1498 = vmul.f32 %v1493, %v1497
        %v1499 = vpack.c.bf16 %v1498, %v1498
        %1500 = vrot.lane.b32.xlu0 %v1239, 72
        %v1501 = vpop.permute.xlu0 %1500
        %v1504 = vsel %vm1259, %v1499, 0
        %1506 = vmatpush.bf16.msra.mxu0 0
        %1507 = vmatpush.bf16.msra.mxu0 0
        %1508 = vmatpush.bf16.msra.mxu0 0
        %1509 = vmatpush.bf16.msra.mxu0 0
        %1510 = vmatpush.bf16.msra.mxu0 0
        %1511 = vmatpush.bf16.msra.mxu0 0
        %1512 = vmatpush.bf16.msra.mxu0 0
        %1513 = vmatpush.bf16.msra.mxu0 %v1501
        %1514 = vmatmul.bf16.gmra.mxu0 %v1504
        %v1515 = vpop.f32.mrf.mxu0
        %v1516 = vadd.f32 0.0, %v1515
        %v1517 = vpop.f32.mrf.mxu0
        %1518 = vdwg.mxu0
        %v1519 = vpack.c.bf16 %v1516, %v1516
        %v1520 = vld [vmem:[%s13 + $0xc] sm:$0xf]
        %v1522 = vsel %vm806, %v1519, 0
        %v1525 = vsel %vm843, %v1520, 0
        %1527 = vmatpush.bf16.msra.mxu0 0
        %1528 = vmatpush.bf16.msra.mxu0 0
        %1529 = vmatpush.bf16.msra.mxu0 0
        %1530 = vmatpush.bf16.msra.mxu0 0
        %1531 = vmatpush.bf16.msra.mxu0 0
        %1532 = vmatpush.bf16.msra.mxu0 0
        %1533 = vmatpush.bf16.msra.mxu0 0
        %1534 = vmatpush.bf16.msra.mxu0 %v1525
        %1535 = vmatmul.bf16.gmra.mxu0 %v1522
        %v1536 = vpop.f32.mrf.mxu0
        %v1537 = vadd.f32 0.0, %v1536
        %v1538 = vpop.f32.mrf.mxu0
        %1539 = vdwg.mxu0
        %v1540 = vadd.f32 %v1464, %v1537
        %v1542 = vperm.slane %v1236, 0
        %v1544 = vadd.f32 %v1540, %v1542
        %v1545 = vadd.f32 %v1158, %v1544
        %v1546 = vld [vmem:[%s15] sm:$0x1]
        %v1547 = vld [vmem:[%s16] sm:$0x1]
        %v1548 = vsel %vm782, %v1545, 0.0
        %1549 = vadd.xlane.f32.xlu0 %v1548
        %v1550 = vpop.xlane.xlu0 %1549
        %v1551 = vmul.f32 %v1550, %v1131
        %v1552 = vsub.f32 %v1545, %v1551
        %v1553 = vmul.f32 %v1552, %v1552
        %v1554 = vsel %vm782, %v1553, 0.0
        %1555 = vadd.xlane.f32.xlu0 %v1554
        %v1556 = vpop.xlane.xlu0 %1555
        %v1557 = vmul.f32 %v1556, %v1131
        %v1558 = vadd.f32 %v1557, 1e-05
        %v1559 = vrsqrt.pop %v1558
        %v1560 = vmul.f32 %v1559, %v1558
        %v1561 = vmul.f32 %v1560, %v1559
        %v1562 = vmul.f32 0.5, %v1561
        %v1563 = vsub.f32 1.5, %v1562
        %v1564 = vmul.f32 %v1559, %v1563
        %vm1565 = vweird.f32 %v1558
        %vm1566 = vweird.f32 %v1559
        %vm1567 = vmor %vm1565, %vm1566
        %v1568 = vsel %vm1567, %v1559, %v1564
        %v1569 = vmul.f32 %v1552, %v1568
        %v1571 = vperm.slane %v1546, 0
        %v1573 = vmul.f32 %v1569, %v1571
        %v1575 = vperm.slane %v1547, 0
        %v1577 = vadd.f32 %v1573, %v1575
        %v1578 = vpack.c.bf16 %v1577, %v1577
        %v1579 = vld [vmem:[%s17] sm:$0xf]
        %v1580 = vld [vmem:[%s17 + $0x4] sm:$0xf]
        %v1581 = vld [vmem:[%s17 + $0x8] sm:$0xf]
        %v1582 = vld [vmem:[%s17 + $0xc] sm:$0xf]
        %v1583 = vld [vmem:[%s18] sm:$0x1]
        %v1585 = vperm.slane %v1583, 0
        %v1591 = vunpack.c.l.b16 %v1579
        %v1592 = vunpack.c.l.b16 %v1580
        %v1593 = vunpack.c.l.b16 %v1581
        %v1594 = vunpack.c.l.b16 %v1582
        %v1595 = vpack.c.b16 %v1592, %v1591
        %v1596 = vpack.c.b16 %v1594, %v1593
        %v1600 = vsel %vm782, %v1578, 0
        %1602 = vmatpush.bf16.msra.mxu0 0
        %1603 = vmatpush.bf16.msra.mxu0 0
        %1604 = vmatpush.bf16.msra.mxu0 0
        %1605 = vmatpush.bf16.msra.mxu0 0
        %1606 = vmatpush.bf16.msra.mxu0 0
        %1607 = vmatpush.bf16.msra.mxu0 0
        %1608 = vmatpush.bf16.msra.mxu0 %v1596
        %1609 = vmatpush.bf16.msra.mxu0 %v1595
        %1610 = vmatmul.bf16.gmra.mxu0 %v1600
        %v1611 = vpop.f32.mrf.mxu0
        %v1612 = vadd.f32 %v1585, %v1611
        %v1613 = vpop.f32.mrf.mxu0
        %1614 = vdwg.mxu0
        %v1615 = vmax.f32 %v1612, 0.0
        %v1616 = vpack.c.bf16 %v1615, %v1615
        %v1617 = vld [vmem:[%s19] sm:$0xf]
        %v1618 = vld [vmem:[%s19 + $0x4] sm:$0xf]
        %v1619 = vld [vmem:[%s19 + $0x8] sm:$0xf]
        %v1620 = vld [vmem:[%s19 + $0xc] sm:$0xf]
        %v1621 = vld [vmem:[%s19 + $0x10] sm:$0xf]
        %v1622 = vld [vmem:[%s19 + $0x14] sm:$0xf]
        %v1623 = vld [vmem:[%s19 + $0x18] sm:$0xf]
        %v1624 = vld [vmem:[%s19 + $0x1c] sm:$0xf]
        %v1625 = vld [vmem:[%s19 + $0x20] sm:$0xf]
        %v1626 = vld [vmem:[%s19 + $0x24] sm:$0xf]
        %v1627 = vld [vmem:[%s19 + $0x28] sm:$0xf]
        %v1628 = vld [vmem:[%s19 + $0x2c] sm:$0xf]
        %v1629 = vld [vmem:[%s19 + $0x30] sm:$0xf]
        %v1630 = vld [vmem:[%s19 + $0x34] sm:$0xf]
        %v1631 = vld [vmem:[%s19 + $0x38] sm:$0xf]
        %v1632 = vld [vmem:[%s19 + $0x3c] sm:$0xf]
        %v1633 = vld [vmem:[%s20] sm:$0x1]
        %v1635 = vperm.slane %v1633, 0
        %v1653 = vunpack.c.l.b16 %v1617
        %v1654 = vunpack.c.l.b16 %v1618
        %v1655 = vunpack.c.l.b16 %v1619
        %v1656 = vunpack.c.l.b16 %v1620
        %v1657 = vunpack.c.l.b16 %v1621
        %v1658 = vunpack.c.l.b16 %v1622
        %v1659 = vunpack.c.l.b16 %v1623
        %v1660 = vunpack.c.l.b16 %v1624
        %v1661 = vunpack.c.l.b16 %v1625
        %v1662 = vunpack.c.l.b16 %v1626
        %v1663 = vunpack.c.l.b16 %v1627
        %v1664 = vunpack.c.l.b16 %v1628
        %v1665 = vunpack.c.l.b16 %v1629
        %v1666 = vunpack.c.l.b16 %v1630
        %v1667 = vunpack.c.l.b16 %v1631
        %v1668 = vunpack.c.l.b16 %v1632
        %v1669 = vpack.c.b16 %v1654, %v1653
        %v1670 = vpack.c.b16 %v1656, %v1655
        %v1671 = vpack.c.b16 %v1658, %v1657
        %v1672 = vpack.c.b16 %v1660, %v1659
        %v1673 = vpack.c.b16 %v1662, %v1661
        %v1674 = vpack.c.b16 %v1664, %v1663
        %v1675 = vpack.c.b16 %v1666, %v1665
        %v1676 = vpack.c.b16 %v1668, %v1667
        %1685 = vmatpush.bf16.msra.mxu0 %v1676
        %1686 = vmatpush.bf16.msra.mxu0 %v1675
        %1687 = vmatpush.bf16.msra.mxu0 %v1674
        %1688 = vmatpush.bf16.msra.mxu0 %v1673
        %1689 = vmatpush.bf16.msra.mxu0 %v1672
        %1690 = vmatpush.bf16.msra.mxu0 %v1671
        %1691 = vmatpush.bf16.msra.mxu0 %v1670
        %1692 = vmatpush.bf16.msra.mxu0 %v1669
        %1693 = vmatmul.bf16.gmra.mxu0 %v1616
        %v1694 = vpop.f32.mrf.mxu0
        %v1695 = vadd.f32 %v1635, %v1694
        %v1696 = vpop.f32.mrf.mxu0
        %1697 = vdwg.mxu0
        %v1698 = vadd.f32 %v1577, %v1695
        %v1699 = vld [vmem:[%s21] sm:$0x1]
        %v1700 = vld [vmem:[#allocation2] sm:$0x1]
        %v1701 = vsel %vm782, %v1698, 0.0
        %1702 = vadd.xlane.f32.xlu0 %v1701
        %v1703 = vpop.xlane.xlu0 %1702
        %v1704 = vmul.f32 %v1703, %v1131
        %v1705 = vsub.f32 %v1698, %v1704
        %v1706 = vmul.f32 %v1705, %v1705
        %v1707 = vsel %vm782, %v1706, 0.0
        %1708 = vadd.xlane.f32.xlu0 %v1707
        %v1709 = vpop.xlane.xlu0 %1708
        %v1710 = vmul.f32 %v1709, %v1131
        %v1711 = vadd.f32 %v1710, 1e-05
        %v1712 = vrsqrt.pop %v1711
        %v1713 = vmul.f32 %v1712, %v1711
        %v1714 = vmul.f32 %v1713, %v1712
        %v1715 = vmul.f32 0.5, %v1714
        %v1716 = vsub.f32 1.5, %v1715
        %v1717 = vmul.f32 %v1712, %v1716
        %vm1718 = vweird.f32 %v1711
        %vm1719 = vweird.f32 %v1712
        %vm1720 = vmor %vm1718, %vm1719
        %v1721 = vsel %vm1720, %v1712, %v1717
        %v1722 = vmul.f32 %v1705, %v1721
        %v1724 = vperm.slane %v1699, 0
        %v1726 = vmul.f32 %v1722, %v1724
        %v1728 = vperm.slane %v1700, 0
        %v1730 = vadd.f32 %v1726, %v1728
        %1731 = vst.msk [vmem:[%s757] sm:$0xff] %vm782, %v1730
        %p1732 = scmp.lt.s32.totalorder %s35, 1
        %s1733 = scalar_select %p1732, %s35, 1
        %s1734 = smul.addr %s1733, 8
        %s1735 = scalar_lea.vmem %s23, %s1734
        // Predicated region
        $region117: #{vision_encoder_decoder.12} parent=111 // pred_check
          %p1736 = pneg %p551
        $region118: #{vision_encoder_decoder.12} parent=111 // pred_check_branch
          %1738 = sbr.rel (%p1736) target = $region120
        $region119: #{vision_encoder_decoder.12} parent=111 // pred_region
          _
        $region120: #{vision_encoder_decoder.12} parent=111 // pred_fallthru
          _
      $region112: #{vision_encoder_decoder.12} parent=5 // pred_fallthru
        _
      %p1739 = scmp.le.s32.totalorder 2, %s30
      // Predicated region
      $region121: #{vision_encoder_decoder.12} parent=5 // pred_check
        %p1740 = pneg %p1739
      $region122: #{vision_encoder_decoder.12} parent=5 // pred_check_branch
        %1742 = sbr.rel (%p1740) target = $region124
      $region123: #{vision_encoder_decoder.12} parent=5 // pred_region
        %s1743 = ssub.s32 %s30, 2
        // Predicated region
        $region125: #{vision_encoder_decoder.12} parent=123 // pred_check
          %p1744 = pneg %p557
        $region126: #{vision_encoder_decoder.12} parent=123 // pred_check_branch
          %1746 = sbr.rel (%p1744) target = $region128
        $region127: #{vision_encoder_decoder.12} parent=123 // pred_region
          %p1747 = scmp.lt.s32.totalorder %s36, 1
          %s1748 = scalar_select %p1747, %s36, 1
          %s1749 = smul.addr %s1748, 8
          %s1750 = scalar_lea.vmem %s23, %s1749
        $region128: #{vision_encoder_decoder.12} parent=123 // pred_fallthru
          _
      $region124: #{vision_encoder_decoder.12} parent=5 // pred_fallthru
        _
    $region6: #{vision_encoder_decoder.12} parent=1 // loop_footer
      %s34 = sadd.s32 1, %s30
    $region7: #{vision_encoder_decoder.12} parent=1 // loop_footer_branch
      %29 = sbr.rel target = $region3
    $region8: #{vision_encoder_decoder.12} parent=1 // loop_exit
      _
    %1751 = vsyncpa [#allocation3], 1
    %s1752 = scalar_lea.sflag [#allocation3], 1
    %1753 = vsyncpa %s1752, 1

</llo_original>
